<compile_context>
chip_gen: v6e
topology: v6e:2x2x1
jax: 0.10.0
libtpu: 0.0.40
codegen_flags: <defaults>
</compile_context>

<pallas_src>
import functools

import jax
import jax.numpy as jnp
from jax.experimental import pallas as pl
from jax.experimental.pallas import tpu as pltpu

EPS = 1e-5
LEAKY_SLOPE = 0.2


def _leaky(x, slope):
    return jnp.maximum(x, slope * x)


# ----------------------------- Pallas kernels ------------------------------ #
def _mm_bias_act_kernel(x_ref, w_ref, b_ref, o_ref, *, slope):
    """out = (x @ w + b), optionally LeakyReLU.  Tiled over M."""
    y = jnp.dot(x_ref[...], w_ref[...], preferred_element_type=jnp.float32)
    y = y + b_ref[...]
    if slope is not None:
        y = _leaky(y, slope)
    o_ref[...] = y


def _mm_bias_bn_act_fused_kernel(x_ref, w_ref, b_ref, g_ref, beta_ref, o_ref,
                                 *, m_true, slope):
    """Single-tile fully fused: LeakyReLU(BN_train(x @ w + b))."""
    y = jnp.dot(x_ref[...], w_ref[...], preferred_element_type=jnp.float32)
    y = y + b_ref[...]
    if m_true < y.shape[0]:                       # mask zero-padded rows
        rows = jax.lax.broadcasted_iota(jnp.int32, y.shape, 0)
        ym = jnp.where(rows < m_true, y, 0.0)
    else:
        ym = y
    inv_m = 1.0 / m_true
    mean = jnp.sum(ym, axis=0, keepdims=True) * inv_m
    var = jnp.sum(ym * ym, axis=0, keepdims=True) * inv_m - mean * mean
    scale = g_ref[...] * jax.lax.rsqrt(var + EPS)
    shift = beta_ref[...] - mean * scale
    o_ref[...] = _leaky(y * scale + shift, slope)


def _mm_bias_stats_kernel(x_ref, w_ref, b_ref, y_ref, stats_ref,
                          *, m_true, m_pad, tm):
    """Pass A: y = x @ w + b per tile; accumulate per-channel sum / sum-sq."""
    i = pl.program_id(0)
    y = jnp.dot(x_ref[...], w_ref[...], preferred_element_type=jnp.float32)
    y = y + b_ref[...]
    y_ref[...] = y
    if m_true < m_pad:                            # mask zero-padded rows
        rows = i * tm + jax.lax.broadcasted_iota(jnp.int32, y.shape, 0)
        ym = jnp.where(rows < m_true, y, 0.0)
    else:
        ym = y
    s = jnp.sum(ym, axis=0, keepdims=True)
    sq = jnp.sum(ym * ym, axis=0, keepdims=True)
    upd = jnp.concatenate(
        [s, sq, jnp.zeros((6, y.shape[1]), jnp.float32)], axis=0)

    @pl.when(i == 0)
    def _():
        stats_ref[...] = jnp.zeros_like(stats_ref)

    stats_ref[...] += upd


def _bn_act_kernel(y_ref, stats_ref, g_ref, beta_ref, o_ref, *, m_true, slope):
    """Pass B: per-channel normalize (one FMA) + LeakyReLU.  Tiled over M."""
    st = stats_ref[...]
    inv_m = 1.0 / m_true
    mean = st[0:1, :] * inv_m
    var = st[1:2, :] * inv_m - mean * mean
    scale = g_ref[...] * jax.lax.rsqrt(var + EPS)
    shift = beta_ref[...] - mean * scale
    o_ref[...] = _leaky(y_ref[...] * scale + shift, slope)


# ------------------------------ JAX wrappers -------------------------------- #
def _round_up(x, m):
    return (x + m - 1) // m * m


def _pad2d(a, rows, cols):
    return jnp.pad(a, ((0, rows - a.shape[0]), (0, cols - a.shape[1])))


def _row_vec(v, cols):
    return _pad2d(v.reshape(1, -1).astype(jnp.float32), 1, cols)


_DN = ("NHWC", "HWIO", "NHWC")


def _patches_nhwc(x_nhwc, k, stride, padding):
    """im2col via lax.conv_general_dilated_patches (fused by XLA)."""
    p = jax.lax.conv_general_dilated_patches(
        x_nhwc, (k, k), (stride, stride), padding, dimension_numbers=_DN)
    N, Ho, Wo, K = p.shape
    return p.reshape(N * Ho * Wo, K), Ho, Wo


def _weight_rows(w_oihw):
    """[Cout,Cin,kh,kw] -> [K, Cout], feature order guaranteed to match
    _patches_nhwc by running the *same* patch-extraction on the weights."""
    Cout, Cin, kh, kw = w_oihw.shape
    w_nhwc = jnp.transpose(w_oihw, (0, 2, 3, 1))              # [Cout,kh,kw,Cin]
    w_rows = jax.lax.conv_general_dilated_patches(
        w_nhwc, (kh, kw), (1, 1), "VALID", dimension_numbers=_DN)
    return w_rows.reshape(Cout, Cin * kh * kw).T              # [K, Cout]


def _conv_matmul(patches, w_oihw, bias, gamma, beta, *, bn, slope, tm=256):
    """patches:[M,K] -> activation [M,Cout] (f32) of conv(+bias)(+BN)(+leaky)."""
    M, K = patches.shape
    Cout, Cin, kh, kw = w_oihw.shape
    assert K == Cin * kh * kw, (K, Cin, kh, kw)

    Kp = _round_up(K, 128)                 # lane-aligned contraction dim
    Cp = _round_up(Cout, 128)              # lane-dense output channels
    tm_eff = min(tm, _round_up(M, 8))      # sublane-aligned M tile
    Mp = _round_up(M, tm_eff)
    grid_m = Mp // tm_eff

    w_p = _pad2d(_weight_rows(w_oihw), Kp, Cp).astype(jnp.bfloat16)
    x_p = _pad2d(patches.astype(jnp.bfloat16), Mp, Kp)
    b_p = (_row_vec(bias, Cp) if bias is not None
           else jnp.zeros((1, Cp), jnp.float32))

    x_spec = pl.BlockSpec((tm_eff, Kp), lambda i: (i, 0))
    w_spec = pl.BlockSpec((Kp, Cp), lambda i: (0, 0))
    vec_spec = pl.BlockSpec((1, Cp), lambda i: (0, 0))
    y_spec = pl.BlockSpec((tm_eff, Cp), lambda i: (i, 0))

    if not bn:
        y = pl.pallas_call(
            functools.partial(_mm_bias_act_kernel, slope=slope),
            out_shape=jax.ShapeDtypeStruct((Mp, Cp), jnp.float32),
            grid_spec=pltpu.PrefetchScalarGridSpec(
                num_scalar_prefetch=0, grid=(grid_m,),
                in_specs=[x_spec, w_spec, vec_spec],
                out_specs=y_spec),
            compiler_params=pltpu.CompilerParams(
                dimension_semantics=("parallel",)),
        )(x_p, w_p, b_p)
        return y[:M, :Cout]

    g_p = _row_vec(gamma, Cp)
    be_p = _row_vec(beta, Cp)

    if grid_m == 1:
        # Whole layer fits one tile: fully fused conv + bias + BN + LeakyReLU.
        y = pl.pallas_call(
            functools.partial(_mm_bias_bn_act_fused_kernel,
                              m_true=M, slope=slope),
            out_shape=jax.ShapeDtypeStruct((Mp, Cp), jnp.float32),
            grid_spec=pltpu.PrefetchScalarGridSpec(
                num_scalar_prefetch=0, grid=(1,),
                in_specs=[x_spec, w_spec, vec_spec, vec_spec, vec_spec],
                out_specs=y_spec),
            compiler_params=pltpu.CompilerParams(
                dimension_semantics=("arbitrary",)),
        )(x_p, w_p, b_p, g_p, be_p)
        return y[:M, :Cout]

    # Tiled path: pass A accumulates stats across the M grid, pass B normalizes.
    stats_spec = pl.BlockSpec((8, Cp), lambda i: (0, 0))
    y_raw, stats = pl.pallas_call(
        functools.partial(_mm_bias_stats_kernel,
                          m_true=M, m_pad=Mp, tm=tm_eff),
        out_shape=(jax.ShapeDtypeStruct((Mp, Cp), jnp.float32),
                   jax.ShapeDtypeStruct((8, Cp), jnp.float32)),
        grid_spec=pltpu.PrefetchScalarGridSpec(
            num_scalar_prefetch=0, grid=(grid_m,),
            in_specs=[x_spec, w_spec, vec_spec],
            out_specs=(y_spec, stats_spec)),
        compiler_params=pltpu.CompilerParams(
            dimension_semantics=("arbitrary",)),   # stats accumulate across M
    )(x_p, w_p, b_p)

    y = pl.pallas_call(
        functools.partial(_bn_act_kernel, m_true=M, slope=slope),
        out_shape=jax.ShapeDtypeStruct((Mp, Cp), jnp.float32),
        grid_spec=pltpu.PrefetchScalarGridSpec(
            num_scalar_prefetch=0, grid=(grid_m,),
            in_specs=[y_spec, stats_spec, vec_spec, vec_spec],
            out_specs=y_spec),
        compiler_params=pltpu.CompilerParams(
            dimension_semantics=("parallel",)),
    )(y_raw, stats, g_p, be_p)
    return y[:M, :Cout]


def _disc_block(x_nhwc, w, b, gamma, beta, *, bn, tm=256):
    """Conv2d(k=4, s=2, p=1) [+ BN(train)] + LeakyReLU(0.2), NHWC in/out."""
    N = x_nhwc.shape[0]
    Cout = w.shape[0]
    p, Ho, Wo = _patches_nhwc(x_nhwc.astype(jnp.bfloat16), 4, 2,
                              [(1, 1), (1, 1)])
    y = _conv_matmul(p, w, b, gamma, beta, bn=bn, slope=LEAKY_SLOPE, tm=tm)
    return y.reshape(N, Ho, Wo, Cout)


def discriminator_forward(img_a, img_b, params, *, tm=256):
    """Pallas forward of the FE-GAN Discriminator (4-layer PatchGAN), NCHW."""
    # TODO(synk): BatchNorm uses training-mode batch statistics (PyTorch
    # default in .train()); eval-mode running statistics are not modeled.
    x = jnp.concatenate([img_a, img_b], axis=1)               # [N, 2*Cin, H, W]
    x = jnp.transpose(x, (0, 2, 3, 1)).astype(jnp.float32)    # NHWC
    x = _disc_block(x, params["w1"], params["b1"], None, None, bn=False, tm=tm)
    x = _disc_block(x, params["w2"], params["b2"], params["g2"], params["be2"],
                    bn=True, tm=tm)
    x = _disc_block(x, params["w3"], params["b3"], params["g3"], params["be3"],
                    bn=True, tm=tm)
    x = _disc_block(x, params["w4"], params["b4"], params["g4"], params["be4"],
                    bn=True, tm=tm)
    # ZeroPad2d((1, 0, 1, 0)) folded into the final conv's padding:
    # H: (top 1+1, bottom 0+1) = (2, 1);  W: (left 1+1, right 0+1) = (2, 1).
    N = x.shape[0]
    p, Ho, Wo = _patches_nhwc(x.astype(jnp.bfloat16), 4, 1, [(2, 1), (2, 1)])
    y = _conv_matmul(p, params["w5"], None, None, None,
                     bn=False, slope=None, tm=tm)
    y = y.reshape(N, Ho, Wo, 1)
    return jnp.transpose(y, (0, 3, 1, 2))                     # NCHW


# --------------------------- pure-JAX reference ------------------------------ #
def _ref_conv(x, w, b, stride, padding):
    y = jax.lax.conv_general_dilated(
        x, w, (stride, stride), padding,
        dimension_numbers=("NCHW", "OIHW", "NCHW"))
    if b is not None:
        y = y + b.reshape(1, -1, 1, 1)
    return y


def _ref_bn(x, g, b):
    mean = x.mean(axis=(0, 2, 3), keepdims=True)
    var = ((x - mean) ** 2).mean(axis=(0, 2, 3), keepdims=True)
    return ((x - mean) * jax.lax.rsqrt(var + EPS) * g.reshape(1, -1, 1, 1)
            + b.reshape(1, -1, 1, 1))


def ref_forward(img_a, img_b, params):
    lr = lambda t: jnp.maximum(t, LEAKY_SLOPE * t)
    x = jnp.concatenate([img_a, img_b], axis=1)
    x = lr(_ref_conv(x, params["w1"], params["b1"], 2, [(1, 1), (1, 1)]))
    x = lr(_ref_bn(_ref_conv(x, params["w2"], params["b2"], 2, [(1, 1), (1, 1)]),
                   params["g2"], params["be2"]))
    x = lr(_ref_bn(_ref_conv(x, params["w3"], params["b3"], 2, [(1, 1), (1, 1)]),
                   params["g3"], params["be3"]))
    x = lr(_ref_bn(_ref_conv(x, params["w4"], params["b4"], 2, [(1, 1), (1, 1)]),
                   params["g4"], params["be4"]))
    return _ref_conv(x, params["w5"], None, 1, [(2, 1), (2, 1)])


# ---------------------------------- main ------------------------------------- #
if __name__ == "__main__":
    key = jax.random.PRNGKey(0)
    N, Cin, H, W = 2, 3, 64, 64
    ks = jax.random.split(key, 20)

    def wn(shape, k):
        return 0.05 * jax.random.normal(k, shape, jnp.float32)

    params = {
        "w1": wn((32, 2 * Cin, 4, 4), ks[0]),
        "b1": 0.1 * jax.random.normal(ks[1], (32,), jnp.float32),
        "w2": wn((64, 32, 4, 4), ks[2]),
        "b2": 0.1 * jax.random.normal(ks[3], (64,), jnp.float32),
        "g2": 1.0 + 0.1 * jax.random.normal(ks[4], (64,), jnp.float32),
        "be2": 0.1 * jax.random.normal(ks[5], (64,), jnp.float32),
        "w3": wn((128, 64, 4, 4), ks[6]),
        "b3": 0.1 * jax.random.normal(ks[7], (128,), jnp.float32),
        "g3": 1.0 + 0.1 * jax.random.normal(ks[8], (128,), jnp.float32),
        "be3": 0.1 * jax.random.normal(ks[9], (128,), jnp.float32),
        "w4": wn((256, 128, 4, 4), ks[10]),
        "b4": 0.1 * jax.random.normal(ks[11], (256,), jnp.float32),
        "g4": 1.0 + 0.1 * jax.random.normal(ks[12], (256,), jnp.float32),
        "be4": 0.1 * jax.random.normal(ks[13], (256,), jnp.float32),
        "w5": wn((1, 256, 4, 4), ks[14]),
    }
    img_a = jax.random.normal(ks[15], (N, Cin, H, W), jnp.float32)
    img_b = jax.random.normal(ks[16], (N, Cin, H, W), jnp.float32)

    fwd = jax.jit(discriminator_forward)
    out = jax.block_until_ready(fwd(img_a, img_b, params))

    ref = jax.block_until_ready(ref_forward(img_a, img_b, params))
    assert out.shape == ref.shape, (out.shape, ref.shape)
    err = float(jnp.max(jnp.abs(out - ref)))
    scale = float(jnp.max(jnp.abs(ref)))
    assert err <= 5e-2 * (1.0 + scale), (err, scale)   # bf16-MXU tolerance

    print("KERNEL_OK")
</pallas_src>

<mosaic_0001>
module attributes {stable_mosaic.version = 11 : i64} {
  func.func @_mm_bias_act_kernel(%arg0: i32, %arg1: memref<256x128xbf16, #tpu.memory_space<vmem>>, %arg2: memref<128x128xbf16, #tpu.memory_space<vmem>>, %arg3: memref<1x128xf32, #tpu.memory_space<vmem>>, %arg4: memref<256x128xf32, #tpu.memory_space<vmem>>) attributes {dimension_semantics = [#tpu.dimension_semantics<parallel>], iteration_bounds = array<i64: 8>, scalar_prefetch = 0 : i64, scratch_operands = 0 : i64, tpu.core_type = #tpu.core_type<tc>, window_params = [{transform_indices = @transform_0, window_bounds = array<i64: 256, 128>}, {pipeline_mode = #tpu.pipeline_mode<synchronous>, transform_indices = @transform_1, window_bounds = array<i64: 128, 128>}, {pipeline_mode = #tpu.pipeline_mode<synchronous>, transform_indices = @transform_2, window_bounds = array<i64: 1, 128>}, {transform_indices = @transform_3, window_bounds = array<i64: 256, 128>}]} {
    %c0 = arith.constant 0 : index
    %c0_0 = arith.constant 0 : index
    %0 = vector.load %arg1[%c0, %c0_0] : memref<256x128xbf16, #tpu.memory_space<vmem>>, vector<256x128xbf16>
    %c0_1 = arith.constant 0 : index
    %c0_2 = arith.constant 0 : index
    %1 = vector.load %arg2[%c0_1, %c0_2] : memref<128x128xbf16, #tpu.memory_space<vmem>>, vector<128x128xbf16>
    %cst = arith.constant dense<0.000000e+00> : vector<256x128xf32>
    %2 = tpu.matmul %0, %1, %cst {dimension_numbers = #tpu.dot_dimension_numbers<[1], [0], [0], [1], [0, 0, 1, 1], [], []>} : vector<256x128xbf16>, vector<128x128xbf16>, vector<256x128xf32> -> vector<256x128xf32>
    %c0_3 = arith.constant 0 : index
    %c0_4 = arith.constant 0 : index
    %3 = vector.load %arg3[%c0_3, %c0_4] : memref<1x128xf32, #tpu.memory_space<vmem>>, vector<1x128xf32>
    %4 = vector.broadcast %3 : vector<1x128xf32> to vector<256x128xf32>
    %5 = arith.addf %2, %4 : vector<256x128xf32>
    %cst_5 = arith.constant 2.000000e-01 : f32
    %6 = vector.broadcast %cst_5 : f32 to vector<256x128xf32>
    %7 = arith.mulf %6, %5 : vector<256x128xf32>
    %8 = arith.maximumf %5, %7 : vector<256x128xf32>
    %c0_6 = arith.constant 0 : index
    %c0_7 = arith.constant 0 : index
    %9 = vector.load %arg4[%c0_6, %c0_7] : memref<256x128xf32, #tpu.memory_space<vmem>>, vector<256x128xf32>
    tpu.vector_store %arg4[%c0_6, %c0_7], %8 {strides = array<i32>} : memref<256x128xf32, #tpu.memory_space<vmem>>, vector<256x128xf32>,
    return
  }
  func.func @transform_0(%arg0: i32) -> (i32, i32) {
    %c0_i32 = arith.constant 0 : i32
    %c0_i32_0 = arith.constant 0 : i32
    return %arg0, %c0_i32 : i32, i32
  }
  func.func @transform_1(%arg0: i32) -> (i32, i32) {
    %c0_i32 = arith.constant 0 : i32
    %c0_i32_0 = arith.constant 0 : i32
    %c0_i32_1 = arith.constant 0 : i32
    return %c0_i32, %c0_i32_0 : i32, i32
  }
  func.func @transform_2(%arg0: i32) -> (i32, i32) {
    %c0_i32 = arith.constant 0 : i32
    %c0_i32_0 = arith.constant 0 : i32
    %c0_i32_1 = arith.constant 0 : i32
    return %c0_i32, %c0_i32_0 : i32, i32
  }
  func.func @transform_3(%arg0: i32) -> (i32, i32) {
    %c0_i32 = arith.constant 0 : i32
    %c0_i32_0 = arith.constant 0 : i32
    return %arg0, %c0_i32 : i32, i32
  }
}

module attributes {stable_mosaic.version = 11 : i64} {
  func.func @_mm_bias_stats_kernel(%arg0: i32, %arg1: memref<256x512xbf16, #tpu.memory_space<vmem>>, %arg2: memref<512x128xbf16, #tpu.memory_space<vmem>>, %arg3: memref<1x128xf32, #tpu.memory_space<vmem>>, %arg4: memref<256x128xf32, #tpu.memory_space<vmem>>, %arg5: memref<8x128xf32, #tpu.memory_space<vmem>>) attributes {dimension_semantics = [#tpu.dimension_semantics<arbitrary>], iteration_bounds = array<i64: 2>, scalar_prefetch = 0 : i64, scratch_operands = 0 : i64, tpu.core_type = #tpu.core_type<tc>, window_params = [{transform_indices = @transform_0, window_bounds = array<i64: 256, 512>}, {pipeline_mode = #tpu.pipeline_mode<synchronous>, transform_indices = @transform_1, window_bounds = array<i64: 512, 128>}, {pipeline_mode = #tpu.pipeline_mode<synchronous>, transform_indices = @transform_2, window_bounds = array<i64: 1, 128>}, {transform_indices = @transform_3, window_bounds = array<i64: 256, 128>}, {pipeline_mode = #tpu.pipeline_mode<synchronous>, transform_indices = @transform_4, window_bounds = array<i64: 8, 128>}]} {
    %c0 = arith.constant 0 : index
    %c0_0 = arith.constant 0 : index
    %0 = vector.load %arg1[%c0, %c0_0] : memref<256x512xbf16, #tpu.memory_space<vmem>>, vector<256x512xbf16>
    %c0_1 = arith.constant 0 : index
    %c0_2 = arith.constant 0 : index
    %1 = vector.load %arg2[%c0_1, %c0_2] : memref<512x128xbf16, #tpu.memory_space<vmem>>, vector<512x128xbf16>
    %cst = arith.constant dense<0.000000e+00> : vector<256x128xf32>
    %2 = tpu.matmul %0, %1, %cst {dimension_numbers = #tpu.dot_dimension_numbers<[1], [0], [0], [1], [0, 0, 1, 1], [], []>} : vector<256x512xbf16>, vector<512x128xbf16>, vector<256x128xf32> -> vector<256x128xf32>
    %c0_3 = arith.constant 0 : index
    %c0_4 = arith.constant 0 : index
    %3 = vector.load %arg3[%c0_3, %c0_4] : memref<1x128xf32, #tpu.memory_space<vmem>>, vector<1x128xf32>
    %4 = vector.broadcast %3 : vector<1x128xf32> to vector<256x128xf32>
    %5 = arith.addf %2, %4 : vector<256x128xf32>
    %c0_5 = arith.constant 0 : index
    %c0_6 = arith.constant 0 : index
    %6 = vector.load %arg4[%c0_5, %c0_6] : memref<256x128xf32, #tpu.memory_space<vmem>>, vector<256x128xf32>
    tpu.vector_store %arg4[%c0_5, %c0_6], %5 {strides = array<i32>} : memref<256x128xf32, #tpu.memory_space<vmem>>, vector<256x128xf32>,
    %cst_7 = arith.constant dense<0.000000e+00> : vector<128xf32>
    %7 = vector.multi_reduction <add>, %5, %cst_7 [0] : vector<256x128xf32> to vector<128xf32>
    %8 = vector.shape_cast %7 : vector<128xf32> to vector<1x128xf32>
    %9 = arith.mulf %5, %5 : vector<256x128xf32>
    %cst_8 = arith.constant dense<0.000000e+00> : vector<128xf32>
    %10 = vector.multi_reduction <add>, %9, %cst_8 [0] : vector<256x128xf32> to vector<128xf32>
    %11 = vector.shape_cast %10 : vector<128xf32> to vector<1x128xf32>
    %cst_9 = arith.constant 0.000000e+00 : f32
    %12 = vector.broadcast %cst_9 : f32 to vector<6x128xf32>
    %13 = tpu.concatenate %8, %11, %12 in 0 : vector<1x128xf32>, vector<1x128xf32>, vector<6x128xf32> -> vector<8x128xf32>
    %c0_i32 = arith.constant 0 : i32
    %14 = arith.cmpi eq, %arg0, %c0_i32 : i32
    %15 = arith.extui %14 : i1 to i32
    %c0_i32_10 = arith.constant 0 : i32
    %16 = arith.cmpi ne, %15, %c0_i32_10 : i32
    scf.if %16 {
      %cst_15 = arith.constant 0.000000e+00 : f32
      %20 = vector.broadcast %cst_15 : f32 to vector<8x128xf32>
      %c0_16 = arith.constant 0 : index
      %c0_17 = arith.constant 0 : index
      %21 = vector.load %arg5[%c0_16, %c0_17] : memref<8x128xf32, #tpu.memory_space<vmem>>, vector<8x128xf32>
      tpu.vector_store %arg5[%c0_16, %c0_17], %20 {strides = array<i32>} : memref<8x128xf32, #tpu.memory_space<vmem>>, vector<8x128xf32>,
    } else {
    }
    %c0_11 = arith.constant 0 : index
    %c0_12 = arith.constant 0 : index
    %17 = vector.load %arg5[%c0_11, %c0_12] : memref<8x128xf32, #tpu.memory_space<vmem>>, vector<8x128xf32>
    %18 = arith.addf %17, %13 : vector<8x128xf32>
    %c0_13 = arith.constant 0 : index
    %c0_14 = arith.constant 0 : index
    %19 = vector.load %arg5[%c0_13, %c0_14] : memref<8x128xf32, #tpu.memory_space<vmem>>, vector<8x128xf32>
    tpu.vector_store %arg5[%c0_13, %c0_14], %18 {strides = array<i32>} : memref<8x128xf32, #tpu.memory_space<vmem>>, vector<8x128xf32>,
    return
  }
  func.func @transform_0(%arg0: i32) -> (i32, i32) {
    %c0_i32 = arith.constant 0 : i32
    %c0_i32_0 = arith.constant 0 : i32
    return %arg0, %c0_i32 : i32, i32
  }
  func.func @transform_1(%arg0: i32) -> (i32, i32) {
    %c0_i32 = arith.constant 0 : i32
    %c0_i32_0 = arith.constant 0 : i32
    %c0_i32_1 = arith.constant 0 : i32
    return %c0_i32, %c0_i32_0 : i32, i32
  }
  func.func @transform_2(%arg0: i32) -> (i32, i32) {
    %c0_i32 = arith.constant 0 : i32
    %c0_i32_0 = arith.constant 0 : i32
    %c0_i32_1 = arith.constant 0 : i32
    return %c0_i32, %c0_i32_0 : i32, i32
  }
  func.func @transform_3(%arg0: i32) -> (i32, i32) {
    %c0_i32 = arith.constant 0 : i32
    %c0_i32_0 = arith.constant 0 : i32
    return %arg0, %c0_i32 : i32, i32
  }
  func.func @transform_4(%arg0: i32) -> (i32, i32) {
    %c0_i32 = arith.constant 0 : i32
    %c0_i32_0 = arith.constant 0 : i32
    %c0_i32_1 = arith.constant 0 : i32
    return %c0_i32, %c0_i32_0 : i32, i32
  }
}

module attributes {stable_mosaic.version = 11 : i64} {
  func.func @_bn_act_kernel(%arg0: i32, %arg1: memref<256x128xf32, #tpu.memory_space<vmem>>, %arg2: memref<8x128xf32, #tpu.memory_space<vmem>>, %arg3: memref<1x128xf32, #tpu.memory_space<vmem>>, %arg4: memref<1x128xf32, #tpu.memory_space<vmem>>, %arg5: memref<256x128xf32, #tpu.memory_space<vmem>>) attributes {dimension_semantics = [#tpu.dimension_semantics<parallel>], iteration_bounds = array<i64: 2>, scalar_prefetch = 0 : i64, scratch_operands = 0 : i64, tpu.core_type = #tpu.core_type<tc>, window_params = [{transform_indices = @transform_0, window_bounds = array<i64: 256, 128>}, {pipeline_mode = #tpu.pipeline_mode<synchronous>, transform_indices = @transform_1, window_bounds = array<i64: 8, 128>}, {pipeline_mode = #tpu.pipeline_mode<synchronous>, transform_indices = @transform_2, window_bounds = array<i64: 1, 128>}, {pipeline_mode = #tpu.pipeline_mode<synchronous>, transform_indices = @transform_3, window_bounds = array<i64: 1, 128>}, {transform_indices = @transform_4, window_bounds = array<i64: 256, 128>}]} {
    %c0 = arith.constant 0 : index
    %c0_0 = arith.constant 0 : index
    %0 = vector.load %arg2[%c0, %c0_0] : memref<8x128xf32, #tpu.memory_space<vmem>>, vector<8x128xf32>
    %1 = vector.extract_strided_slice %0 {offsets = [0, 0], sizes = [1, 128], strides = [1, 1]} : vector<8x128xf32> to vector<1x128xf32>
    %cst = arith.constant 0.001953125 : f32
    %2 = vector.broadcast %cst : f32 to vector<1x128xf32>
    %3 = arith.mulf %1, %2 : vector<1x128xf32>
    %4 = vector.extract_strided_slice %0 {offsets = [1, 0], sizes = [1, 128], strides = [1, 1]} : vector<8x128xf32> to vector<1x128xf32>
    %cst_1 = arith.constant 0.001953125 : f32
    %5 = vector.broadcast %cst_1 : f32 to vector<1x128xf32>
    %6 = arith.mulf %4, %5 : vector<1x128xf32>
    %7 = arith.mulf %3, %3 : vector<1x128xf32>
    %8 = arith.subf %6, %7 : vector<1x128xf32>
    %c0_2 = arith.constant 0 : index
    %c0_3 = arith.constant 0 : index
    %9 = vector.load %arg3[%c0_2, %c0_3] : memref<1x128xf32, #tpu.memory_space<vmem>>, vector<1x128xf32>
    %cst_4 = arith.constant 9.99999974E-6 : f32
    %10 = vector.broadcast %cst_4 : f32 to vector<1x128xf32>
    %11 = arith.addf %8, %10 : vector<1x128xf32>
    %12 = math.rsqrt %11 : vector<1x128xf32>
    %13 = arith.mulf %9, %12 : vector<1x128xf32>
    %c0_5 = arith.constant 0 : index
    %c0_6 = arith.constant 0 : index
    %14 = vector.load %arg4[%c0_5, %c0_6] : memref<1x128xf32, #tpu.memory_space<vmem>>, vector<1x128xf32>
    %15 = arith.mulf %3, %13 : vector<1x128xf32>
    %16 = arith.subf %14, %15 : vector<1x128xf32>
    %c0_7 = arith.constant 0 : index
    %c0_8 = arith.constant 0 : index
    %17 = vector.load %arg1[%c0_7, %c0_8] : memref<256x128xf32, #tpu.memory_space<vmem>>, vector<256x128xf32>
    %18 = vector.broadcast %13 : vector<1x128xf32> to vector<256x128xf32>
    %19 = arith.mulf %17, %18 : vector<256x128xf32>
    %20 = vector.broadcast %16 : vector<1x128xf32> to vector<256x128xf32>
    %21 = arith.addf %19, %20 : vector<256x128xf32>
    %cst_9 = arith.constant 2.000000e-01 : f32
    %22 = vector.broadcast %cst_9 : f32 to vector<256x128xf32>
    %23 = arith.mulf %22, %21 : vector<256x128xf32>
    %24 = arith.maximumf %21, %23 : vector<256x128xf32>
    %c0_10 = arith.constant 0 : index
    %c0_11 = arith.constant 0 : index
    %25 = vector.load %arg5[%c0_10, %c0_11] : memref<256x128xf32, #tpu.memory_space<vmem>>, vector<256x128xf32>
    tpu.vector_store %arg5[%c0_10, %c0_11], %24 {strides = array<i32>} : memref<256x128xf32, #tpu.memory_space<vmem>>, vector<256x128xf32>,
    return
  }
  func.func @transform_0(%arg0: i32) -> (i32, i32) {
    %c0_i32 = arith.constant 0 : i32
    %c0_i32_0 = arith.constant 0 : i32
    return %arg0, %c0_i32 : i32, i32
  }
  func.func @transform_1(%arg0: i32) -> (i32, i32) {
    %c0_i32 = arith.constant 0 : i32
    %c0_i32_0 = arith.constant 0 : i32
    %c0_i32_1 = arith.constant 0 : i32
    return %c0_i32, %c0_i32_0 : i32, i32
  }
  func.func @transform_2(%arg0: i32) -> (i32, i32) {
    %c0_i32 = arith.constant 0 : i32
    %c0_i32_0 = arith.constant 0 : i32
    %c0_i32_1 = arith.constant 0 : i32
    return %c0_i32, %c0_i32_0 : i32, i32
  }
  func.func @transform_3(%arg0: i32) -> (i32, i32) {
    %c0_i32 = arith.constant 0 : i32
    %c0_i32_0 = arith.constant 0 : i32
    %c0_i32_1 = arith.constant 0 : i32
    return %c0_i32, %c0_i32_0 : i32, i32
  }
  func.func @transform_4(%arg0: i32) -> (i32, i32) {
    %c0_i32 = arith.constant 0 : i32
    %c0_i32_0 = arith.constant 0 : i32
    return %arg0, %c0_i32 : i32, i32
  }
}

module attributes {stable_mosaic.version = 11 : i64} {
  func.func @_mm_bias_bn_act_fused_kernel(%arg0: i32, %arg1: memref<128x1024xbf16, #tpu.memory_space<vmem>>, %arg2: memref<1024x128xbf16, #tpu.memory_space<vmem>>, %arg3: memref<1x128xf32, #tpu.memory_space<vmem>>, %arg4: memref<1x128xf32, #tpu.memory_space<vmem>>, %arg5: memref<1x128xf32, #tpu.memory_space<vmem>>, %arg6: memref<128x128xf32, #tpu.memory_space<vmem>>) attributes {dimension_semantics = [#tpu.dimension_semantics<arbitrary>], iteration_bounds = array<i64: 1>, scalar_prefetch = 0 : i64, scratch_operands = 0 : i64, tpu.core_type = #tpu.core_type<tc>, window_params = [{transform_indices = @transform_0, window_bounds = array<i64: 128, 1024>}, {pipeline_mode = #tpu.pipeline_mode<synchronous>, transform_indices = @transform_1, window_bounds = array<i64: 1024, 128>}, {pipeline_mode = #tpu.pipeline_mode<synchronous>, transform_indices = @transform_2, window_bounds = array<i64: 1, 128>}, {pipeline_mode = #tpu.pipeline_mode<synchronous>, transform_indices = @transform_3, window_bounds = array<i64: 1, 128>}, {pipeline_mode = #tpu.pipeline_mode<synchronous>, transform_indices = @transform_4, window_bounds = array<i64: 1, 128>}, {transform_indices = @transform_5, window_bounds = array<i64: 128, 128>}]} {
    %c0 = arith.constant 0 : index
    %c0_0 = arith.constant 0 : index
    %0 = vector.load %arg1[%c0, %c0_0] : memref<128x1024xbf16, #tpu.memory_space<vmem>>, vector<128x1024xbf16>
    %c0_1 = arith.constant 0 : index
    %c0_2 = arith.constant 0 : index
    %1 = vector.load %arg2[%c0_1, %c0_2] : memref<1024x128xbf16, #tpu.memory_space<vmem>>, vector<1024x128xbf16>
    %cst = arith.constant dense<0.000000e+00> : vector<128x128xf32>
    %2 = tpu.matmul %0, %1, %cst {dimension_numbers = #tpu.dot_dimension_numbers<[1], [0], [0], [1], [0, 0, 1, 1], [], []>} : vector<128x1024xbf16>, vector<1024x128xbf16>, vector<128x128xf32> -> vector<128x128xf32>
    %c0_3 = arith.constant 0 : index
    %c0_4 = arith.constant 0 : index
    %3 = vector.load %arg3[%c0_3, %c0_4] : memref<1x128xf32, #tpu.memory_space<vmem>>, vector<1x128xf32>
    %4 = vector.broadcast %3 : vector<1x128xf32> to vector<128x128xf32>
    %5 = arith.addf %2, %4 : vector<128x128xf32>
    %cst_5 = arith.constant dense<0.000000e+00> : vector<128xf32>
    %6 = vector.multi_reduction <add>, %5, %cst_5 [0] : vector<128x128xf32> to vector<128xf32>
    %7 = vector.shape_cast %6 : vector<128xf32> to vector<1x128xf32>
    %cst_6 = arith.constant 7.812500e-03 : f32
    %8 = vector.broadcast %cst_6 : f32 to vector<1x128xf32>
    %9 = arith.mulf %7, %8 : vector<1x128xf32>
    %10 = arith.mulf %5, %5 : vector<128x128xf32>
    %cst_7 = arith.constant dense<0.000000e+00> : vector<128xf32>
    %11 = vector.multi_reduction <add>, %10, %cst_7 [0] : vector<128x128xf32> to vector<128xf32>
    %12 = vector.shape_cast %11 : vector<128xf32> to vector<1x128xf32>
    %cst_8 = arith.constant 7.812500e-03 : f32
    %13 = vector.broadcast %cst_8 : f32 to vector<1x128xf32>
    %14 = arith.mulf %12, %13 : vector<1x128xf32>
    %15 = arith.mulf %9, %9 : vector<1x128xf32>
    %16 = arith.subf %14, %15 : vector<1x128xf32>
    %c0_9 = arith.constant 0 : index
    %c0_10 = arith.constant 0 : index
    %17 = vector.load %arg4[%c0_9, %c0_10] : memref<1x128xf32, #tpu.memory_space<vmem>>, vector<1x128xf32>
    %cst_11 = arith.constant 9.99999974E-6 : f32
    %18 = vector.broadcast %cst_11 : f32 to vector<1x128xf32>
    %19 = arith.addf %16, %18 : vector<1x128xf32>
    %20 = math.rsqrt %19 : vector<1x128xf32>
    %21 = arith.mulf %17, %20 : vector<1x128xf32>
    %c0_12 = arith.constant 0 : index
    %c0_13 = arith.constant 0 : index
    %22 = vector.load %arg5[%c0_12, %c0_13] : memref<1x128xf32, #tpu.memory_space<vmem>>, vector<1x128xf32>
    %23 = arith.mulf %9, %21 : vector<1x128xf32>
    %24 = arith.subf %22, %23 : vector<1x128xf32>
    %25 = vector.broadcast %21 : vector<1x128xf32> to vector<128x128xf32>
    %26 = arith.mulf %5, %25 : vector<128x128xf32>
    %27 = vector.broadcast %24 : vector<1x128xf32> to vector<128x128xf32>
    %28 = arith.addf %26, %27 : vector<128x128xf32>
    %cst_14 = arith.constant 2.000000e-01 : f32
    %29 = vector.broadcast %cst_14 : f32 to vector<128x128xf32>
    %30 = arith.mulf %29, %28 : vector<128x128xf32>
    %31 = arith.maximumf %28, %30 : vector<128x128xf32>
    %c0_15 = arith.constant 0 : index
    %c0_16 = arith.constant 0 : index
    %32 = vector.load %arg6[%c0_15, %c0_16] : memref<128x128xf32, #tpu.memory_space<vmem>>, vector<128x128xf32>
    tpu.vector_store %arg6[%c0_15, %c0_16], %31 {strides = array<i32>} : memref<128x128xf32, #tpu.memory_space<vmem>>, vector<128x128xf32>,
    return
  }
  func.func @transform_0(%arg0: i32) -> (i32, i32) {
    %c0_i32 = arith.constant 0 : i32
    %c0_i32_0 = arith.constant 0 : i32
    return %arg0, %c0_i32 : i32, i32
  }
  func.func @transform_1(%arg0: i32) -> (i32, i32) {
    %c0_i32 = arith.constant 0 : i32
    %c0_i32_0 = arith.constant 0 : i32
    %c0_i32_1 = arith.constant 0 : i32
    return %c0_i32, %c0_i32_0 : i32, i32
  }
  func.func @transform_2(%arg0: i32) -> (i32, i32) {
    %c0_i32 = arith.constant 0 : i32
    %c0_i32_0 = arith.constant 0 : i32
    %c0_i32_1 = arith.constant 0 : i32
    return %c0_i32, %c0_i32_0 : i32, i32
  }
  func.func @transform_3(%arg0: i32) -> (i32, i32) {
    %c0_i32 = arith.constant 0 : i32
    %c0_i32_0 = arith.constant 0 : i32
    %c0_i32_1 = arith.constant 0 : i32
    return %c0_i32, %c0_i32_0 : i32, i32
  }
  func.func @transform_4(%arg0: i32) -> (i32, i32) {
    %c0_i32 = arith.constant 0 : i32
    %c0_i32_0 = arith.constant 0 : i32
    %c0_i32_1 = arith.constant 0 : i32
    return %c0_i32, %c0_i32_0 : i32, i32
  }
  func.func @transform_5(%arg0: i32) -> (i32, i32) {
    %c0_i32 = arith.constant 0 : i32
    %c0_i32_0 = arith.constant 0 : i32
    return %arg0, %c0_i32 : i32, i32
  }
}

module attributes {stable_mosaic.version = 11 : i64} {
  func.func @_mm_bias_bn_act_fused_kernel(%arg0: i32, %arg1: memref<32x2048xbf16, #tpu.memory_space<vmem>>, %arg2: memref<2048x256xbf16, #tpu.memory_space<vmem>>, %arg3: memref<1x256xf32, #tpu.memory_space<vmem>>, %arg4: memref<1x256xf32, #tpu.memory_space<vmem>>, %arg5: memref<1x256xf32, #tpu.memory_space<vmem>>, %arg6: memref<32x256xf32, #tpu.memory_space<vmem>>) attributes {dimension_semantics = [#tpu.dimension_semantics<arbitrary>], iteration_bounds = array<i64: 1>, scalar_prefetch = 0 : i64, scratch_operands = 0 : i64, tpu.core_type = #tpu.core_type<tc>, window_params = [{transform_indices = @transform_0, window_bounds = array<i64: 32, 2048>}, {pipeline_mode = #tpu.pipeline_mode<synchronous>, transform_indices = @transform_1, window_bounds = array<i64: 2048, 256>}, {pipeline_mode = #tpu.pipeline_mode<synchronous>, transform_indices = @transform_2, window_bounds = array<i64: 1, 256>}, {pipeline_mode = #tpu.pipeline_mode<synchronous>, transform_indices = @transform_3, window_bounds = array<i64: 1, 256>}, {pipeline_mode = #tpu.pipeline_mode<synchronous>, transform_indices = @transform_4, window_bounds = array<i64: 1, 256>}, {transform_indices = @transform_5, window_bounds = array<i64: 32, 256>}]} {
    %c0 = arith.constant 0 : index
    %c0_0 = arith.constant 0 : index
    %0 = vector.load %arg1[%c0, %c0_0] : memref<32x2048xbf16, #tpu.memory_space<vmem>>, vector<32x2048xbf16>
    %c0_1 = arith.constant 0 : index
    %c0_2 = arith.constant 0 : index
    %1 = vector.load %arg2[%c0_1, %c0_2] : memref<2048x256xbf16, #tpu.memory_space<vmem>>, vector<2048x256xbf16>
    %cst = arith.constant dense<0.000000e+00> : vector<32x256xf32>
    %2 = tpu.matmul %0, %1, %cst {dimension_numbers = #tpu.dot_dimension_numbers<[1], [0], [0], [1], [0, 0, 1, 1], [], []>} : vector<32x2048xbf16>, vector<2048x256xbf16>, vector<32x256xf32> -> vector<32x256xf32>
    %c0_3 = arith.constant 0 : index
    %c0_4 = arith.constant 0 : index
    %3 = vector.load %arg3[%c0_3, %c0_4] : memref<1x256xf32, #tpu.memory_space<vmem>>, vector<1x256xf32>
    %4 = vector.broadcast %3 : vector<1x256xf32> to vector<32x256xf32>
    %5 = arith.addf %2, %4 : vector<32x256xf32>
    %cst_5 = arith.constant dense<0.000000e+00> : vector<256xf32>
    %6 = vector.multi_reduction <add>, %5, %cst_5 [0] : vector<32x256xf32> to vector<256xf32>
    %7 = vector.shape_cast %6 : vector<256xf32> to vector<1x256xf32>
    %cst_6 = arith.constant 3.125000e-02 : f32
    %8 = vector.broadcast %cst_6 : f32 to vector<1x256xf32>
    %9 = arith.mulf %7, %8 : vector<1x256xf32>
    %10 = arith.mulf %5, %5 : vector<32x256xf32>
    %cst_7 = arith.constant dense<0.000000e+00> : vector<256xf32>
    %11 = vector.multi_reduction <add>, %10, %cst_7 [0] : vector<32x256xf32> to vector<256xf32>
    %12 = vector.shape_cast %11 : vector<256xf32> to vector<1x256xf32>
    %cst_8 = arith.constant 3.125000e-02 : f32
    %13 = vector.broadcast %cst_8 : f32 to vector<1x256xf32>
    %14 = arith.mulf %12, %13 : vector<1x256xf32>
    %15 = arith.mulf %9, %9 : vector<1x256xf32>
    %16 = arith.subf %14, %15 : vector<1x256xf32>
    %c0_9 = arith.constant 0 : index
    %c0_10 = arith.constant 0 : index
    %17 = vector.load %arg4[%c0_9, %c0_10] : memref<1x256xf32, #tpu.memory_space<vmem>>, vector<1x256xf32>
    %cst_11 = arith.constant 9.99999974E-6 : f32
    %18 = vector.broadcast %cst_11 : f32 to vector<1x256xf32>
    %19 = arith.addf %16, %18 : vector<1x256xf32>
    %20 = math.rsqrt %19 : vector<1x256xf32>
    %21 = arith.mulf %17, %20 : vector<1x256xf32>
    %c0_12 = arith.constant 0 : index
    %c0_13 = arith.constant 0 : index
    %22 = vector.load %arg5[%c0_12, %c0_13] : memref<1x256xf32, #tpu.memory_space<vmem>>, vector<1x256xf32>
    %23 = arith.mulf %9, %21 : vector<1x256xf32>
    %24 = arith.subf %22, %23 : vector<1x256xf32>
    %25 = vector.broadcast %21 : vector<1x256xf32> to vector<32x256xf32>
    %26 = arith.mulf %5, %25 : vector<32x256xf32>
    %27 = vector.broadcast %24 : vector<1x256xf32> to vector<32x256xf32>
    %28 = arith.addf %26, %27 : vector<32x256xf32>
    %cst_14 = arith.constant 2.000000e-01 : f32
    %29 = vector.broadcast %cst_14 : f32 to vector<32x256xf32>
    %30 = arith.mulf %29, %28 : vector<32x256xf32>
    %31 = arith.maximumf %28, %30 : vector<32x256xf32>
    %c0_15 = arith.constant 0 : index
    %c0_16 = arith.constant 0 : index
    %32 = vector.load %arg6[%c0_15, %c0_16] : memref<32x256xf32, #tpu.memory_space<vmem>>, vector<32x256xf32>
    tpu.vector_store %arg6[%c0_15, %c0_16], %31 {strides = array<i32>} : memref<32x256xf32, #tpu.memory_space<vmem>>, vector<32x256xf32>,
    return
  }
  func.func @transform_0(%arg0: i32) -> (i32, i32) {
    %c0_i32 = arith.constant 0 : i32
    %c0_i32_0 = arith.constant 0 : i32
    return %arg0, %c0_i32 : i32, i32
  }
  func.func @transform_1(%arg0: i32) -> (i32, i32) {
    %c0_i32 = arith.constant 0 : i32
    %c0_i32_0 = arith.constant 0 : i32
    %c0_i32_1 = arith.constant 0 : i32
    return %c0_i32, %c0_i32_0 : i32, i32
  }
  func.func @transform_2(%arg0: i32) -> (i32, i32) {
    %c0_i32 = arith.constant 0 : i32
    %c0_i32_0 = arith.constant 0 : i32
    %c0_i32_1 = arith.constant 0 : i32
    return %c0_i32, %c0_i32_0 : i32, i32
  }
  func.func @transform_3(%arg0: i32) -> (i32, i32) {
    %c0_i32 = arith.constant 0 : i32
    %c0_i32_0 = arith.constant 0 : i32
    %c0_i32_1 = arith.constant 0 : i32
    return %c0_i32, %c0_i32_0 : i32, i32
  }
  func.func @transform_4(%arg0: i32) -> (i32, i32) {
    %c0_i32 = arith.constant 0 : i32
    %c0_i32_0 = arith.constant 0 : i32
    %c0_i32_1 = arith.constant 0 : i32
    return %c0_i32, %c0_i32_0 : i32, i32
  }
  func.func @transform_5(%arg0: i32) -> (i32, i32) {
    %c0_i32 = arith.constant 0 : i32
    %c0_i32_0 = arith.constant 0 : i32
    return %arg0, %c0_i32 : i32, i32
  }
}

module attributes {stable_mosaic.version = 11 : i64} {
  func.func @_mm_bias_act_kernel(%arg0: i32, %arg1: memref<32x4096xbf16, #tpu.memory_space<vmem>>, %arg2: memref<4096x128xbf16, #tpu.memory_space<vmem>>, %arg3: memref<1x128xf32, #tpu.memory_space<vmem>>, %arg4: memref<32x128xf32, #tpu.memory_space<vmem>>) attributes {dimension_semantics = [#tpu.dimension_semantics<parallel>], iteration_bounds = array<i64: 1>, scalar_prefetch = 0 : i64, scratch_operands = 0 : i64, tpu.core_type = #tpu.core_type<tc>, window_params = [{transform_indices = @transform_0, window_bounds = array<i64: 32, 4096>}, {pipeline_mode = #tpu.pipeline_mode<synchronous>, transform_indices = @transform_1, window_bounds = array<i64: 4096, 128>}, {pipeline_mode = #tpu.pipeline_mode<synchronous>, transform_indices = @transform_2, window_bounds = array<i64: 1, 128>}, {transform_indices = @transform_3, window_bounds = array<i64: 32, 128>}]} {
    %c0 = arith.constant 0 : index
    %c0_0 = arith.constant 0 : index
    %0 = vector.load %arg1[%c0, %c0_0] : memref<32x4096xbf16, #tpu.memory_space<vmem>>, vector<32x4096xbf16>
    %c0_1 = arith.constant 0 : index
    %c0_2 = arith.constant 0 : index
    %1 = vector.load %arg2[%c0_1, %c0_2] : memref<4096x128xbf16, #tpu.memory_space<vmem>>, vector<4096x128xbf16>
    %cst = arith.constant dense<0.000000e+00> : vector<32x128xf32>
    %2 = tpu.matmul %0, %1, %cst {dimension_numbers = #tpu.dot_dimension_numbers<[1], [0], [0], [1], [0, 0, 1, 1], [], []>} : vector<32x4096xbf16>, vector<4096x128xbf16>, vector<32x128xf32> -> vector<32x128xf32>
    %c0_3 = arith.constant 0 : index
    %c0_4 = arith.constant 0 : index
    %3 = vector.load %arg3[%c0_3, %c0_4] : memref<1x128xf32, #tpu.memory_space<vmem>>, vector<1x128xf32>
    %4 = vector.broadcast %3 : vector<1x128xf32> to vector<32x128xf32>
    %5 = arith.addf %2, %4 : vector<32x128xf32>
    %c0_5 = arith.constant 0 : index
    %c0_6 = arith.constant 0 : index
    %6 = vector.load %arg4[%c0_5, %c0_6] : memref<32x128xf32, #tpu.memory_space<vmem>>, vector<32x128xf32>
    tpu.vector_store %arg4[%c0_5, %c0_6], %5 {strides = array<i32>} : memref<32x128xf32, #tpu.memory_space<vmem>>, vector<32x128xf32>,
    return
  }
  func.func @transform_0(%arg0: i32) -> (i32, i32) {
    %c0_i32 = arith.constant 0 : i32
    %c0_i32_0 = arith.constant 0 : i32
    return %arg0, %c0_i32 : i32, i32
  }
  func.func @transform_1(%arg0: i32) -> (i32, i32) {
    %c0_i32 = arith.constant 0 : i32
    %c0_i32_0 = arith.constant 0 : i32
    %c0_i32_1 = arith.constant 0 : i32
    return %c0_i32, %c0_i32_0 : i32, i32
  }
  func.func @transform_2(%arg0: i32) -> (i32, i32) {
    %c0_i32 = arith.constant 0 : i32
    %c0_i32_0 = arith.constant 0 : i32
    %c0_i32_1 = arith.constant 0 : i32
    return %c0_i32, %c0_i32_0 : i32, i32
  }
  func.func @transform_3(%arg0: i32) -> (i32, i32) {
    %c0_i32 = arith.constant 0 : i32
    %c0_i32_0 = arith.constant 0 : i32
    return %arg0, %c0_i32 : i32, i32
  }
}

</mosaic_0001>

<llo_original>
// kernel: discriminator_forward.6
$region0: #{discriminator_forward.6}
  #allocation0 [shape = 'u32[]', space=smem, size = 0x4, offset = 0x4, fixed_abs, tag = 'smem constant byte address 0x4 - core index']
  #allocation1 [shape = 'u32[144,128]{1,0:T(1,128)}', space=vmem, size = 0x12000, scoped, tag = 'internal scratch']
  %s0 = inlined_call_operand.vmem [shape: bf16[2048,128], index: 0, kind: input, shape index: {}]
  %s1 = inlined_call_operand.vmem [shape: bf16[128,128], index: 1, kind: input, shape index: {}]
  %s2 = inlined_call_operand.vmem [shape: f32[1,128], index: 2, kind: input, shape index: {}]
  %s3 = inlined_call_operand.vmem [shape: f32[2048,128], index: 3, kind: output, shape index: {}]
  %s4 = sld [smem:[#allocation0]]
  $region45: #{discriminator_forward.6} parent=0
    _
  %s6 = ssub.s32 1, %s4
  %s7 = scalar_select 0, %s6, %s4
  loop: start=0, step=1, limit=10
  $region2: #{discriminator_forward.6} parent=0 // loop_pre_header
    _
  $region3: #{discriminator_forward.6} parent=0 // loop_header
    %s9 = sphi 0, %s13
    %p10 = scmp.ge.s32.totalorder %s9, 10
    %s19 = sphi 0, %s21
    %s22 = sphi 0, %s19
    %s23 = sphi 0, %s22
    %s39 = sphi 0, %s23
    %s43 = sphi 0, %s43
    %s45 = sphi 0, %s43
    %s46 = sphi 0, %s45
    %s60 = sphi 0, %s46
    %s64 = sphi 0, %s64
    %s66 = sphi 0, %s64
    %s67 = sphi 0, %s66
    %s81 = sphi 0, %s67
    %s87 = sphi 0, %s89
    %s90 = sphi 0, %s87
    %s91 = sphi 0, %s90
    %s107 = sphi 0, %s91
  $region4: #{discriminator_forward.6} parent=0 // loop_header_branch
    %12 = sbr.rel (%p10) target = $region8
  $region5: #{discriminator_forward.6} parent=0 // loop_body
    %s14 = ssub.s32 %s9, 1
    %s15 = ssub.s32 %s9, 2
    %s16 = sadd.s32 %s9, 1
    %s17 = ssub.s32 %s9, %s16
    %p18 = scmp.eq.s32.totalorder %s17, 0
    %s20 = sadd.s32 %s19, 1
    %s21 = scalar_select %p18, %s19, %s20
    %p24 = pneg %p18
    %p25 = scmp.eq.s32.totalorder %s9, 7
    %p26 = por %p24, %p25
    %p27 = scmp.ne.s32.totalorder %s19, %s22
    %p28 = scmp.eq.s32.totalorder %s9, 0
    %p29 = por %p27, %p28
    %p30 = scmp.ne.s32.totalorder %s19, %s22
    %p31 = scmp.eq.s32.totalorder %s14, 7
    %p32 = por %p30, %p31
    %p33 = scmp.ne.s32.totalorder %s22, %s23
    %p34 = scmp.eq.s32.totalorder %s14, 0
    %p35 = por %p33, %p34
    %p36 = scmp.ne.s32.totalorder %s22, %s23
    %p37 = scmp.eq.s32.totalorder %s15, 7
    %p38 = por %p36, %p37
    %p40 = scmp.ne.s32.totalorder %s23, %s39
    %p41 = scmp.eq.s32.totalorder %s15, 0
    %p42 = por %p40, %p41
    %s44 = sadd.s32 %s43, 1
    %p47 = scmp.eq.s32.totalorder %s9, 7
    %p48 = scmp.ne.s32.totalorder %s43, %s45
    %p49 = scmp.eq.s32.totalorder %s9, 0
    %p50 = por %p48, %p49
    %p51 = scmp.ne.s32.totalorder %s43, %s45
    %p52 = scmp.eq.s32.totalorder %s14, 7
    %p53 = por %p51, %p52
    %p54 = scmp.ne.s32.totalorder %s45, %s46
    %p55 = scmp.eq.s32.totalorder %s14, 0
    %p56 = por %p54, %p55
    %p57 = scmp.ne.s32.totalorder %s45, %s46
    %p58 = scmp.eq.s32.totalorder %s15, 7
    %p59 = por %p57, %p58
    %p61 = scmp.ne.s32.totalorder %s46, %s60
    %p62 = scmp.eq.s32.totalorder %s15, 0
    %p63 = por %p61, %p62
    %s65 = sadd.s32 %s64, 1
    %p68 = scmp.eq.s32.totalorder %s9, 7
    %p69 = scmp.ne.s32.totalorder %s64, %s66
    %p70 = scmp.eq.s32.totalorder %s9, 0
    %p71 = por %p69, %p70
    %p72 = scmp.ne.s32.totalorder %s64, %s66
    %p73 = scmp.eq.s32.totalorder %s14, 7
    %p74 = por %p72, %p73
    %p75 = scmp.ne.s32.totalorder %s66, %s67
    %p76 = scmp.eq.s32.totalorder %s14, 0
    %p77 = por %p75, %p76
    %p78 = scmp.ne.s32.totalorder %s66, %s67
    %p79 = scmp.eq.s32.totalorder %s15, 7
    %p80 = por %p78, %p79
    %p82 = scmp.ne.s32.totalorder %s67, %s81
    %p83 = scmp.eq.s32.totalorder %s15, 0
    %p84 = por %p82, %p83
    %s85 = ssub.s32 %s9, %s16
    %p86 = scmp.eq.s32.totalorder %s85, 0
    %s88 = sadd.s32 %s87, 1
    %s89 = scalar_select %p86, %s87, %s88
    %p92 = pneg %p86
    %p93 = scmp.eq.s32.totalorder %s9, 7
    %p94 = por %p92, %p93
    %p95 = scmp.ne.s32.totalorder %s87, %s90
    %p96 = scmp.eq.s32.totalorder %s9, 0
    %p97 = por %p95, %p96
    %p98 = scmp.ne.s32.totalorder %s87, %s90
    %p99 = scmp.eq.s32.totalorder %s14, 7
    %p100 = por %p98, %p99
    %p101 = scmp.ne.s32.totalorder %s90, %s91
    %p102 = scmp.eq.s32.totalorder %s14, 0
    %p103 = por %p101, %p102
    %p104 = scmp.ne.s32.totalorder %s90, %s91
    %p105 = scmp.eq.s32.totalorder %s15, 7
    %p106 = por %p104, %p105
    %p108 = scmp.ne.s32.totalorder %s91, %s107
    %p109 = scmp.eq.s32.totalorder %s15, 0
    %p110 = por %p108, %p109
    %p111 = scmp.le.s32.totalorder 1, %s9
    %p112 = scmp.lt.s32.totalorder %s9, 9
    %p113 = pnand %p111, %p112
    %p114 = pneg %p113
    // Predicated region
    $region9: #{discriminator_forward.6} parent=5 // pred_check
      _
    $region10: #{discriminator_forward.6} parent=5 // pred_check_branch
      %116 = sbr.rel (%p113) target = $region12
    $region11: #{discriminator_forward.6} parent=5 // pred_region
      %s117 = ssub.s32 %s9, 1
      // Predicated region
      $region13: #{discriminator_forward.6} parent=11 // pred_check
        %p118 = pneg %p56
      $region14: #{discriminator_forward.6} parent=11 // pred_check_branch
        %120 = sbr.rel (%p118) target = $region16
      $region15: #{discriminator_forward.6} parent=11 // pred_region
        _
      $region16: #{discriminator_forward.6} parent=11 // pred_fallthru
        _
      // Predicated region
      $region17: #{discriminator_forward.6} parent=11 // pred_check
        %p121 = pneg %p77
      $region18: #{discriminator_forward.6} parent=11 // pred_check_branch
        %123 = sbr.rel (%p121) target = $region20
      $region19: #{discriminator_forward.6} parent=11 // pred_region
        _
      $region20: #{discriminator_forward.6} parent=11 // pred_fallthru
        _
    $region12: #{discriminator_forward.6} parent=5 // pred_fallthru
      _
    %p124 = scmp.lt.s32.totalorder %s9, 8
    // Predicated region
    $region21: #{discriminator_forward.6} parent=5 // pred_check
      %p125 = pneg %p124
    $region22: #{discriminator_forward.6} parent=5 // pred_check_branch
      %127 = sbr.rel (%p125) target = $region24
    $region23: #{discriminator_forward.6} parent=5 // pred_region
      // Predicated region
      $region25: #{discriminator_forward.6} parent=23 // pred_check
        %p128 = pneg %p29
      $region26: #{discriminator_forward.6} parent=23 // pred_check_branch
        %130 = sbr.rel (%p128) target = $region28
      $region27: #{discriminator_forward.6} parent=23 // pred_region
        %s131 = smul.u32 32, %s9
        %p132 = scmp.lt.s32.totalorder %s131, 255
        %s133 = scalar_select %p132, %s131, 255
        %s134 = smul.addr %s133, 4
        %s135 = scalar_lea.vmem %s0, %s134
        %s136 = smul.u32 32, %s9
      $region28: #{discriminator_forward.6} parent=23 // pred_fallthru
        _
    $region24: #{discriminator_forward.6} parent=5 // pred_fallthru
      _
    %p137 = scmp.le.s32.totalorder 1, %s9
    %p138 = scmp.lt.s32.totalorder %s9, 9
    %p139 = pnand %p137, %p138
    %p140 = pneg %p139
    // Predicated region
    $region29: #{discriminator_forward.6} parent=5 // pred_check
      _
    $region30: #{discriminator_forward.6} parent=5 // pred_check_branch
      %142 = sbr.rel (%p139) target = $region32
    $region31: #{discriminator_forward.6} parent=5 // pred_region
      %s143 = ssub.s32 %s9, 1
      %s144 = smul.u32 32, %s14
      %p145 = scmp.lt.s32.totalorder %s144, 255
      %s146 = scalar_select %p145, %s144, 255
      %s147 = smul.addr %s146, 4
      %s148 = scalar_lea.vmem %s0, %s147
      %p149 = pneg %p35
      %p150 = pneg %p32
      %p151 = pneg %p56
      %p152 = pneg %p53
      %p153 = pneg %p77
      %p154 = pneg %p74
      %p155 = pneg %p103
      %p156 = pneg %p100
      %s157 = smul.u32 32, %s14
      %p158 = scmp.lt.s32.totalorder %s157, 255
      %s159 = scalar_select %p158, %s157, 255
      %s160 = smul.addr %s159, 8
      %s161 = scalar_lea.vmem %s3, %s160
      %s162 = smul.u32 32, %s14
      %p163 = scmp.lt.s32.totalorder %s162, 255
      %s164 = scalar_select %p163, %s162, 255
      %s165 = smul.addr %s164, 4
      %s166 = scalar_lea.vmem %s0, %s165
      %s167 = smul.u32 32, %s14
      %s168 = smul.u32 32, %s14
      %p169 = scmp.lt.s32.totalorder %s168, 255
      %s170 = scalar_select %p169, %s168, 255
      %s171 = smul.addr %s170, 8
      %s172 = scalar_lea.vmem %s3, %s171
      %s173 = smul.u32 32, %s14
      %v175 = vld [vmem:[%s166] sm:$0xf]
      %v176 = vld [vmem:[%s166 + $0x4] sm:$0xf]
      %v177 = vld [vmem:[%s166 + $0x8] sm:$0xf]
      %v178 = vld [vmem:[%s166 + $0xc] sm:$0xf]
      %v179 = vld [vmem:[%s166 + $0x10] sm:$0xf]
      %v180 = vld [vmem:[%s166 + $0x14] sm:$0xf]
      %v181 = vld [vmem:[%s166 + $0x18] sm:$0xf]
      %v182 = vld [vmem:[%s166 + $0x1c] sm:$0xf]
      %v183 = vld [vmem:[%s166 + $0x20] sm:$0xf]
      %v184 = vld [vmem:[%s166 + $0x24] sm:$0xf]
      %v185 = vld [vmem:[%s166 + $0x28] sm:$0xf]
      %v186 = vld [vmem:[%s166 + $0x2c] sm:$0xf]
      %v187 = vld [vmem:[%s166 + $0x30] sm:$0xf]
      %v188 = vld [vmem:[%s166 + $0x34] sm:$0xf]
      %v189 = vld [vmem:[%s166 + $0x38] sm:$0xf]
      %v190 = vld [vmem:[%s166 + $0x3c] sm:$0xf]
      %v191 = vld [vmem:[%s166 + $0x40] sm:$0xf]
      %v192 = vld [vmem:[%s166 + $0x44] sm:$0xf]
      %v193 = vld [vmem:[%s166 + $0x48] sm:$0xf]
      %v194 = vld [vmem:[%s166 + $0x4c] sm:$0xf]
      %v195 = vld [vmem:[%s166 + $0x50] sm:$0xf]
      %v196 = vld [vmem:[%s166 + $0x54] sm:$0xf]
      %v197 = vld [vmem:[%s166 + $0x58] sm:$0xf]
      %v198 = vld [vmem:[%s166 + $0x5c] sm:$0xf]
      %v199 = vld [vmem:[%s166 + $0x60] sm:$0xf]
      %v200 = vld [vmem:[%s166 + $0x64] sm:$0xf]
      %v201 = vld [vmem:[%s166 + $0x68] sm:$0xf]
      %v202 = vld [vmem:[%s166 + $0x6c] sm:$0xf]
      %v203 = vld [vmem:[%s166 + $0x70] sm:$0xf]
      %v204 = vld [vmem:[%s166 + $0x74] sm:$0xf]
      %v205 = vld [vmem:[%s166 + $0x78] sm:$0xf]
      %v206 = vld [vmem:[%s166 + $0x7c] sm:$0xf]
      %v207 = vld [vmem:[%s1] sm:$0xf]
      %v208 = vld [vmem:[%s1 + $0x4] sm:$0xf]
      %v209 = vld [vmem:[%s1 + $0x8] sm:$0xf]
      %v210 = vld [vmem:[%s1 + $0xc] sm:$0xf]
      %v211 = vld [vmem:[%s1 + $0x10] sm:$0xf]
      %v212 = vld [vmem:[%s1 + $0x14] sm:$0xf]
      %v213 = vld [vmem:[%s1 + $0x18] sm:$0xf]
      %v214 = vld [vmem:[%s1 + $0x1c] sm:$0xf]
      %v215 = vld [vmem:[%s1 + $0x20] sm:$0xf]
      %v216 = vld [vmem:[%s1 + $0x24] sm:$0xf]
      %v217 = vld [vmem:[%s1 + $0x28] sm:$0xf]
      %v218 = vld [vmem:[%s1 + $0x2c] sm:$0xf]
      %v219 = vld [vmem:[%s1 + $0x30] sm:$0xf]
      %v220 = vld [vmem:[%s1 + $0x34] sm:$0xf]
      %v221 = vld [vmem:[%s1 + $0x38] sm:$0xf]
      %v222 = vld [vmem:[%s1 + $0x3c] sm:$0xf]
      %v223 = vld [vmem:[%s2] sm:$0x1]
      %v225 = vlaneseq
      %v226 = vshrl.u32 %v225, 7
      %v227 = vsub.s32 0, %v226
      %v228 = vrot.slane %v223, %v227
      %v262 = vunpack.c.l.b16 %v175
      %v263 = vunpack.c.l.b16 %v176
      %v264 = vunpack.c.l.b16 %v177
      %v265 = vunpack.c.l.b16 %v178
      %v266 = vunpack.c.l.b16 %v179
      %v267 = vunpack.c.l.b16 %v180
      %v268 = vunpack.c.l.b16 %v181
      %v269 = vunpack.c.l.b16 %v182
      %v270 = vunpack.c.l.b16 %v183
      %v271 = vunpack.c.l.b16 %v184
      %v272 = vunpack.c.l.b16 %v185
      %v273 = vunpack.c.l.b16 %v186
      %v274 = vunpack.c.l.b16 %v187
      %v275 = vunpack.c.l.b16 %v188
      %v276 = vunpack.c.l.b16 %v189
      %v277 = vunpack.c.l.b16 %v190
      %v278 = vunpack.c.l.b16 %v191
      %v279 = vunpack.c.l.b16 %v192
      %v280 = vunpack.c.l.b16 %v193
      %v281 = vunpack.c.l.b16 %v194
      %v282 = vunpack.c.l.b16 %v195
      %v283 = vunpack.c.l.b16 %v196
      %v284 = vunpack.c.l.b16 %v197
      %v285 = vunpack.c.l.b16 %v198
      %v286 = vunpack.c.l.b16 %v199
      %v287 = vunpack.c.l.b16 %v200
      %v288 = vunpack.c.l.b16 %v201
      %v289 = vunpack.c.l.b16 %v202
      %v290 = vunpack.c.l.b16 %v203
      %v291 = vunpack.c.l.b16 %v204
      %v292 = vunpack.c.l.b16 %v205
      %v293 = vunpack.c.l.b16 %v206
      %v294 = vpack.c.b16 %v263, %v262
      %v295 = vpack.c.b16 %v265, %v264
      %v296 = vpack.c.b16 %v267, %v266
      %v297 = vpack.c.b16 %v269, %v268
      %v298 = vpack.c.b16 %v271, %v270
      %v299 = vpack.c.b16 %v273, %v272
      %v300 = vpack.c.b16 %v275, %v274
      %v301 = vpack.c.b16 %v277, %v276
      %v302 = vpack.c.b16 %v279, %v278
      %v303 = vpack.c.b16 %v281, %v280
      %v304 = vpack.c.b16 %v283, %v282
      %v305 = vpack.c.b16 %v285, %v284
      %v306 = vpack.c.b16 %v287, %v286
      %v307 = vpack.c.b16 %v289, %v288
      %v308 = vpack.c.b16 %v291, %v290
      %v309 = vpack.c.b16 %v293, %v292
      %v342 = vunpack.c.l.b16 %v207
      %v343 = vunpack.c.l.b16 %v208
      %v344 = vunpack.c.l.b16 %v209
      %v345 = vunpack.c.l.b16 %v210
      %v346 = vunpack.c.l.b16 %v211
      %v347 = vunpack.c.l.b16 %v212
      %v348 = vunpack.c.l.b16 %v213
      %v349 = vunpack.c.l.b16 %v214
      %v350 = vunpack.c.l.b16 %v215
      %v351 = vunpack.c.l.b16 %v216
      %v352 = vunpack.c.l.b16 %v217
      %v353 = vunpack.c.l.b16 %v218
      %v354 = vunpack.c.l.b16 %v219
      %v355 = vunpack.c.l.b16 %v220
      %v356 = vunpack.c.l.b16 %v221
      %v357 = vunpack.c.l.b16 %v222
      %v358 = vpack.c.b16 %v343, %v342
      %v359 = vpack.c.b16 %v345, %v344
      %v360 = vpack.c.b16 %v347, %v346
      %v361 = vpack.c.b16 %v349, %v348
      %v362 = vpack.c.b16 %v351, %v350
      %v363 = vpack.c.b16 %v353, %v352
      %v364 = vpack.c.b16 %v355, %v354
      %v365 = vpack.c.b16 %v357, %v356
      %374 = vmatprep.subr.bf16.mxu0 0
      %375 = vmatpush1.bf16.msra.mxu0 %v365
      %376 = vmatprep.subr.bf16.mxu0 0
      %377 = vmatpush1.bf16.msra.mxu0 %v364
      %378 = vmatprep.subr.bf16.mxu0 0
      %379 = vmatpush1.bf16.msra.mxu0 %v363
      %380 = vmatprep.subr.bf16.mxu0 0
      %381 = vmatpush1.bf16.msra.mxu0 %v362
      %382 = vmatprep.subr.bf16.mxu0 0
      %383 = vmatpush1.bf16.msra.mxu0 %v361
      %384 = vmatprep.subr.bf16.mxu0 0
      %385 = vmatpush1.bf16.msra.mxu0 %v360
      %386 = vmatprep.subr.bf16.mxu0 0
      %387 = vmatpush1.bf16.msra.mxu0 %v359
      %388 = vmatprep.subr.bf16.mxu0 0
      %389 = vmatpush1.bf16.msra.mxu0 %v358
      %390 = vmatprep.subr.bf16.mxu0 0
      %391 = vmatpush2.bf16.msra.mxu0 0
      %392 = vmatprep.subr.bf16.mxu0 0
      %393 = vmatpush2.bf16.msra.mxu0 0
      %394 = vmatprep.subr.bf16.mxu0 0
      %395 = vmatpush2.bf16.msra.mxu0 0
      %396 = vmatprep.subr.bf16.mxu0 0
      %397 = vmatpush2.bf16.msra.mxu0 0
      %398 = vmatprep.subr.bf16.mxu0 0
      %399 = vmatpush2.bf16.msra.mxu0 0
      %400 = vmatprep.subr.bf16.mxu0 0
      %401 = vmatpush2.bf16.msra.mxu0 0
      %402 = vmatprep.subr.bf16.mxu0 0
      %403 = vmatpush2.bf16.msra.mxu0 0
      %404 = vmatprep.subr.bf16.mxu0 0
      %405 = vmatpush2.bf16.msra.mxu0 0
      %406 = vmatprep.mubr.bf16.mxu0 0
      %407 = vmatmul.mubr.bf16.gmra.mxu0 %v294
      %v408 = vpop.f32.mrf.mxu0
      %v409 = vadd.f32 %v228, %v408
      %v410 = vpop.f32.mrf.mxu0
      %v411 = vpop.f32.mrf.mxu0
      %v412 = vadd.f32 %v228, %v411
      %v413 = vpop.f32.mrf.mxu0
      %414 = vmatprep.mubr.bf16.mxu0 0
      %415 = vmatmul.mubr.bf16.gmra.mxu0 %v295
      %v416 = vpop.f32.mrf.mxu0
      %v417 = vadd.f32 %v228, %v416
      %v418 = vpop.f32.mrf.mxu0
      %v419 = vpop.f32.mrf.mxu0
      %v420 = vadd.f32 %v228, %v419
      %v421 = vpop.f32.mrf.mxu0
      %422 = vmatprep.mubr.bf16.mxu0 0
      %423 = vmatmul.mubr.bf16.gmra.mxu0 %v296
      %v424 = vpop.f32.mrf.mxu0
      %v425 = vadd.f32 %v228, %v424
      %v426 = vpop.f32.mrf.mxu0
      %v427 = vpop.f32.mrf.mxu0
      %v428 = vadd.f32 %v228, %v427
      %v429 = vpop.f32.mrf.mxu0
      %430 = vmatprep.mubr.bf16.mxu0 0
      %431 = vmatmul.mubr.bf16.gmra.mxu0 %v297
      %v432 = vpop.f32.mrf.mxu0
      %v433 = vadd.f32 %v228, %v432
      %v434 = vpop.f32.mrf.mxu0
      %v435 = vpop.f32.mrf.mxu0
      %v436 = vadd.f32 %v228, %v435
      %v437 = vpop.f32.mrf.mxu0
      %438 = vmatprep.mubr.bf16.mxu0 0
      %439 = vmatmul.mubr.bf16.gmra.mxu0 %v298
      %v440 = vpop.f32.mrf.mxu0
      %v441 = vadd.f32 %v228, %v440
      %v442 = vpop.f32.mrf.mxu0
      %v443 = vpop.f32.mrf.mxu0
      %v444 = vadd.f32 %v228, %v443
      %v445 = vpop.f32.mrf.mxu0
      %446 = vmatprep.mubr.bf16.mxu0 0
      %447 = vmatmul.mubr.bf16.gmra.mxu0 %v299
      %v448 = vpop.f32.mrf.mxu0
      %v449 = vadd.f32 %v228, %v448
      %v450 = vpop.f32.mrf.mxu0
      %v451 = vpop.f32.mrf.mxu0
      %v452 = vadd.f32 %v228, %v451
      %v453 = vpop.f32.mrf.mxu0
      %454 = vmatprep.mubr.bf16.mxu0 0
      %455 = vmatmul.mubr.bf16.gmra.mxu0 %v300
      %v456 = vpop.f32.mrf.mxu0
      %v457 = vadd.f32 %v228, %v456
      %v458 = vpop.f32.mrf.mxu0
      %v459 = vpop.f32.mrf.mxu0
      %v460 = vadd.f32 %v228, %v459
      %v461 = vpop.f32.mrf.mxu0
      %462 = vmatprep.mubr.bf16.mxu0 0
      %463 = vmatmul.mubr.bf16.gmra.mxu0 %v301
      %v464 = vpop.f32.mrf.mxu0
      %v465 = vadd.f32 %v228, %v464
      %v466 = vpop.f32.mrf.mxu0
      %v467 = vpop.f32.mrf.mxu0
      %v468 = vadd.f32 %v228, %v467
      %v469 = vpop.f32.mrf.mxu0
      %470 = vmatprep.mubr.bf16.mxu0 0
      %471 = vmatmul.mubr.bf16.gmra.mxu0 %v302
      %v472 = vpop.f32.mrf.mxu0
      %v473 = vadd.f32 %v228, %v472
      %v474 = vpop.f32.mrf.mxu0
      %v475 = vpop.f32.mrf.mxu0
      %v476 = vadd.f32 %v228, %v475
      %v477 = vpop.f32.mrf.mxu0
      %478 = vmatprep.mubr.bf16.mxu0 0
      %479 = vmatmul.mubr.bf16.gmra.mxu0 %v303
      %v480 = vpop.f32.mrf.mxu0
      %v481 = vadd.f32 %v228, %v480
      %v482 = vpop.f32.mrf.mxu0
      %v483 = vpop.f32.mrf.mxu0
      %v484 = vadd.f32 %v228, %v483
      %v485 = vpop.f32.mrf.mxu0
      %486 = vmatprep.mubr.bf16.mxu0 0
      %487 = vmatmul.mubr.bf16.gmra.mxu0 %v304
      %v488 = vpop.f32.mrf.mxu0
      %v489 = vadd.f32 %v228, %v488
      %v490 = vpop.f32.mrf.mxu0
      %v491 = vpop.f32.mrf.mxu0
      %v492 = vadd.f32 %v228, %v491
      %v493 = vpop.f32.mrf.mxu0
      %494 = vmatprep.mubr.bf16.mxu0 0
      %495 = vmatmul.mubr.bf16.gmra.mxu0 %v305
      %v496 = vpop.f32.mrf.mxu0
      %v497 = vadd.f32 %v228, %v496
      %v498 = vpop.f32.mrf.mxu0
      %v499 = vpop.f32.mrf.mxu0
      %v500 = vadd.f32 %v228, %v499
      %v501 = vpop.f32.mrf.mxu0
      %502 = vmatprep.mubr.bf16.mxu0 0
      %503 = vmatmul.mubr.bf16.gmra.mxu0 %v306
      %v504 = vpop.f32.mrf.mxu0
      %v505 = vadd.f32 %v228, %v504
      %v506 = vpop.f32.mrf.mxu0
      %v507 = vpop.f32.mrf.mxu0
      %v508 = vadd.f32 %v228, %v507
      %v509 = vpop.f32.mrf.mxu0
      %510 = vmatprep.mubr.bf16.mxu0 0
      %511 = vmatmul.mubr.bf16.gmra.mxu0 %v307
      %v512 = vpop.f32.mrf.mxu0
      %v513 = vadd.f32 %v228, %v512
      %v514 = vpop.f32.mrf.mxu0
      %v515 = vpop.f32.mrf.mxu0
      %v516 = vadd.f32 %v228, %v515
      %v517 = vpop.f32.mrf.mxu0
      %518 = vmatprep.mubr.bf16.mxu0 0
      %519 = vmatmul.mubr.bf16.gmra.mxu0 %v308
      %v520 = vpop.f32.mrf.mxu0
      %v521 = vadd.f32 %v228, %v520
      %v522 = vpop.f32.mrf.mxu0
      %v523 = vpop.f32.mrf.mxu0
      %v524 = vadd.f32 %v228, %v523
      %v525 = vpop.f32.mrf.mxu0
      %526 = vmatprep.mubr.bf16.mxu0 0
      %527 = vmatmul.mubr.bf16.gmra.mxu0 %v309
      %v528 = vpop.f32.mrf.mxu0
      %v529 = vadd.f32 %v228, %v528
      %v530 = vpop.f32.mrf.mxu0
      %v531 = vpop.f32.mrf.mxu0
      %v532 = vadd.f32 %v228, %v531
      %v533 = vpop.f32.mrf.mxu0
      %534 = vdwg.mxu0
      %v535 = vmul.f32 %v409, 0.2
      %v536 = vmul.f32 %v412, 0.2
      %v537 = vmul.f32 %v417, 0.2
      %v538 = vmul.f32 %v420, 0.2
      %v539 = vmul.f32 %v425, 0.2
      %v540 = vmul.f32 %v428, 0.2
      %v541 = vmul.f32 %v433, 0.2
      %v542 = vmul.f32 %v436, 0.2
      %v543 = vmul.f32 %v441, 0.2
      %v544 = vmul.f32 %v444, 0.2
      %v545 = vmul.f32 %v449, 0.2
      %v546 = vmul.f32 %v452, 0.2
      %v547 = vmul.f32 %v457, 0.2
      %v548 = vmul.f32 %v460, 0.2
      %v549 = vmul.f32 %v465, 0.2
      %v550 = vmul.f32 %v468, 0.2
      %v551 = vmul.f32 %v473, 0.2
      %v552 = vmul.f32 %v476, 0.2
      %v553 = vmul.f32 %v481, 0.2
      %v554 = vmul.f32 %v484, 0.2
      %v555 = vmul.f32 %v489, 0.2
      %v556 = vmul.f32 %v492, 0.2
      %v557 = vmul.f32 %v497, 0.2
      %v558 = vmul.f32 %v500, 0.2
      %v559 = vmul.f32 %v505, 0.2
      %v560 = vmul.f32 %v508, 0.2
      %v561 = vmul.f32 %v513, 0.2
      %v562 = vmul.f32 %v516, 0.2
      %v563 = vmul.f32 %v521, 0.2
      %v564 = vmul.f32 %v524, 0.2
      %v565 = vmul.f32 %v529, 0.2
      %v566 = vmul.f32 %v532, 0.2
      %v567 = vmax.f32 %v409, %v535
      %v568 = vmax.f32 %v412, %v536
      %v569 = vmax.f32 %v417, %v537
      %v570 = vmax.f32 %v420, %v538
      %v571 = vmax.f32 %v425, %v539
      %v572 = vmax.f32 %v428, %v540
      %v573 = vmax.f32 %v433, %v541
      %v574 = vmax.f32 %v436, %v542
      %v575 = vmax.f32 %v441, %v543
      %v576 = vmax.f32 %v444, %v544
      %v577 = vmax.f32 %v449, %v545
      %v578 = vmax.f32 %v452, %v546
      %v579 = vmax.f32 %v457, %v547
      %v580 = vmax.f32 %v460, %v548
      %v581 = vmax.f32 %v465, %v549
      %v582 = vmax.f32 %v468, %v550
      %v583 = vmax.f32 %v473, %v551
      %v584 = vmax.f32 %v476, %v552
      %v585 = vmax.f32 %v481, %v553
      %v586 = vmax.f32 %v484, %v554
      %v587 = vmax.f32 %v489, %v555
      %v588 = vmax.f32 %v492, %v556
      %v589 = vmax.f32 %v497, %v557
      %v590 = vmax.f32 %v500, %v558
      %v591 = vmax.f32 %v505, %v559
      %v592 = vmax.f32 %v508, %v560
      %v593 = vmax.f32 %v513, %v561
      %v594 = vmax.f32 %v516, %v562
      %v595 = vmax.f32 %v521, %v563
      %v596 = vmax.f32 %v524, %v564
      %v597 = vmax.f32 %v529, %v565
      %v598 = vmax.f32 %v532, %v566
      %599 = vst [vmem:[%s172] sm:$0xff] %v567
      %600 = vst [vmem:[%s172 + $0x8] sm:$0xff] %v568
      %601 = vst [vmem:[%s172 + $0x10] sm:$0xff] %v569
      %602 = vst [vmem:[%s172 + $0x18] sm:$0xff] %v570
      %603 = vst [vmem:[%s172 + $0x20] sm:$0xff] %v571
      %604 = vst [vmem:[%s172 + $0x28] sm:$0xff] %v572
      %605 = vst [vmem:[%s172 + $0x30] sm:$0xff] %v573
      %606 = vst [vmem:[%s172 + $0x38] sm:$0xff] %v574
      %607 = vst [vmem:[%s172 + $0x40] sm:$0xff] %v575
      %608 = vst [vmem:[%s172 + $0x48] sm:$0xff] %v576
      %609 = vst [vmem:[%s172 + $0x50] sm:$0xff] %v577
      %610 = vst [vmem:[%s172 + $0x58] sm:$0xff] %v578
      %611 = vst [vmem:[%s172 + $0x60] sm:$0xff] %v579
      %612 = vst [vmem:[%s172 + $0x68] sm:$0xff] %v580
      %613 = vst [vmem:[%s172 + $0x70] sm:$0xff] %v581
      %614 = vst [vmem:[%s172 + $0x78] sm:$0xff] %v582
      %615 = vst [vmem:[%s172 + $0x80] sm:$0xff] %v583
      %616 = vst [vmem:[%s172 + $0x88] sm:$0xff] %v584
      %617 = vst [vmem:[%s172 + $0x90] sm:$0xff] %v585
      %618 = vst [vmem:[%s172 + $0x98] sm:$0xff] %v586
      %619 = vst [vmem:[%s172 + $0xa0] sm:$0xff] %v587
      %620 = vst [vmem:[%s172 + $0xa8] sm:$0xff] %v588
      %621 = vst [vmem:[%s172 + $0xb0] sm:$0xff] %v589
      %622 = vst [vmem:[%s172 + $0xb8] sm:$0xff] %v590
      %623 = vst [vmem:[%s172 + $0xc0] sm:$0xff] %v591
      %624 = vst [vmem:[%s172 + $0xc8] sm:$0xff] %v592
      %625 = vst [vmem:[%s172 + $0xd0] sm:$0xff] %v593
      %626 = vst [vmem:[%s172 + $0xd8] sm:$0xff] %v594
      %627 = vst [vmem:[%s172 + $0xe0] sm:$0xff] %v595
      %628 = vst [vmem:[%s172 + $0xe8] sm:$0xff] %v596
      %629 = vst [vmem:[%s172 + $0xf0] sm:$0xff] %v597
      %630 = vst [vmem:[%s172 + $0xf8] sm:$0xff] %v598
      %s631 = smul.u32 32, %s14
      %p632 = scmp.lt.s32.totalorder %s631, 255
      %s633 = scalar_select %p632, %s631, 255
      %s634 = smul.addr %s633, 8
      %s635 = scalar_lea.vmem %s3, %s634
      // Predicated region
      $region33: #{discriminator_forward.6} parent=31 // pred_check
        %p636 = pneg %p100
      $region34: #{discriminator_forward.6} parent=31 // pred_check_branch
        %638 = sbr.rel (%p636) target = $region36
      $region35: #{discriminator_forward.6} parent=31 // pred_region
        %s639 = smul.u32 32, %s14
      $region36: #{discriminator_forward.6} parent=31 // pred_fallthru
        _
    $region32: #{discriminator_forward.6} parent=5 // pred_fallthru
      _
    %p640 = scmp.le.s32.totalorder 2, %s9
    // Predicated region
    $region37: #{discriminator_forward.6} parent=5 // pred_check
      %p641 = pneg %p640
    $region38: #{discriminator_forward.6} parent=5 // pred_check_branch
      %643 = sbr.rel (%p641) target = $region40
    $region39: #{discriminator_forward.6} parent=5 // pred_region
      %s644 = ssub.s32 %s9, 2
      // Predicated region
      $region41: #{discriminator_forward.6} parent=39 // pred_check
        %p645 = pneg %p106
      $region42: #{discriminator_forward.6} parent=39 // pred_check_branch
        %647 = sbr.rel (%p645) target = $region44
      $region43: #{discriminator_forward.6} parent=39 // pred_region
        %s648 = smul.u32 32, %s15
        %p649 = scmp.lt.s32.totalorder %s648, 255
        %s650 = scalar_select %p649, %s648, 255
        %s651 = smul.addr %s650, 8
        %s652 = scalar_lea.vmem %s3, %s651
      $region44: #{discriminator_forward.6} parent=39 // pred_fallthru
        _
    $region40: #{discriminator_forward.6} parent=5 // pred_fallthru
      _
  $region6: #{discriminator_forward.6} parent=0 // loop_footer
    %s13 = sadd.s32 1, %s9
  $region7: #{discriminator_forward.6} parent=0 // loop_footer_branch
    %8 = sbr.rel target = $region3
  $region8: #{discriminator_forward.6} parent=0 // loop_exit
    _

// kernel: discriminator_forward.7
$region0: #{discriminator_forward.7}
  #allocation0 [shape = 'u32[]', space=smem, size = 0x4, offset = 0x4, fixed_abs, tag = 'smem constant byte address 0x4 - core index']
  #allocation1 [shape = 'u32[144,128]{1,0:T(1,128)}', space=vmem, size = 0x12000, scoped, tag = 'internal scratch']
  %s0 = inlined_call_operand.vmem [shape: bf16[512,512], index: 0, kind: input, shape index: {}]
  %s1 = inlined_call_operand.vmem [shape: bf16[512,128], index: 1, kind: input, shape index: {}]
  %s2 = inlined_call_operand.vmem [shape: f32[1,128], index: 2, kind: input, shape index: {}]
  %s3 = inlined_call_operand.vmem [shape: f32[512,128], index: 3, kind: output, shape index: {0}]
  %s4 = inlined_call_operand.vmem [shape: f32[8,128], index: 4, kind: output, shape index: {1}]
  %5 = xla_tuple %s3, %s4
  %s6 = sld [smem:[#allocation0]]
  $region57: #{discriminator_forward.7} parent=0
    _
  %s8 = ssub.s32 1, %s6
  %s9 = scalar_select 0, %s8, %s6
  loop: start=0, step=1, limit=4
  $region2: #{discriminator_forward.7} parent=0 // loop_pre_header
    _
  $region3: #{discriminator_forward.7} parent=0 // loop_header
    %s11 = sphi 0, %s15
    %p12 = scmp.ge.s32.totalorder %s11, 4
    %s21 = sphi 0, %s23
    %s24 = sphi 0, %s21
    %s25 = sphi 0, %s24
    %s41 = sphi 0, %s25
    %s45 = sphi 0, %s45
    %s47 = sphi 0, %s45
    %s48 = sphi 0, %s47
    %s62 = sphi 0, %s48
    %s66 = sphi 0, %s66
    %s68 = sphi 0, %s66
    %s69 = sphi 0, %s68
    %s83 = sphi 0, %s69
    %s89 = sphi 0, %s91
    %s92 = sphi 0, %s89
    %s93 = sphi 0, %s92
    %s109 = sphi 0, %s93
    %s113 = sphi 0, %s113
    %s115 = sphi 0, %s113
    %s116 = sphi 0, %s115
    %s130 = sphi 0, %s116
  $region4: #{discriminator_forward.7} parent=0 // loop_header_branch
    %14 = sbr.rel (%p12) target = $region8
  $region5: #{discriminator_forward.7} parent=0 // loop_body
    %s16 = ssub.s32 %s11, 1
    %s17 = ssub.s32 %s11, 2
    %s18 = sadd.s32 %s11, 1
    %s19 = ssub.s32 %s11, %s18
    %p20 = scmp.eq.s32.totalorder %s19, 0
    %s22 = sadd.s32 %s21, 1
    %s23 = scalar_select %p20, %s21, %s22
    %p26 = pneg %p20
    %p27 = scmp.eq.s32.totalorder %s11, 1
    %p28 = por %p26, %p27
    %p29 = scmp.ne.s32.totalorder %s21, %s24
    %p30 = scmp.eq.s32.totalorder %s11, 0
    %p31 = por %p29, %p30
    %p32 = scmp.ne.s32.totalorder %s21, %s24
    %p33 = scmp.eq.s32.totalorder %s16, 1
    %p34 = por %p32, %p33
    %p35 = scmp.ne.s32.totalorder %s24, %s25
    %p36 = scmp.eq.s32.totalorder %s16, 0
    %p37 = por %p35, %p36
    %p38 = scmp.ne.s32.totalorder %s24, %s25
    %p39 = scmp.eq.s32.totalorder %s17, 1
    %p40 = por %p38, %p39
    %p42 = scmp.ne.s32.totalorder %s25, %s41
    %p43 = scmp.eq.s32.totalorder %s17, 0
    %p44 = por %p42, %p43
    %s46 = sadd.s32 %s45, 1
    %p49 = scmp.eq.s32.totalorder %s11, 1
    %p50 = scmp.ne.s32.totalorder %s45, %s47
    %p51 = scmp.eq.s32.totalorder %s11, 0
    %p52 = por %p50, %p51
    %p53 = scmp.ne.s32.totalorder %s45, %s47
    %p54 = scmp.eq.s32.totalorder %s16, 1
    %p55 = por %p53, %p54
    %p56 = scmp.ne.s32.totalorder %s47, %s48
    %p57 = scmp.eq.s32.totalorder %s16, 0
    %p58 = por %p56, %p57
    %p59 = scmp.ne.s32.totalorder %s47, %s48
    %p60 = scmp.eq.s32.totalorder %s17, 1
    %p61 = por %p59, %p60
    %p63 = scmp.ne.s32.totalorder %s48, %s62
    %p64 = scmp.eq.s32.totalorder %s17, 0
    %p65 = por %p63, %p64
    %s67 = sadd.s32 %s66, 1
    %p70 = scmp.eq.s32.totalorder %s11, 1
    %p71 = scmp.ne.s32.totalorder %s66, %s68
    %p72 = scmp.eq.s32.totalorder %s11, 0
    %p73 = por %p71, %p72
    %p74 = scmp.ne.s32.totalorder %s66, %s68
    %p75 = scmp.eq.s32.totalorder %s16, 1
    %p76 = por %p74, %p75
    %p77 = scmp.ne.s32.totalorder %s68, %s69
    %p78 = scmp.eq.s32.totalorder %s16, 0
    %p79 = por %p77, %p78
    %p80 = scmp.ne.s32.totalorder %s68, %s69
    %p81 = scmp.eq.s32.totalorder %s17, 1
    %p82 = por %p80, %p81
    %p84 = scmp.ne.s32.totalorder %s69, %s83
    %p85 = scmp.eq.s32.totalorder %s17, 0
    %p86 = por %p84, %p85
    %s87 = ssub.s32 %s11, %s18
    %p88 = scmp.eq.s32.totalorder %s87, 0
    %s90 = sadd.s32 %s89, 1
    %s91 = scalar_select %p88, %s89, %s90
    %p94 = pneg %p88
    %p95 = scmp.eq.s32.totalorder %s11, 1
    %p96 = por %p94, %p95
    %p97 = scmp.ne.s32.totalorder %s89, %s92
    %p98 = scmp.eq.s32.totalorder %s11, 0
    %p99 = por %p97, %p98
    %p100 = scmp.ne.s32.totalorder %s89, %s92
    %p101 = scmp.eq.s32.totalorder %s16, 1
    %p102 = por %p100, %p101
    %p103 = scmp.ne.s32.totalorder %s92, %s93
    %p104 = scmp.eq.s32.totalorder %s16, 0
    %p105 = por %p103, %p104
    %p106 = scmp.ne.s32.totalorder %s92, %s93
    %p107 = scmp.eq.s32.totalorder %s17, 1
    %p108 = por %p106, %p107
    %p110 = scmp.ne.s32.totalorder %s93, %s109
    %p111 = scmp.eq.s32.totalorder %s17, 0
    %p112 = por %p110, %p111
    %s114 = sadd.s32 %s113, 1
    %p117 = scmp.eq.s32.totalorder %s11, 1
    %p118 = scmp.ne.s32.totalorder %s113, %s115
    %p119 = scmp.eq.s32.totalorder %s11, 0
    %p120 = por %p118, %p119
    %p121 = scmp.ne.s32.totalorder %s113, %s115
    %p122 = scmp.eq.s32.totalorder %s16, 1
    %p123 = por %p121, %p122
    %p124 = scmp.ne.s32.totalorder %s115, %s116
    %p125 = scmp.eq.s32.totalorder %s16, 0
    %p126 = por %p124, %p125
    %p127 = scmp.ne.s32.totalorder %s115, %s116
    %p128 = scmp.eq.s32.totalorder %s17, 1
    %p129 = por %p127, %p128
    %p131 = scmp.ne.s32.totalorder %s116, %s130
    %p132 = scmp.eq.s32.totalorder %s17, 0
    %p133 = por %p131, %p132
    %p134 = scmp.le.s32.totalorder 1, %s11
    %p135 = scmp.lt.s32.totalorder %s11, 3
    %p136 = pnand %p134, %p135
    %p137 = pneg %p136
    // Predicated region
    $region9: #{discriminator_forward.7} parent=5 // pred_check
      _
    $region10: #{discriminator_forward.7} parent=5 // pred_check_branch
      %139 = sbr.rel (%p136) target = $region12
    $region11: #{discriminator_forward.7} parent=5 // pred_region
      %s140 = ssub.s32 %s11, 1
      // Predicated region
      $region13: #{discriminator_forward.7} parent=11 // pred_check
        %p141 = pneg %p58
      $region14: #{discriminator_forward.7} parent=11 // pred_check_branch
        %143 = sbr.rel (%p141) target = $region16
      $region15: #{discriminator_forward.7} parent=11 // pred_region
        _
      $region16: #{discriminator_forward.7} parent=11 // pred_fallthru
        _
      // Predicated region
      $region17: #{discriminator_forward.7} parent=11 // pred_check
        %p144 = pneg %p79
      $region18: #{discriminator_forward.7} parent=11 // pred_check_branch
        %146 = sbr.rel (%p144) target = $region20
      $region19: #{discriminator_forward.7} parent=11 // pred_region
        _
      $region20: #{discriminator_forward.7} parent=11 // pred_fallthru
        _
    $region12: #{discriminator_forward.7} parent=5 // pred_fallthru
      _
    %p147 = scmp.lt.s32.totalorder %s11, 2
    // Predicated region
    $region21: #{discriminator_forward.7} parent=5 // pred_check
      %p148 = pneg %p147
    $region22: #{discriminator_forward.7} parent=5 // pred_check_branch
      %150 = sbr.rel (%p148) target = $region24
    $region23: #{discriminator_forward.7} parent=5 // pred_region
      // Predicated region
      $region25: #{discriminator_forward.7} parent=23 // pred_check
        %p151 = pneg %p31
      $region26: #{discriminator_forward.7} parent=23 // pred_check_branch
        %153 = sbr.rel (%p151) target = $region28
      $region27: #{discriminator_forward.7} parent=23 // pred_region
        %s154 = smul.u32 32, %s11
        %p155 = scmp.lt.s32.totalorder %s154, 63
        %s156 = scalar_select %p155, %s154, 63
        %s157 = smul.addr %s156, 4
        %s158 = smul.addr %s157, 4
        %s159 = scalar_lea.vmem %s0, %s158
        %s160 = smul.u32 32, %s11
      $region28: #{discriminator_forward.7} parent=23 // pred_fallthru
        _
    $region24: #{discriminator_forward.7} parent=5 // pred_fallthru
      _
    %p161 = scmp.le.s32.totalorder 1, %s11
    %p162 = scmp.lt.s32.totalorder %s11, 3
    %p163 = pnand %p161, %p162
    %p164 = pneg %p163
    // Predicated region
    $region29: #{discriminator_forward.7} parent=5 // pred_check
      _
    $region30: #{discriminator_forward.7} parent=5 // pred_check_branch
      %166 = sbr.rel (%p163) target = $region32
    $region31: #{discriminator_forward.7} parent=5 // pred_region
      %s167 = ssub.s32 %s11, 1
      %s168 = smul.u32 32, %s16
      %p169 = scmp.lt.s32.totalorder %s168, 63
      %s170 = scalar_select %p169, %s168, 63
      %s171 = smul.addr %s170, 4
      %s172 = smul.addr %s171, 4
      %s173 = scalar_lea.vmem %s0, %s172
      %p174 = pneg %p37
      %p175 = pneg %p34
      %p176 = pneg %p58
      %p177 = pneg %p55
      %p178 = pneg %p79
      %p179 = pneg %p76
      %p180 = pneg %p105
      %p181 = pneg %p102
      %s182 = smul.u32 32, %s16
      %p183 = scmp.lt.s32.totalorder %s182, 63
      %s184 = scalar_select %p183, %s182, 63
      %s185 = smul.addr %s184, 8
      %s186 = scalar_lea.vmem %s3, %s185
      %p187 = pneg %p126
      %p188 = pneg %p123
      %s189 = smul.u32 32, %s16
      %p190 = scmp.lt.s32.totalorder %s189, 63
      %s191 = scalar_select %p190, %s189, 63
      %s192 = smul.addr %s191, 4
      %s193 = smul.addr %s192, 4
      %s194 = scalar_lea.vmem %s0, %s193
      %s195 = smul.u32 32, %s16
      %s196 = smul.u32 32, %s16
      %p197 = scmp.lt.s32.totalorder %s196, 63
      %s198 = scalar_select %p197, %s196, 63
      %s199 = smul.addr %s198, 8
      %s200 = scalar_lea.vmem %s3, %s199
      %s201 = smul.u32 32, %s16
      %v203 = vld [vmem:[%s194] sm:$0xff]
      %v204 = vld [vmem:[%s194 + $0x8] sm:$0xff]
      %v205 = vld [vmem:[%s194 + $0x10] sm:$0xff]
      %v206 = vld [vmem:[%s194 + $0x18] sm:$0xff]
      %v207 = vld [vmem:[%s194 + $0x20] sm:$0xff]
      %v208 = vld [vmem:[%s194 + $0x28] sm:$0xff]
      %v209 = vld [vmem:[%s194 + $0x30] sm:$0xff]
      %v210 = vld [vmem:[%s194 + $0x38] sm:$0xff]
      %v211 = vld [vmem:[%s194 + $0x40] sm:$0xff]
      %v212 = vld [vmem:[%s194 + $0x48] sm:$0xff]
      %v213 = vld [vmem:[%s194 + $0x50] sm:$0xff]
      %v214 = vld [vmem:[%s194 + $0x58] sm:$0xff]
      %v215 = vld [vmem:[%s194 + $0x60] sm:$0xff]
      %v216 = vld [vmem:[%s194 + $0x68] sm:$0xff]
      %v217 = vld [vmem:[%s194 + $0x70] sm:$0xff]
      %v218 = vld [vmem:[%s194 + $0x78] sm:$0xff]
      %v219 = vld [vmem:[%s194 + $0x80] sm:$0xff]
      %v220 = vld [vmem:[%s194 + $0x88] sm:$0xff]
      %v221 = vld [vmem:[%s194 + $0x90] sm:$0xff]
      %v222 = vld [vmem:[%s194 + $0x98] sm:$0xff]
      %v223 = vld [vmem:[%s194 + $0xa0] sm:$0xff]
      %v224 = vld [vmem:[%s194 + $0xa8] sm:$0xff]
      %v225 = vld [vmem:[%s194 + $0xb0] sm:$0xff]
      %v226 = vld [vmem:[%s194 + $0xb8] sm:$0xff]
      %v227 = vld [vmem:[%s194 + $0xc0] sm:$0xff]
      %v228 = vld [vmem:[%s194 + $0xc8] sm:$0xff]
      %v229 = vld [vmem:[%s194 + $0xd0] sm:$0xff]
      %v230 = vld [vmem:[%s194 + $0xd8] sm:$0xff]
      %v231 = vld [vmem:[%s194 + $0xe0] sm:$0xff]
      %v232 = vld [vmem:[%s194 + $0xe8] sm:$0xff]
      %v233 = vld [vmem:[%s194 + $0xf0] sm:$0xff]
      %v234 = vld [vmem:[%s194 + $0xf8] sm:$0xff]
      %v235 = vld [vmem:[%s194 + $0x100] sm:$0xff]
      %v236 = vld [vmem:[%s194 + $0x108] sm:$0xff]
      %v237 = vld [vmem:[%s194 + $0x110] sm:$0xff]
      %v238 = vld [vmem:[%s194 + $0x118] sm:$0xff]
      %v239 = vld [vmem:[%s194 + $0x120] sm:$0xff]
      %v240 = vld [vmem:[%s194 + $0x128] sm:$0xff]
      %v241 = vld [vmem:[%s194 + $0x130] sm:$0xff]
      %v242 = vld [vmem:[%s194 + $0x138] sm:$0xff]
      %v243 = vld [vmem:[%s194 + $0x140] sm:$0xff]
      %v244 = vld [vmem:[%s194 + $0x148] sm:$0xff]
      %v245 = vld [vmem:[%s194 + $0x150] sm:$0xff]
      %v246 = vld [vmem:[%s194 + $0x158] sm:$0xff]
      %v247 = vld [vmem:[%s194 + $0x160] sm:$0xff]
      %v248 = vld [vmem:[%s194 + $0x168] sm:$0xff]
      %v249 = vld [vmem:[%s194 + $0x170] sm:$0xff]
      %v250 = vld [vmem:[%s194 + $0x178] sm:$0xff]
      %v251 = vld [vmem:[%s194 + $0x180] sm:$0xff]
      %v252 = vld [vmem:[%s194 + $0x188] sm:$0xff]
      %v253 = vld [vmem:[%s194 + $0x190] sm:$0xff]
      %v254 = vld [vmem:[%s194 + $0x198] sm:$0xff]
      %v255 = vld [vmem:[%s194 + $0x1a0] sm:$0xff]
      %v256 = vld [vmem:[%s194 + $0x1a8] sm:$0xff]
      %v257 = vld [vmem:[%s194 + $0x1b0] sm:$0xff]
      %v258 = vld [vmem:[%s194 + $0x1b8] sm:$0xff]
      %v259 = vld [vmem:[%s194 + $0x1c0] sm:$0xff]
      %v260 = vld [vmem:[%s194 + $0x1c8] sm:$0xff]
      %v261 = vld [vmem:[%s194 + $0x1d0] sm:$0xff]
      %v262 = vld [vmem:[%s194 + $0x1d8] sm:$0xff]
      %v263 = vld [vmem:[%s194 + $0x1e0] sm:$0xff]
      %v264 = vld [vmem:[%s194 + $0x1e8] sm:$0xff]
      %v265 = vld [vmem:[%s194 + $0x1f0] sm:$0xff]
      %v266 = vld [vmem:[%s194 + $0x1f8] sm:$0xff]
      %v267 = vld [vmem:[%s1] sm:$0xf]
      %v268 = vld [vmem:[%s1 + $0x4] sm:$0xf]
      %v269 = vld [vmem:[%s1 + $0x8] sm:$0xf]
      %v270 = vld [vmem:[%s1 + $0xc] sm:$0xf]
      %v271 = vld [vmem:[%s1 + $0x10] sm:$0xf]
      %v272 = vld [vmem:[%s1 + $0x14] sm:$0xf]
      %v273 = vld [vmem:[%s1 + $0x18] sm:$0xf]
      %v274 = vld [vmem:[%s1 + $0x1c] sm:$0xf]
      %v275 = vld [vmem:[%s1 + $0x20] sm:$0xf]
      %v276 = vld [vmem:[%s1 + $0x24] sm:$0xf]
      %v277 = vld [vmem:[%s1 + $0x28] sm:$0xf]
      %v278 = vld [vmem:[%s1 + $0x2c] sm:$0xf]
      %v279 = vld [vmem:[%s1 + $0x30] sm:$0xf]
      %v280 = vld [vmem:[%s1 + $0x34] sm:$0xf]
      %v281 = vld [vmem:[%s1 + $0x38] sm:$0xf]
      %v282 = vld [vmem:[%s1 + $0x3c] sm:$0xf]
      %v283 = vld [vmem:[%s1 + $0x40] sm:$0xf]
      %v284 = vld [vmem:[%s1 + $0x44] sm:$0xf]
      %v285 = vld [vmem:[%s1 + $0x48] sm:$0xf]
      %v286 = vld [vmem:[%s1 + $0x4c] sm:$0xf]
      %v287 = vld [vmem:[%s1 + $0x50] sm:$0xf]
      %v288 = vld [vmem:[%s1 + $0x54] sm:$0xf]
      %v289 = vld [vmem:[%s1 + $0x58] sm:$0xf]
      %v290 = vld [vmem:[%s1 + $0x5c] sm:$0xf]
      %v291 = vld [vmem:[%s1 + $0x60] sm:$0xf]
      %v292 = vld [vmem:[%s1 + $0x64] sm:$0xf]
      %v293 = vld [vmem:[%s1 + $0x68] sm:$0xf]
      %v294 = vld [vmem:[%s1 + $0x6c] sm:$0xf]
      %v295 = vld [vmem:[%s1 + $0x70] sm:$0xf]
      %v296 = vld [vmem:[%s1 + $0x74] sm:$0xf]
      %v297 = vld [vmem:[%s1 + $0x78] sm:$0xf]
      %v298 = vld [vmem:[%s1 + $0x7c] sm:$0xf]
      %v299 = vld [vmem:[%s1 + $0x80] sm:$0xf]
      %v300 = vld [vmem:[%s1 + $0x84] sm:$0xf]
      %v301 = vld [vmem:[%s1 + $0x88] sm:$0xf]
      %v302 = vld [vmem:[%s1 + $0x8c] sm:$0xf]
      %v303 = vld [vmem:[%s1 + $0x90] sm:$0xf]
      %v304 = vld [vmem:[%s1 + $0x94] sm:$0xf]
      %v305 = vld [vmem:[%s1 + $0x98] sm:$0xf]
      %v306 = vld [vmem:[%s1 + $0x9c] sm:$0xf]
      %v307 = vld [vmem:[%s1 + $0xa0] sm:$0xf]
      %v308 = vld [vmem:[%s1 + $0xa4] sm:$0xf]
      %v309 = vld [vmem:[%s1 + $0xa8] sm:$0xf]
      %v310 = vld [vmem:[%s1 + $0xac] sm:$0xf]
      %v311 = vld [vmem:[%s1 + $0xb0] sm:$0xf]
      %v312 = vld [vmem:[%s1 + $0xb4] sm:$0xf]
      %v313 = vld [vmem:[%s1 + $0xb8] sm:$0xf]
      %v314 = vld [vmem:[%s1 + $0xbc] sm:$0xf]
      %v315 = vld [vmem:[%s1 + $0xc0] sm:$0xf]
      %v316 = vld [vmem:[%s1 + $0xc4] sm:$0xf]
      %v317 = vld [vmem:[%s1 + $0xc8] sm:$0xf]
      %v318 = vld [vmem:[%s1 + $0xcc] sm:$0xf]
      %v319 = vld [vmem:[%s1 + $0xd0] sm:$0xf]
      %v320 = vld [vmem:[%s1 + $0xd4] sm:$0xf]
      %v321 = vld [vmem:[%s1 + $0xd8] sm:$0xf]
      %v322 = vld [vmem:[%s1 + $0xdc] sm:$0xf]
      %v323 = vld [vmem:[%s1 + $0xe0] sm:$0xf]
      %v324 = vld [vmem:[%s1 + $0xe4] sm:$0xf]
      %v325 = vld [vmem:[%s1 + $0xe8] sm:$0xf]
      %v326 = vld [vmem:[%s1 + $0xec] sm:$0xf]
      %v327 = vld [vmem:[%s1 + $0xf0] sm:$0xf]
      %v328 = vld [vmem:[%s1 + $0xf4] sm:$0xf]
      %v329 = vld [vmem:[%s1 + $0xf8] sm:$0xf]
      %v330 = vld [vmem:[%s1 + $0xfc] sm:$0xf]
      %v331 = vld [vmem:[%s2] sm:$0x1]
      %v333 = vlaneseq
      %v334 = vshrl.u32 %v333, 7
      %v335 = vsub.s32 0, %v334
      %v336 = vrot.slane %v331, %v335
      %v402 = vunpack.c.l.b16 %v203
      %v403 = vunpack.c.h.b16 %v203
      %v404 = vunpack.c.l.b16 %v204
      %v405 = vunpack.c.h.b16 %v204
      %v406 = vunpack.c.l.b16 %v205
      %v407 = vunpack.c.h.b16 %v205
      %v408 = vunpack.c.l.b16 %v206
      %v409 = vunpack.c.h.b16 %v206
      %v410 = vunpack.c.l.b16 %v207
      %v411 = vunpack.c.h.b16 %v207
      %v412 = vunpack.c.l.b16 %v208
      %v413 = vunpack.c.h.b16 %v208
      %v414 = vunpack.c.l.b16 %v209
      %v415 = vunpack.c.h.b16 %v209
      %v416 = vunpack.c.l.b16 %v210
      %v417 = vunpack.c.h.b16 %v210
      %v418 = vunpack.c.l.b16 %v211
      %v419 = vunpack.c.h.b16 %v211
      %v420 = vunpack.c.l.b16 %v212
      %v421 = vunpack.c.h.b16 %v212
      %v422 = vunpack.c.l.b16 %v213
      %v423 = vunpack.c.h.b16 %v213
      %v424 = vunpack.c.l.b16 %v214
      %v425 = vunpack.c.h.b16 %v214
      %v426 = vunpack.c.l.b16 %v215
      %v427 = vunpack.c.h.b16 %v215
      %v428 = vunpack.c.l.b16 %v216
      %v429 = vunpack.c.h.b16 %v216
      %v430 = vunpack.c.l.b16 %v217
      %v431 = vunpack.c.h.b16 %v217
      %v432 = vunpack.c.l.b16 %v218
      %v433 = vunpack.c.h.b16 %v218
      %v434 = vunpack.c.l.b16 %v219
      %v435 = vunpack.c.h.b16 %v219
      %v436 = vunpack.c.l.b16 %v220
      %v437 = vunpack.c.h.b16 %v220
      %v438 = vunpack.c.l.b16 %v221
      %v439 = vunpack.c.h.b16 %v221
      %v440 = vunpack.c.l.b16 %v222
      %v441 = vunpack.c.h.b16 %v222
      %v442 = vunpack.c.l.b16 %v223
      %v443 = vunpack.c.h.b16 %v223
      %v444 = vunpack.c.l.b16 %v224
      %v445 = vunpack.c.h.b16 %v224
      %v446 = vunpack.c.l.b16 %v225
      %v447 = vunpack.c.h.b16 %v225
      %v448 = vunpack.c.l.b16 %v226
      %v449 = vunpack.c.h.b16 %v226
      %v450 = vunpack.c.l.b16 %v227
      %v451 = vunpack.c.h.b16 %v227
      %v452 = vunpack.c.l.b16 %v228
      %v453 = vunpack.c.h.b16 %v228
      %v454 = vunpack.c.l.b16 %v229
      %v455 = vunpack.c.h.b16 %v229
      %v456 = vunpack.c.l.b16 %v230
      %v457 = vunpack.c.h.b16 %v230
      %v458 = vunpack.c.l.b16 %v231
      %v459 = vunpack.c.h.b16 %v231
      %v460 = vunpack.c.l.b16 %v232
      %v461 = vunpack.c.h.b16 %v232
      %v462 = vunpack.c.l.b16 %v233
      %v463 = vunpack.c.h.b16 %v233
      %v464 = vunpack.c.l.b16 %v234
      %v465 = vunpack.c.h.b16 %v234
      %v466 = vunpack.c.l.b16 %v235
      %v467 = vunpack.c.h.b16 %v235
      %v468 = vunpack.c.l.b16 %v236
      %v469 = vunpack.c.h.b16 %v236
      %v470 = vunpack.c.l.b16 %v237
      %v471 = vunpack.c.h.b16 %v237
      %v472 = vunpack.c.l.b16 %v238
      %v473 = vunpack.c.h.b16 %v238
      %v474 = vunpack.c.l.b16 %v239
      %v475 = vunpack.c.h.b16 %v239
      %v476 = vunpack.c.l.b16 %v240
      %v477 = vunpack.c.h.b16 %v240
      %v478 = vunpack.c.l.b16 %v241
      %v479 = vunpack.c.h.b16 %v241
      %v480 = vunpack.c.l.b16 %v242
      %v481 = vunpack.c.h.b16 %v242
      %v482 = vunpack.c.l.b16 %v243
      %v483 = vunpack.c.h.b16 %v243
      %v484 = vunpack.c.l.b16 %v244
      %v485 = vunpack.c.h.b16 %v244
      %v486 = vunpack.c.l.b16 %v245
      %v487 = vunpack.c.h.b16 %v245
      %v488 = vunpack.c.l.b16 %v246
      %v489 = vunpack.c.h.b16 %v246
      %v490 = vunpack.c.l.b16 %v247
      %v491 = vunpack.c.h.b16 %v247
      %v492 = vunpack.c.l.b16 %v248
      %v493 = vunpack.c.h.b16 %v248
      %v494 = vunpack.c.l.b16 %v249
      %v495 = vunpack.c.h.b16 %v249
      %v496 = vunpack.c.l.b16 %v250
      %v497 = vunpack.c.h.b16 %v250
      %v498 = vunpack.c.l.b16 %v251
      %v499 = vunpack.c.h.b16 %v251
      %v500 = vunpack.c.l.b16 %v252
      %v501 = vunpack.c.h.b16 %v252
      %v502 = vunpack.c.l.b16 %v253
      %v503 = vunpack.c.h.b16 %v253
      %v504 = vunpack.c.l.b16 %v254
      %v505 = vunpack.c.h.b16 %v254
      %v506 = vunpack.c.l.b16 %v255
      %v507 = vunpack.c.h.b16 %v255
      %v508 = vunpack.c.l.b16 %v256
      %v509 = vunpack.c.h.b16 %v256
      %v510 = vunpack.c.l.b16 %v257
      %v511 = vunpack.c.h.b16 %v257
      %v512 = vunpack.c.l.b16 %v258
      %v513 = vunpack.c.h.b16 %v258
      %v514 = vunpack.c.l.b16 %v259
      %v515 = vunpack.c.h.b16 %v259
      %v516 = vunpack.c.l.b16 %v260
      %v517 = vunpack.c.h.b16 %v260
      %v518 = vunpack.c.l.b16 %v261
      %v519 = vunpack.c.h.b16 %v261
      %v520 = vunpack.c.l.b16 %v262
      %v521 = vunpack.c.h.b16 %v262
      %v522 = vunpack.c.l.b16 %v263
      %v523 = vunpack.c.h.b16 %v263
      %v524 = vunpack.c.l.b16 %v264
      %v525 = vunpack.c.h.b16 %v264
      %v526 = vunpack.c.l.b16 %v265
      %v527 = vunpack.c.h.b16 %v265
      %v528 = vunpack.c.l.b16 %v266
      %v529 = vunpack.c.h.b16 %v266
      %v530 = vpack.c.b16 %v406, %v402
      %v531 = vpack.c.b16 %v407, %v403
      %v532 = vpack.c.b16 %v408, %v404
      %v533 = vpack.c.b16 %v409, %v405
      %v534 = vpack.c.b16 %v414, %v410
      %v535 = vpack.c.b16 %v415, %v411
      %v536 = vpack.c.b16 %v416, %v412
      %v537 = vpack.c.b16 %v417, %v413
      %v538 = vpack.c.b16 %v422, %v418
      %v539 = vpack.c.b16 %v423, %v419
      %v540 = vpack.c.b16 %v424, %v420
      %v541 = vpack.c.b16 %v425, %v421
      %v542 = vpack.c.b16 %v430, %v426
      %v543 = vpack.c.b16 %v431, %v427
      %v544 = vpack.c.b16 %v432, %v428
      %v545 = vpack.c.b16 %v433, %v429
      %v546 = vpack.c.b16 %v438, %v434
      %v547 = vpack.c.b16 %v439, %v435
      %v548 = vpack.c.b16 %v440, %v436
      %v549 = vpack.c.b16 %v441, %v437
      %v550 = vpack.c.b16 %v446, %v442
      %v551 = vpack.c.b16 %v447, %v443
      %v552 = vpack.c.b16 %v448, %v444
      %v553 = vpack.c.b16 %v449, %v445
      %v554 = vpack.c.b16 %v454, %v450
      %v555 = vpack.c.b16 %v455, %v451
      %v556 = vpack.c.b16 %v456, %v452
      %v557 = vpack.c.b16 %v457, %v453
      %v558 = vpack.c.b16 %v462, %v458
      %v559 = vpack.c.b16 %v463, %v459
      %v560 = vpack.c.b16 %v464, %v460
      %v561 = vpack.c.b16 %v465, %v461
      %v562 = vpack.c.b16 %v470, %v466
      %v563 = vpack.c.b16 %v471, %v467
      %v564 = vpack.c.b16 %v472, %v468
      %v565 = vpack.c.b16 %v473, %v469
      %v566 = vpack.c.b16 %v478, %v474
      %v567 = vpack.c.b16 %v479, %v475
      %v568 = vpack.c.b16 %v480, %v476
      %v569 = vpack.c.b16 %v481, %v477
      %v570 = vpack.c.b16 %v486, %v482
      %v571 = vpack.c.b16 %v487, %v483
      %v572 = vpack.c.b16 %v488, %v484
      %v573 = vpack.c.b16 %v489, %v485
      %v574 = vpack.c.b16 %v494, %v490
      %v575 = vpack.c.b16 %v495, %v491
      %v576 = vpack.c.b16 %v496, %v492
      %v577 = vpack.c.b16 %v497, %v493
      %v578 = vpack.c.b16 %v502, %v498
      %v579 = vpack.c.b16 %v503, %v499
      %v580 = vpack.c.b16 %v504, %v500
      %v581 = vpack.c.b16 %v505, %v501
      %v582 = vpack.c.b16 %v510, %v506
      %v583 = vpack.c.b16 %v511, %v507
      %v584 = vpack.c.b16 %v512, %v508
      %v585 = vpack.c.b16 %v513, %v509
      %v586 = vpack.c.b16 %v518, %v514
      %v587 = vpack.c.b16 %v519, %v515
      %v588 = vpack.c.b16 %v520, %v516
      %v589 = vpack.c.b16 %v521, %v517
      %v590 = vpack.c.b16 %v526, %v522
      %v591 = vpack.c.b16 %v527, %v523
      %v592 = vpack.c.b16 %v528, %v524
      %v593 = vpack.c.b16 %v529, %v525
      %v722 = vunpack.c.l.b16 %v267
      %v723 = vunpack.c.l.b16 %v268
      %v724 = vunpack.c.l.b16 %v269
      %v725 = vunpack.c.l.b16 %v270
      %v726 = vunpack.c.l.b16 %v271
      %v727 = vunpack.c.l.b16 %v272
      %v728 = vunpack.c.l.b16 %v273
      %v729 = vunpack.c.l.b16 %v274
      %v730 = vunpack.c.l.b16 %v275
      %v731 = vunpack.c.l.b16 %v276
      %v732 = vunpack.c.l.b16 %v277
      %v733 = vunpack.c.l.b16 %v278
      %v734 = vunpack.c.l.b16 %v279
      %v735 = vunpack.c.l.b16 %v280
      %v736 = vunpack.c.l.b16 %v281
      %v737 = vunpack.c.l.b16 %v282
      %v738 = vunpack.c.l.b16 %v283
      %v739 = vunpack.c.l.b16 %v284
      %v740 = vunpack.c.l.b16 %v285
      %v741 = vunpack.c.l.b16 %v286
      %v742 = vunpack.c.l.b16 %v287
      %v743 = vunpack.c.l.b16 %v288
      %v744 = vunpack.c.l.b16 %v289
      %v745 = vunpack.c.l.b16 %v290
      %v746 = vunpack.c.l.b16 %v291
      %v747 = vunpack.c.l.b16 %v292
      %v748 = vunpack.c.l.b16 %v293
      %v749 = vunpack.c.l.b16 %v294
      %v750 = vunpack.c.l.b16 %v295
      %v751 = vunpack.c.l.b16 %v296
      %v752 = vunpack.c.l.b16 %v297
      %v753 = vunpack.c.l.b16 %v298
      %v754 = vunpack.c.l.b16 %v299
      %v755 = vunpack.c.l.b16 %v300
      %v756 = vunpack.c.l.b16 %v301
      %v757 = vunpack.c.l.b16 %v302
      %v758 = vunpack.c.l.b16 %v303
      %v759 = vunpack.c.l.b16 %v304
      %v760 = vunpack.c.l.b16 %v305
      %v761 = vunpack.c.l.b16 %v306
      %v762 = vunpack.c.l.b16 %v307
      %v763 = vunpack.c.l.b16 %v308
      %v764 = vunpack.c.l.b16 %v309
      %v765 = vunpack.c.l.b16 %v310
      %v766 = vunpack.c.l.b16 %v311
      %v767 = vunpack.c.l.b16 %v312
      %v768 = vunpack.c.l.b16 %v313
      %v769 = vunpack.c.l.b16 %v314
      %v770 = vunpack.c.l.b16 %v315
      %v771 = vunpack.c.l.b16 %v316
      %v772 = vunpack.c.l.b16 %v317
      %v773 = vunpack.c.l.b16 %v318
      %v774 = vunpack.c.l.b16 %v319
      %v775 = vunpack.c.l.b16 %v320
      %v776 = vunpack.c.l.b16 %v321
      %v777 = vunpack.c.l.b16 %v322
      %v778 = vunpack.c.l.b16 %v323
      %v779 = vunpack.c.l.b16 %v324
      %v780 = vunpack.c.l.b16 %v325
      %v781 = vunpack.c.l.b16 %v326
      %v782 = vunpack.c.l.b16 %v327
      %v783 = vunpack.c.l.b16 %v328
      %v784 = vunpack.c.l.b16 %v329
      %v785 = vunpack.c.l.b16 %v330
      %v786 = vpack.c.b16 %v723, %v722
      %v787 = vpack.c.b16 %v725, %v724
      %v788 = vpack.c.b16 %v727, %v726
      %v789 = vpack.c.b16 %v729, %v728
      %v790 = vpack.c.b16 %v731, %v730
      %v791 = vpack.c.b16 %v733, %v732
      %v792 = vpack.c.b16 %v735, %v734
      %v793 = vpack.c.b16 %v737, %v736
      %v794 = vpack.c.b16 %v739, %v738
      %v795 = vpack.c.b16 %v741, %v740
      %v796 = vpack.c.b16 %v743, %v742
      %v797 = vpack.c.b16 %v745, %v744
      %v798 = vpack.c.b16 %v747, %v746
      %v799 = vpack.c.b16 %v749, %v748
      %v800 = vpack.c.b16 %v751, %v750
      %v801 = vpack.c.b16 %v753, %v752
      %v802 = vpack.c.b16 %v755, %v754
      %v803 = vpack.c.b16 %v757, %v756
      %v804 = vpack.c.b16 %v759, %v758
      %v805 = vpack.c.b16 %v761, %v760
      %v806 = vpack.c.b16 %v763, %v762
      %v807 = vpack.c.b16 %v765, %v764
      %v808 = vpack.c.b16 %v767, %v766
      %v809 = vpack.c.b16 %v769, %v768
      %v810 = vpack.c.b16 %v771, %v770
      %v811 = vpack.c.b16 %v773, %v772
      %v812 = vpack.c.b16 %v775, %v774
      %v813 = vpack.c.b16 %v777, %v776
      %v814 = vpack.c.b16 %v779, %v778
      %v815 = vpack.c.b16 %v781, %v780
      %v816 = vpack.c.b16 %v783, %v782
      %v817 = vpack.c.b16 %v785, %v784
      %850 = vmatprep.subr.bf16.mxu0 0
      %851 = vmatpush1.bf16.msra.mxu0 %v793
      %852 = vmatprep.subr.bf16.mxu0 0
      %853 = vmatpush1.bf16.msra.mxu0 %v792
      %854 = vmatprep.subr.bf16.mxu0 0
      %855 = vmatpush1.bf16.msra.mxu0 %v791
      %856 = vmatprep.subr.bf16.mxu0 0
      %857 = vmatpush1.bf16.msra.mxu0 %v790
      %858 = vmatprep.subr.bf16.mxu0 0
      %859 = vmatpush1.bf16.msra.mxu0 %v789
      %860 = vmatprep.subr.bf16.mxu0 0
      %861 = vmatpush1.bf16.msra.mxu0 %v788
      %862 = vmatprep.subr.bf16.mxu0 0
      %863 = vmatpush1.bf16.msra.mxu0 %v787
      %864 = vmatprep.subr.bf16.mxu0 0
      %865 = vmatpush1.bf16.msra.mxu0 %v786
      %866 = vmatprep.subr.bf16.mxu0 0
      %867 = vmatpush2.bf16.msra.mxu0 %v801
      %868 = vmatprep.subr.bf16.mxu0 0
      %869 = vmatpush2.bf16.msra.mxu0 %v800
      %870 = vmatprep.subr.bf16.mxu0 0
      %871 = vmatpush2.bf16.msra.mxu0 %v799
      %872 = vmatprep.subr.bf16.mxu0 0
      %873 = vmatpush2.bf16.msra.mxu0 %v798
      %874 = vmatprep.subr.bf16.mxu0 0
      %875 = vmatpush2.bf16.msra.mxu0 %v797
      %876 = vmatprep.subr.bf16.mxu0 0
      %877 = vmatpush2.bf16.msra.mxu0 %v796
      %878 = vmatprep.subr.bf16.mxu0 0
      %879 = vmatpush2.bf16.msra.mxu0 %v795
      %880 = vmatprep.subr.bf16.mxu0 0
      %881 = vmatpush2.bf16.msra.mxu0 %v794
      %882 = vmatprep.mubr.bf16.mxu0 %v531
      %883 = vmatmul.mubr.bf16.gmra.mxu0 %v530
      %v884 = vpop.f32.mrf.mxu0
      %v885 = vadd.f32 %v336, %v884
      %v886 = vpop.f32.mrf.mxu0
      %v887 = vpop.f32.mrf.mxu0
      %v888 = vadd.f32 %v336, %v887
      %v889 = vpop.f32.mrf.mxu0
      %890 = vmatprep.mubr.bf16.mxu0 %v535
      %891 = vmatmul.mubr.bf16.gmra.mxu0 %v534
      %v892 = vpop.f32.mrf.mxu0
      %v893 = vadd.f32 %v336, %v892
      %v894 = vpop.f32.mrf.mxu0
      %v895 = vpop.f32.mrf.mxu0
      %v896 = vadd.f32 %v336, %v895
      %v897 = vpop.f32.mrf.mxu0
      %898 = vmatprep.mubr.bf16.mxu0 %v539
      %899 = vmatmul.mubr.bf16.gmra.mxu0 %v538
      %v900 = vpop.f32.mrf.mxu0
      %v901 = vadd.f32 %v336, %v900
      %v902 = vpop.f32.mrf.mxu0
      %v903 = vpop.f32.mrf.mxu0
      %v904 = vadd.f32 %v336, %v903
      %v905 = vpop.f32.mrf.mxu0
      %906 = vmatprep.mubr.bf16.mxu0 %v543
      %907 = vmatmul.mubr.bf16.gmra.mxu0 %v542
      %v908 = vpop.f32.mrf.mxu0
      %v909 = vadd.f32 %v336, %v908
      %v910 = vpop.f32.mrf.mxu0
      %v911 = vpop.f32.mrf.mxu0
      %v912 = vadd.f32 %v336, %v911
      %v913 = vpop.f32.mrf.mxu0
      %914 = vmatprep.mubr.bf16.mxu0 %v547
      %915 = vmatmul.mubr.bf16.gmra.mxu0 %v546
      %v916 = vpop.f32.mrf.mxu0
      %v917 = vadd.f32 %v336, %v916
      %v918 = vpop.f32.mrf.mxu0
      %v919 = vpop.f32.mrf.mxu0
      %v920 = vadd.f32 %v336, %v919
      %v921 = vpop.f32.mrf.mxu0
      %922 = vmatprep.mubr.bf16.mxu0 %v551
      %923 = vmatmul.mubr.bf16.gmra.mxu0 %v550
      %v924 = vpop.f32.mrf.mxu0
      %v925 = vadd.f32 %v336, %v924
      %v926 = vpop.f32.mrf.mxu0
      %v927 = vpop.f32.mrf.mxu0
      %v928 = vadd.f32 %v336, %v927
      %v929 = vpop.f32.mrf.mxu0
      %930 = vmatprep.mubr.bf16.mxu0 %v555
      %931 = vmatmul.mubr.bf16.gmra.mxu0 %v554
      %v932 = vpop.f32.mrf.mxu0
      %v933 = vadd.f32 %v336, %v932
      %v934 = vpop.f32.mrf.mxu0
      %v935 = vpop.f32.mrf.mxu0
      %v936 = vadd.f32 %v336, %v935
      %v937 = vpop.f32.mrf.mxu0
      %938 = vmatprep.mubr.bf16.mxu0 %v559
      %939 = vmatmul.mubr.bf16.gmra.mxu0 %v558
      %v940 = vpop.f32.mrf.mxu0
      %v941 = vadd.f32 %v336, %v940
      %v942 = vpop.f32.mrf.mxu0
      %v943 = vpop.f32.mrf.mxu0
      %v944 = vadd.f32 %v336, %v943
      %v945 = vpop.f32.mrf.mxu0
      %946 = vmatprep.mubr.bf16.mxu0 %v563
      %947 = vmatmul.mubr.bf16.gmra.mxu0 %v562
      %v948 = vpop.f32.mrf.mxu0
      %v949 = vadd.f32 %v336, %v948
      %v950 = vpop.f32.mrf.mxu0
      %v951 = vpop.f32.mrf.mxu0
      %v952 = vadd.f32 %v336, %v951
      %v953 = vpop.f32.mrf.mxu0
      %954 = vmatprep.mubr.bf16.mxu0 %v567
      %955 = vmatmul.mubr.bf16.gmra.mxu0 %v566
      %v956 = vpop.f32.mrf.mxu0
      %v957 = vadd.f32 %v336, %v956
      %v958 = vpop.f32.mrf.mxu0
      %v959 = vpop.f32.mrf.mxu0
      %v960 = vadd.f32 %v336, %v959
      %v961 = vpop.f32.mrf.mxu0
      %962 = vmatprep.mubr.bf16.mxu0 %v571
      %963 = vmatmul.mubr.bf16.gmra.mxu0 %v570
      %v964 = vpop.f32.mrf.mxu0
      %v965 = vadd.f32 %v336, %v964
      %v966 = vpop.f32.mrf.mxu0
      %v967 = vpop.f32.mrf.mxu0
      %v968 = vadd.f32 %v336, %v967
      %v969 = vpop.f32.mrf.mxu0
      %970 = vmatprep.mubr.bf16.mxu0 %v575
      %971 = vmatmul.mubr.bf16.gmra.mxu0 %v574
      %v972 = vpop.f32.mrf.mxu0
      %v973 = vadd.f32 %v336, %v972
      %v974 = vpop.f32.mrf.mxu0
      %v975 = vpop.f32.mrf.mxu0
      %v976 = vadd.f32 %v336, %v975
      %v977 = vpop.f32.mrf.mxu0
      %978 = vmatprep.mubr.bf16.mxu0 %v579
      %979 = vmatmul.mubr.bf16.gmra.mxu0 %v578
      %v980 = vpop.f32.mrf.mxu0
      %v981 = vadd.f32 %v336, %v980
      %v982 = vpop.f32.mrf.mxu0
      %v983 = vpop.f32.mrf.mxu0
      %v984 = vadd.f32 %v336, %v983
      %v985 = vpop.f32.mrf.mxu0
      %986 = vmatprep.mubr.bf16.mxu0 %v583
      %987 = vmatmul.mubr.bf16.gmra.mxu0 %v582
      %v988 = vpop.f32.mrf.mxu0
      %v989 = vadd.f32 %v336, %v988
      %v990 = vpop.f32.mrf.mxu0
      %v991 = vpop.f32.mrf.mxu0
      %v992 = vadd.f32 %v336, %v991
      %v993 = vpop.f32.mrf.mxu0
      %994 = vmatprep.mubr.bf16.mxu0 %v587
      %995 = vmatmul.mubr.bf16.gmra.mxu0 %v586
      %v996 = vpop.f32.mrf.mxu0
      %v997 = vadd.f32 %v336, %v996
      %v998 = vpop.f32.mrf.mxu0
      %v999 = vpop.f32.mrf.mxu0
      %v1000 = vadd.f32 %v336, %v999
      %v1001 = vpop.f32.mrf.mxu0
      %1002 = vmatprep.mubr.bf16.mxu0 %v591
      %1003 = vmatmul.mubr.bf16.gmra.mxu0 %v590
      %v1004 = vpop.f32.mrf.mxu0
      %v1005 = vadd.f32 %v336, %v1004
      %v1006 = vpop.f32.mrf.mxu0
      %v1007 = vpop.f32.mrf.mxu0
      %v1008 = vadd.f32 %v336, %v1007
      %v1009 = vpop.f32.mrf.mxu0
      %1010 = vdwg.mxu0
      %1011 = vmatprep.subr.bf16.mxu0 0
      %1012 = vmatpush1.bf16.msra.mxu0 %v809
      %1013 = vmatprep.subr.bf16.mxu0 0
      %1014 = vmatpush1.bf16.msra.mxu0 %v808
      %1015 = vmatprep.subr.bf16.mxu0 0
      %1016 = vmatpush1.bf16.msra.mxu0 %v807
      %1017 = vmatprep.subr.bf16.mxu0 0
      %1018 = vmatpush1.bf16.msra.mxu0 %v806
      %1019 = vmatprep.subr.bf16.mxu0 0
      %1020 = vmatpush1.bf16.msra.mxu0 %v805
      %1021 = vmatprep.subr.bf16.mxu0 0
      %1022 = vmatpush1.bf16.msra.mxu0 %v804
      %1023 = vmatprep.subr.bf16.mxu0 0
      %1024 = vmatpush1.bf16.msra.mxu0 %v803
      %1025 = vmatprep.subr.bf16.mxu0 0
      %1026 = vmatpush1.bf16.msra.mxu0 %v802
      %1027 = vmatprep.subr.bf16.mxu0 0
      %1028 = vmatpush2.bf16.msra.mxu0 %v817
      %1029 = vmatprep.subr.bf16.mxu0 0
      %1030 = vmatpush2.bf16.msra.mxu0 %v816
      %1031 = vmatprep.subr.bf16.mxu0 0
      %1032 = vmatpush2.bf16.msra.mxu0 %v815
      %1033 = vmatprep.subr.bf16.mxu0 0
      %1034 = vmatpush2.bf16.msra.mxu0 %v814
      %1035 = vmatprep.subr.bf16.mxu0 0
      %1036 = vmatpush2.bf16.msra.mxu0 %v813
      %1037 = vmatprep.subr.bf16.mxu0 0
      %1038 = vmatpush2.bf16.msra.mxu0 %v812
      %1039 = vmatprep.subr.bf16.mxu0 0
      %1040 = vmatpush2.bf16.msra.mxu0 %v811
      %1041 = vmatprep.subr.bf16.mxu0 0
      %1042 = vmatpush2.bf16.msra.mxu0 %v810
      %1043 = vmatprep.mubr.bf16.mxu0 %v533
      %1044 = vmatmul.mubr.bf16.gmra.mxu0 %v532
      %v1045 = vpop.f32.mrf.mxu0
      %v1046 = vadd.f32 %v885, %v1045
      %v1047 = vpop.f32.mrf.mxu0
      %v1048 = vpop.f32.mrf.mxu0
      %v1049 = vadd.f32 %v888, %v1048
      %v1050 = vpop.f32.mrf.mxu0
      %1051 = vmatprep.mubr.bf16.mxu0 %v537
      %1052 = vmatmul.mubr.bf16.gmra.mxu0 %v536
      %v1053 = vpop.f32.mrf.mxu0
      %v1054 = vadd.f32 %v893, %v1053
      %v1055 = vpop.f32.mrf.mxu0
      %v1056 = vpop.f32.mrf.mxu0
      %v1057 = vadd.f32 %v896, %v1056
      %v1058 = vpop.f32.mrf.mxu0
      %1059 = vmatprep.mubr.bf16.mxu0 %v541
      %1060 = vmatmul.mubr.bf16.gmra.mxu0 %v540
      %v1061 = vpop.f32.mrf.mxu0
      %v1062 = vadd.f32 %v901, %v1061
      %v1063 = vpop.f32.mrf.mxu0
      %v1064 = vpop.f32.mrf.mxu0
      %v1065 = vadd.f32 %v904, %v1064
      %v1066 = vpop.f32.mrf.mxu0
      %1067 = vmatprep.mubr.bf16.mxu0 %v545
      %1068 = vmatmul.mubr.bf16.gmra.mxu0 %v544
      %v1069 = vpop.f32.mrf.mxu0
      %v1070 = vadd.f32 %v909, %v1069
      %v1071 = vpop.f32.mrf.mxu0
      %v1072 = vpop.f32.mrf.mxu0
      %v1073 = vadd.f32 %v912, %v1072
      %v1074 = vpop.f32.mrf.mxu0
      %1075 = vmatprep.mubr.bf16.mxu0 %v549
      %1076 = vmatmul.mubr.bf16.gmra.mxu0 %v548
      %v1077 = vpop.f32.mrf.mxu0
      %v1078 = vadd.f32 %v917, %v1077
      %v1079 = vpop.f32.mrf.mxu0
      %v1080 = vpop.f32.mrf.mxu0
      %v1081 = vadd.f32 %v920, %v1080
      %v1082 = vpop.f32.mrf.mxu0
      %1083 = vmatprep.mubr.bf16.mxu0 %v553
      %1084 = vmatmul.mubr.bf16.gmra.mxu0 %v552
      %v1085 = vpop.f32.mrf.mxu0
      %v1086 = vadd.f32 %v925, %v1085
      %v1087 = vpop.f32.mrf.mxu0
      %v1088 = vpop.f32.mrf.mxu0
      %v1089 = vadd.f32 %v928, %v1088
      %v1090 = vpop.f32.mrf.mxu0
      %1091 = vmatprep.mubr.bf16.mxu0 %v557
      %1092 = vmatmul.mubr.bf16.gmra.mxu0 %v556
      %v1093 = vpop.f32.mrf.mxu0
      %v1094 = vadd.f32 %v933, %v1093
      %v1095 = vpop.f32.mrf.mxu0
      %v1096 = vpop.f32.mrf.mxu0
      %v1097 = vadd.f32 %v936, %v1096
      %v1098 = vpop.f32.mrf.mxu0
      %1099 = vmatprep.mubr.bf16.mxu0 %v561
      %1100 = vmatmul.mubr.bf16.gmra.mxu0 %v560
      %v1101 = vpop.f32.mrf.mxu0
      %v1102 = vadd.f32 %v941, %v1101
      %v1103 = vpop.f32.mrf.mxu0
      %v1104 = vpop.f32.mrf.mxu0
      %v1105 = vadd.f32 %v944, %v1104
      %v1106 = vpop.f32.mrf.mxu0
      %1107 = vmatprep.mubr.bf16.mxu0 %v565
      %1108 = vmatmul.mubr.bf16.gmra.mxu0 %v564
      %v1109 = vpop.f32.mrf.mxu0
      %v1110 = vadd.f32 %v949, %v1109
      %v1111 = vpop.f32.mrf.mxu0
      %v1112 = vpop.f32.mrf.mxu0
      %v1113 = vadd.f32 %v952, %v1112
      %v1114 = vpop.f32.mrf.mxu0
      %1115 = vmatprep.mubr.bf16.mxu0 %v569
      %1116 = vmatmul.mubr.bf16.gmra.mxu0 %v568
      %v1117 = vpop.f32.mrf.mxu0
      %v1118 = vadd.f32 %v957, %v1117
      %v1119 = vpop.f32.mrf.mxu0
      %v1120 = vpop.f32.mrf.mxu0
      %v1121 = vadd.f32 %v960, %v1120
      %v1122 = vpop.f32.mrf.mxu0
      %1123 = vmatprep.mubr.bf16.mxu0 %v573
      %1124 = vmatmul.mubr.bf16.gmra.mxu0 %v572
      %v1125 = vpop.f32.mrf.mxu0
      %v1126 = vadd.f32 %v965, %v1125
      %v1127 = vpop.f32.mrf.mxu0
      %v1128 = vpop.f32.mrf.mxu0
      %v1129 = vadd.f32 %v968, %v1128
      %v1130 = vpop.f32.mrf.mxu0
      %1131 = vmatprep.mubr.bf16.mxu0 %v577
      %1132 = vmatmul.mubr.bf16.gmra.mxu0 %v576
      %v1133 = vpop.f32.mrf.mxu0
      %v1134 = vadd.f32 %v973, %v1133
      %v1135 = vpop.f32.mrf.mxu0
      %v1136 = vpop.f32.mrf.mxu0
      %v1137 = vadd.f32 %v976, %v1136
      %v1138 = vpop.f32.mrf.mxu0
      %1139 = vmatprep.mubr.bf16.mxu0 %v581
      %1140 = vmatmul.mubr.bf16.gmra.mxu0 %v580
      %v1141 = vpop.f32.mrf.mxu0
      %v1142 = vadd.f32 %v981, %v1141
      %v1143 = vpop.f32.mrf.mxu0
      %v1144 = vpop.f32.mrf.mxu0
      %v1145 = vadd.f32 %v984, %v1144
      %v1146 = vpop.f32.mrf.mxu0
      %1147 = vmatprep.mubr.bf16.mxu0 %v585
      %1148 = vmatmul.mubr.bf16.gmra.mxu0 %v584
      %v1149 = vpop.f32.mrf.mxu0
      %v1150 = vadd.f32 %v989, %v1149
      %v1151 = vpop.f32.mrf.mxu0
      %v1152 = vpop.f32.mrf.mxu0
      %v1153 = vadd.f32 %v992, %v1152
      %v1154 = vpop.f32.mrf.mxu0
      %1155 = vmatprep.mubr.bf16.mxu0 %v589
      %1156 = vmatmul.mubr.bf16.gmra.mxu0 %v588
      %v1157 = vpop.f32.mrf.mxu0
      %v1158 = vadd.f32 %v997, %v1157
      %v1159 = vpop.f32.mrf.mxu0
      %v1160 = vpop.f32.mrf.mxu0
      %v1161 = vadd.f32 %v1000, %v1160
      %v1162 = vpop.f32.mrf.mxu0
      %1163 = vmatprep.mubr.bf16.mxu0 %v593
      %1164 = vmatmul.mubr.bf16.gmra.mxu0 %v592
      %v1165 = vpop.f32.mrf.mxu0
      %v1166 = vadd.f32 %v1005, %v1165
      %v1167 = vpop.f32.mrf.mxu0
      %v1168 = vpop.f32.mrf.mxu0
      %v1169 = vadd.f32 %v1008, %v1168
      %v1170 = vpop.f32.mrf.mxu0
      %1171 = vdwg.mxu0
      %1172 = vst [vmem:[%s200] sm:$0xff] %v1046
      %1173 = vst [vmem:[%s200 + $0x8] sm:$0xff] %v1049
      %1174 = vst [vmem:[%s200 + $0x10] sm:$0xff] %v1054
      %1175 = vst [vmem:[%s200 + $0x18] sm:$0xff] %v1057
      %1176 = vst [vmem:[%s200 + $0x20] sm:$0xff] %v1062
      %1177 = vst [vmem:[%s200 + $0x28] sm:$0xff] %v1065
      %1178 = vst [vmem:[%s200 + $0x30] sm:$0xff] %v1070
      %1179 = vst [vmem:[%s200 + $0x38] sm:$0xff] %v1073
      %1180 = vst [vmem:[%s200 + $0x40] sm:$0xff] %v1078
      %1181 = vst [vmem:[%s200 + $0x48] sm:$0xff] %v1081
      %1182 = vst [vmem:[%s200 + $0x50] sm:$0xff] %v1086
      %1183 = vst [vmem:[%s200 + $0x58] sm:$0xff] %v1089
      %1184 = vst [vmem:[%s200 + $0x60] sm:$0xff] %v1094
      %1185 = vst [vmem:[%s200 + $0x68] sm:$0xff] %v1097
      %1186 = vst [vmem:[%s200 + $0x70] sm:$0xff] %v1102
      %1187 = vst [vmem:[%s200 + $0x78] sm:$0xff] %v1105
      %1188 = vst [vmem:[%s200 + $0x80] sm:$0xff] %v1110
      %1189 = vst [vmem:[%s200 + $0x88] sm:$0xff] %v1113
      %1190 = vst [vmem:[%s200 + $0x90] sm:$0xff] %v1118
      %1191 = vst [vmem:[%s200 + $0x98] sm:$0xff] %v1121
      %1192 = vst [vmem:[%s200 + $0xa0] sm:$0xff] %v1126
      %1193 = vst [vmem:[%s200 + $0xa8] sm:$0xff] %v1129
      %1194 = vst [vmem:[%s200 + $0xb0] sm:$0xff] %v1134
      %1195 = vst [vmem:[%s200 + $0xb8] sm:$0xff] %v1137
      %1196 = vst [vmem:[%s200 + $0xc0] sm:$0xff] %v1142
      %1197 = vst [vmem:[%s200 + $0xc8] sm:$0xff] %v1145
      %1198 = vst [vmem:[%s200 + $0xd0] sm:$0xff] %v1150
      %1199 = vst [vmem:[%s200 + $0xd8] sm:$0xff] %v1153
      %1200 = vst [vmem:[%s200 + $0xe0] sm:$0xff] %v1158
      %1201 = vst [vmem:[%s200 + $0xe8] sm:$0xff] %v1161
      %1202 = vst [vmem:[%s200 + $0xf0] sm:$0xff] %v1166
      %1203 = vst [vmem:[%s200 + $0xf8] sm:$0xff] %v1169
      %v1204 = vadd.f32 %v1046, %v1049
      %v1205 = vadd.f32 %v1204, %v1054
      %v1206 = vadd.f32 %v1205, %v1057
      %v1207 = vadd.f32 %v1206, %v1062
      %v1208 = vadd.f32 %v1207, %v1065
      %v1209 = vadd.f32 %v1208, %v1070
      %v1210 = vadd.f32 %v1209, %v1073
      %v1211 = vadd.f32 %v1210, %v1078
      %v1212 = vadd.f32 %v1211, %v1081
      %v1213 = vadd.f32 %v1212, %v1086
      %v1214 = vadd.f32 %v1213, %v1089
      %v1215 = vadd.f32 %v1214, %v1094
      %v1216 = vadd.f32 %v1215, %v1097
      %v1217 = vadd.f32 %v1216, %v1102
      %v1218 = vadd.f32 %v1217, %v1105
      %v1219 = vadd.f32 %v1218, %v1110
      %v1220 = vadd.f32 %v1219, %v1113
      %v1221 = vadd.f32 %v1220, %v1118
      %v1222 = vadd.f32 %v1221, %v1121
      %v1223 = vadd.f32 %v1222, %v1126
      %v1224 = vadd.f32 %v1223, %v1129
      %v1225 = vadd.f32 %v1224, %v1134
      %v1226 = vadd.f32 %v1225, %v1137
      %v1227 = vadd.f32 %v1226, %v1142
      %v1228 = vadd.f32 %v1227, %v1145
      %v1229 = vadd.f32 %v1228, %v1150
      %v1230 = vadd.f32 %v1229, %v1153
      %v1231 = vadd.f32 %v1230, %v1158
      %v1232 = vadd.f32 %v1231, %v1161
      %v1233 = vadd.f32 %v1232, %v1166
      %v1234 = vadd.f32 %v1233, %v1169
      %v1235 = vrot.slane %v1234, 4
      %v1236 = vadd.f32 %v1234, %v1235
      %v1237 = vrot.slane %v1236, 2
      %v1238 = vadd.f32 %v1236, %v1237
      %v1239 = vrot.slane %v1238, 1
      %v1240 = vadd.f32 %v1238, %v1239
      %v1241 = vmul.f32 %v1046, %v1046
      %v1242 = vmul.f32 %v1049, %v1049
      %v1243 = vmul.f32 %v1054, %v1054
      %v1244 = vmul.f32 %v1057, %v1057
      %v1245 = vmul.f32 %v1062, %v1062
      %v1246 = vmul.f32 %v1065, %v1065
      %v1247 = vmul.f32 %v1070, %v1070
      %v1248 = vmul.f32 %v1073, %v1073
      %v1249 = vmul.f32 %v1078, %v1078
      %v1250 = vmul.f32 %v1081, %v1081
      %v1251 = vmul.f32 %v1086, %v1086
      %v1252 = vmul.f32 %v1089, %v1089
      %v1253 = vmul.f32 %v1094, %v1094
      %v1254 = vmul.f32 %v1097, %v1097
      %v1255 = vmul.f32 %v1102, %v1102
      %v1256 = vmul.f32 %v1105, %v1105
      %v1257 = vmul.f32 %v1110, %v1110
      %v1258 = vmul.f32 %v1113, %v1113
      %v1259 = vmul.f32 %v1118, %v1118
      %v1260 = vmul.f32 %v1121, %v1121
      %v1261 = vmul.f32 %v1126, %v1126
      %v1262 = vmul.f32 %v1129, %v1129
      %v1263 = vmul.f32 %v1134, %v1134
      %v1264 = vmul.f32 %v1137, %v1137
      %v1265 = vmul.f32 %v1142, %v1142
      %v1266 = vmul.f32 %v1145, %v1145
      %v1267 = vmul.f32 %v1150, %v1150
      %v1268 = vmul.f32 %v1153, %v1153
      %v1269 = vmul.f32 %v1158, %v1158
      %v1270 = vmul.f32 %v1161, %v1161
      %v1271 = vmul.f32 %v1166, %v1166
      %v1272 = vmul.f32 %v1169, %v1169
      %v1273 = vadd.f32 %v1241, %v1242
      %v1274 = vadd.f32 %v1273, %v1243
      %v1275 = vadd.f32 %v1274, %v1244
      %v1276 = vadd.f32 %v1275, %v1245
      %v1277 = vadd.f32 %v1276, %v1246
      %v1278 = vadd.f32 %v1277, %v1247
      %v1279 = vadd.f32 %v1278, %v1248
      %v1280 = vadd.f32 %v1279, %v1249
      %v1281 = vadd.f32 %v1280, %v1250
      %v1282 = vadd.f32 %v1281, %v1251
      %v1283 = vadd.f32 %v1282, %v1252
      %v1284 = vadd.f32 %v1283, %v1253
      %v1285 = vadd.f32 %v1284, %v1254
      %v1286 = vadd.f32 %v1285, %v1255
      %v1287 = vadd.f32 %v1286, %v1256
      %v1288 = vadd.f32 %v1287, %v1257
      %v1289 = vadd.f32 %v1288, %v1258
      %v1290 = vadd.f32 %v1289, %v1259
      %v1291 = vadd.f32 %v1290, %v1260
      %v1292 = vadd.f32 %v1291, %v1261
      %v1293 = vadd.f32 %v1292, %v1262
      %v1294 = vadd.f32 %v1293, %v1263
      %v1295 = vadd.f32 %v1294, %v1264
      %v1296 = vadd.f32 %v1295, %v1265
      %v1297 = vadd.f32 %v1296, %v1266
      %v1298 = vadd.f32 %v1297, %v1267
      %v1299 = vadd.f32 %v1298, %v1268
      %v1300 = vadd.f32 %v1299, %v1269
      %v1301 = vadd.f32 %v1300, %v1270
      %v1302 = vadd.f32 %v1301, %v1271
      %v1303 = vadd.f32 %v1302, %v1272
      %v1304 = vrot.slane %v1303, 4
      %v1305 = vadd.f32 %v1303, %v1304
      %v1306 = vrot.slane %v1305, 2
      %v1307 = vadd.f32 %v1305, %v1306
      %v1308 = vrot.slane %v1307, 1
      %v1309 = vadd.f32 %v1307, %v1308
      %vm1310 = vcmask 1040384
      %v1311 = vsel %vm1310, %v1240, %v1309
      %vm1312 = vcmask 1041408
      %v1313 = vsel %vm1312, %v1311, 0.0
      %p1314 = scmp.eq.s32.totalorder %s16, 0
      // Predicated region
      $region33: #{discriminator_forward.7} parent=31 // pred_check
        %p1315 = pneg %p1314
      $region34: #{discriminator_forward.7} parent=31 // pred_check_branch
        %1317 = sbr.rel (%p1315) target = $region36
      $region35: #{discriminator_forward.7} parent=31 // pred_region
        %1318 = vst [vmem:[%s4] sm:$0xff] 0.0
      $region36: #{discriminator_forward.7} parent=31 // pred_fallthru
        _
      %v1319 = vld [vmem:[%s4] sm:$0xff]
      %v1320 = vadd.f32 %v1319, %v1313
      %1321 = vst [vmem:[%s4] sm:$0xff] %v1320
      %s1322 = smul.u32 32, %s16
      %p1323 = scmp.lt.s32.totalorder %s1322, 63
      %s1324 = scalar_select %p1323, %s1322, 63
      %s1325 = smul.addr %s1324, 8
      %s1326 = scalar_lea.vmem %s3, %s1325
      // Predicated region
      $region37: #{discriminator_forward.7} parent=31 // pred_check
        %p1327 = pneg %p102
      $region38: #{discriminator_forward.7} parent=31 // pred_check_branch
        %1329 = sbr.rel (%p1327) target = $region40
      $region39: #{discriminator_forward.7} parent=31 // pred_region
        %s1330 = smul.u32 32, %s16
      $region40: #{discriminator_forward.7} parent=31 // pred_fallthru
        _
      // Predicated region
      $region41: #{discriminator_forward.7} parent=31 // pred_check
        %p1331 = pneg %p123
      $region42: #{discriminator_forward.7} parent=31 // pred_check_branch
        %1333 = sbr.rel (%p1331) target = $region44
      $region43: #{discriminator_forward.7} parent=31 // pred_region
        _
      $region44: #{discriminator_forward.7} parent=31 // pred_fallthru
        _
      // Predicated region
      $region45: #{discriminator_forward.7} parent=31 // pred_check
        %p1334 = pneg %p123
      $region46: #{discriminator_forward.7} parent=31 // pred_check_branch
        %1336 = sbr.rel (%p1334) target = $region48
      $region47: #{discriminator_forward.7} parent=31 // pred_region
        _
      $region48: #{discriminator_forward.7} parent=31 // pred_fallthru
        _
    $region32: #{discriminator_forward.7} parent=5 // pred_fallthru
      _
    %p1337 = scmp.le.s32.totalorder 2, %s11
    // Predicated region
    $region49: #{discriminator_forward.7} parent=5 // pred_check
      %p1338 = pneg %p1337
    $region50: #{discriminator_forward.7} parent=5 // pred_check_branch
      %1340 = sbr.rel (%p1338) target = $region52
    $region51: #{discriminator_forward.7} parent=5 // pred_region
      %s1341 = ssub.s32 %s11, 2
      // Predicated region
      $region53: #{discriminator_forward.7} parent=51 // pred_check
        %p1342 = pneg %p108
      $region54: #{discriminator_forward.7} parent=51 // pred_check_branch
        %1344 = sbr.rel (%p1342) target = $region56
      $region55: #{discriminator_forward.7} parent=51 // pred_region
        %s1345 = smul.u32 32, %s17
        %p1346 = scmp.lt.s32.totalorder %s1345, 63
        %s1347 = scalar_select %p1346, %s1345, 63
        %s1348 = smul.addr %s1347, 8
        %s1349 = scalar_lea.vmem %s3, %s1348
      $region56: #{discriminator_forward.7} parent=51 // pred_fallthru
        _
    $region52: #{discriminator_forward.7} parent=5 // pred_fallthru
      _
  $region6: #{discriminator_forward.7} parent=0 // loop_footer
    %s15 = sadd.s32 1, %s11
  $region7: #{discriminator_forward.7} parent=0 // loop_footer_branch
    %10 = sbr.rel target = $region3
  $region8: #{discriminator_forward.7} parent=0 // loop_exit
    _

// kernel: discriminator_forward.8
$region0: #{discriminator_forward.8}
  #allocation0 [shape = 'u32[]', space=smem, size = 0x4, offset = 0x4, fixed_abs, tag = 'smem constant byte address 0x4 - core index']
  #allocation1 [shape = 'u32[144,128]{1,0:T(1,128)}', space=vmem, size = 0x12000, scoped, tag = 'internal scratch']
  %s0 = inlined_call_operand.vmem [shape: f32[512,128], index: 0, kind: input, shape index: {}]
  %s1 = inlined_call_operand.vmem [shape: f32[8,128], index: 1, kind: input, shape index: {}]
  %s2 = inlined_call_operand.vmem [shape: f32[1,128], index: 2, kind: input, shape index: {}]
  %s3 = inlined_call_operand.vmem [shape: f32[1,128], index: 3, kind: input, shape index: {}]
  %s4 = inlined_call_operand.vmem [shape: f32[512,128], index: 4, kind: output, shape index: {}]
  %s5 = sld [smem:[#allocation0]]
  $region49: #{discriminator_forward.8} parent=0
    _
  %s7 = ssub.s32 1, %s5
  %s8 = scalar_select 0, %s7, %s5
  loop: start=0, step=1, limit=4
  $region2: #{discriminator_forward.8} parent=0 // loop_pre_header
    _
  $region3: #{discriminator_forward.8} parent=0 // loop_header
    %s10 = sphi 0, %s14
    %p11 = scmp.ge.s32.totalorder %s10, 4
    %s20 = sphi 0, %s22
    %s23 = sphi 0, %s20
    %s24 = sphi 0, %s23
    %s40 = sphi 0, %s24
    %s44 = sphi 0, %s44
    %s46 = sphi 0, %s44
    %s47 = sphi 0, %s46
    %s61 = sphi 0, %s47
    %s65 = sphi 0, %s65
    %s67 = sphi 0, %s65
    %s68 = sphi 0, %s67
    %s82 = sphi 0, %s68
    %s86 = sphi 0, %s86
    %s88 = sphi 0, %s86
    %s89 = sphi 0, %s88
    %s103 = sphi 0, %s89
    %s109 = sphi 0, %s111
    %s112 = sphi 0, %s109
    %s113 = sphi 0, %s112
    %s129 = sphi 0, %s113
  $region4: #{discriminator_forward.8} parent=0 // loop_header_branch
    %13 = sbr.rel (%p11) target = $region8
  $region5: #{discriminator_forward.8} parent=0 // loop_body
    %s15 = ssub.s32 %s10, 1
    %s16 = ssub.s32 %s10, 2
    %s17 = sadd.s32 %s10, 1
    %s18 = ssub.s32 %s10, %s17
    %p19 = scmp.eq.s32.totalorder %s18, 0
    %s21 = sadd.s32 %s20, 1
    %s22 = scalar_select %p19, %s20, %s21
    %p25 = pneg %p19
    %p26 = scmp.eq.s32.totalorder %s10, 1
    %p27 = por %p25, %p26
    %p28 = scmp.ne.s32.totalorder %s20, %s23
    %p29 = scmp.eq.s32.totalorder %s10, 0
    %p30 = por %p28, %p29
    %p31 = scmp.ne.s32.totalorder %s20, %s23
    %p32 = scmp.eq.s32.totalorder %s15, 1
    %p33 = por %p31, %p32
    %p34 = scmp.ne.s32.totalorder %s23, %s24
    %p35 = scmp.eq.s32.totalorder %s15, 0
    %p36 = por %p34, %p35
    %p37 = scmp.ne.s32.totalorder %s23, %s24
    %p38 = scmp.eq.s32.totalorder %s16, 1
    %p39 = por %p37, %p38
    %p41 = scmp.ne.s32.totalorder %s24, %s40
    %p42 = scmp.eq.s32.totalorder %s16, 0
    %p43 = por %p41, %p42
    %s45 = sadd.s32 %s44, 1
    %p48 = scmp.eq.s32.totalorder %s10, 1
    %p49 = scmp.ne.s32.totalorder %s44, %s46
    %p50 = scmp.eq.s32.totalorder %s10, 0
    %p51 = por %p49, %p50
    %p52 = scmp.ne.s32.totalorder %s44, %s46
    %p53 = scmp.eq.s32.totalorder %s15, 1
    %p54 = por %p52, %p53
    %p55 = scmp.ne.s32.totalorder %s46, %s47
    %p56 = scmp.eq.s32.totalorder %s15, 0
    %p57 = por %p55, %p56
    %p58 = scmp.ne.s32.totalorder %s46, %s47
    %p59 = scmp.eq.s32.totalorder %s16, 1
    %p60 = por %p58, %p59
    %p62 = scmp.ne.s32.totalorder %s47, %s61
    %p63 = scmp.eq.s32.totalorder %s16, 0
    %p64 = por %p62, %p63
    %s66 = sadd.s32 %s65, 1
    %p69 = scmp.eq.s32.totalorder %s10, 1
    %p70 = scmp.ne.s32.totalorder %s65, %s67
    %p71 = scmp.eq.s32.totalorder %s10, 0
    %p72 = por %p70, %p71
    %p73 = scmp.ne.s32.totalorder %s65, %s67
    %p74 = scmp.eq.s32.totalorder %s15, 1
    %p75 = por %p73, %p74
    %p76 = scmp.ne.s32.totalorder %s67, %s68
    %p77 = scmp.eq.s32.totalorder %s15, 0
    %p78 = por %p76, %p77
    %p79 = scmp.ne.s32.totalorder %s67, %s68
    %p80 = scmp.eq.s32.totalorder %s16, 1
    %p81 = por %p79, %p80
    %p83 = scmp.ne.s32.totalorder %s68, %s82
    %p84 = scmp.eq.s32.totalorder %s16, 0
    %p85 = por %p83, %p84
    %s87 = sadd.s32 %s86, 1
    %p90 = scmp.eq.s32.totalorder %s10, 1
    %p91 = scmp.ne.s32.totalorder %s86, %s88
    %p92 = scmp.eq.s32.totalorder %s10, 0
    %p93 = por %p91, %p92
    %p94 = scmp.ne.s32.totalorder %s86, %s88
    %p95 = scmp.eq.s32.totalorder %s15, 1
    %p96 = por %p94, %p95
    %p97 = scmp.ne.s32.totalorder %s88, %s89
    %p98 = scmp.eq.s32.totalorder %s15, 0
    %p99 = por %p97, %p98
    %p100 = scmp.ne.s32.totalorder %s88, %s89
    %p101 = scmp.eq.s32.totalorder %s16, 1
    %p102 = por %p100, %p101
    %p104 = scmp.ne.s32.totalorder %s89, %s103
    %p105 = scmp.eq.s32.totalorder %s16, 0
    %p106 = por %p104, %p105
    %s107 = ssub.s32 %s10, %s17
    %p108 = scmp.eq.s32.totalorder %s107, 0
    %s110 = sadd.s32 %s109, 1
    %s111 = scalar_select %p108, %s109, %s110
    %p114 = pneg %p108
    %p115 = scmp.eq.s32.totalorder %s10, 1
    %p116 = por %p114, %p115
    %p117 = scmp.ne.s32.totalorder %s109, %s112
    %p118 = scmp.eq.s32.totalorder %s10, 0
    %p119 = por %p117, %p118
    %p120 = scmp.ne.s32.totalorder %s109, %s112
    %p121 = scmp.eq.s32.totalorder %s15, 1
    %p122 = por %p120, %p121
    %p123 = scmp.ne.s32.totalorder %s112, %s113
    %p124 = scmp.eq.s32.totalorder %s15, 0
    %p125 = por %p123, %p124
    %p126 = scmp.ne.s32.totalorder %s112, %s113
    %p127 = scmp.eq.s32.totalorder %s16, 1
    %p128 = por %p126, %p127
    %p130 = scmp.ne.s32.totalorder %s113, %s129
    %p131 = scmp.eq.s32.totalorder %s16, 0
    %p132 = por %p130, %p131
    %p133 = scmp.le.s32.totalorder 1, %s10
    %p134 = scmp.lt.s32.totalorder %s10, 3
    %p135 = pnand %p133, %p134
    %p136 = pneg %p135
    // Predicated region
    $region9: #{discriminator_forward.8} parent=5 // pred_check
      _
    $region10: #{discriminator_forward.8} parent=5 // pred_check_branch
      %138 = sbr.rel (%p135) target = $region12
    $region11: #{discriminator_forward.8} parent=5 // pred_region
      %s139 = ssub.s32 %s10, 1
      // Predicated region
      $region13: #{discriminator_forward.8} parent=11 // pred_check
        %p140 = pneg %p57
      $region14: #{discriminator_forward.8} parent=11 // pred_check_branch
        %142 = sbr.rel (%p140) target = $region16
      $region15: #{discriminator_forward.8} parent=11 // pred_region
        _
      $region16: #{discriminator_forward.8} parent=11 // pred_fallthru
        _
      // Predicated region
      $region17: #{discriminator_forward.8} parent=11 // pred_check
        %p143 = pneg %p78
      $region18: #{discriminator_forward.8} parent=11 // pred_check_branch
        %145 = sbr.rel (%p143) target = $region20
      $region19: #{discriminator_forward.8} parent=11 // pred_region
        _
      $region20: #{discriminator_forward.8} parent=11 // pred_fallthru
        _
      // Predicated region
      $region21: #{discriminator_forward.8} parent=11 // pred_check
        %p146 = pneg %p99
      $region22: #{discriminator_forward.8} parent=11 // pred_check_branch
        %148 = sbr.rel (%p146) target = $region24
      $region23: #{discriminator_forward.8} parent=11 // pred_region
        _
      $region24: #{discriminator_forward.8} parent=11 // pred_fallthru
        _
    $region12: #{discriminator_forward.8} parent=5 // pred_fallthru
      _
    %p149 = scmp.lt.s32.totalorder %s10, 2
    // Predicated region
    $region25: #{discriminator_forward.8} parent=5 // pred_check
      %p150 = pneg %p149
    $region26: #{discriminator_forward.8} parent=5 // pred_check_branch
      %152 = sbr.rel (%p150) target = $region28
    $region27: #{discriminator_forward.8} parent=5 // pred_region
      // Predicated region
      $region29: #{discriminator_forward.8} parent=27 // pred_check
        %p153 = pneg %p30
      $region30: #{discriminator_forward.8} parent=27 // pred_check_branch
        %155 = sbr.rel (%p153) target = $region32
      $region31: #{discriminator_forward.8} parent=27 // pred_region
        %s156 = smul.u32 32, %s10
        %p157 = scmp.lt.s32.totalorder %s156, 63
        %s158 = scalar_select %p157, %s156, 63
        %s159 = smul.addr %s158, 8
        %s160 = scalar_lea.vmem %s0, %s159
        %s161 = smul.u32 32, %s10
      $region32: #{discriminator_forward.8} parent=27 // pred_fallthru
        _
    $region28: #{discriminator_forward.8} parent=5 // pred_fallthru
      _
    %p162 = scmp.le.s32.totalorder 1, %s10
    %p163 = scmp.lt.s32.totalorder %s10, 3
    %p164 = pnand %p162, %p163
    %p165 = pneg %p164
    // Predicated region
    $region33: #{discriminator_forward.8} parent=5 // pred_check
      _
    $region34: #{discriminator_forward.8} parent=5 // pred_check_branch
      %167 = sbr.rel (%p164) target = $region36
    $region35: #{discriminator_forward.8} parent=5 // pred_region
      %s168 = ssub.s32 %s10, 1
      %s169 = smul.u32 32, %s15
      %p170 = scmp.lt.s32.totalorder %s169, 63
      %s171 = scalar_select %p170, %s169, 63
      %s172 = smul.addr %s171, 8
      %s173 = scalar_lea.vmem %s0, %s172
      %p174 = pneg %p36
      %p175 = pneg %p33
      %p176 = pneg %p57
      %p177 = pneg %p54
      %p178 = pneg %p78
      %p179 = pneg %p75
      %p180 = pneg %p99
      %p181 = pneg %p96
      %p182 = pneg %p125
      %p183 = pneg %p122
      %s184 = smul.u32 32, %s15
      %p185 = scmp.lt.s32.totalorder %s184, 63
      %s186 = scalar_select %p185, %s184, 63
      %s187 = smul.addr %s186, 8
      %s188 = scalar_lea.vmem %s4, %s187
      %s189 = smul.u32 32, %s15
      %p190 = scmp.lt.s32.totalorder %s189, 63
      %s191 = scalar_select %p190, %s189, 63
      %s192 = smul.addr %s191, 8
      %s193 = scalar_lea.vmem %s0, %s192
      %s194 = smul.u32 32, %s15
      %s195 = smul.u32 32, %s15
      %p196 = scmp.lt.s32.totalorder %s195, 63
      %s197 = scalar_select %p196, %s195, 63
      %s198 = smul.addr %s197, 8
      %s199 = scalar_lea.vmem %s4, %s198
      %s200 = smul.u32 32, %s15
      %v201 = vld [vmem:[%s1] sm:$0xff]
      %v202 = vmul.f32 %v201, 0.001953125
      %v203 = vmul.f32 %v202, %v202
      %v205 = vrot.slane %v203, 7
      %v207 = vsub.f32 %v202, %v205
      %v208 = vld [vmem:[%s2] sm:$0x1]
      %v209 = vadd.f32 %v207, 1e-05
      %v210 = vrsqrt.pop %v209
      %v213 = vunpack.c.l.s4 1966171168
      %v214 = vunpack.c.0.s8 %v213
      %v215 = vlaneseq
      %v216 = vshrl.u32 %v215, 7
      %v217 = vsub.s32 %v214, %v216
      %v218 = vrot.slane %v210, %v217
      %v219 = vcombine.high %v218, %v218
      %v221 = vunpack.c.l.s4 1966171168
      %v222 = vunpack.c.0.s8 %v221
      %v223 = vlaneseq
      %v224 = vshrl.u32 %v223, 7
      %v225 = vsub.s32 %v222, %v224
      %v226 = vrot.slane %v219, %v225
      %v228 = vmul.f32 %v208, %v226
      %v229 = vld [vmem:[%s3] sm:$0x1]
      %v230 = vmul.f32 %v202, %v228
      %v231 = vsub.f32 %v229, %v230
      %v232 = vld [vmem:[%s193] sm:$0xff]
      %v233 = vld [vmem:[%s193 + $0x8] sm:$0xff]
      %v234 = vld [vmem:[%s193 + $0x10] sm:$0xff]
      %v235 = vld [vmem:[%s193 + $0x18] sm:$0xff]
      %v236 = vld [vmem:[%s193 + $0x20] sm:$0xff]
      %v237 = vld [vmem:[%s193 + $0x28] sm:$0xff]
      %v238 = vld [vmem:[%s193 + $0x30] sm:$0xff]
      %v239 = vld [vmem:[%s193 + $0x38] sm:$0xff]
      %v240 = vld [vmem:[%s193 + $0x40] sm:$0xff]
      %v241 = vld [vmem:[%s193 + $0x48] sm:$0xff]
      %v242 = vld [vmem:[%s193 + $0x50] sm:$0xff]
      %v243 = vld [vmem:[%s193 + $0x58] sm:$0xff]
      %v244 = vld [vmem:[%s193 + $0x60] sm:$0xff]
      %v245 = vld [vmem:[%s193 + $0x68] sm:$0xff]
      %v246 = vld [vmem:[%s193 + $0x70] sm:$0xff]
      %v247 = vld [vmem:[%s193 + $0x78] sm:$0xff]
      %v248 = vld [vmem:[%s193 + $0x80] sm:$0xff]
      %v249 = vld [vmem:[%s193 + $0x88] sm:$0xff]
      %v250 = vld [vmem:[%s193 + $0x90] sm:$0xff]
      %v251 = vld [vmem:[%s193 + $0x98] sm:$0xff]
      %v252 = vld [vmem:[%s193 + $0xa0] sm:$0xff]
      %v253 = vld [vmem:[%s193 + $0xa8] sm:$0xff]
      %v254 = vld [vmem:[%s193 + $0xb0] sm:$0xff]
      %v255 = vld [vmem:[%s193 + $0xb8] sm:$0xff]
      %v256 = vld [vmem:[%s193 + $0xc0] sm:$0xff]
      %v257 = vld [vmem:[%s193 + $0xc8] sm:$0xff]
      %v258 = vld [vmem:[%s193 + $0xd0] sm:$0xff]
      %v259 = vld [vmem:[%s193 + $0xd8] sm:$0xff]
      %v260 = vld [vmem:[%s193 + $0xe0] sm:$0xff]
      %v261 = vld [vmem:[%s193 + $0xe8] sm:$0xff]
      %v262 = vld [vmem:[%s193 + $0xf0] sm:$0xff]
      %v263 = vld [vmem:[%s193 + $0xf8] sm:$0xff]
      %v265 = vlaneseq
      %v266 = vshrl.u32 %v265, 7
      %v267 = vsub.s32 0, %v266
      %v268 = vrot.slane %v228, %v267
      %v270 = vmul.f32 %v232, %v268
      %v271 = vmul.f32 %v233, %v268
      %v272 = vmul.f32 %v234, %v268
      %v273 = vmul.f32 %v235, %v268
      %v274 = vmul.f32 %v236, %v268
      %v275 = vmul.f32 %v237, %v268
      %v276 = vmul.f32 %v238, %v268
      %v277 = vmul.f32 %v239, %v268
      %v278 = vmul.f32 %v240, %v268
      %v279 = vmul.f32 %v241, %v268
      %v280 = vmul.f32 %v242, %v268
      %v281 = vmul.f32 %v243, %v268
      %v282 = vmul.f32 %v244, %v268
      %v283 = vmul.f32 %v245, %v268
      %v284 = vmul.f32 %v246, %v268
      %v285 = vmul.f32 %v247, %v268
      %v286 = vmul.f32 %v248, %v268
      %v287 = vmul.f32 %v249, %v268
      %v288 = vmul.f32 %v250, %v268
      %v289 = vmul.f32 %v251, %v268
      %v290 = vmul.f32 %v252, %v268
      %v291 = vmul.f32 %v253, %v268
      %v292 = vmul.f32 %v254, %v268
      %v293 = vmul.f32 %v255, %v268
      %v294 = vmul.f32 %v256, %v268
      %v295 = vmul.f32 %v257, %v268
      %v296 = vmul.f32 %v258, %v268
      %v297 = vmul.f32 %v259, %v268
      %v298 = vmul.f32 %v260, %v268
      %v299 = vmul.f32 %v261, %v268
      %v300 = vmul.f32 %v262, %v268
      %v301 = vmul.f32 %v263, %v268
      %v303 = vlaneseq
      %v304 = vshrl.u32 %v303, 7
      %v305 = vsub.s32 0, %v304
      %v306 = vrot.slane %v231, %v305
      %v308 = vadd.f32 %v270, %v306
      %v309 = vadd.f32 %v271, %v306
      %v310 = vadd.f32 %v272, %v306
      %v311 = vadd.f32 %v273, %v306
      %v312 = vadd.f32 %v274, %v306
      %v313 = vadd.f32 %v275, %v306
      %v314 = vadd.f32 %v276, %v306
      %v315 = vadd.f32 %v277, %v306
      %v316 = vadd.f32 %v278, %v306
      %v317 = vadd.f32 %v279, %v306
      %v318 = vadd.f32 %v280, %v306
      %v319 = vadd.f32 %v281, %v306
      %v320 = vadd.f32 %v282, %v306
      %v321 = vadd.f32 %v283, %v306
      %v322 = vadd.f32 %v284, %v306
      %v323 = vadd.f32 %v285, %v306
      %v324 = vadd.f32 %v286, %v306
      %v325 = vadd.f32 %v287, %v306
      %v326 = vadd.f32 %v288, %v306
      %v327 = vadd.f32 %v289, %v306
      %v328 = vadd.f32 %v290, %v306
      %v329 = vadd.f32 %v291, %v306
      %v330 = vadd.f32 %v292, %v306
      %v331 = vadd.f32 %v293, %v306
      %v332 = vadd.f32 %v294, %v306
      %v333 = vadd.f32 %v295, %v306
      %v334 = vadd.f32 %v296, %v306
      %v335 = vadd.f32 %v297, %v306
      %v336 = vadd.f32 %v298, %v306
      %v337 = vadd.f32 %v299, %v306
      %v338 = vadd.f32 %v300, %v306
      %v339 = vadd.f32 %v301, %v306
      %v340 = vmul.f32 %v308, 0.2
      %v341 = vmul.f32 %v309, 0.2
      %v342 = vmul.f32 %v310, 0.2
      %v343 = vmul.f32 %v311, 0.2
      %v344 = vmul.f32 %v312, 0.2
      %v345 = vmul.f32 %v313, 0.2
      %v346 = vmul.f32 %v314, 0.2
      %v347 = vmul.f32 %v315, 0.2
      %v348 = vmul.f32 %v316, 0.2
      %v349 = vmul.f32 %v317, 0.2
      %v350 = vmul.f32 %v318, 0.2
      %v351 = vmul.f32 %v319, 0.2
      %v352 = vmul.f32 %v320, 0.2
      %v353 = vmul.f32 %v321, 0.2
      %v354 = vmul.f32 %v322, 0.2
      %v355 = vmul.f32 %v323, 0.2
      %v356 = vmul.f32 %v324, 0.2
      %v357 = vmul.f32 %v325, 0.2
      %v358 = vmul.f32 %v326, 0.2
      %v359 = vmul.f32 %v327, 0.2
      %v360 = vmul.f32 %v328, 0.2
      %v361 = vmul.f32 %v329, 0.2
      %v362 = vmul.f32 %v330, 0.2
      %v363 = vmul.f32 %v331, 0.2
      %v364 = vmul.f32 %v332, 0.2
      %v365 = vmul.f32 %v333, 0.2
      %v366 = vmul.f32 %v334, 0.2
      %v367 = vmul.f32 %v335, 0.2
      %v368 = vmul.f32 %v336, 0.2
      %v369 = vmul.f32 %v337, 0.2
      %v370 = vmul.f32 %v338, 0.2
      %v371 = vmul.f32 %v339, 0.2
      %v372 = vmax.f32 %v308, %v340
      %v373 = vmax.f32 %v309, %v341
      %v374 = vmax.f32 %v310, %v342
      %v375 = vmax.f32 %v311, %v343
      %v376 = vmax.f32 %v312, %v344
      %v377 = vmax.f32 %v313, %v345
      %v378 = vmax.f32 %v314, %v346
      %v379 = vmax.f32 %v315, %v347
      %v380 = vmax.f32 %v316, %v348
      %v381 = vmax.f32 %v317, %v349
      %v382 = vmax.f32 %v318, %v350
      %v383 = vmax.f32 %v319, %v351
      %v384 = vmax.f32 %v320, %v352
      %v385 = vmax.f32 %v321, %v353
      %v386 = vmax.f32 %v322, %v354
      %v387 = vmax.f32 %v323, %v355
      %v388 = vmax.f32 %v324, %v356
      %v389 = vmax.f32 %v325, %v357
      %v390 = vmax.f32 %v326, %v358
      %v391 = vmax.f32 %v327, %v359
      %v392 = vmax.f32 %v328, %v360
      %v393 = vmax.f32 %v329, %v361
      %v394 = vmax.f32 %v330, %v362
      %v395 = vmax.f32 %v331, %v363
      %v396 = vmax.f32 %v332, %v364
      %v397 = vmax.f32 %v333, %v365
      %v398 = vmax.f32 %v334, %v366
      %v399 = vmax.f32 %v335, %v367
      %v400 = vmax.f32 %v336, %v368
      %v401 = vmax.f32 %v337, %v369
      %v402 = vmax.f32 %v338, %v370
      %v403 = vmax.f32 %v339, %v371
      %404 = vst [vmem:[%s199] sm:$0xff] %v372
      %405 = vst [vmem:[%s199 + $0x8] sm:$0xff] %v373
      %406 = vst [vmem:[%s199 + $0x10] sm:$0xff] %v374
      %407 = vst [vmem:[%s199 + $0x18] sm:$0xff] %v375
      %408 = vst [vmem:[%s199 + $0x20] sm:$0xff] %v376
      %409 = vst [vmem:[%s199 + $0x28] sm:$0xff] %v377
      %410 = vst [vmem:[%s199 + $0x30] sm:$0xff] %v378
      %411 = vst [vmem:[%s199 + $0x38] sm:$0xff] %v379
      %412 = vst [vmem:[%s199 + $0x40] sm:$0xff] %v380
      %413 = vst [vmem:[%s199 + $0x48] sm:$0xff] %v381
      %414 = vst [vmem:[%s199 + $0x50] sm:$0xff] %v382
      %415 = vst [vmem:[%s199 + $0x58] sm:$0xff] %v383
      %416 = vst [vmem:[%s199 + $0x60] sm:$0xff] %v384
      %417 = vst [vmem:[%s199 + $0x68] sm:$0xff] %v385
      %418 = vst [vmem:[%s199 + $0x70] sm:$0xff] %v386
      %419 = vst [vmem:[%s199 + $0x78] sm:$0xff] %v387
      %420 = vst [vmem:[%s199 + $0x80] sm:$0xff] %v388
      %421 = vst [vmem:[%s199 + $0x88] sm:$0xff] %v389
      %422 = vst [vmem:[%s199 + $0x90] sm:$0xff] %v390
      %423 = vst [vmem:[%s199 + $0x98] sm:$0xff] %v391
      %424 = vst [vmem:[%s199 + $0xa0] sm:$0xff] %v392
      %425 = vst [vmem:[%s199 + $0xa8] sm:$0xff] %v393
      %426 = vst [vmem:[%s199 + $0xb0] sm:$0xff] %v394
      %427 = vst [vmem:[%s199 + $0xb8] sm:$0xff] %v395
      %428 = vst [vmem:[%s199 + $0xc0] sm:$0xff] %v396
      %429 = vst [vmem:[%s199 + $0xc8] sm:$0xff] %v397
      %430 = vst [vmem:[%s199 + $0xd0] sm:$0xff] %v398
      %431 = vst [vmem:[%s199 + $0xd8] sm:$0xff] %v399
      %432 = vst [vmem:[%s199 + $0xe0] sm:$0xff] %v400
      %433 = vst [vmem:[%s199 + $0xe8] sm:$0xff] %v401
      %434 = vst [vmem:[%s199 + $0xf0] sm:$0xff] %v402
      %435 = vst [vmem:[%s199 + $0xf8] sm:$0xff] %v403
      %s436 = smul.u32 32, %s15
      %p437 = scmp.lt.s32.totalorder %s436, 63
      %s438 = scalar_select %p437, %s436, 63
      %s439 = smul.addr %s438, 8
      %s440 = scalar_lea.vmem %s4, %s439
      // Predicated region
      $region37: #{discriminator_forward.8} parent=35 // pred_check
        %p441 = pneg %p122
      $region38: #{discriminator_forward.8} parent=35 // pred_check_branch
        %443 = sbr.rel (%p441) target = $region40
      $region39: #{discriminator_forward.8} parent=35 // pred_region
        %s444 = smul.u32 32, %s15
      $region40: #{discriminator_forward.8} parent=35 // pred_fallthru
        _
    $region36: #{discriminator_forward.8} parent=5 // pred_fallthru
      _
    %p445 = scmp.le.s32.totalorder 2, %s10
    // Predicated region
    $region41: #{discriminator_forward.8} parent=5 // pred_check
      %p446 = pneg %p445
    $region42: #{discriminator_forward.8} parent=5 // pred_check_branch
      %448 = sbr.rel (%p446) target = $region44
    $region43: #{discriminator_forward.8} parent=5 // pred_region
      %s449 = ssub.s32 %s10, 2
      // Predicated region
      $region45: #{discriminator_forward.8} parent=43 // pred_check
        %p450 = pneg %p128
      $region46: #{discriminator_forward.8} parent=43 // pred_check_branch
        %452 = sbr.rel (%p450) target = $region48
      $region47: #{discriminator_forward.8} parent=43 // pred_region
        %s453 = smul.u32 32, %s16
        %p454 = scmp.lt.s32.totalorder %s453, 63
        %s455 = scalar_select %p454, %s453, 63
        %s456 = smul.addr %s455, 8
        %s457 = scalar_lea.vmem %s4, %s456
      $region48: #{discriminator_forward.8} parent=43 // pred_fallthru
        _
    $region44: #{discriminator_forward.8} parent=5 // pred_fallthru
      _
  $region6: #{discriminator_forward.8} parent=0 // loop_footer
    %s14 = sadd.s32 1, %s10
  $region7: #{discriminator_forward.8} parent=0 // loop_footer_branch
    %9 = sbr.rel target = $region3
  $region8: #{discriminator_forward.8} parent=0 // loop_exit
    _

// kernel: discriminator_forward.9
$region0: #{discriminator_forward.9}
  #allocation0 [shape = 'u32[]', space=smem, size = 0x4, offset = 0x4, fixed_abs, tag = 'smem constant byte address 0x4 - core index']
  #allocation1 [shape = 'u32[144,128]{1,0:T(1,128)}', space=vmem, size = 0x12000, scoped, tag = 'internal scratch']
  %s0 = inlined_call_operand.vmem [shape: bf16[128,1024], index: 0, kind: input, shape index: {}]
  %s1 = inlined_call_operand.vmem [shape: bf16[1024,128], index: 1, kind: input, shape index: {}]
  %s2 = inlined_call_operand.vmem [shape: f32[1,128], index: 2, kind: input, shape index: {}]
  %s3 = inlined_call_operand.vmem [shape: f32[1,128], index: 3, kind: input, shape index: {}]
  %s4 = inlined_call_operand.vmem [shape: f32[1,128], index: 4, kind: input, shape index: {}]
  %s5 = inlined_call_operand.vmem [shape: f32[128,128], index: 5, kind: output, shape index: {}]
  %s6 = sld [smem:[#allocation0]]
  $region30: #{discriminator_forward.9} parent=0
    _
  %s8 = ssub.s32 1, %s6
  %s9 = scalar_select 0, %s8, %s6
  // Predicated region
  $region2: #{discriminator_forward.9} parent=0 // pred_check
    _
  $region3: #{discriminator_forward.9} parent=0 // pred_check_branch
    %11 = sbr.rel (0) target = $region5
  $region4: #{discriminator_forward.9} parent=0 // pred_region
    _
  $region5: #{discriminator_forward.9} parent=0 // pred_fallthru
    _
  // Predicated region
  $region6: #{discriminator_forward.9} parent=0 // pred_check
    _
  $region7: #{discriminator_forward.9} parent=0 // pred_check_branch
    %13 = sbr.rel (0) target = $region9
  $region8: #{discriminator_forward.9} parent=0 // pred_region
    _
  $region9: #{discriminator_forward.9} parent=0 // pred_fallthru
    _
  // Predicated region
  $region10: #{discriminator_forward.9} parent=0 // pred_check
    _
  $region11: #{discriminator_forward.9} parent=0 // pred_check_branch
    %15 = sbr.rel (0) target = $region13
  $region12: #{discriminator_forward.9} parent=0 // pred_region
    _
  $region13: #{discriminator_forward.9} parent=0 // pred_fallthru
    _
  // Predicated region
  $region14: #{discriminator_forward.9} parent=0 // pred_check
    _
  $region15: #{discriminator_forward.9} parent=0 // pred_check_branch
    %17 = sbr.rel (0) target = $region17
  $region16: #{discriminator_forward.9} parent=0 // pred_region
    _
  $region17: #{discriminator_forward.9} parent=0 // pred_fallthru
    _
  // Predicated region
  $region18: #{discriminator_forward.9} parent=0 // pred_check
    _
  $region19: #{discriminator_forward.9} parent=0 // pred_check_branch
    %19 = sbr.rel (0) target = $region21
  $region20: #{discriminator_forward.9} parent=0 // pred_region
    _
  $region21: #{discriminator_forward.9} parent=0 // pred_fallthru
    _
  %v21 = vld [vmem:[%s0] sm:$0xff]
  %v22 = vld [vmem:[%s0 + $0x8] sm:$0xff]
  %v23 = vld [vmem:[%s0 + $0x10] sm:$0xff]
  %v24 = vld [vmem:[%s0 + $0x18] sm:$0xff]
  %v25 = vld [vmem:[%s0 + $0x20] sm:$0xff]
  %v26 = vld [vmem:[%s0 + $0x28] sm:$0xff]
  %v27 = vld [vmem:[%s0 + $0x30] sm:$0xff]
  %v28 = vld [vmem:[%s0 + $0x38] sm:$0xff]
  %v29 = vld [vmem:[%s0 + $0x40] sm:$0xff]
  %v30 = vld [vmem:[%s0 + $0x48] sm:$0xff]
  %v31 = vld [vmem:[%s0 + $0x50] sm:$0xff]
  %v32 = vld [vmem:[%s0 + $0x58] sm:$0xff]
  %v33 = vld [vmem:[%s0 + $0x60] sm:$0xff]
  %v34 = vld [vmem:[%s0 + $0x68] sm:$0xff]
  %v35 = vld [vmem:[%s0 + $0x70] sm:$0xff]
  %v36 = vld [vmem:[%s0 + $0x78] sm:$0xff]
  %v37 = vld [vmem:[%s0 + $0x80] sm:$0xff]
  %v38 = vld [vmem:[%s0 + $0x88] sm:$0xff]
  %v39 = vld [vmem:[%s0 + $0x90] sm:$0xff]
  %v40 = vld [vmem:[%s0 + $0x98] sm:$0xff]
  %v41 = vld [vmem:[%s0 + $0xa0] sm:$0xff]
  %v42 = vld [vmem:[%s0 + $0xa8] sm:$0xff]
  %v43 = vld [vmem:[%s0 + $0xb0] sm:$0xff]
  %v44 = vld [vmem:[%s0 + $0xb8] sm:$0xff]
  %v45 = vld [vmem:[%s0 + $0xc0] sm:$0xff]
  %v46 = vld [vmem:[%s0 + $0xc8] sm:$0xff]
  %v47 = vld [vmem:[%s0 + $0xd0] sm:$0xff]
  %v48 = vld [vmem:[%s0 + $0xd8] sm:$0xff]
  %v49 = vld [vmem:[%s0 + $0xe0] sm:$0xff]
  %v50 = vld [vmem:[%s0 + $0xe8] sm:$0xff]
  %v51 = vld [vmem:[%s0 + $0xf0] sm:$0xff]
  %v52 = vld [vmem:[%s0 + $0xf8] sm:$0xff]
  %v53 = vld [vmem:[%s0 + $0x100] sm:$0xff]
  %v54 = vld [vmem:[%s0 + $0x108] sm:$0xff]
  %v55 = vld [vmem:[%s0 + $0x110] sm:$0xff]
  %v56 = vld [vmem:[%s0 + $0x118] sm:$0xff]
  %v57 = vld [vmem:[%s0 + $0x120] sm:$0xff]
  %v58 = vld [vmem:[%s0 + $0x128] sm:$0xff]
  %v59 = vld [vmem:[%s0 + $0x130] sm:$0xff]
  %v60 = vld [vmem:[%s0 + $0x138] sm:$0xff]
  %v61 = vld [vmem:[%s0 + $0x140] sm:$0xff]
  %v62 = vld [vmem:[%s0 + $0x148] sm:$0xff]
  %v63 = vld [vmem:[%s0 + $0x150] sm:$0xff]
  %v64 = vld [vmem:[%s0 + $0x158] sm:$0xff]
  %v65 = vld [vmem:[%s0 + $0x160] sm:$0xff]
  %v66 = vld [vmem:[%s0 + $0x168] sm:$0xff]
  %v67 = vld [vmem:[%s0 + $0x170] sm:$0xff]
  %v68 = vld [vmem:[%s0 + $0x178] sm:$0xff]
  %v69 = vld [vmem:[%s0 + $0x180] sm:$0xff]
  %v70 = vld [vmem:[%s0 + $0x188] sm:$0xff]
  %v71 = vld [vmem:[%s0 + $0x190] sm:$0xff]
  %v72 = vld [vmem:[%s0 + $0x198] sm:$0xff]
  %v73 = vld [vmem:[%s0 + $0x1a0] sm:$0xff]
  %v74 = vld [vmem:[%s0 + $0x1a8] sm:$0xff]
  %v75 = vld [vmem:[%s0 + $0x1b0] sm:$0xff]
  %v76 = vld [vmem:[%s0 + $0x1b8] sm:$0xff]
  %v77 = vld [vmem:[%s0 + $0x1c0] sm:$0xff]
  %v78 = vld [vmem:[%s0 + $0x1c8] sm:$0xff]
  %v79 = vld [vmem:[%s0 + $0x1d0] sm:$0xff]
  %v80 = vld [vmem:[%s0 + $0x1d8] sm:$0xff]
  %v81 = vld [vmem:[%s0 + $0x1e0] sm:$0xff]
  %v82 = vld [vmem:[%s0 + $0x1e8] sm:$0xff]
  %v83 = vld [vmem:[%s0 + $0x1f0] sm:$0xff]
  %v84 = vld [vmem:[%s0 + $0x1f8] sm:$0xff]
  %v85 = vld [vmem:[%s1] sm:$0xf]
  %v86 = vld [vmem:[%s1 + $0x4] sm:$0xf]
  %v87 = vld [vmem:[%s1 + $0x8] sm:$0xf]
  %v88 = vld [vmem:[%s1 + $0xc] sm:$0xf]
  %v89 = vld [vmem:[%s1 + $0x10] sm:$0xf]
  %v90 = vld [vmem:[%s1 + $0x14] sm:$0xf]
  %v91 = vld [vmem:[%s1 + $0x18] sm:$0xf]
  %v92 = vld [vmem:[%s1 + $0x1c] sm:$0xf]
  %v93 = vld [vmem:[%s1 + $0x20] sm:$0xf]
  %v94 = vld [vmem:[%s1 + $0x24] sm:$0xf]
  %v95 = vld [vmem:[%s1 + $0x28] sm:$0xf]
  %v96 = vld [vmem:[%s1 + $0x2c] sm:$0xf]
  %v97 = vld [vmem:[%s1 + $0x30] sm:$0xf]
  %v98 = vld [vmem:[%s1 + $0x34] sm:$0xf]
  %v99 = vld [vmem:[%s1 + $0x38] sm:$0xf]
  %v100 = vld [vmem:[%s1 + $0x3c] sm:$0xf]
  %v101 = vld [vmem:[%s1 + $0x40] sm:$0xf]
  %v102 = vld [vmem:[%s1 + $0x44] sm:$0xf]
  %v103 = vld [vmem:[%s1 + $0x48] sm:$0xf]
  %v104 = vld [vmem:[%s1 + $0x4c] sm:$0xf]
  %v105 = vld [vmem:[%s1 + $0x50] sm:$0xf]
  %v106 = vld [vmem:[%s1 + $0x54] sm:$0xf]
  %v107 = vld [vmem:[%s1 + $0x58] sm:$0xf]
  %v108 = vld [vmem:[%s1 + $0x5c] sm:$0xf]
  %v109 = vld [vmem:[%s1 + $0x60] sm:$0xf]
  %v110 = vld [vmem:[%s1 + $0x64] sm:$0xf]
  %v111 = vld [vmem:[%s1 + $0x68] sm:$0xf]
  %v112 = vld [vmem:[%s1 + $0x6c] sm:$0xf]
  %v113 = vld [vmem:[%s1 + $0x70] sm:$0xf]
  %v114 = vld [vmem:[%s1 + $0x74] sm:$0xf]
  %v115 = vld [vmem:[%s1 + $0x78] sm:$0xf]
  %v116 = vld [vmem:[%s1 + $0x7c] sm:$0xf]
  %v117 = vld [vmem:[%s1 + $0x80] sm:$0xf]
  %v118 = vld [vmem:[%s1 + $0x84] sm:$0xf]
  %v119 = vld [vmem:[%s1 + $0x88] sm:$0xf]
  %v120 = vld [vmem:[%s1 + $0x8c] sm:$0xf]
  %v121 = vld [vmem:[%s1 + $0x90] sm:$0xf]
  %v122 = vld [vmem:[%s1 + $0x94] sm:$0xf]
  %v123 = vld [vmem:[%s1 + $0x98] sm:$0xf]
  %v124 = vld [vmem:[%s1 + $0x9c] sm:$0xf]
  %v125 = vld [vmem:[%s1 + $0xa0] sm:$0xf]
  %v126 = vld [vmem:[%s1 + $0xa4] sm:$0xf]
  %v127 = vld [vmem:[%s1 + $0xa8] sm:$0xf]
  %v128 = vld [vmem:[%s1 + $0xac] sm:$0xf]
  %v129 = vld [vmem:[%s1 + $0xb0] sm:$0xf]
  %v130 = vld [vmem:[%s1 + $0xb4] sm:$0xf]
  %v131 = vld [vmem:[%s1 + $0xb8] sm:$0xf]
  %v132 = vld [vmem:[%s1 + $0xbc] sm:$0xf]
  %v133 = vld [vmem:[%s1 + $0xc0] sm:$0xf]
  %v134 = vld [vmem:[%s1 + $0xc4] sm:$0xf]
  %v135 = vld [vmem:[%s1 + $0xc8] sm:$0xf]
  %v136 = vld [vmem:[%s1 + $0xcc] sm:$0xf]
  %v137 = vld [vmem:[%s1 + $0xd0] sm:$0xf]
  %v138 = vld [vmem:[%s1 + $0xd4] sm:$0xf]
  %v139 = vld [vmem:[%s1 + $0xd8] sm:$0xf]
  %v140 = vld [vmem:[%s1 + $0xdc] sm:$0xf]
  %v141 = vld [vmem:[%s1 + $0xe0] sm:$0xf]
  %v142 = vld [vmem:[%s1 + $0xe4] sm:$0xf]
  %v143 = vld [vmem:[%s1 + $0xe8] sm:$0xf]
  %v144 = vld [vmem:[%s1 + $0xec] sm:$0xf]
  %v145 = vld [vmem:[%s1 + $0xf0] sm:$0xf]
  %v146 = vld [vmem:[%s1 + $0xf4] sm:$0xf]
  %v147 = vld [vmem:[%s1 + $0xf8] sm:$0xf]
  %v148 = vld [vmem:[%s1 + $0xfc] sm:$0xf]
  %v149 = vld [vmem:[%s1 + $0x100] sm:$0xf]
  %v150 = vld [vmem:[%s1 + $0x104] sm:$0xf]
  %v151 = vld [vmem:[%s1 + $0x108] sm:$0xf]
  %v152 = vld [vmem:[%s1 + $0x10c] sm:$0xf]
  %v153 = vld [vmem:[%s1 + $0x110] sm:$0xf]
  %v154 = vld [vmem:[%s1 + $0x114] sm:$0xf]
  %v155 = vld [vmem:[%s1 + $0x118] sm:$0xf]
  %v156 = vld [vmem:[%s1 + $0x11c] sm:$0xf]
  %v157 = vld [vmem:[%s1 + $0x120] sm:$0xf]
  %v158 = vld [vmem:[%s1 + $0x124] sm:$0xf]
  %v159 = vld [vmem:[%s1 + $0x128] sm:$0xf]
  %v160 = vld [vmem:[%s1 + $0x12c] sm:$0xf]
  %v161 = vld [vmem:[%s1 + $0x130] sm:$0xf]
  %v162 = vld [vmem:[%s1 + $0x134] sm:$0xf]
  %v163 = vld [vmem:[%s1 + $0x138] sm:$0xf]
  %v164 = vld [vmem:[%s1 + $0x13c] sm:$0xf]
  %v165 = vld [vmem:[%s1 + $0x140] sm:$0xf]
  %v166 = vld [vmem:[%s1 + $0x144] sm:$0xf]
  %v167 = vld [vmem:[%s1 + $0x148] sm:$0xf]
  %v168 = vld [vmem:[%s1 + $0x14c] sm:$0xf]
  %v169 = vld [vmem:[%s1 + $0x150] sm:$0xf]
  %v170 = vld [vmem:[%s1 + $0x154] sm:$0xf]
  %v171 = vld [vmem:[%s1 + $0x158] sm:$0xf]
  %v172 = vld [vmem:[%s1 + $0x15c] sm:$0xf]
  %v173 = vld [vmem:[%s1 + $0x160] sm:$0xf]
  %v174 = vld [vmem:[%s1 + $0x164] sm:$0xf]
  %v175 = vld [vmem:[%s1 + $0x168] sm:$0xf]
  %v176 = vld [vmem:[%s1 + $0x16c] sm:$0xf]
  %v177 = vld [vmem:[%s1 + $0x170] sm:$0xf]
  %v178 = vld [vmem:[%s1 + $0x174] sm:$0xf]
  %v179 = vld [vmem:[%s1 + $0x178] sm:$0xf]
  %v180 = vld [vmem:[%s1 + $0x17c] sm:$0xf]
  %v181 = vld [vmem:[%s1 + $0x180] sm:$0xf]
  %v182 = vld [vmem:[%s1 + $0x184] sm:$0xf]
  %v183 = vld [vmem:[%s1 + $0x188] sm:$0xf]
  %v184 = vld [vmem:[%s1 + $0x18c] sm:$0xf]
  %v185 = vld [vmem:[%s1 + $0x190] sm:$0xf]
  %v186 = vld [vmem:[%s1 + $0x194] sm:$0xf]
  %v187 = vld [vmem:[%s1 + $0x198] sm:$0xf]
  %v188 = vld [vmem:[%s1 + $0x19c] sm:$0xf]
  %v189 = vld [vmem:[%s1 + $0x1a0] sm:$0xf]
  %v190 = vld [vmem:[%s1 + $0x1a4] sm:$0xf]
  %v191 = vld [vmem:[%s1 + $0x1a8] sm:$0xf]
  %v192 = vld [vmem:[%s1 + $0x1ac] sm:$0xf]
  %v193 = vld [vmem:[%s1 + $0x1b0] sm:$0xf]
  %v194 = vld [vmem:[%s1 + $0x1b4] sm:$0xf]
  %v195 = vld [vmem:[%s1 + $0x1b8] sm:$0xf]
  %v196 = vld [vmem:[%s1 + $0x1bc] sm:$0xf]
  %v197 = vld [vmem:[%s1 + $0x1c0] sm:$0xf]
  %v198 = vld [vmem:[%s1 + $0x1c4] sm:$0xf]
  %v199 = vld [vmem:[%s1 + $0x1c8] sm:$0xf]
  %v200 = vld [vmem:[%s1 + $0x1cc] sm:$0xf]
  %v201 = vld [vmem:[%s1 + $0x1d0] sm:$0xf]
  %v202 = vld [vmem:[%s1 + $0x1d4] sm:$0xf]
  %v203 = vld [vmem:[%s1 + $0x1d8] sm:$0xf]
  %v204 = vld [vmem:[%s1 + $0x1dc] sm:$0xf]
  %v205 = vld [vmem:[%s1 + $0x1e0] sm:$0xf]
  %v206 = vld [vmem:[%s1 + $0x1e4] sm:$0xf]
  %v207 = vld [vmem:[%s1 + $0x1e8] sm:$0xf]
  %v208 = vld [vmem:[%s1 + $0x1ec] sm:$0xf]
  %v209 = vld [vmem:[%s1 + $0x1f0] sm:$0xf]
  %v210 = vld [vmem:[%s1 + $0x1f4] sm:$0xf]
  %v211 = vld [vmem:[%s1 + $0x1f8] sm:$0xf]
  %v212 = vld [vmem:[%s1 + $0x1fc] sm:$0xf]
  %v213 = vld [vmem:[%s2] sm:$0x1]
  %v215 = vlaneseq
  %v216 = vshrl.u32 %v215, 7
  %v217 = vsub.s32 0, %v216
  %v218 = vrot.slane %v213, %v217
  %v284 = vunpack.c.l.b16 %v21
  %v285 = vunpack.c.h.b16 %v21
  %v286 = vunpack.c.l.b16 %v22
  %v287 = vunpack.c.h.b16 %v22
  %v288 = vunpack.c.l.b16 %v23
  %v289 = vunpack.c.h.b16 %v23
  %v290 = vunpack.c.l.b16 %v24
  %v291 = vunpack.c.h.b16 %v24
  %v292 = vunpack.c.l.b16 %v25
  %v293 = vunpack.c.h.b16 %v25
  %v294 = vunpack.c.l.b16 %v26
  %v295 = vunpack.c.h.b16 %v26
  %v296 = vunpack.c.l.b16 %v27
  %v297 = vunpack.c.h.b16 %v27
  %v298 = vunpack.c.l.b16 %v28
  %v299 = vunpack.c.h.b16 %v28
  %v300 = vunpack.c.l.b16 %v29
  %v301 = vunpack.c.h.b16 %v29
  %v302 = vunpack.c.l.b16 %v30
  %v303 = vunpack.c.h.b16 %v30
  %v304 = vunpack.c.l.b16 %v31
  %v305 = vunpack.c.h.b16 %v31
  %v306 = vunpack.c.l.b16 %v32
  %v307 = vunpack.c.h.b16 %v32
  %v308 = vunpack.c.l.b16 %v33
  %v309 = vunpack.c.h.b16 %v33
  %v310 = vunpack.c.l.b16 %v34
  %v311 = vunpack.c.h.b16 %v34
  %v312 = vunpack.c.l.b16 %v35
  %v313 = vunpack.c.h.b16 %v35
  %v314 = vunpack.c.l.b16 %v36
  %v315 = vunpack.c.h.b16 %v36
  %v316 = vunpack.c.l.b16 %v37
  %v317 = vunpack.c.h.b16 %v37
  %v318 = vunpack.c.l.b16 %v38
  %v319 = vunpack.c.h.b16 %v38
  %v320 = vunpack.c.l.b16 %v39
  %v321 = vunpack.c.h.b16 %v39
  %v322 = vunpack.c.l.b16 %v40
  %v323 = vunpack.c.h.b16 %v40
  %v324 = vunpack.c.l.b16 %v41
  %v325 = vunpack.c.h.b16 %v41
  %v326 = vunpack.c.l.b16 %v42
  %v327 = vunpack.c.h.b16 %v42
  %v328 = vunpack.c.l.b16 %v43
  %v329 = vunpack.c.h.b16 %v43
  %v330 = vunpack.c.l.b16 %v44
  %v331 = vunpack.c.h.b16 %v44
  %v332 = vunpack.c.l.b16 %v45
  %v333 = vunpack.c.h.b16 %v45
  %v334 = vunpack.c.l.b16 %v46
  %v335 = vunpack.c.h.b16 %v46
  %v336 = vunpack.c.l.b16 %v47
  %v337 = vunpack.c.h.b16 %v47
  %v338 = vunpack.c.l.b16 %v48
  %v339 = vunpack.c.h.b16 %v48
  %v340 = vunpack.c.l.b16 %v49
  %v341 = vunpack.c.h.b16 %v49
  %v342 = vunpack.c.l.b16 %v50
  %v343 = vunpack.c.h.b16 %v50
  %v344 = vunpack.c.l.b16 %v51
  %v345 = vunpack.c.h.b16 %v51
  %v346 = vunpack.c.l.b16 %v52
  %v347 = vunpack.c.h.b16 %v52
  %v348 = vunpack.c.l.b16 %v53
  %v349 = vunpack.c.h.b16 %v53
  %v350 = vunpack.c.l.b16 %v54
  %v351 = vunpack.c.h.b16 %v54
  %v352 = vunpack.c.l.b16 %v55
  %v353 = vunpack.c.h.b16 %v55
  %v354 = vunpack.c.l.b16 %v56
  %v355 = vunpack.c.h.b16 %v56
  %v356 = vunpack.c.l.b16 %v57
  %v357 = vunpack.c.h.b16 %v57
  %v358 = vunpack.c.l.b16 %v58
  %v359 = vunpack.c.h.b16 %v58
  %v360 = vunpack.c.l.b16 %v59
  %v361 = vunpack.c.h.b16 %v59
  %v362 = vunpack.c.l.b16 %v60
  %v363 = vunpack.c.h.b16 %v60
  %v364 = vunpack.c.l.b16 %v61
  %v365 = vunpack.c.h.b16 %v61
  %v366 = vunpack.c.l.b16 %v62
  %v367 = vunpack.c.h.b16 %v62
  %v368 = vunpack.c.l.b16 %v63
  %v369 = vunpack.c.h.b16 %v63
  %v370 = vunpack.c.l.b16 %v64
  %v371 = vunpack.c.h.b16 %v64
  %v372 = vunpack.c.l.b16 %v65
  %v373 = vunpack.c.h.b16 %v65
  %v374 = vunpack.c.l.b16 %v66
  %v375 = vunpack.c.h.b16 %v66
  %v376 = vunpack.c.l.b16 %v67
  %v377 = vunpack.c.h.b16 %v67
  %v378 = vunpack.c.l.b16 %v68
  %v379 = vunpack.c.h.b16 %v68
  %v380 = vunpack.c.l.b16 %v69
  %v381 = vunpack.c.h.b16 %v69
  %v382 = vunpack.c.l.b16 %v70
  %v383 = vunpack.c.h.b16 %v70
  %v384 = vunpack.c.l.b16 %v71
  %v385 = vunpack.c.h.b16 %v71
  %v386 = vunpack.c.l.b16 %v72
  %v387 = vunpack.c.h.b16 %v72
  %v388 = vunpack.c.l.b16 %v73
  %v389 = vunpack.c.h.b16 %v73
  %v390 = vunpack.c.l.b16 %v74
  %v391 = vunpack.c.h.b16 %v74
  %v392 = vunpack.c.l.b16 %v75
  %v393 = vunpack.c.h.b16 %v75
  %v394 = vunpack.c.l.b16 %v76
  %v395 = vunpack.c.h.b16 %v76
  %v396 = vunpack.c.l.b16 %v77
  %v397 = vunpack.c.h.b16 %v77
  %v398 = vunpack.c.l.b16 %v78
  %v399 = vunpack.c.h.b16 %v78
  %v400 = vunpack.c.l.b16 %v79
  %v401 = vunpack.c.h.b16 %v79
  %v402 = vunpack.c.l.b16 %v80
  %v403 = vunpack.c.h.b16 %v80
  %v404 = vunpack.c.l.b16 %v81
  %v405 = vunpack.c.h.b16 %v81
  %v406 = vunpack.c.l.b16 %v82
  %v407 = vunpack.c.h.b16 %v82
  %v408 = vunpack.c.l.b16 %v83
  %v409 = vunpack.c.h.b16 %v83
  %v410 = vunpack.c.l.b16 %v84
  %v411 = vunpack.c.h.b16 %v84
  %v412 = vpack.c.b16 %v292, %v284
  %v413 = vpack.c.b16 %v293, %v285
  %v414 = vpack.c.b16 %v294, %v286
  %v415 = vpack.c.b16 %v295, %v287
  %v416 = vpack.c.b16 %v296, %v288
  %v417 = vpack.c.b16 %v297, %v289
  %v418 = vpack.c.b16 %v298, %v290
  %v419 = vpack.c.b16 %v299, %v291
  %v420 = vpack.c.b16 %v308, %v300
  %v421 = vpack.c.b16 %v309, %v301
  %v422 = vpack.c.b16 %v310, %v302
  %v423 = vpack.c.b16 %v311, %v303
  %v424 = vpack.c.b16 %v312, %v304
  %v425 = vpack.c.b16 %v313, %v305
  %v426 = vpack.c.b16 %v314, %v306
  %v427 = vpack.c.b16 %v315, %v307
  %v428 = vpack.c.b16 %v324, %v316
  %v429 = vpack.c.b16 %v325, %v317
  %v430 = vpack.c.b16 %v326, %v318
  %v431 = vpack.c.b16 %v327, %v319
  %v432 = vpack.c.b16 %v328, %v320
  %v433 = vpack.c.b16 %v329, %v321
  %v434 = vpack.c.b16 %v330, %v322
  %v435 = vpack.c.b16 %v331, %v323
  %v436 = vpack.c.b16 %v340, %v332
  %v437 = vpack.c.b16 %v341, %v333
  %v438 = vpack.c.b16 %v342, %v334
  %v439 = vpack.c.b16 %v343, %v335
  %v440 = vpack.c.b16 %v344, %v336
  %v441 = vpack.c.b16 %v345, %v337
  %v442 = vpack.c.b16 %v346, %v338
  %v443 = vpack.c.b16 %v347, %v339
  %v444 = vpack.c.b16 %v356, %v348
  %v445 = vpack.c.b16 %v357, %v349
  %v446 = vpack.c.b16 %v358, %v350
  %v447 = vpack.c.b16 %v359, %v351
  %v448 = vpack.c.b16 %v360, %v352
  %v449 = vpack.c.b16 %v361, %v353
  %v450 = vpack.c.b16 %v362, %v354
  %v451 = vpack.c.b16 %v363, %v355
  %v452 = vpack.c.b16 %v372, %v364
  %v453 = vpack.c.b16 %v373, %v365
  %v454 = vpack.c.b16 %v374, %v366
  %v455 = vpack.c.b16 %v375, %v367
  %v456 = vpack.c.b16 %v376, %v368
  %v457 = vpack.c.b16 %v377, %v369
  %v458 = vpack.c.b16 %v378, %v370
  %v459 = vpack.c.b16 %v379, %v371
  %v460 = vpack.c.b16 %v388, %v380
  %v461 = vpack.c.b16 %v389, %v381
  %v462 = vpack.c.b16 %v390, %v382
  %v463 = vpack.c.b16 %v391, %v383
  %v464 = vpack.c.b16 %v392, %v384
  %v465 = vpack.c.b16 %v393, %v385
  %v466 = vpack.c.b16 %v394, %v386
  %v467 = vpack.c.b16 %v395, %v387
  %v468 = vpack.c.b16 %v404, %v396
  %v469 = vpack.c.b16 %v405, %v397
  %v470 = vpack.c.b16 %v406, %v398
  %v471 = vpack.c.b16 %v407, %v399
  %v472 = vpack.c.b16 %v408, %v400
  %v473 = vpack.c.b16 %v409, %v401
  %v474 = vpack.c.b16 %v410, %v402
  %v475 = vpack.c.b16 %v411, %v403
  %v668 = vunpack.c.l.b16 %v85
  %v669 = vunpack.c.l.b16 %v86
  %v670 = vunpack.c.l.b16 %v87
  %v671 = vunpack.c.l.b16 %v88
  %v672 = vunpack.c.l.b16 %v89
  %v673 = vunpack.c.l.b16 %v90
  %v674 = vunpack.c.l.b16 %v91
  %v675 = vunpack.c.l.b16 %v92
  %v676 = vunpack.c.l.b16 %v93
  %v677 = vunpack.c.l.b16 %v94
  %v678 = vunpack.c.l.b16 %v95
  %v679 = vunpack.c.l.b16 %v96
  %v680 = vunpack.c.l.b16 %v97
  %v681 = vunpack.c.l.b16 %v98
  %v682 = vunpack.c.l.b16 %v99
  %v683 = vunpack.c.l.b16 %v100
  %v684 = vunpack.c.l.b16 %v101
  %v685 = vunpack.c.l.b16 %v102
  %v686 = vunpack.c.l.b16 %v103
  %v687 = vunpack.c.l.b16 %v104
  %v688 = vunpack.c.l.b16 %v105
  %v689 = vunpack.c.l.b16 %v106
  %v690 = vunpack.c.l.b16 %v107
  %v691 = vunpack.c.l.b16 %v108
  %v692 = vunpack.c.l.b16 %v109
  %v693 = vunpack.c.l.b16 %v110
  %v694 = vunpack.c.l.b16 %v111
  %v695 = vunpack.c.l.b16 %v112
  %v696 = vunpack.c.l.b16 %v113
  %v697 = vunpack.c.l.b16 %v114
  %v698 = vunpack.c.l.b16 %v115
  %v699 = vunpack.c.l.b16 %v116
  %v700 = vunpack.c.l.b16 %v117
  %v701 = vunpack.c.l.b16 %v118
  %v702 = vunpack.c.l.b16 %v119
  %v703 = vunpack.c.l.b16 %v120
  %v704 = vunpack.c.l.b16 %v121
  %v705 = vunpack.c.l.b16 %v122
  %v706 = vunpack.c.l.b16 %v123
  %v707 = vunpack.c.l.b16 %v124
  %v708 = vunpack.c.l.b16 %v125
  %v709 = vunpack.c.l.b16 %v126
  %v710 = vunpack.c.l.b16 %v127
  %v711 = vunpack.c.l.b16 %v128
  %v712 = vunpack.c.l.b16 %v129
  %v713 = vunpack.c.l.b16 %v130
  %v714 = vunpack.c.l.b16 %v131
  %v715 = vunpack.c.l.b16 %v132
  %v716 = vunpack.c.l.b16 %v133
  %v717 = vunpack.c.l.b16 %v134
  %v718 = vunpack.c.l.b16 %v135
  %v719 = vunpack.c.l.b16 %v136
  %v720 = vunpack.c.l.b16 %v137
  %v721 = vunpack.c.l.b16 %v138
  %v722 = vunpack.c.l.b16 %v139
  %v723 = vunpack.c.l.b16 %v140
  %v724 = vunpack.c.l.b16 %v141
  %v725 = vunpack.c.l.b16 %v142
  %v726 = vunpack.c.l.b16 %v143
  %v727 = vunpack.c.l.b16 %v144
  %v728 = vunpack.c.l.b16 %v145
  %v729 = vunpack.c.l.b16 %v146
  %v730 = vunpack.c.l.b16 %v147
  %v731 = vunpack.c.l.b16 %v148
  %v732 = vunpack.c.l.b16 %v149
  %v733 = vunpack.c.l.b16 %v150
  %v734 = vunpack.c.l.b16 %v151
  %v735 = vunpack.c.l.b16 %v152
  %v736 = vunpack.c.l.b16 %v153
  %v737 = vunpack.c.l.b16 %v154
  %v738 = vunpack.c.l.b16 %v155
  %v739 = vunpack.c.l.b16 %v156
  %v740 = vunpack.c.l.b16 %v157
  %v741 = vunpack.c.l.b16 %v158
  %v742 = vunpack.c.l.b16 %v159
  %v743 = vunpack.c.l.b16 %v160
  %v744 = vunpack.c.l.b16 %v161
  %v745 = vunpack.c.l.b16 %v162
  %v746 = vunpack.c.l.b16 %v163
  %v747 = vunpack.c.l.b16 %v164
  %v748 = vunpack.c.l.b16 %v165
  %v749 = vunpack.c.l.b16 %v166
  %v750 = vunpack.c.l.b16 %v167
  %v751 = vunpack.c.l.b16 %v168
  %v752 = vunpack.c.l.b16 %v169
  %v753 = vunpack.c.l.b16 %v170
  %v754 = vunpack.c.l.b16 %v171
  %v755 = vunpack.c.l.b16 %v172
  %v756 = vunpack.c.l.b16 %v173
  %v757 = vunpack.c.l.b16 %v174
  %v758 = vunpack.c.l.b16 %v175
  %v759 = vunpack.c.l.b16 %v176
  %v760 = vunpack.c.l.b16 %v177
  %v761 = vunpack.c.l.b16 %v178
  %v762 = vunpack.c.l.b16 %v179
  %v763 = vunpack.c.l.b16 %v180
  %v764 = vunpack.c.l.b16 %v181
  %v765 = vunpack.c.l.b16 %v182
  %v766 = vunpack.c.l.b16 %v183
  %v767 = vunpack.c.l.b16 %v184
  %v768 = vunpack.c.l.b16 %v185
  %v769 = vunpack.c.l.b16 %v186
  %v770 = vunpack.c.l.b16 %v187
  %v771 = vunpack.c.l.b16 %v188
  %v772 = vunpack.c.l.b16 %v189
  %v773 = vunpack.c.l.b16 %v190
  %v774 = vunpack.c.l.b16 %v191
  %v775 = vunpack.c.l.b16 %v192
  %v776 = vunpack.c.l.b16 %v193
  %v777 = vunpack.c.l.b16 %v194
  %v778 = vunpack.c.l.b16 %v195
  %v779 = vunpack.c.l.b16 %v196
  %v780 = vunpack.c.l.b16 %v197
  %v781 = vunpack.c.l.b16 %v198
  %v782 = vunpack.c.l.b16 %v199
  %v783 = vunpack.c.l.b16 %v200
  %v784 = vunpack.c.l.b16 %v201
  %v785 = vunpack.c.l.b16 %v202
  %v786 = vunpack.c.l.b16 %v203
  %v787 = vunpack.c.l.b16 %v204
  %v788 = vunpack.c.l.b16 %v205
  %v789 = vunpack.c.l.b16 %v206
  %v790 = vunpack.c.l.b16 %v207
  %v791 = vunpack.c.l.b16 %v208
  %v792 = vunpack.c.l.b16 %v209
  %v793 = vunpack.c.l.b16 %v210
  %v794 = vunpack.c.l.b16 %v211
  %v795 = vunpack.c.l.b16 %v212
  %v796 = vpack.c.b16 %v669, %v668
  %v797 = vpack.c.b16 %v671, %v670
  %v798 = vpack.c.b16 %v673, %v672
  %v799 = vpack.c.b16 %v675, %v674
  %v800 = vpack.c.b16 %v677, %v676
  %v801 = vpack.c.b16 %v679, %v678
  %v802 = vpack.c.b16 %v681, %v680
  %v803 = vpack.c.b16 %v683, %v682
  %v804 = vpack.c.b16 %v685, %v684
  %v805 = vpack.c.b16 %v687, %v686
  %v806 = vpack.c.b16 %v689, %v688
  %v807 = vpack.c.b16 %v691, %v690
  %v808 = vpack.c.b16 %v693, %v692
  %v809 = vpack.c.b16 %v695, %v694
  %v810 = vpack.c.b16 %v697, %v696
  %v811 = vpack.c.b16 %v699, %v698
  %v812 = vpack.c.b16 %v701, %v700
  %v813 = vpack.c.b16 %v703, %v702
  %v814 = vpack.c.b16 %v705, %v704
  %v815 = vpack.c.b16 %v707, %v706
  %v816 = vpack.c.b16 %v709, %v708
  %v817 = vpack.c.b16 %v711, %v710
  %v818 = vpack.c.b16 %v713, %v712
  %v819 = vpack.c.b16 %v715, %v714
  %v820 = vpack.c.b16 %v717, %v716
  %v821 = vpack.c.b16 %v719, %v718
  %v822 = vpack.c.b16 %v721, %v720
  %v823 = vpack.c.b16 %v723, %v722
  %v824 = vpack.c.b16 %v725, %v724
  %v825 = vpack.c.b16 %v727, %v726
  %v826 = vpack.c.b16 %v729, %v728
  %v827 = vpack.c.b16 %v731, %v730
  %v828 = vpack.c.b16 %v733, %v732
  %v829 = vpack.c.b16 %v735, %v734
  %v830 = vpack.c.b16 %v737, %v736
  %v831 = vpack.c.b16 %v739, %v738
  %v832 = vpack.c.b16 %v741, %v740
  %v833 = vpack.c.b16 %v743, %v742
  %v834 = vpack.c.b16 %v745, %v744
  %v835 = vpack.c.b16 %v747, %v746
  %v836 = vpack.c.b16 %v749, %v748
  %v837 = vpack.c.b16 %v751, %v750
  %v838 = vpack.c.b16 %v753, %v752
  %v839 = vpack.c.b16 %v755, %v754
  %v840 = vpack.c.b16 %v757, %v756
  %v841 = vpack.c.b16 %v759, %v758
  %v842 = vpack.c.b16 %v761, %v760
  %v843 = vpack.c.b16 %v763, %v762
  %v844 = vpack.c.b16 %v765, %v764
  %v845 = vpack.c.b16 %v767, %v766
  %v846 = vpack.c.b16 %v769, %v768
  %v847 = vpack.c.b16 %v771, %v770
  %v848 = vpack.c.b16 %v773, %v772
  %v849 = vpack.c.b16 %v775, %v774
  %v850 = vpack.c.b16 %v777, %v776
  %v851 = vpack.c.b16 %v779, %v778
  %v852 = vpack.c.b16 %v781, %v780
  %v853 = vpack.c.b16 %v783, %v782
  %v854 = vpack.c.b16 %v785, %v784
  %v855 = vpack.c.b16 %v787, %v786
  %v856 = vpack.c.b16 %v789, %v788
  %v857 = vpack.c.b16 %v791, %v790
  %v858 = vpack.c.b16 %v793, %v792
  %v859 = vpack.c.b16 %v795, %v794
  %924 = vmatprep.subr.bf16.mxu0 0
  %925 = vmatpush1.bf16.msra.mxu0 %v803
  %926 = vmatprep.subr.bf16.mxu0 0
  %927 = vmatpush1.bf16.msra.mxu0 %v802
  %928 = vmatprep.subr.bf16.mxu0 0
  %929 = vmatpush1.bf16.msra.mxu0 %v801
  %930 = vmatprep.subr.bf16.mxu0 0
  %931 = vmatpush1.bf16.msra.mxu0 %v800
  %932 = vmatprep.subr.bf16.mxu0 0
  %933 = vmatpush1.bf16.msra.mxu0 %v799
  %934 = vmatprep.subr.bf16.mxu0 0
  %935 = vmatpush1.bf16.msra.mxu0 %v798
  %936 = vmatprep.subr.bf16.mxu0 0
  %937 = vmatpush1.bf16.msra.mxu0 %v797
  %938 = vmatprep.subr.bf16.mxu0 0
  %939 = vmatpush1.bf16.msra.mxu0 %v796
  %940 = vmatprep.subr.bf16.mxu0 0
  %941 = vmatpush2.bf16.msra.mxu0 %v811
  %942 = vmatprep.subr.bf16.mxu0 0
  %943 = vmatpush2.bf16.msra.mxu0 %v810
  %944 = vmatprep.subr.bf16.mxu0 0
  %945 = vmatpush2.bf16.msra.mxu0 %v809
  %946 = vmatprep.subr.bf16.mxu0 0
  %947 = vmatpush2.bf16.msra.mxu0 %v808
  %948 = vmatprep.subr.bf16.mxu0 0
  %949 = vmatpush2.bf16.msra.mxu0 %v807
  %950 = vmatprep.subr.bf16.mxu0 0
  %951 = vmatpush2.bf16.msra.mxu0 %v806
  %952 = vmatprep.subr.bf16.mxu0 0
  %953 = vmatpush2.bf16.msra.mxu0 %v805
  %954 = vmatprep.subr.bf16.mxu0 0
  %955 = vmatpush2.bf16.msra.mxu0 %v804
  %956 = vmatprep.mubr.bf16.mxu0 %v413
  %957 = vmatmul.mubr.bf16.gmra.mxu0 %v412
  %v958 = vpop.f32.mrf.mxu0
  %v959 = vadd.f32 %v218, %v958
  %v960 = vpop.f32.mrf.mxu0
  %v961 = vpop.f32.mrf.mxu0
  %v962 = vadd.f32 %v218, %v961
  %v963 = vpop.f32.mrf.mxu0
  %964 = vmatprep.mubr.bf16.mxu0 %v421
  %965 = vmatmul.mubr.bf16.gmra.mxu0 %v420
  %v966 = vpop.f32.mrf.mxu0
  %v967 = vadd.f32 %v218, %v966
  %v968 = vpop.f32.mrf.mxu0
  %v969 = vpop.f32.mrf.mxu0
  %v970 = vadd.f32 %v218, %v969
  %v971 = vpop.f32.mrf.mxu0
  %972 = vmatprep.mubr.bf16.mxu0 %v429
  %973 = vmatmul.mubr.bf16.gmra.mxu0 %v428
  %v974 = vpop.f32.mrf.mxu0
  %v975 = vadd.f32 %v218, %v974
  %v976 = vpop.f32.mrf.mxu0
  %v977 = vpop.f32.mrf.mxu0
  %v978 = vadd.f32 %v218, %v977
  %v979 = vpop.f32.mrf.mxu0
  %980 = vmatprep.mubr.bf16.mxu0 %v437
  %981 = vmatmul.mubr.bf16.gmra.mxu0 %v436
  %v982 = vpop.f32.mrf.mxu0
  %v983 = vadd.f32 %v218, %v982
  %v984 = vpop.f32.mrf.mxu0
  %v985 = vpop.f32.mrf.mxu0
  %v986 = vadd.f32 %v218, %v985
  %v987 = vpop.f32.mrf.mxu0
  %988 = vmatprep.mubr.bf16.mxu0 %v445
  %989 = vmatmul.mubr.bf16.gmra.mxu0 %v444
  %v990 = vpop.f32.mrf.mxu0
  %v991 = vadd.f32 %v218, %v990
  %v992 = vpop.f32.mrf.mxu0
  %v993 = vpop.f32.mrf.mxu0
  %v994 = vadd.f32 %v218, %v993
  %v995 = vpop.f32.mrf.mxu0
  %996 = vmatprep.mubr.bf16.mxu0 %v453
  %997 = vmatmul.mubr.bf16.gmra.mxu0 %v452
  %v998 = vpop.f32.mrf.mxu0
  %v999 = vadd.f32 %v218, %v998
  %v1000 = vpop.f32.mrf.mxu0
  %v1001 = vpop.f32.mrf.mxu0
  %v1002 = vadd.f32 %v218, %v1001
  %v1003 = vpop.f32.mrf.mxu0
  %1004 = vmatprep.mubr.bf16.mxu0 %v461
  %1005 = vmatmul.mubr.bf16.gmra.mxu0 %v460
  %v1006 = vpop.f32.mrf.mxu0
  %v1007 = vadd.f32 %v218, %v1006
  %v1008 = vpop.f32.mrf.mxu0
  %v1009 = vpop.f32.mrf.mxu0
  %v1010 = vadd.f32 %v218, %v1009
  %v1011 = vpop.f32.mrf.mxu0
  %1012 = vmatprep.mubr.bf16.mxu0 %v469
  %1013 = vmatmul.mubr.bf16.gmra.mxu0 %v468
  %v1014 = vpop.f32.mrf.mxu0
  %v1015 = vadd.f32 %v218, %v1014
  %v1016 = vpop.f32.mrf.mxu0
  %v1017 = vpop.f32.mrf.mxu0
  %v1018 = vadd.f32 %v218, %v1017
  %v1019 = vpop.f32.mrf.mxu0
  %1020 = vdwg.mxu0
  %1021 = vmatprep.subr.bf16.mxu0 0
  %1022 = vmatpush1.bf16.msra.mxu0 %v819
  %1023 = vmatprep.subr.bf16.mxu0 0
  %1024 = vmatpush1.bf16.msra.mxu0 %v818
  %1025 = vmatprep.subr.bf16.mxu0 0
  %1026 = vmatpush1.bf16.msra.mxu0 %v817
  %1027 = vmatprep.subr.bf16.mxu0 0
  %1028 = vmatpush1.bf16.msra.mxu0 %v816
  %1029 = vmatprep.subr.bf16.mxu0 0
  %1030 = vmatpush1.bf16.msra.mxu0 %v815
  %1031 = vmatprep.subr.bf16.mxu0 0
  %1032 = vmatpush1.bf16.msra.mxu0 %v814
  %1033 = vmatprep.subr.bf16.mxu0 0
  %1034 = vmatpush1.bf16.msra.mxu0 %v813
  %1035 = vmatprep.subr.bf16.mxu0 0
  %1036 = vmatpush1.bf16.msra.mxu0 %v812
  %1037 = vmatprep.subr.bf16.mxu0 0
  %1038 = vmatpush2.bf16.msra.mxu0 %v827
  %1039 = vmatprep.subr.bf16.mxu0 0
  %1040 = vmatpush2.bf16.msra.mxu0 %v826
  %1041 = vmatprep.subr.bf16.mxu0 0
  %1042 = vmatpush2.bf16.msra.mxu0 %v825
  %1043 = vmatprep.subr.bf16.mxu0 0
  %1044 = vmatpush2.bf16.msra.mxu0 %v824
  %1045 = vmatprep.subr.bf16.mxu0 0
  %1046 = vmatpush2.bf16.msra.mxu0 %v823
  %1047 = vmatprep.subr.bf16.mxu0 0
  %1048 = vmatpush2.bf16.msra.mxu0 %v822
  %1049 = vmatprep.subr.bf16.mxu0 0
  %1050 = vmatpush2.bf16.msra.mxu0 %v821
  %1051 = vmatprep.subr.bf16.mxu0 0
  %1052 = vmatpush2.bf16.msra.mxu0 %v820
  %1053 = vmatprep.mubr.bf16.mxu0 %v415
  %1054 = vmatmul.mubr.bf16.gmra.mxu0 %v414
  %v1055 = vpop.f32.mrf.mxu0
  %v1056 = vadd.f32 %v959, %v1055
  %v1057 = vpop.f32.mrf.mxu0
  %v1058 = vpop.f32.mrf.mxu0
  %v1059 = vadd.f32 %v962, %v1058
  %v1060 = vpop.f32.mrf.mxu0
  %1061 = vmatprep.mubr.bf16.mxu0 %v423
  %1062 = vmatmul.mubr.bf16.gmra.mxu0 %v422
  %v1063 = vpop.f32.mrf.mxu0
  %v1064 = vadd.f32 %v967, %v1063
  %v1065 = vpop.f32.mrf.mxu0
  %v1066 = vpop.f32.mrf.mxu0
  %v1067 = vadd.f32 %v970, %v1066
  %v1068 = vpop.f32.mrf.mxu0
  %1069 = vmatprep.mubr.bf16.mxu0 %v431
  %1070 = vmatmul.mubr.bf16.gmra.mxu0 %v430
  %v1071 = vpop.f32.mrf.mxu0
  %v1072 = vadd.f32 %v975, %v1071
  %v1073 = vpop.f32.mrf.mxu0
  %v1074 = vpop.f32.mrf.mxu0
  %v1075 = vadd.f32 %v978, %v1074
  %v1076 = vpop.f32.mrf.mxu0
  %1077 = vmatprep.mubr.bf16.mxu0 %v439
  %1078 = vmatmul.mubr.bf16.gmra.mxu0 %v438
  %v1079 = vpop.f32.mrf.mxu0
  %v1080 = vadd.f32 %v983, %v1079
  %v1081 = vpop.f32.mrf.mxu0
  %v1082 = vpop.f32.mrf.mxu0
  %v1083 = vadd.f32 %v986, %v1082
  %v1084 = vpop.f32.mrf.mxu0
  %1085 = vmatprep.mubr.bf16.mxu0 %v447
  %1086 = vmatmul.mubr.bf16.gmra.mxu0 %v446
  %v1087 = vpop.f32.mrf.mxu0
  %v1088 = vadd.f32 %v991, %v1087
  %v1089 = vpop.f32.mrf.mxu0
  %v1090 = vpop.f32.mrf.mxu0
  %v1091 = vadd.f32 %v994, %v1090
  %v1092 = vpop.f32.mrf.mxu0
  %1093 = vmatprep.mubr.bf16.mxu0 %v455
  %1094 = vmatmul.mubr.bf16.gmra.mxu0 %v454
  %v1095 = vpop.f32.mrf.mxu0
  %v1096 = vadd.f32 %v999, %v1095
  %v1097 = vpop.f32.mrf.mxu0
  %v1098 = vpop.f32.mrf.mxu0
  %v1099 = vadd.f32 %v1002, %v1098
  %v1100 = vpop.f32.mrf.mxu0
  %1101 = vmatprep.mubr.bf16.mxu0 %v463
  %1102 = vmatmul.mubr.bf16.gmra.mxu0 %v462
  %v1103 = vpop.f32.mrf.mxu0
  %v1104 = vadd.f32 %v1007, %v1103
  %v1105 = vpop.f32.mrf.mxu0
  %v1106 = vpop.f32.mrf.mxu0
  %v1107 = vadd.f32 %v1010, %v1106
  %v1108 = vpop.f32.mrf.mxu0
  %1109 = vmatprep.mubr.bf16.mxu0 %v471
  %1110 = vmatmul.mubr.bf16.gmra.mxu0 %v470
  %v1111 = vpop.f32.mrf.mxu0
  %v1112 = vadd.f32 %v1015, %v1111
  %v1113 = vpop.f32.mrf.mxu0
  %v1114 = vpop.f32.mrf.mxu0
  %v1115 = vadd.f32 %v1018, %v1114
  %v1116 = vpop.f32.mrf.mxu0
  %1117 = vdwg.mxu0
  %1118 = vmatprep.subr.bf16.mxu0 0
  %1119 = vmatpush1.bf16.msra.mxu0 %v835
  %1120 = vmatprep.subr.bf16.mxu0 0
  %1121 = vmatpush1.bf16.msra.mxu0 %v834
  %1122 = vmatprep.subr.bf16.mxu0 0
  %1123 = vmatpush1.bf16.msra.mxu0 %v833
  %1124 = vmatprep.subr.bf16.mxu0 0
  %1125 = vmatpush1.bf16.msra.mxu0 %v832
  %1126 = vmatprep.subr.bf16.mxu0 0
  %1127 = vmatpush1.bf16.msra.mxu0 %v831
  %1128 = vmatprep.subr.bf16.mxu0 0
  %1129 = vmatpush1.bf16.msra.mxu0 %v830
  %1130 = vmatprep.subr.bf16.mxu0 0
  %1131 = vmatpush1.bf16.msra.mxu0 %v829
  %1132 = vmatprep.subr.bf16.mxu0 0
  %1133 = vmatpush1.bf16.msra.mxu0 %v828
  %1134 = vmatprep.subr.bf16.mxu0 0
  %1135 = vmatpush2.bf16.msra.mxu0 %v843
  %1136 = vmatprep.subr.bf16.mxu0 0
  %1137 = vmatpush2.bf16.msra.mxu0 %v842
  %1138 = vmatprep.subr.bf16.mxu0 0
  %1139 = vmatpush2.bf16.msra.mxu0 %v841
  %1140 = vmatprep.subr.bf16.mxu0 0
  %1141 = vmatpush2.bf16.msra.mxu0 %v840
  %1142 = vmatprep.subr.bf16.mxu0 0
  %1143 = vmatpush2.bf16.msra.mxu0 %v839
  %1144 = vmatprep.subr.bf16.mxu0 0
  %1145 = vmatpush2.bf16.msra.mxu0 %v838
  %1146 = vmatprep.subr.bf16.mxu0 0
  %1147 = vmatpush2.bf16.msra.mxu0 %v837
  %1148 = vmatprep.subr.bf16.mxu0 0
  %1149 = vmatpush2.bf16.msra.mxu0 %v836
  %1150 = vmatprep.mubr.bf16.mxu0 %v417
  %1151 = vmatmul.mubr.bf16.gmra.mxu0 %v416
  %v1152 = vpop.f32.mrf.mxu0
  %v1153 = vadd.f32 %v1056, %v1152
  %v1154 = vpop.f32.mrf.mxu0
  %v1155 = vpop.f32.mrf.mxu0
  %v1156 = vadd.f32 %v1059, %v1155
  %v1157 = vpop.f32.mrf.mxu0
  %1158 = vmatprep.mubr.bf16.mxu0 %v425
  %1159 = vmatmul.mubr.bf16.gmra.mxu0 %v424
  %v1160 = vpop.f32.mrf.mxu0
  %v1161 = vadd.f32 %v1064, %v1160
  %v1162 = vpop.f32.mrf.mxu0
  %v1163 = vpop.f32.mrf.mxu0
  %v1164 = vadd.f32 %v1067, %v1163
  %v1165 = vpop.f32.mrf.mxu0
  %1166 = vmatprep.mubr.bf16.mxu0 %v433
  %1167 = vmatmul.mubr.bf16.gmra.mxu0 %v432
  %v1168 = vpop.f32.mrf.mxu0
  %v1169 = vadd.f32 %v1072, %v1168
  %v1170 = vpop.f32.mrf.mxu0
  %v1171 = vpop.f32.mrf.mxu0
  %v1172 = vadd.f32 %v1075, %v1171
  %v1173 = vpop.f32.mrf.mxu0
  %1174 = vmatprep.mubr.bf16.mxu0 %v441
  %1175 = vmatmul.mubr.bf16.gmra.mxu0 %v440
  %v1176 = vpop.f32.mrf.mxu0
  %v1177 = vadd.f32 %v1080, %v1176
  %v1178 = vpop.f32.mrf.mxu0
  %v1179 = vpop.f32.mrf.mxu0
  %v1180 = vadd.f32 %v1083, %v1179
  %v1181 = vpop.f32.mrf.mxu0
  %1182 = vmatprep.mubr.bf16.mxu0 %v449
  %1183 = vmatmul.mubr.bf16.gmra.mxu0 %v448
  %v1184 = vpop.f32.mrf.mxu0
  %v1185 = vadd.f32 %v1088, %v1184
  %v1186 = vpop.f32.mrf.mxu0
  %v1187 = vpop.f32.mrf.mxu0
  %v1188 = vadd.f32 %v1091, %v1187
  %v1189 = vpop.f32.mrf.mxu0
  %1190 = vmatprep.mubr.bf16.mxu0 %v457
  %1191 = vmatmul.mubr.bf16.gmra.mxu0 %v456
  %v1192 = vpop.f32.mrf.mxu0
  %v1193 = vadd.f32 %v1096, %v1192
  %v1194 = vpop.f32.mrf.mxu0
  %v1195 = vpop.f32.mrf.mxu0
  %v1196 = vadd.f32 %v1099, %v1195
  %v1197 = vpop.f32.mrf.mxu0
  %1198 = vmatprep.mubr.bf16.mxu0 %v465
  %1199 = vmatmul.mubr.bf16.gmra.mxu0 %v464
  %v1200 = vpop.f32.mrf.mxu0
  %v1201 = vadd.f32 %v1104, %v1200
  %v1202 = vpop.f32.mrf.mxu0
  %v1203 = vpop.f32.mrf.mxu0
  %v1204 = vadd.f32 %v1107, %v1203
  %v1205 = vpop.f32.mrf.mxu0
  %1206 = vmatprep.mubr.bf16.mxu0 %v473
  %1207 = vmatmul.mubr.bf16.gmra.mxu0 %v472
  %v1208 = vpop.f32.mrf.mxu0
  %v1209 = vadd.f32 %v1112, %v1208
  %v1210 = vpop.f32.mrf.mxu0
  %v1211 = vpop.f32.mrf.mxu0
  %v1212 = vadd.f32 %v1115, %v1211
  %v1213 = vpop.f32.mrf.mxu0
  %1214 = vdwg.mxu0
  %1215 = vmatprep.subr.bf16.mxu0 0
  %1216 = vmatpush1.bf16.msra.mxu0 %v851
  %1217 = vmatprep.subr.bf16.mxu0 0
  %1218 = vmatpush1.bf16.msra.mxu0 %v850
  %1219 = vmatprep.subr.bf16.mxu0 0
  %1220 = vmatpush1.bf16.msra.mxu0 %v849
  %1221 = vmatprep.subr.bf16.mxu0 0
  %1222 = vmatpush1.bf16.msra.mxu0 %v848
  %1223 = vmatprep.subr.bf16.mxu0 0
  %1224 = vmatpush1.bf16.msra.mxu0 %v847
  %1225 = vmatprep.subr.bf16.mxu0 0
  %1226 = vmatpush1.bf16.msra.mxu0 %v846
  %1227 = vmatprep.subr.bf16.mxu0 0
  %1228 = vmatpush1.bf16.msra.mxu0 %v845
  %1229 = vmatprep.subr.bf16.mxu0 0
  %1230 = vmatpush1.bf16.msra.mxu0 %v844
  %1231 = vmatprep.subr.bf16.mxu0 0
  %1232 = vmatpush2.bf16.msra.mxu0 %v859
  %1233 = vmatprep.subr.bf16.mxu0 0
  %1234 = vmatpush2.bf16.msra.mxu0 %v858
  %1235 = vmatprep.subr.bf16.mxu0 0
  %1236 = vmatpush2.bf16.msra.mxu0 %v857
  %1237 = vmatprep.subr.bf16.mxu0 0
  %1238 = vmatpush2.bf16.msra.mxu0 %v856
  %1239 = vmatprep.subr.bf16.mxu0 0
  %1240 = vmatpush2.bf16.msra.mxu0 %v855
  %1241 = vmatprep.subr.bf16.mxu0 0
  %1242 = vmatpush2.bf16.msra.mxu0 %v854
  %1243 = vmatprep.subr.bf16.mxu0 0
  %1244 = vmatpush2.bf16.msra.mxu0 %v853
  %1245 = vmatprep.subr.bf16.mxu0 0
  %1246 = vmatpush2.bf16.msra.mxu0 %v852
  %1247 = vmatprep.mubr.bf16.mxu0 %v419
  %1248 = vmatmul.mubr.bf16.gmra.mxu0 %v418
  %v1249 = vpop.f32.mrf.mxu0
  %v1250 = vadd.f32 %v1153, %v1249
  %v1251 = vpop.f32.mrf.mxu0
  %v1252 = vpop.f32.mrf.mxu0
  %v1253 = vadd.f32 %v1156, %v1252
  %v1254 = vpop.f32.mrf.mxu0
  %1255 = vmatprep.mubr.bf16.mxu0 %v427
  %1256 = vmatmul.mubr.bf16.gmra.mxu0 %v426
  %v1257 = vpop.f32.mrf.mxu0
  %v1258 = vadd.f32 %v1161, %v1257
  %v1259 = vpop.f32.mrf.mxu0
  %v1260 = vpop.f32.mrf.mxu0
  %v1261 = vadd.f32 %v1164, %v1260
  %v1262 = vpop.f32.mrf.mxu0
  %1263 = vmatprep.mubr.bf16.mxu0 %v435
  %1264 = vmatmul.mubr.bf16.gmra.mxu0 %v434
  %v1265 = vpop.f32.mrf.mxu0
  %v1266 = vadd.f32 %v1169, %v1265
  %v1267 = vpop.f32.mrf.mxu0
  %v1268 = vpop.f32.mrf.mxu0
  %v1269 = vadd.f32 %v1172, %v1268
  %v1270 = vpop.f32.mrf.mxu0
  %1271 = vmatprep.mubr.bf16.mxu0 %v443
  %1272 = vmatmul.mubr.bf16.gmra.mxu0 %v442
  %v1273 = vpop.f32.mrf.mxu0
  %v1274 = vadd.f32 %v1177, %v1273
  %v1275 = vpop.f32.mrf.mxu0
  %v1276 = vpop.f32.mrf.mxu0
  %v1277 = vadd.f32 %v1180, %v1276
  %v1278 = vpop.f32.mrf.mxu0
  %1279 = vmatprep.mubr.bf16.mxu0 %v451
  %1280 = vmatmul.mubr.bf16.gmra.mxu0 %v450
  %v1281 = vpop.f32.mrf.mxu0
  %v1282 = vadd.f32 %v1185, %v1281
  %v1283 = vpop.f32.mrf.mxu0
  %v1284 = vpop.f32.mrf.mxu0
  %v1285 = vadd.f32 %v1188, %v1284
  %v1286 = vpop.f32.mrf.mxu0
  %1287 = vmatprep.mubr.bf16.mxu0 %v459
  %1288 = vmatmul.mubr.bf16.gmra.mxu0 %v458
  %v1289 = vpop.f32.mrf.mxu0
  %v1290 = vadd.f32 %v1193, %v1289
  %v1291 = vpop.f32.mrf.mxu0
  %v1292 = vpop.f32.mrf.mxu0
  %v1293 = vadd.f32 %v1196, %v1292
  %v1294 = vpop.f32.mrf.mxu0
  %1295 = vmatprep.mubr.bf16.mxu0 %v467
  %1296 = vmatmul.mubr.bf16.gmra.mxu0 %v466
  %v1297 = vpop.f32.mrf.mxu0
  %v1298 = vadd.f32 %v1201, %v1297
  %v1299 = vpop.f32.mrf.mxu0
  %v1300 = vpop.f32.mrf.mxu0
  %v1301 = vadd.f32 %v1204, %v1300
  %v1302 = vpop.f32.mrf.mxu0
  %1303 = vmatprep.mubr.bf16.mxu0 %v475
  %1304 = vmatmul.mubr.bf16.gmra.mxu0 %v474
  %v1305 = vpop.f32.mrf.mxu0
  %v1306 = vadd.f32 %v1209, %v1305
  %v1307 = vpop.f32.mrf.mxu0
  %v1308 = vpop.f32.mrf.mxu0
  %v1309 = vadd.f32 %v1212, %v1308
  %v1310 = vpop.f32.mrf.mxu0
  %1311 = vdwg.mxu0
  %v1312 = vadd.f32 %v1250, %v1253
  %v1313 = vadd.f32 %v1312, %v1258
  %v1314 = vadd.f32 %v1313, %v1261
  %v1315 = vadd.f32 %v1314, %v1266
  %v1316 = vadd.f32 %v1315, %v1269
  %v1317 = vadd.f32 %v1316, %v1274
  %v1318 = vadd.f32 %v1317, %v1277
  %v1319 = vadd.f32 %v1318, %v1282
  %v1320 = vadd.f32 %v1319, %v1285
  %v1321 = vadd.f32 %v1320, %v1290
  %v1322 = vadd.f32 %v1321, %v1293
  %v1323 = vadd.f32 %v1322, %v1298
  %v1324 = vadd.f32 %v1323, %v1301
  %v1325 = vadd.f32 %v1324, %v1306
  %v1326 = vadd.f32 %v1325, %v1309
  %v1327 = vrot.slane %v1326, 4
  %v1328 = vadd.f32 %v1326, %v1327
  %v1329 = vrot.slane %v1328, 2
  %v1330 = vadd.f32 %v1328, %v1329
  %v1331 = vrot.slane %v1330, 1
  %v1332 = vadd.f32 %v1330, %v1331
  %v1333 = vmul.f32 %v1332, 0.0078125
  %v1334 = vmul.f32 %v1250, %v1250
  %v1335 = vmul.f32 %v1253, %v1253
  %v1336 = vmul.f32 %v1258, %v1258
  %v1337 = vmul.f32 %v1261, %v1261
  %v1338 = vmul.f32 %v1266, %v1266
  %v1339 = vmul.f32 %v1269, %v1269
  %v1340 = vmul.f32 %v1274, %v1274
  %v1341 = vmul.f32 %v1277, %v1277
  %v1342 = vmul.f32 %v1282, %v1282
  %v1343 = vmul.f32 %v1285, %v1285
  %v1344 = vmul.f32 %v1290, %v1290
  %v1345 = vmul.f32 %v1293, %v1293
  %v1346 = vmul.f32 %v1298, %v1298
  %v1347 = vmul.f32 %v1301, %v1301
  %v1348 = vmul.f32 %v1306, %v1306
  %v1349 = vmul.f32 %v1309, %v1309
  %v1350 = vadd.f32 %v1334, %v1335
  %v1351 = vadd.f32 %v1350, %v1336
  %v1352 = vadd.f32 %v1351, %v1337
  %v1353 = vadd.f32 %v1352, %v1338
  %v1354 = vadd.f32 %v1353, %v1339
  %v1355 = vadd.f32 %v1354, %v1340
  %v1356 = vadd.f32 %v1355, %v1341
  %v1357 = vadd.f32 %v1356, %v1342
  %v1358 = vadd.f32 %v1357, %v1343
  %v1359 = vadd.f32 %v1358, %v1344
  %v1360 = vadd.f32 %v1359, %v1345
  %v1361 = vadd.f32 %v1360, %v1346
  %v1362 = vadd.f32 %v1361, %v1347
  %v1363 = vadd.f32 %v1362, %v1348
  %v1364 = vadd.f32 %v1363, %v1349
  %v1365 = vrot.slane %v1364, 4
  %v1366 = vadd.f32 %v1364, %v1365
  %v1367 = vrot.slane %v1366, 2
  %v1368 = vadd.f32 %v1366, %v1367
  %v1369 = vrot.slane %v1368, 1
  %v1370 = vadd.f32 %v1368, %v1369
  %v1371 = vmul.f32 %v1370, 0.0078125
  %v1372 = vmul.f32 %v1333, %v1333
  %v1373 = vsub.f32 %v1371, %v1372
  %v1374 = vld [vmem:[%s3] sm:$0x1]
  %v1375 = vadd.f32 %v1373, 1e-05
  %v1376 = vrsqrt.pop %v1375
  %v1377 = vmul.f32 %v1374, %v1376
  %v1378 = vld [vmem:[%s4] sm:$0x1]
  %v1379 = vmul.f32 %v1333, %v1377
  %v1380 = vsub.f32 %v1378, %v1379
  %v1382 = vlaneseq
  %v1383 = vshrl.u32 %v1382, 7
  %v1384 = vsub.s32 0, %v1383
  %v1385 = vrot.slane %v1377, %v1384
  %v1387 = vmul.f32 %v1250, %v1385
  %v1388 = vmul.f32 %v1253, %v1385
  %v1389 = vmul.f32 %v1258, %v1385
  %v1390 = vmul.f32 %v1261, %v1385
  %v1391 = vmul.f32 %v1266, %v1385
  %v1392 = vmul.f32 %v1269, %v1385
  %v1393 = vmul.f32 %v1274, %v1385
  %v1394 = vmul.f32 %v1277, %v1385
  %v1395 = vmul.f32 %v1282, %v1385
  %v1396 = vmul.f32 %v1285, %v1385
  %v1397 = vmul.f32 %v1290, %v1385
  %v1398 = vmul.f32 %v1293, %v1385
  %v1399 = vmul.f32 %v1298, %v1385
  %v1400 = vmul.f32 %v1301, %v1385
  %v1401 = vmul.f32 %v1306, %v1385
  %v1402 = vmul.f32 %v1309, %v1385
  %v1404 = vlaneseq
  %v1405 = vshrl.u32 %v1404, 7
  %v1406 = vsub.s32 0, %v1405
  %v1407 = vrot.slane %v1380, %v1406
  %v1409 = vadd.f32 %v1387, %v1407
  %v1410 = vadd.f32 %v1388, %v1407
  %v1411 = vadd.f32 %v1389, %v1407
  %v1412 = vadd.f32 %v1390, %v1407
  %v1413 = vadd.f32 %v1391, %v1407
  %v1414 = vadd.f32 %v1392, %v1407
  %v1415 = vadd.f32 %v1393, %v1407
  %v1416 = vadd.f32 %v1394, %v1407
  %v1417 = vadd.f32 %v1395, %v1407
  %v1418 = vadd.f32 %v1396, %v1407
  %v1419 = vadd.f32 %v1397, %v1407
  %v1420 = vadd.f32 %v1398, %v1407
  %v1421 = vadd.f32 %v1399, %v1407
  %v1422 = vadd.f32 %v1400, %v1407
  %v1423 = vadd.f32 %v1401, %v1407
  %v1424 = vadd.f32 %v1402, %v1407
  %v1425 = vmul.f32 %v1409, 0.2
  %v1426 = vmul.f32 %v1410, 0.2
  %v1427 = vmul.f32 %v1411, 0.2
  %v1428 = vmul.f32 %v1412, 0.2
  %v1429 = vmul.f32 %v1413, 0.2
  %v1430 = vmul.f32 %v1414, 0.2
  %v1431 = vmul.f32 %v1415, 0.2
  %v1432 = vmul.f32 %v1416, 0.2
  %v1433 = vmul.f32 %v1417, 0.2
  %v1434 = vmul.f32 %v1418, 0.2
  %v1435 = vmul.f32 %v1419, 0.2
  %v1436 = vmul.f32 %v1420, 0.2
  %v1437 = vmul.f32 %v1421, 0.2
  %v1438 = vmul.f32 %v1422, 0.2
  %v1439 = vmul.f32 %v1423, 0.2
  %v1440 = vmul.f32 %v1424, 0.2
  %v1441 = vmax.f32 %v1409, %v1425
  %v1442 = vmax.f32 %v1410, %v1426
  %v1443 = vmax.f32 %v1411, %v1427
  %v1444 = vmax.f32 %v1412, %v1428
  %v1445 = vmax.f32 %v1413, %v1429
  %v1446 = vmax.f32 %v1414, %v1430
  %v1447 = vmax.f32 %v1415, %v1431
  %v1448 = vmax.f32 %v1416, %v1432
  %v1449 = vmax.f32 %v1417, %v1433
  %v1450 = vmax.f32 %v1418, %v1434
  %v1451 = vmax.f32 %v1419, %v1435
  %v1452 = vmax.f32 %v1420, %v1436
  %v1453 = vmax.f32 %v1421, %v1437
  %v1454 = vmax.f32 %v1422, %v1438
  %v1455 = vmax.f32 %v1423, %v1439
  %v1456 = vmax.f32 %v1424, %v1440
  %1457 = vst [vmem:[%s5] sm:$0xff] %v1441
  %1458 = vst [vmem:[%s5 + $0x8] sm:$0xff] %v1442
  %1459 = vst [vmem:[%s5 + $0x10] sm:$0xff] %v1443
  %1460 = vst [vmem:[%s5 + $0x18] sm:$0xff] %v1444
  %1461 = vst [vmem:[%s5 + $0x20] sm:$0xff] %v1445
  %1462 = vst [vmem:[%s5 + $0x28] sm:$0xff] %v1446
  %1463 = vst [vmem:[%s5 + $0x30] sm:$0xff] %v1447
  %1464 = vst [vmem:[%s5 + $0x38] sm:$0xff] %v1448
  %1465 = vst [vmem:[%s5 + $0x40] sm:$0xff] %v1449
  %1466 = vst [vmem:[%s5 + $0x48] sm:$0xff] %v1450
  %1467 = vst [vmem:[%s5 + $0x50] sm:$0xff] %v1451
  %1468 = vst [vmem:[%s5 + $0x58] sm:$0xff] %v1452
  %1469 = vst [vmem:[%s5 + $0x60] sm:$0xff] %v1453
  %1470 = vst [vmem:[%s5 + $0x68] sm:$0xff] %v1454
  %1471 = vst [vmem:[%s5 + $0x70] sm:$0xff] %v1455
  %1472 = vst [vmem:[%s5 + $0x78] sm:$0xff] %v1456
  // Predicated region
  $region22: #{discriminator_forward.9} parent=0 // pred_check
    _
  $region23: #{discriminator_forward.9} parent=0 // pred_check_branch
    %1474 = sbr.rel (0) target = $region25
  $region24: #{discriminator_forward.9} parent=0 // pred_region
    _
  $region25: #{discriminator_forward.9} parent=0 // pred_fallthru
    _
  // Predicated region
  $region26: #{discriminator_forward.9} parent=0 // pred_check
    _
  $region27: #{discriminator_forward.9} parent=0 // pred_check_branch
    %1476 = sbr.rel (0) target = $region29
  $region28: #{discriminator_forward.9} parent=0 // pred_region
    _
  $region29: #{discriminator_forward.9} parent=0 // pred_fallthru
    _

// kernel: discriminator_forward.10
$region0: #{discriminator_forward.10}
  #allocation0 [shape = 'u32[]', space=smem, size = 0x4, offset = 0x4, fixed_abs, tag = 'smem constant byte address 0x4 - core index']
  #allocation1 [shape = 'u32[144,128]{1,0:T(1,128)}', space=vmem, size = 0x12000, scoped, tag = 'internal scratch']
  %s0 = inlined_call_operand.vmem [shape: bf16[32,2048], index: 0, kind: input, shape index: {}]
  %s1 = inlined_call_operand.vmem [shape: bf16[2048,256], index: 1, kind: input, shape index: {}]
  %s2 = inlined_call_operand.vmem [shape: f32[1,256], index: 2, kind: input, shape index: {}]
  %s3 = inlined_call_operand.vmem [shape: f32[1,256], index: 3, kind: input, shape index: {}]
  %s4 = inlined_call_operand.vmem [shape: f32[1,256], index: 4, kind: input, shape index: {}]
  %s5 = inlined_call_operand.vmem [shape: f32[32,256], index: 5, kind: output, shape index: {}]
  %s6 = sld [smem:[#allocation0]]
  $region30: #{discriminator_forward.10} parent=0
    _
  %s8 = ssub.s32 1, %s6
  %s9 = scalar_select 0, %s8, %s6
  // Predicated region
  $region2: #{discriminator_forward.10} parent=0 // pred_check
    _
  $region3: #{discriminator_forward.10} parent=0 // pred_check_branch
    %11 = sbr.rel (0) target = $region5
  $region4: #{discriminator_forward.10} parent=0 // pred_region
    _
  $region5: #{discriminator_forward.10} parent=0 // pred_fallthru
    _
  // Predicated region
  $region6: #{discriminator_forward.10} parent=0 // pred_check
    _
  $region7: #{discriminator_forward.10} parent=0 // pred_check_branch
    %13 = sbr.rel (0) target = $region9
  $region8: #{discriminator_forward.10} parent=0 // pred_region
    _
  $region9: #{discriminator_forward.10} parent=0 // pred_fallthru
    _
  // Predicated region
  $region10: #{discriminator_forward.10} parent=0 // pred_check
    _
  $region11: #{discriminator_forward.10} parent=0 // pred_check_branch
    %15 = sbr.rel (0) target = $region13
  $region12: #{discriminator_forward.10} parent=0 // pred_region
    _
  $region13: #{discriminator_forward.10} parent=0 // pred_fallthru
    _
  // Predicated region
  $region14: #{discriminator_forward.10} parent=0 // pred_check
    _
  $region15: #{discriminator_forward.10} parent=0 // pred_check_branch
    %17 = sbr.rel (0) target = $region17
  $region16: #{discriminator_forward.10} parent=0 // pred_region
    _
  $region17: #{discriminator_forward.10} parent=0 // pred_fallthru
    _
  // Predicated region
  $region18: #{discriminator_forward.10} parent=0 // pred_check
    _
  $region19: #{discriminator_forward.10} parent=0 // pred_check_branch
    %19 = sbr.rel (0) target = $region21
  $region20: #{discriminator_forward.10} parent=0 // pred_region
    _
  $region21: #{discriminator_forward.10} parent=0 // pred_fallthru
    _
  %v20 = vld [vmem:[%s0] sm:$0xff]
  %v21 = vld [vmem:[%s0 + $0x8] sm:$0xff]
  %v22 = vld [vmem:[%s0 + $0x10] sm:$0xff]
  %v23 = vld [vmem:[%s0 + $0x18] sm:$0xff]
  %v24 = vld [vmem:[%s0 + $0x20] sm:$0xff]
  %v25 = vld [vmem:[%s0 + $0x28] sm:$0xff]
  %v26 = vld [vmem:[%s0 + $0x30] sm:$0xff]
  %v27 = vld [vmem:[%s0 + $0x38] sm:$0xff]
  %v28 = vld [vmem:[%s0 + $0x40] sm:$0xff]
  %v29 = vld [vmem:[%s0 + $0x48] sm:$0xff]
  %v30 = vld [vmem:[%s0 + $0x50] sm:$0xff]
  %v31 = vld [vmem:[%s0 + $0x58] sm:$0xff]
  %v32 = vld [vmem:[%s0 + $0x60] sm:$0xff]
  %v33 = vld [vmem:[%s0 + $0x68] sm:$0xff]
  %v34 = vld [vmem:[%s0 + $0x70] sm:$0xff]
  %v35 = vld [vmem:[%s0 + $0x78] sm:$0xff]
  %v36 = vld [vmem:[%s0 + $0x80] sm:$0xff]
  %v37 = vld [vmem:[%s0 + $0x88] sm:$0xff]
  %v38 = vld [vmem:[%s0 + $0x90] sm:$0xff]
  %v39 = vld [vmem:[%s0 + $0x98] sm:$0xff]
  %v40 = vld [vmem:[%s0 + $0xa0] sm:$0xff]
  %v41 = vld [vmem:[%s0 + $0xa8] sm:$0xff]
  %v42 = vld [vmem:[%s0 + $0xb0] sm:$0xff]
  %v43 = vld [vmem:[%s0 + $0xb8] sm:$0xff]
  %v44 = vld [vmem:[%s0 + $0xc0] sm:$0xff]
  %v45 = vld [vmem:[%s0 + $0xc8] sm:$0xff]
  %v46 = vld [vmem:[%s0 + $0xd0] sm:$0xff]
  %v47 = vld [vmem:[%s0 + $0xd8] sm:$0xff]
  %v48 = vld [vmem:[%s0 + $0xe0] sm:$0xff]
  %v49 = vld [vmem:[%s0 + $0xe8] sm:$0xff]
  %v50 = vld [vmem:[%s0 + $0xf0] sm:$0xff]
  %v51 = vld [vmem:[%s0 + $0xf8] sm:$0xff]
  %v52 = vld [vmem:[%s1] sm:$0xff]
  %v53 = vld [vmem:[%s1 + $0x8] sm:$0xff]
  %v54 = vld [vmem:[%s1 + $0x10] sm:$0xff]
  %v55 = vld [vmem:[%s1 + $0x18] sm:$0xff]
  %v56 = vld [vmem:[%s1 + $0x20] sm:$0xff]
  %v57 = vld [vmem:[%s1 + $0x28] sm:$0xff]
  %v58 = vld [vmem:[%s1 + $0x30] sm:$0xff]
  %v59 = vld [vmem:[%s1 + $0x38] sm:$0xff]
  %v60 = vld [vmem:[%s1 + $0x40] sm:$0xff]
  %v61 = vld [vmem:[%s1 + $0x48] sm:$0xff]
  %v62 = vld [vmem:[%s1 + $0x50] sm:$0xff]
  %v63 = vld [vmem:[%s1 + $0x58] sm:$0xff]
  %v64 = vld [vmem:[%s1 + $0x60] sm:$0xff]
  %v65 = vld [vmem:[%s1 + $0x68] sm:$0xff]
  %v66 = vld [vmem:[%s1 + $0x70] sm:$0xff]
  %v67 = vld [vmem:[%s1 + $0x78] sm:$0xff]
  %v68 = vld [vmem:[%s1 + $0x80] sm:$0xff]
  %v69 = vld [vmem:[%s1 + $0x88] sm:$0xff]
  %v70 = vld [vmem:[%s1 + $0x90] sm:$0xff]
  %v71 = vld [vmem:[%s1 + $0x98] sm:$0xff]
  %v72 = vld [vmem:[%s1 + $0xa0] sm:$0xff]
  %v73 = vld [vmem:[%s1 + $0xa8] sm:$0xff]
  %v74 = vld [vmem:[%s1 + $0xb0] sm:$0xff]
  %v75 = vld [vmem:[%s1 + $0xb8] sm:$0xff]
  %v76 = vld [vmem:[%s1 + $0xc0] sm:$0xff]
  %v77 = vld [vmem:[%s1 + $0xc8] sm:$0xff]
  %v78 = vld [vmem:[%s1 + $0xd0] sm:$0xff]
  %v79 = vld [vmem:[%s1 + $0xd8] sm:$0xff]
  %v80 = vld [vmem:[%s1 + $0xe0] sm:$0xff]
  %v81 = vld [vmem:[%s1 + $0xe8] sm:$0xff]
  %v82 = vld [vmem:[%s1 + $0xf0] sm:$0xff]
  %v83 = vld [vmem:[%s1 + $0xf8] sm:$0xff]
  %v84 = vld [vmem:[%s1 + $0x100] sm:$0xff]
  %v85 = vld [vmem:[%s1 + $0x108] sm:$0xff]
  %v86 = vld [vmem:[%s1 + $0x110] sm:$0xff]
  %v87 = vld [vmem:[%s1 + $0x118] sm:$0xff]
  %v88 = vld [vmem:[%s1 + $0x120] sm:$0xff]
  %v89 = vld [vmem:[%s1 + $0x128] sm:$0xff]
  %v90 = vld [vmem:[%s1 + $0x130] sm:$0xff]
  %v91 = vld [vmem:[%s1 + $0x138] sm:$0xff]
  %v92 = vld [vmem:[%s1 + $0x140] sm:$0xff]
  %v93 = vld [vmem:[%s1 + $0x148] sm:$0xff]
  %v94 = vld [vmem:[%s1 + $0x150] sm:$0xff]
  %v95 = vld [vmem:[%s1 + $0x158] sm:$0xff]
  %v96 = vld [vmem:[%s1 + $0x160] sm:$0xff]
  %v97 = vld [vmem:[%s1 + $0x168] sm:$0xff]
  %v98 = vld [vmem:[%s1 + $0x170] sm:$0xff]
  %v99 = vld [vmem:[%s1 + $0x178] sm:$0xff]
  %v100 = vld [vmem:[%s1 + $0x180] sm:$0xff]
  %v101 = vld [vmem:[%s1 + $0x188] sm:$0xff]
  %v102 = vld [vmem:[%s1 + $0x190] sm:$0xff]
  %v103 = vld [vmem:[%s1 + $0x198] sm:$0xff]
  %v104 = vld [vmem:[%s1 + $0x1a0] sm:$0xff]
  %v105 = vld [vmem:[%s1 + $0x1a8] sm:$0xff]
  %v106 = vld [vmem:[%s1 + $0x1b0] sm:$0xff]
  %v107 = vld [vmem:[%s1 + $0x1b8] sm:$0xff]
  %v108 = vld [vmem:[%s1 + $0x1c0] sm:$0xff]
  %v109 = vld [vmem:[%s1 + $0x1c8] sm:$0xff]
  %v110 = vld [vmem:[%s1 + $0x1d0] sm:$0xff]
  %v111 = vld [vmem:[%s1 + $0x1d8] sm:$0xff]
  %v112 = vld [vmem:[%s1 + $0x1e0] sm:$0xff]
  %v113 = vld [vmem:[%s1 + $0x1e8] sm:$0xff]
  %v114 = vld [vmem:[%s1 + $0x1f0] sm:$0xff]
  %v115 = vld [vmem:[%s1 + $0x1f8] sm:$0xff]
  %v116 = vld [vmem:[%s1 + $0x200] sm:$0xff]
  %v117 = vld [vmem:[%s1 + $0x208] sm:$0xff]
  %v118 = vld [vmem:[%s1 + $0x210] sm:$0xff]
  %v119 = vld [vmem:[%s1 + $0x218] sm:$0xff]
  %v120 = vld [vmem:[%s1 + $0x220] sm:$0xff]
  %v121 = vld [vmem:[%s1 + $0x228] sm:$0xff]
  %v122 = vld [vmem:[%s1 + $0x230] sm:$0xff]
  %v123 = vld [vmem:[%s1 + $0x238] sm:$0xff]
  %v124 = vld [vmem:[%s1 + $0x240] sm:$0xff]
  %v125 = vld [vmem:[%s1 + $0x248] sm:$0xff]
  %v126 = vld [vmem:[%s1 + $0x250] sm:$0xff]
  %v127 = vld [vmem:[%s1 + $0x258] sm:$0xff]
  %v128 = vld [vmem:[%s1 + $0x260] sm:$0xff]
  %v129 = vld [vmem:[%s1 + $0x268] sm:$0xff]
  %v130 = vld [vmem:[%s1 + $0x270] sm:$0xff]
  %v131 = vld [vmem:[%s1 + $0x278] sm:$0xff]
  %v132 = vld [vmem:[%s1 + $0x280] sm:$0xff]
  %v133 = vld [vmem:[%s1 + $0x288] sm:$0xff]
  %v134 = vld [vmem:[%s1 + $0x290] sm:$0xff]
  %v135 = vld [vmem:[%s1 + $0x298] sm:$0xff]
  %v136 = vld [vmem:[%s1 + $0x2a0] sm:$0xff]
  %v137 = vld [vmem:[%s1 + $0x2a8] sm:$0xff]
  %v138 = vld [vmem:[%s1 + $0x2b0] sm:$0xff]
  %v139 = vld [vmem:[%s1 + $0x2b8] sm:$0xff]
  %v140 = vld [vmem:[%s1 + $0x2c0] sm:$0xff]
  %v141 = vld [vmem:[%s1 + $0x2c8] sm:$0xff]
  %v142 = vld [vmem:[%s1 + $0x2d0] sm:$0xff]
  %v143 = vld [vmem:[%s1 + $0x2d8] sm:$0xff]
  %v144 = vld [vmem:[%s1 + $0x2e0] sm:$0xff]
  %v145 = vld [vmem:[%s1 + $0x2e8] sm:$0xff]
  %v146 = vld [vmem:[%s1 + $0x2f0] sm:$0xff]
  %v147 = vld [vmem:[%s1 + $0x2f8] sm:$0xff]
  %v148 = vld [vmem:[%s1 + $0x300] sm:$0xff]
  %v149 = vld [vmem:[%s1 + $0x308] sm:$0xff]
  %v150 = vld [vmem:[%s1 + $0x310] sm:$0xff]
  %v151 = vld [vmem:[%s1 + $0x318] sm:$0xff]
  %v152 = vld [vmem:[%s1 + $0x320] sm:$0xff]
  %v153 = vld [vmem:[%s1 + $0x328] sm:$0xff]
  %v154 = vld [vmem:[%s1 + $0x330] sm:$0xff]
  %v155 = vld [vmem:[%s1 + $0x338] sm:$0xff]
  %v156 = vld [vmem:[%s1 + $0x340] sm:$0xff]
  %v157 = vld [vmem:[%s1 + $0x348] sm:$0xff]
  %v158 = vld [vmem:[%s1 + $0x350] sm:$0xff]
  %v159 = vld [vmem:[%s1 + $0x358] sm:$0xff]
  %v160 = vld [vmem:[%s1 + $0x360] sm:$0xff]
  %v161 = vld [vmem:[%s1 + $0x368] sm:$0xff]
  %v162 = vld [vmem:[%s1 + $0x370] sm:$0xff]
  %v163 = vld [vmem:[%s1 + $0x378] sm:$0xff]
  %v164 = vld [vmem:[%s1 + $0x380] sm:$0xff]
  %v165 = vld [vmem:[%s1 + $0x388] sm:$0xff]
  %v166 = vld [vmem:[%s1 + $0x390] sm:$0xff]
  %v167 = vld [vmem:[%s1 + $0x398] sm:$0xff]
  %v168 = vld [vmem:[%s1 + $0x3a0] sm:$0xff]
  %v169 = vld [vmem:[%s1 + $0x3a8] sm:$0xff]
  %v170 = vld [vmem:[%s1 + $0x3b0] sm:$0xff]
  %v171 = vld [vmem:[%s1 + $0x3b8] sm:$0xff]
  %v172 = vld [vmem:[%s1 + $0x3c0] sm:$0xff]
  %v173 = vld [vmem:[%s1 + $0x3c8] sm:$0xff]
  %v174 = vld [vmem:[%s1 + $0x3d0] sm:$0xff]
  %v175 = vld [vmem:[%s1 + $0x3d8] sm:$0xff]
  %v176 = vld [vmem:[%s1 + $0x3e0] sm:$0xff]
  %v177 = vld [vmem:[%s1 + $0x3e8] sm:$0xff]
  %v178 = vld [vmem:[%s1 + $0x3f0] sm:$0xff]
  %v179 = vld [vmem:[%s1 + $0x3f8] sm:$0xff]
  %v180 = vld [vmem:[%s1 + $0x400] sm:$0xff]
  %v181 = vld [vmem:[%s1 + $0x408] sm:$0xff]
  %v182 = vld [vmem:[%s1 + $0x410] sm:$0xff]
  %v183 = vld [vmem:[%s1 + $0x418] sm:$0xff]
  %v184 = vld [vmem:[%s1 + $0x420] sm:$0xff]
  %v185 = vld [vmem:[%s1 + $0x428] sm:$0xff]
  %v186 = vld [vmem:[%s1 + $0x430] sm:$0xff]
  %v187 = vld [vmem:[%s1 + $0x438] sm:$0xff]
  %v188 = vld [vmem:[%s1 + $0x440] sm:$0xff]
  %v189 = vld [vmem:[%s1 + $0x448] sm:$0xff]
  %v190 = vld [vmem:[%s1 + $0x450] sm:$0xff]
  %v191 = vld [vmem:[%s1 + $0x458] sm:$0xff]
  %v192 = vld [vmem:[%s1 + $0x460] sm:$0xff]
  %v193 = vld [vmem:[%s1 + $0x468] sm:$0xff]
  %v194 = vld [vmem:[%s1 + $0x470] sm:$0xff]
  %v195 = vld [vmem:[%s1 + $0x478] sm:$0xff]
  %v196 = vld [vmem:[%s1 + $0x480] sm:$0xff]
  %v197 = vld [vmem:[%s1 + $0x488] sm:$0xff]
  %v198 = vld [vmem:[%s1 + $0x490] sm:$0xff]
  %v199 = vld [vmem:[%s1 + $0x498] sm:$0xff]
  %v200 = vld [vmem:[%s1 + $0x4a0] sm:$0xff]
  %v201 = vld [vmem:[%s1 + $0x4a8] sm:$0xff]
  %v202 = vld [vmem:[%s1 + $0x4b0] sm:$0xff]
  %v203 = vld [vmem:[%s1 + $0x4b8] sm:$0xff]
  %v204 = vld [vmem:[%s1 + $0x4c0] sm:$0xff]
  %v205 = vld [vmem:[%s1 + $0x4c8] sm:$0xff]
  %v206 = vld [vmem:[%s1 + $0x4d0] sm:$0xff]
  %v207 = vld [vmem:[%s1 + $0x4d8] sm:$0xff]
  %v208 = vld [vmem:[%s1 + $0x4e0] sm:$0xff]
  %v209 = vld [vmem:[%s1 + $0x4e8] sm:$0xff]
  %v210 = vld [vmem:[%s1 + $0x4f0] sm:$0xff]
  %v211 = vld [vmem:[%s1 + $0x4f8] sm:$0xff]
  %v212 = vld [vmem:[%s1 + $0x500] sm:$0xff]
  %v213 = vld [vmem:[%s1 + $0x508] sm:$0xff]
  %v214 = vld [vmem:[%s1 + $0x510] sm:$0xff]
  %v215 = vld [vmem:[%s1 + $0x518] sm:$0xff]
  %v216 = vld [vmem:[%s1 + $0x520] sm:$0xff]
  %v217 = vld [vmem:[%s1 + $0x528] sm:$0xff]
  %v218 = vld [vmem:[%s1 + $0x530] sm:$0xff]
  %v219 = vld [vmem:[%s1 + $0x538] sm:$0xff]
  %v220 = vld [vmem:[%s1 + $0x540] sm:$0xff]
  %v221 = vld [vmem:[%s1 + $0x548] sm:$0xff]
  %v222 = vld [vmem:[%s1 + $0x550] sm:$0xff]
  %v223 = vld [vmem:[%s1 + $0x558] sm:$0xff]
  %v224 = vld [vmem:[%s1 + $0x560] sm:$0xff]
  %v225 = vld [vmem:[%s1 + $0x568] sm:$0xff]
  %v226 = vld [vmem:[%s1 + $0x570] sm:$0xff]
  %v227 = vld [vmem:[%s1 + $0x578] sm:$0xff]
  %v228 = vld [vmem:[%s1 + $0x580] sm:$0xff]
  %v229 = vld [vmem:[%s1 + $0x588] sm:$0xff]
  %v230 = vld [vmem:[%s1 + $0x590] sm:$0xff]
  %v231 = vld [vmem:[%s1 + $0x598] sm:$0xff]
  %v232 = vld [vmem:[%s1 + $0x5a0] sm:$0xff]
  %v233 = vld [vmem:[%s1 + $0x5a8] sm:$0xff]
  %v234 = vld [vmem:[%s1 + $0x5b0] sm:$0xff]
  %v235 = vld [vmem:[%s1 + $0x5b8] sm:$0xff]
  %v236 = vld [vmem:[%s1 + $0x5c0] sm:$0xff]
  %v237 = vld [vmem:[%s1 + $0x5c8] sm:$0xff]
  %v238 = vld [vmem:[%s1 + $0x5d0] sm:$0xff]
  %v239 = vld [vmem:[%s1 + $0x5d8] sm:$0xff]
  %v240 = vld [vmem:[%s1 + $0x5e0] sm:$0xff]
  %v241 = vld [vmem:[%s1 + $0x5e8] sm:$0xff]
  %v242 = vld [vmem:[%s1 + $0x5f0] sm:$0xff]
  %v243 = vld [vmem:[%s1 + $0x5f8] sm:$0xff]
  %v244 = vld [vmem:[%s1 + $0x600] sm:$0xff]
  %v245 = vld [vmem:[%s1 + $0x608] sm:$0xff]
  %v246 = vld [vmem:[%s1 + $0x610] sm:$0xff]
  %v247 = vld [vmem:[%s1 + $0x618] sm:$0xff]
  %v248 = vld [vmem:[%s1 + $0x620] sm:$0xff]
  %v249 = vld [vmem:[%s1 + $0x628] sm:$0xff]
  %v250 = vld [vmem:[%s1 + $0x630] sm:$0xff]
  %v251 = vld [vmem:[%s1 + $0x638] sm:$0xff]
  %v252 = vld [vmem:[%s1 + $0x640] sm:$0xff]
  %v253 = vld [vmem:[%s1 + $0x648] sm:$0xff]
  %v254 = vld [vmem:[%s1 + $0x650] sm:$0xff]
  %v255 = vld [vmem:[%s1 + $0x658] sm:$0xff]
  %v256 = vld [vmem:[%s1 + $0x660] sm:$0xff]
  %v257 = vld [vmem:[%s1 + $0x668] sm:$0xff]
  %v258 = vld [vmem:[%s1 + $0x670] sm:$0xff]
  %v259 = vld [vmem:[%s1 + $0x678] sm:$0xff]
  %v260 = vld [vmem:[%s1 + $0x680] sm:$0xff]
  %v261 = vld [vmem:[%s1 + $0x688] sm:$0xff]
  %v262 = vld [vmem:[%s1 + $0x690] sm:$0xff]
  %v263 = vld [vmem:[%s1 + $0x698] sm:$0xff]
  %v264 = vld [vmem:[%s1 + $0x6a0] sm:$0xff]
  %v265 = vld [vmem:[%s1 + $0x6a8] sm:$0xff]
  %v266 = vld [vmem:[%s1 + $0x6b0] sm:$0xff]
  %v267 = vld [vmem:[%s1 + $0x6b8] sm:$0xff]
  %v268 = vld [vmem:[%s1 + $0x6c0] sm:$0xff]
  %v269 = vld [vmem:[%s1 + $0x6c8] sm:$0xff]
  %v270 = vld [vmem:[%s1 + $0x6d0] sm:$0xff]
  %v271 = vld [vmem:[%s1 + $0x6d8] sm:$0xff]
  %v272 = vld [vmem:[%s1 + $0x6e0] sm:$0xff]
  %v273 = vld [vmem:[%s1 + $0x6e8] sm:$0xff]
  %v274 = vld [vmem:[%s1 + $0x6f0] sm:$0xff]
  %v275 = vld [vmem:[%s1 + $0x6f8] sm:$0xff]
  %v276 = vld [vmem:[%s1 + $0x700] sm:$0xff]
  %v277 = vld [vmem:[%s1 + $0x708] sm:$0xff]
  %v278 = vld [vmem:[%s1 + $0x710] sm:$0xff]
  %v279 = vld [vmem:[%s1 + $0x718] sm:$0xff]
  %v280 = vld [vmem:[%s1 + $0x720] sm:$0xff]
  %v281 = vld [vmem:[%s1 + $0x728] sm:$0xff]
  %v282 = vld [vmem:[%s1 + $0x730] sm:$0xff]
  %v283 = vld [vmem:[%s1 + $0x738] sm:$0xff]
  %v284 = vld [vmem:[%s1 + $0x740] sm:$0xff]
  %v285 = vld [vmem:[%s1 + $0x748] sm:$0xff]
  %v286 = vld [vmem:[%s1 + $0x750] sm:$0xff]
  %v287 = vld [vmem:[%s1 + $0x758] sm:$0xff]
  %v288 = vld [vmem:[%s1 + $0x760] sm:$0xff]
  %v289 = vld [vmem:[%s1 + $0x768] sm:$0xff]
  %v290 = vld [vmem:[%s1 + $0x770] sm:$0xff]
  %v291 = vld [vmem:[%s1 + $0x778] sm:$0xff]
  %v292 = vld [vmem:[%s1 + $0x780] sm:$0xff]
  %v293 = vld [vmem:[%s1 + $0x788] sm:$0xff]
  %v294 = vld [vmem:[%s1 + $0x790] sm:$0xff]
  %v295 = vld [vmem:[%s1 + $0x798] sm:$0xff]
  %v296 = vld [vmem:[%s1 + $0x7a0] sm:$0xff]
  %v297 = vld [vmem:[%s1 + $0x7a8] sm:$0xff]
  %v298 = vld [vmem:[%s1 + $0x7b0] sm:$0xff]
  %v299 = vld [vmem:[%s1 + $0x7b8] sm:$0xff]
  %v300 = vld [vmem:[%s1 + $0x7c0] sm:$0xff]
  %v301 = vld [vmem:[%s1 + $0x7c8] sm:$0xff]
  %v302 = vld [vmem:[%s1 + $0x7d0] sm:$0xff]
  %v303 = vld [vmem:[%s1 + $0x7d8] sm:$0xff]
  %v304 = vld [vmem:[%s1 + $0x7e0] sm:$0xff]
  %v305 = vld [vmem:[%s1 + $0x7e8] sm:$0xff]
  %v306 = vld [vmem:[%s1 + $0x7f0] sm:$0xff]
  %v307 = vld [vmem:[%s1 + $0x7f8] sm:$0xff]
  %v308 = vld [vmem:[%s2] sm:$0x3]
  %v310 = vlaneseq
  %v311 = vshrl.u32 %v310, 7
  %v312 = vsub.s32 0, %v311
  %v313 = vrot.slane %v308, %v312
  %v314 = vlaneseq
  %v315 = vshrl.u32 %v314, 7
  %v316 = vsub.s32 1, %v315
  %v317 = vrot.slane %v308, %v316
  %v352 = vunpack.c.l.b16 %v20
  %v353 = vunpack.c.h.b16 %v20
  %v354 = vunpack.c.l.b16 %v21
  %v355 = vunpack.c.h.b16 %v21
  %v356 = vunpack.c.l.b16 %v22
  %v357 = vunpack.c.h.b16 %v22
  %v358 = vunpack.c.l.b16 %v23
  %v359 = vunpack.c.h.b16 %v23
  %v360 = vunpack.c.l.b16 %v24
  %v361 = vunpack.c.h.b16 %v24
  %v362 = vunpack.c.l.b16 %v25
  %v363 = vunpack.c.h.b16 %v25
  %v364 = vunpack.c.l.b16 %v26
  %v365 = vunpack.c.h.b16 %v26
  %v366 = vunpack.c.l.b16 %v27
  %v367 = vunpack.c.h.b16 %v27
  %v368 = vunpack.c.l.b16 %v28
  %v369 = vunpack.c.h.b16 %v28
  %v370 = vunpack.c.l.b16 %v29
  %v371 = vunpack.c.h.b16 %v29
  %v372 = vunpack.c.l.b16 %v30
  %v373 = vunpack.c.h.b16 %v30
  %v374 = vunpack.c.l.b16 %v31
  %v375 = vunpack.c.h.b16 %v31
  %v376 = vunpack.c.l.b16 %v32
  %v377 = vunpack.c.h.b16 %v32
  %v378 = vunpack.c.l.b16 %v33
  %v379 = vunpack.c.h.b16 %v33
  %v380 = vunpack.c.l.b16 %v34
  %v381 = vunpack.c.h.b16 %v34
  %v382 = vunpack.c.l.b16 %v35
  %v383 = vunpack.c.h.b16 %v35
  %v384 = vunpack.c.l.b16 %v36
  %v385 = vunpack.c.h.b16 %v36
  %v386 = vunpack.c.l.b16 %v37
  %v387 = vunpack.c.h.b16 %v37
  %v388 = vunpack.c.l.b16 %v38
  %v389 = vunpack.c.h.b16 %v38
  %v390 = vunpack.c.l.b16 %v39
  %v391 = vunpack.c.h.b16 %v39
  %v392 = vunpack.c.l.b16 %v40
  %v393 = vunpack.c.h.b16 %v40
  %v394 = vunpack.c.l.b16 %v41
  %v395 = vunpack.c.h.b16 %v41
  %v396 = vunpack.c.l.b16 %v42
  %v397 = vunpack.c.h.b16 %v42
  %v398 = vunpack.c.l.b16 %v43
  %v399 = vunpack.c.h.b16 %v43
  %v400 = vunpack.c.l.b16 %v44
  %v401 = vunpack.c.h.b16 %v44
  %v402 = vunpack.c.l.b16 %v45
  %v403 = vunpack.c.h.b16 %v45
  %v404 = vunpack.c.l.b16 %v46
  %v405 = vunpack.c.h.b16 %v46
  %v406 = vunpack.c.l.b16 %v47
  %v407 = vunpack.c.h.b16 %v47
  %v408 = vunpack.c.l.b16 %v48
  %v409 = vunpack.c.h.b16 %v48
  %v410 = vunpack.c.l.b16 %v49
  %v411 = vunpack.c.h.b16 %v49
  %v412 = vunpack.c.l.b16 %v50
  %v413 = vunpack.c.h.b16 %v50
  %v414 = vunpack.c.l.b16 %v51
  %v415 = vunpack.c.h.b16 %v51
  %v416 = vpack.c.b16 %v368, %v352
  %v417 = vpack.c.b16 %v369, %v353
  %v418 = vpack.c.b16 %v370, %v354
  %v419 = vpack.c.b16 %v371, %v355
  %v420 = vpack.c.b16 %v372, %v356
  %v421 = vpack.c.b16 %v373, %v357
  %v422 = vpack.c.b16 %v374, %v358
  %v423 = vpack.c.b16 %v375, %v359
  %v424 = vpack.c.b16 %v376, %v360
  %v425 = vpack.c.b16 %v377, %v361
  %v426 = vpack.c.b16 %v378, %v362
  %v427 = vpack.c.b16 %v379, %v363
  %v428 = vpack.c.b16 %v380, %v364
  %v429 = vpack.c.b16 %v381, %v365
  %v430 = vpack.c.b16 %v382, %v366
  %v431 = vpack.c.b16 %v383, %v367
  %v432 = vpack.c.b16 %v400, %v384
  %v433 = vpack.c.b16 %v401, %v385
  %v434 = vpack.c.b16 %v402, %v386
  %v435 = vpack.c.b16 %v403, %v387
  %v436 = vpack.c.b16 %v404, %v388
  %v437 = vpack.c.b16 %v405, %v389
  %v438 = vpack.c.b16 %v406, %v390
  %v439 = vpack.c.b16 %v407, %v391
  %v440 = vpack.c.b16 %v408, %v392
  %v441 = vpack.c.b16 %v409, %v393
  %v442 = vpack.c.b16 %v410, %v394
  %v443 = vpack.c.b16 %v411, %v395
  %v444 = vpack.c.b16 %v412, %v396
  %v445 = vpack.c.b16 %v413, %v397
  %v446 = vpack.c.b16 %v414, %v398
  %v447 = vpack.c.b16 %v415, %v399
  %v736 = vunpack.c.l.b16 %v52
  %v737 = vunpack.c.h.b16 %v52
  %v738 = vunpack.c.l.b16 %v53
  %v739 = vunpack.c.h.b16 %v53
  %v740 = vunpack.c.l.b16 %v54
  %v741 = vunpack.c.h.b16 %v54
  %v742 = vunpack.c.l.b16 %v55
  %v743 = vunpack.c.h.b16 %v55
  %v744 = vunpack.c.l.b16 %v56
  %v745 = vunpack.c.h.b16 %v56
  %v746 = vunpack.c.l.b16 %v57
  %v747 = vunpack.c.h.b16 %v57
  %v748 = vunpack.c.l.b16 %v58
  %v749 = vunpack.c.h.b16 %v58
  %v750 = vunpack.c.l.b16 %v59
  %v751 = vunpack.c.h.b16 %v59
  %v752 = vunpack.c.l.b16 %v60
  %v753 = vunpack.c.h.b16 %v60
  %v754 = vunpack.c.l.b16 %v61
  %v755 = vunpack.c.h.b16 %v61
  %v756 = vunpack.c.l.b16 %v62
  %v757 = vunpack.c.h.b16 %v62
  %v758 = vunpack.c.l.b16 %v63
  %v759 = vunpack.c.h.b16 %v63
  %v760 = vunpack.c.l.b16 %v64
  %v761 = vunpack.c.h.b16 %v64
  %v762 = vunpack.c.l.b16 %v65
  %v763 = vunpack.c.h.b16 %v65
  %v764 = vunpack.c.l.b16 %v66
  %v765 = vunpack.c.h.b16 %v66
  %v766 = vunpack.c.l.b16 %v67
  %v767 = vunpack.c.h.b16 %v67
  %v768 = vunpack.c.l.b16 %v68
  %v769 = vunpack.c.h.b16 %v68
  %v770 = vunpack.c.l.b16 %v69
  %v771 = vunpack.c.h.b16 %v69
  %v772 = vunpack.c.l.b16 %v70
  %v773 = vunpack.c.h.b16 %v70
  %v774 = vunpack.c.l.b16 %v71
  %v775 = vunpack.c.h.b16 %v71
  %v776 = vunpack.c.l.b16 %v72
  %v777 = vunpack.c.h.b16 %v72
  %v778 = vunpack.c.l.b16 %v73
  %v779 = vunpack.c.h.b16 %v73
  %v780 = vunpack.c.l.b16 %v74
  %v781 = vunpack.c.h.b16 %v74
  %v782 = vunpack.c.l.b16 %v75
  %v783 = vunpack.c.h.b16 %v75
  %v784 = vunpack.c.l.b16 %v76
  %v785 = vunpack.c.h.b16 %v76
  %v786 = vunpack.c.l.b16 %v77
  %v787 = vunpack.c.h.b16 %v77
  %v788 = vunpack.c.l.b16 %v78
  %v789 = vunpack.c.h.b16 %v78
  %v790 = vunpack.c.l.b16 %v79
  %v791 = vunpack.c.h.b16 %v79
  %v792 = vunpack.c.l.b16 %v80
  %v793 = vunpack.c.h.b16 %v80
  %v794 = vunpack.c.l.b16 %v81
  %v795 = vunpack.c.h.b16 %v81
  %v796 = vunpack.c.l.b16 %v82
  %v797 = vunpack.c.h.b16 %v82
  %v798 = vunpack.c.l.b16 %v83
  %v799 = vunpack.c.h.b16 %v83
  %v800 = vunpack.c.l.b16 %v84
  %v801 = vunpack.c.h.b16 %v84
  %v802 = vunpack.c.l.b16 %v85
  %v803 = vunpack.c.h.b16 %v85
  %v804 = vunpack.c.l.b16 %v86
  %v805 = vunpack.c.h.b16 %v86
  %v806 = vunpack.c.l.b16 %v87
  %v807 = vunpack.c.h.b16 %v87
  %v808 = vunpack.c.l.b16 %v88
  %v809 = vunpack.c.h.b16 %v88
  %v810 = vunpack.c.l.b16 %v89
  %v811 = vunpack.c.h.b16 %v89
  %v812 = vunpack.c.l.b16 %v90
  %v813 = vunpack.c.h.b16 %v90
  %v814 = vunpack.c.l.b16 %v91
  %v815 = vunpack.c.h.b16 %v91
  %v816 = vunpack.c.l.b16 %v92
  %v817 = vunpack.c.h.b16 %v92
  %v818 = vunpack.c.l.b16 %v93
  %v819 = vunpack.c.h.b16 %v93
  %v820 = vunpack.c.l.b16 %v94
  %v821 = vunpack.c.h.b16 %v94
  %v822 = vunpack.c.l.b16 %v95
  %v823 = vunpack.c.h.b16 %v95
  %v824 = vunpack.c.l.b16 %v96
  %v825 = vunpack.c.h.b16 %v96
  %v826 = vunpack.c.l.b16 %v97
  %v827 = vunpack.c.h.b16 %v97
  %v828 = vunpack.c.l.b16 %v98
  %v829 = vunpack.c.h.b16 %v98
  %v830 = vunpack.c.l.b16 %v99
  %v831 = vunpack.c.h.b16 %v99
  %v832 = vunpack.c.l.b16 %v100
  %v833 = vunpack.c.h.b16 %v100
  %v834 = vunpack.c.l.b16 %v101
  %v835 = vunpack.c.h.b16 %v101
  %v836 = vunpack.c.l.b16 %v102
  %v837 = vunpack.c.h.b16 %v102
  %v838 = vunpack.c.l.b16 %v103
  %v839 = vunpack.c.h.b16 %v103
  %v840 = vunpack.c.l.b16 %v104
  %v841 = vunpack.c.h.b16 %v104
  %v842 = vunpack.c.l.b16 %v105
  %v843 = vunpack.c.h.b16 %v105
  %v844 = vunpack.c.l.b16 %v106
  %v845 = vunpack.c.h.b16 %v106
  %v846 = vunpack.c.l.b16 %v107
  %v847 = vunpack.c.h.b16 %v107
  %v848 = vunpack.c.l.b16 %v108
  %v849 = vunpack.c.h.b16 %v108
  %v850 = vunpack.c.l.b16 %v109
  %v851 = vunpack.c.h.b16 %v109
  %v852 = vunpack.c.l.b16 %v110
  %v853 = vunpack.c.h.b16 %v110
  %v854 = vunpack.c.l.b16 %v111
  %v855 = vunpack.c.h.b16 %v111
  %v856 = vunpack.c.l.b16 %v112
  %v857 = vunpack.c.h.b16 %v112
  %v858 = vunpack.c.l.b16 %v113
  %v859 = vunpack.c.h.b16 %v113
  %v860 = vunpack.c.l.b16 %v114
  %v861 = vunpack.c.h.b16 %v114
  %v862 = vunpack.c.l.b16 %v115
  %v863 = vunpack.c.h.b16 %v115
  %v864 = vunpack.c.l.b16 %v116
  %v865 = vunpack.c.h.b16 %v116
  %v866 = vunpack.c.l.b16 %v117
  %v867 = vunpack.c.h.b16 %v117
  %v868 = vunpack.c.l.b16 %v118
  %v869 = vunpack.c.h.b16 %v118
  %v870 = vunpack.c.l.b16 %v119
  %v871 = vunpack.c.h.b16 %v119
  %v872 = vunpack.c.l.b16 %v120
  %v873 = vunpack.c.h.b16 %v120
  %v874 = vunpack.c.l.b16 %v121
  %v875 = vunpack.c.h.b16 %v121
  %v876 = vunpack.c.l.b16 %v122
  %v877 = vunpack.c.h.b16 %v122
  %v878 = vunpack.c.l.b16 %v123
  %v879 = vunpack.c.h.b16 %v123
  %v880 = vunpack.c.l.b16 %v124
  %v881 = vunpack.c.h.b16 %v124
  %v882 = vunpack.c.l.b16 %v125
  %v883 = vunpack.c.h.b16 %v125
  %v884 = vunpack.c.l.b16 %v126
  %v885 = vunpack.c.h.b16 %v126
  %v886 = vunpack.c.l.b16 %v127
  %v887 = vunpack.c.h.b16 %v127
  %v888 = vunpack.c.l.b16 %v128
  %v889 = vunpack.c.h.b16 %v128
  %v890 = vunpack.c.l.b16 %v129
  %v891 = vunpack.c.h.b16 %v129
  %v892 = vunpack.c.l.b16 %v130
  %v893 = vunpack.c.h.b16 %v130
  %v894 = vunpack.c.l.b16 %v131
  %v895 = vunpack.c.h.b16 %v131
  %v896 = vunpack.c.l.b16 %v132
  %v897 = vunpack.c.h.b16 %v132
  %v898 = vunpack.c.l.b16 %v133
  %v899 = vunpack.c.h.b16 %v133
  %v900 = vunpack.c.l.b16 %v134
  %v901 = vunpack.c.h.b16 %v134
  %v902 = vunpack.c.l.b16 %v135
  %v903 = vunpack.c.h.b16 %v135
  %v904 = vunpack.c.l.b16 %v136
  %v905 = vunpack.c.h.b16 %v136
  %v906 = vunpack.c.l.b16 %v137
  %v907 = vunpack.c.h.b16 %v137
  %v908 = vunpack.c.l.b16 %v138
  %v909 = vunpack.c.h.b16 %v138
  %v910 = vunpack.c.l.b16 %v139
  %v911 = vunpack.c.h.b16 %v139
  %v912 = vunpack.c.l.b16 %v140
  %v913 = vunpack.c.h.b16 %v140
  %v914 = vunpack.c.l.b16 %v141
  %v915 = vunpack.c.h.b16 %v141
  %v916 = vunpack.c.l.b16 %v142
  %v917 = vunpack.c.h.b16 %v142
  %v918 = vunpack.c.l.b16 %v143
  %v919 = vunpack.c.h.b16 %v143
  %v920 = vunpack.c.l.b16 %v144
  %v921 = vunpack.c.h.b16 %v144
  %v922 = vunpack.c.l.b16 %v145
  %v923 = vunpack.c.h.b16 %v145
  %v924 = vunpack.c.l.b16 %v146
  %v925 = vunpack.c.h.b16 %v146
  %v926 = vunpack.c.l.b16 %v147
  %v927 = vunpack.c.h.b16 %v147
  %v928 = vunpack.c.l.b16 %v148
  %v929 = vunpack.c.h.b16 %v148
  %v930 = vunpack.c.l.b16 %v149
  %v931 = vunpack.c.h.b16 %v149
  %v932 = vunpack.c.l.b16 %v150
  %v933 = vunpack.c.h.b16 %v150
  %v934 = vunpack.c.l.b16 %v151
  %v935 = vunpack.c.h.b16 %v151
  %v936 = vunpack.c.l.b16 %v152
  %v937 = vunpack.c.h.b16 %v152
  %v938 = vunpack.c.l.b16 %v153
  %v939 = vunpack.c.h.b16 %v153
  %v940 = vunpack.c.l.b16 %v154
  %v941 = vunpack.c.h.b16 %v154
  %v942 = vunpack.c.l.b16 %v155
  %v943 = vunpack.c.h.b16 %v155
  %v944 = vunpack.c.l.b16 %v156
  %v945 = vunpack.c.h.b16 %v156
  %v946 = vunpack.c.l.b16 %v157
  %v947 = vunpack.c.h.b16 %v157
  %v948 = vunpack.c.l.b16 %v158
  %v949 = vunpack.c.h.b16 %v158
  %v950 = vunpack.c.l.b16 %v159
  %v951 = vunpack.c.h.b16 %v159
  %v952 = vunpack.c.l.b16 %v160
  %v953 = vunpack.c.h.b16 %v160
  %v954 = vunpack.c.l.b16 %v161
  %v955 = vunpack.c.h.b16 %v161
  %v956 = vunpack.c.l.b16 %v162
  %v957 = vunpack.c.h.b16 %v162
  %v958 = vunpack.c.l.b16 %v163
  %v959 = vunpack.c.h.b16 %v163
  %v960 = vunpack.c.l.b16 %v164
  %v961 = vunpack.c.h.b16 %v164
  %v962 = vunpack.c.l.b16 %v165
  %v963 = vunpack.c.h.b16 %v165
  %v964 = vunpack.c.l.b16 %v166
  %v965 = vunpack.c.h.b16 %v166
  %v966 = vunpack.c.l.b16 %v167
  %v967 = vunpack.c.h.b16 %v167
  %v968 = vunpack.c.l.b16 %v168
  %v969 = vunpack.c.h.b16 %v168
  %v970 = vunpack.c.l.b16 %v169
  %v971 = vunpack.c.h.b16 %v169
  %v972 = vunpack.c.l.b16 %v170
  %v973 = vunpack.c.h.b16 %v170
  %v974 = vunpack.c.l.b16 %v171
  %v975 = vunpack.c.h.b16 %v171
  %v976 = vunpack.c.l.b16 %v172
  %v977 = vunpack.c.h.b16 %v172
  %v978 = vunpack.c.l.b16 %v173
  %v979 = vunpack.c.h.b16 %v173
  %v980 = vunpack.c.l.b16 %v174
  %v981 = vunpack.c.h.b16 %v174
  %v982 = vunpack.c.l.b16 %v175
  %v983 = vunpack.c.h.b16 %v175
  %v984 = vunpack.c.l.b16 %v176
  %v985 = vunpack.c.h.b16 %v176
  %v986 = vunpack.c.l.b16 %v177
  %v987 = vunpack.c.h.b16 %v177
  %v988 = vunpack.c.l.b16 %v178
  %v989 = vunpack.c.h.b16 %v178
  %v990 = vunpack.c.l.b16 %v179
  %v991 = vunpack.c.h.b16 %v179
  %v992 = vunpack.c.l.b16 %v180
  %v993 = vunpack.c.h.b16 %v180
  %v994 = vunpack.c.l.b16 %v181
  %v995 = vunpack.c.h.b16 %v181
  %v996 = vunpack.c.l.b16 %v182
  %v997 = vunpack.c.h.b16 %v182
  %v998 = vunpack.c.l.b16 %v183
  %v999 = vunpack.c.h.b16 %v183
  %v1000 = vunpack.c.l.b16 %v184
  %v1001 = vunpack.c.h.b16 %v184
  %v1002 = vunpack.c.l.b16 %v185
  %v1003 = vunpack.c.h.b16 %v185
  %v1004 = vunpack.c.l.b16 %v186
  %v1005 = vunpack.c.h.b16 %v186
  %v1006 = vunpack.c.l.b16 %v187
  %v1007 = vunpack.c.h.b16 %v187
  %v1008 = vunpack.c.l.b16 %v188
  %v1009 = vunpack.c.h.b16 %v188
  %v1010 = vunpack.c.l.b16 %v189
  %v1011 = vunpack.c.h.b16 %v189
  %v1012 = vunpack.c.l.b16 %v190
  %v1013 = vunpack.c.h.b16 %v190
  %v1014 = vunpack.c.l.b16 %v191
  %v1015 = vunpack.c.h.b16 %v191
  %v1016 = vunpack.c.l.b16 %v192
  %v1017 = vunpack.c.h.b16 %v192
  %v1018 = vunpack.c.l.b16 %v193
  %v1019 = vunpack.c.h.b16 %v193
  %v1020 = vunpack.c.l.b16 %v194
  %v1021 = vunpack.c.h.b16 %v194
  %v1022 = vunpack.c.l.b16 %v195
  %v1023 = vunpack.c.h.b16 %v195
  %v1024 = vunpack.c.l.b16 %v196
  %v1025 = vunpack.c.h.b16 %v196
  %v1026 = vunpack.c.l.b16 %v197
  %v1027 = vunpack.c.h.b16 %v197
  %v1028 = vunpack.c.l.b16 %v198
  %v1029 = vunpack.c.h.b16 %v198
  %v1030 = vunpack.c.l.b16 %v199
  %v1031 = vunpack.c.h.b16 %v199
  %v1032 = vunpack.c.l.b16 %v200
  %v1033 = vunpack.c.h.b16 %v200
  %v1034 = vunpack.c.l.b16 %v201
  %v1035 = vunpack.c.h.b16 %v201
  %v1036 = vunpack.c.l.b16 %v202
  %v1037 = vunpack.c.h.b16 %v202
  %v1038 = vunpack.c.l.b16 %v203
  %v1039 = vunpack.c.h.b16 %v203
  %v1040 = vunpack.c.l.b16 %v204
  %v1041 = vunpack.c.h.b16 %v204
  %v1042 = vunpack.c.l.b16 %v205
  %v1043 = vunpack.c.h.b16 %v205
  %v1044 = vunpack.c.l.b16 %v206
  %v1045 = vunpack.c.h.b16 %v206
  %v1046 = vunpack.c.l.b16 %v207
  %v1047 = vunpack.c.h.b16 %v207
  %v1048 = vunpack.c.l.b16 %v208
  %v1049 = vunpack.c.h.b16 %v208
  %v1050 = vunpack.c.l.b16 %v209
  %v1051 = vunpack.c.h.b16 %v209
  %v1052 = vunpack.c.l.b16 %v210
  %v1053 = vunpack.c.h.b16 %v210
  %v1054 = vunpack.c.l.b16 %v211
  %v1055 = vunpack.c.h.b16 %v211
  %v1056 = vunpack.c.l.b16 %v212
  %v1057 = vunpack.c.h.b16 %v212
  %v1058 = vunpack.c.l.b16 %v213
  %v1059 = vunpack.c.h.b16 %v213
  %v1060 = vunpack.c.l.b16 %v214
  %v1061 = vunpack.c.h.b16 %v214
  %v1062 = vunpack.c.l.b16 %v215
  %v1063 = vunpack.c.h.b16 %v215
  %v1064 = vunpack.c.l.b16 %v216
  %v1065 = vunpack.c.h.b16 %v216
  %v1066 = vunpack.c.l.b16 %v217
  %v1067 = vunpack.c.h.b16 %v217
  %v1068 = vunpack.c.l.b16 %v218
  %v1069 = vunpack.c.h.b16 %v218
  %v1070 = vunpack.c.l.b16 %v219
  %v1071 = vunpack.c.h.b16 %v219
  %v1072 = vunpack.c.l.b16 %v220
  %v1073 = vunpack.c.h.b16 %v220
  %v1074 = vunpack.c.l.b16 %v221
  %v1075 = vunpack.c.h.b16 %v221
  %v1076 = vunpack.c.l.b16 %v222
  %v1077 = vunpack.c.h.b16 %v222
  %v1078 = vunpack.c.l.b16 %v223
  %v1079 = vunpack.c.h.b16 %v223
  %v1080 = vunpack.c.l.b16 %v224
  %v1081 = vunpack.c.h.b16 %v224
  %v1082 = vunpack.c.l.b16 %v225
  %v1083 = vunpack.c.h.b16 %v225
  %v1084 = vunpack.c.l.b16 %v226
  %v1085 = vunpack.c.h.b16 %v226
  %v1086 = vunpack.c.l.b16 %v227
  %v1087 = vunpack.c.h.b16 %v227
  %v1088 = vunpack.c.l.b16 %v228
  %v1089 = vunpack.c.h.b16 %v228
  %v1090 = vunpack.c.l.b16 %v229
  %v1091 = vunpack.c.h.b16 %v229
  %v1092 = vunpack.c.l.b16 %v230
  %v1093 = vunpack.c.h.b16 %v230
  %v1094 = vunpack.c.l.b16 %v231
  %v1095 = vunpack.c.h.b16 %v231
  %v1096 = vunpack.c.l.b16 %v232
  %v1097 = vunpack.c.h.b16 %v232
  %v1098 = vunpack.c.l.b16 %v233
  %v1099 = vunpack.c.h.b16 %v233
  %v1100 = vunpack.c.l.b16 %v234
  %v1101 = vunpack.c.h.b16 %v234
  %v1102 = vunpack.c.l.b16 %v235
  %v1103 = vunpack.c.h.b16 %v235
  %v1104 = vunpack.c.l.b16 %v236
  %v1105 = vunpack.c.h.b16 %v236
  %v1106 = vunpack.c.l.b16 %v237
  %v1107 = vunpack.c.h.b16 %v237
  %v1108 = vunpack.c.l.b16 %v238
  %v1109 = vunpack.c.h.b16 %v238
  %v1110 = vunpack.c.l.b16 %v239
  %v1111 = vunpack.c.h.b16 %v239
  %v1112 = vunpack.c.l.b16 %v240
  %v1113 = vunpack.c.h.b16 %v240
  %v1114 = vunpack.c.l.b16 %v241
  %v1115 = vunpack.c.h.b16 %v241
  %v1116 = vunpack.c.l.b16 %v242
  %v1117 = vunpack.c.h.b16 %v242
  %v1118 = vunpack.c.l.b16 %v243
  %v1119 = vunpack.c.h.b16 %v243
  %v1120 = vunpack.c.l.b16 %v244
  %v1121 = vunpack.c.h.b16 %v244
  %v1122 = vunpack.c.l.b16 %v245
  %v1123 = vunpack.c.h.b16 %v245
  %v1124 = vunpack.c.l.b16 %v246
  %v1125 = vunpack.c.h.b16 %v246
  %v1126 = vunpack.c.l.b16 %v247
  %v1127 = vunpack.c.h.b16 %v247
  %v1128 = vunpack.c.l.b16 %v248
  %v1129 = vunpack.c.h.b16 %v248
  %v1130 = vunpack.c.l.b16 %v249
  %v1131 = vunpack.c.h.b16 %v249
  %v1132 = vunpack.c.l.b16 %v250
  %v1133 = vunpack.c.h.b16 %v250
  %v1134 = vunpack.c.l.b16 %v251
  %v1135 = vunpack.c.h.b16 %v251
  %v1136 = vunpack.c.l.b16 %v252
  %v1137 = vunpack.c.h.b16 %v252
  %v1138 = vunpack.c.l.b16 %v253
  %v1139 = vunpack.c.h.b16 %v253
  %v1140 = vunpack.c.l.b16 %v254
  %v1141 = vunpack.c.h.b16 %v254
  %v1142 = vunpack.c.l.b16 %v255
  %v1143 = vunpack.c.h.b16 %v255
  %v1144 = vunpack.c.l.b16 %v256
  %v1145 = vunpack.c.h.b16 %v256
  %v1146 = vunpack.c.l.b16 %v257
  %v1147 = vunpack.c.h.b16 %v257
  %v1148 = vunpack.c.l.b16 %v258
  %v1149 = vunpack.c.h.b16 %v258
  %v1150 = vunpack.c.l.b16 %v259
  %v1151 = vunpack.c.h.b16 %v259
  %v1152 = vunpack.c.l.b16 %v260
  %v1153 = vunpack.c.h.b16 %v260
  %v1154 = vunpack.c.l.b16 %v261
  %v1155 = vunpack.c.h.b16 %v261
  %v1156 = vunpack.c.l.b16 %v262
  %v1157 = vunpack.c.h.b16 %v262
  %v1158 = vunpack.c.l.b16 %v263
  %v1159 = vunpack.c.h.b16 %v263
  %v1160 = vunpack.c.l.b16 %v264
  %v1161 = vunpack.c.h.b16 %v264
  %v1162 = vunpack.c.l.b16 %v265
  %v1163 = vunpack.c.h.b16 %v265
  %v1164 = vunpack.c.l.b16 %v266
  %v1165 = vunpack.c.h.b16 %v266
  %v1166 = vunpack.c.l.b16 %v267
  %v1167 = vunpack.c.h.b16 %v267
  %v1168 = vunpack.c.l.b16 %v268
  %v1169 = vunpack.c.h.b16 %v268
  %v1170 = vunpack.c.l.b16 %v269
  %v1171 = vunpack.c.h.b16 %v269
  %v1172 = vunpack.c.l.b16 %v270
  %v1173 = vunpack.c.h.b16 %v270
  %v1174 = vunpack.c.l.b16 %v271
  %v1175 = vunpack.c.h.b16 %v271
  %v1176 = vunpack.c.l.b16 %v272
  %v1177 = vunpack.c.h.b16 %v272
  %v1178 = vunpack.c.l.b16 %v273
  %v1179 = vunpack.c.h.b16 %v273
  %v1180 = vunpack.c.l.b16 %v274
  %v1181 = vunpack.c.h.b16 %v274
  %v1182 = vunpack.c.l.b16 %v275
  %v1183 = vunpack.c.h.b16 %v275
  %v1184 = vunpack.c.l.b16 %v276
  %v1185 = vunpack.c.h.b16 %v276
  %v1186 = vunpack.c.l.b16 %v277
  %v1187 = vunpack.c.h.b16 %v277
  %v1188 = vunpack.c.l.b16 %v278
  %v1189 = vunpack.c.h.b16 %v278
  %v1190 = vunpack.c.l.b16 %v279
  %v1191 = vunpack.c.h.b16 %v279
  %v1192 = vunpack.c.l.b16 %v280
  %v1193 = vunpack.c.h.b16 %v280
  %v1194 = vunpack.c.l.b16 %v281
  %v1195 = vunpack.c.h.b16 %v281
  %v1196 = vunpack.c.l.b16 %v282
  %v1197 = vunpack.c.h.b16 %v282
  %v1198 = vunpack.c.l.b16 %v283
  %v1199 = vunpack.c.h.b16 %v283
  %v1200 = vunpack.c.l.b16 %v284
  %v1201 = vunpack.c.h.b16 %v284
  %v1202 = vunpack.c.l.b16 %v285
  %v1203 = vunpack.c.h.b16 %v285
  %v1204 = vunpack.c.l.b16 %v286
  %v1205 = vunpack.c.h.b16 %v286
  %v1206 = vunpack.c.l.b16 %v287
  %v1207 = vunpack.c.h.b16 %v287
  %v1208 = vunpack.c.l.b16 %v288
  %v1209 = vunpack.c.h.b16 %v288
  %v1210 = vunpack.c.l.b16 %v289
  %v1211 = vunpack.c.h.b16 %v289
  %v1212 = vunpack.c.l.b16 %v290
  %v1213 = vunpack.c.h.b16 %v290
  %v1214 = vunpack.c.l.b16 %v291
  %v1215 = vunpack.c.h.b16 %v291
  %v1216 = vunpack.c.l.b16 %v292
  %v1217 = vunpack.c.h.b16 %v292
  %v1218 = vunpack.c.l.b16 %v293
  %v1219 = vunpack.c.h.b16 %v293
  %v1220 = vunpack.c.l.b16 %v294
  %v1221 = vunpack.c.h.b16 %v294
  %v1222 = vunpack.c.l.b16 %v295
  %v1223 = vunpack.c.h.b16 %v295
  %v1224 = vunpack.c.l.b16 %v296
  %v1225 = vunpack.c.h.b16 %v296
  %v1226 = vunpack.c.l.b16 %v297
  %v1227 = vunpack.c.h.b16 %v297
  %v1228 = vunpack.c.l.b16 %v298
  %v1229 = vunpack.c.h.b16 %v298
  %v1230 = vunpack.c.l.b16 %v299
  %v1231 = vunpack.c.h.b16 %v299
  %v1232 = vunpack.c.l.b16 %v300
  %v1233 = vunpack.c.h.b16 %v300
  %v1234 = vunpack.c.l.b16 %v301
  %v1235 = vunpack.c.h.b16 %v301
  %v1236 = vunpack.c.l.b16 %v302
  %v1237 = vunpack.c.h.b16 %v302
  %v1238 = vunpack.c.l.b16 %v303
  %v1239 = vunpack.c.h.b16 %v303
  %v1240 = vunpack.c.l.b16 %v304
  %v1241 = vunpack.c.h.b16 %v304
  %v1242 = vunpack.c.l.b16 %v305
  %v1243 = vunpack.c.h.b16 %v305
  %v1244 = vunpack.c.l.b16 %v306
  %v1245 = vunpack.c.h.b16 %v306
  %v1246 = vunpack.c.l.b16 %v307
  %v1247 = vunpack.c.h.b16 %v307
  %v1248 = vpack.c.b16 %v738, %v736
  %v1249 = vpack.c.b16 %v739, %v737
  %v1250 = vpack.c.b16 %v742, %v740
  %v1251 = vpack.c.b16 %v743, %v741
  %v1252 = vpack.c.b16 %v746, %v744
  %v1253 = vpack.c.b16 %v747, %v745
  %v1254 = vpack.c.b16 %v750, %v748
  %v1255 = vpack.c.b16 %v751, %v749
  %v1256 = vpack.c.b16 %v754, %v752
  %v1257 = vpack.c.b16 %v755, %v753
  %v1258 = vpack.c.b16 %v758, %v756
  %v1259 = vpack.c.b16 %v759, %v757
  %v1260 = vpack.c.b16 %v762, %v760
  %v1261 = vpack.c.b16 %v763, %v761
  %v1262 = vpack.c.b16 %v766, %v764
  %v1263 = vpack.c.b16 %v767, %v765
  %v1264 = vpack.c.b16 %v770, %v768
  %v1265 = vpack.c.b16 %v771, %v769
  %v1266 = vpack.c.b16 %v774, %v772
  %v1267 = vpack.c.b16 %v775, %v773
  %v1268 = vpack.c.b16 %v778, %v776
  %v1269 = vpack.c.b16 %v779, %v777
  %v1270 = vpack.c.b16 %v782, %v780
  %v1271 = vpack.c.b16 %v783, %v781
  %v1272 = vpack.c.b16 %v786, %v784
  %v1273 = vpack.c.b16 %v787, %v785
  %v1274 = vpack.c.b16 %v790, %v788
  %v1275 = vpack.c.b16 %v791, %v789
  %v1276 = vpack.c.b16 %v794, %v792
  %v1277 = vpack.c.b16 %v795, %v793
  %v1278 = vpack.c.b16 %v798, %v796
  %v1279 = vpack.c.b16 %v799, %v797
  %v1280 = vpack.c.b16 %v802, %v800
  %v1281 = vpack.c.b16 %v803, %v801
  %v1282 = vpack.c.b16 %v806, %v804
  %v1283 = vpack.c.b16 %v807, %v805
  %v1284 = vpack.c.b16 %v810, %v808
  %v1285 = vpack.c.b16 %v811, %v809
  %v1286 = vpack.c.b16 %v814, %v812
  %v1287 = vpack.c.b16 %v815, %v813
  %v1288 = vpack.c.b16 %v818, %v816
  %v1289 = vpack.c.b16 %v819, %v817
  %v1290 = vpack.c.b16 %v822, %v820
  %v1291 = vpack.c.b16 %v823, %v821
  %v1292 = vpack.c.b16 %v826, %v824
  %v1293 = vpack.c.b16 %v827, %v825
  %v1294 = vpack.c.b16 %v830, %v828
  %v1295 = vpack.c.b16 %v831, %v829
  %v1296 = vpack.c.b16 %v834, %v832
  %v1297 = vpack.c.b16 %v835, %v833
  %v1298 = vpack.c.b16 %v838, %v836
  %v1299 = vpack.c.b16 %v839, %v837
  %v1300 = vpack.c.b16 %v842, %v840
  %v1301 = vpack.c.b16 %v843, %v841
  %v1302 = vpack.c.b16 %v846, %v844
  %v1303 = vpack.c.b16 %v847, %v845
  %v1304 = vpack.c.b16 %v850, %v848
  %v1305 = vpack.c.b16 %v851, %v849
  %v1306 = vpack.c.b16 %v854, %v852
  %v1307 = vpack.c.b16 %v855, %v853
  %v1308 = vpack.c.b16 %v858, %v856
  %v1309 = vpack.c.b16 %v859, %v857
  %v1310 = vpack.c.b16 %v862, %v860
  %v1311 = vpack.c.b16 %v863, %v861
  %v1312 = vpack.c.b16 %v866, %v864
  %v1313 = vpack.c.b16 %v867, %v865
  %v1314 = vpack.c.b16 %v870, %v868
  %v1315 = vpack.c.b16 %v871, %v869
  %v1316 = vpack.c.b16 %v874, %v872
  %v1317 = vpack.c.b16 %v875, %v873
  %v1318 = vpack.c.b16 %v878, %v876
  %v1319 = vpack.c.b16 %v879, %v877
  %v1320 = vpack.c.b16 %v882, %v880
  %v1321 = vpack.c.b16 %v883, %v881
  %v1322 = vpack.c.b16 %v886, %v884
  %v1323 = vpack.c.b16 %v887, %v885
  %v1324 = vpack.c.b16 %v890, %v888
  %v1325 = vpack.c.b16 %v891, %v889
  %v1326 = vpack.c.b16 %v894, %v892
  %v1327 = vpack.c.b16 %v895, %v893
  %v1328 = vpack.c.b16 %v898, %v896
  %v1329 = vpack.c.b16 %v899, %v897
  %v1330 = vpack.c.b16 %v902, %v900
  %v1331 = vpack.c.b16 %v903, %v901
  %v1332 = vpack.c.b16 %v906, %v904
  %v1333 = vpack.c.b16 %v907, %v905
  %v1334 = vpack.c.b16 %v910, %v908
  %v1335 = vpack.c.b16 %v911, %v909
  %v1336 = vpack.c.b16 %v914, %v912
  %v1337 = vpack.c.b16 %v915, %v913
  %v1338 = vpack.c.b16 %v918, %v916
  %v1339 = vpack.c.b16 %v919, %v917
  %v1340 = vpack.c.b16 %v922, %v920
  %v1341 = vpack.c.b16 %v923, %v921
  %v1342 = vpack.c.b16 %v926, %v924
  %v1343 = vpack.c.b16 %v927, %v925
  %v1344 = vpack.c.b16 %v930, %v928
  %v1345 = vpack.c.b16 %v931, %v929
  %v1346 = vpack.c.b16 %v934, %v932
  %v1347 = vpack.c.b16 %v935, %v933
  %v1348 = vpack.c.b16 %v938, %v936
  %v1349 = vpack.c.b16 %v939, %v937
  %v1350 = vpack.c.b16 %v942, %v940
  %v1351 = vpack.c.b16 %v943, %v941
  %v1352 = vpack.c.b16 %v946, %v944
  %v1353 = vpack.c.b16 %v947, %v945
  %v1354 = vpack.c.b16 %v950, %v948
  %v1355 = vpack.c.b16 %v951, %v949
  %v1356 = vpack.c.b16 %v954, %v952
  %v1357 = vpack.c.b16 %v955, %v953
  %v1358 = vpack.c.b16 %v958, %v956
  %v1359 = vpack.c.b16 %v959, %v957
  %v1360 = vpack.c.b16 %v962, %v960
  %v1361 = vpack.c.b16 %v963, %v961
  %v1362 = vpack.c.b16 %v966, %v964
  %v1363 = vpack.c.b16 %v967, %v965
  %v1364 = vpack.c.b16 %v970, %v968
  %v1365 = vpack.c.b16 %v971, %v969
  %v1366 = vpack.c.b16 %v974, %v972
  %v1367 = vpack.c.b16 %v975, %v973
  %v1368 = vpack.c.b16 %v978, %v976
  %v1369 = vpack.c.b16 %v979, %v977
  %v1370 = vpack.c.b16 %v982, %v980
  %v1371 = vpack.c.b16 %v983, %v981
  %v1372 = vpack.c.b16 %v986, %v984
  %v1373 = vpack.c.b16 %v987, %v985
  %v1374 = vpack.c.b16 %v990, %v988
  %v1375 = vpack.c.b16 %v991, %v989
  %v1376 = vpack.c.b16 %v994, %v992
  %v1377 = vpack.c.b16 %v995, %v993
  %v1378 = vpack.c.b16 %v998, %v996
  %v1379 = vpack.c.b16 %v999, %v997
  %v1380 = vpack.c.b16 %v1002, %v1000
  %v1381 = vpack.c.b16 %v1003, %v1001
  %v1382 = vpack.c.b16 %v1006, %v1004
  %v1383 = vpack.c.b16 %v1007, %v1005
  %v1384 = vpack.c.b16 %v1010, %v1008
  %v1385 = vpack.c.b16 %v1011, %v1009
  %v1386 = vpack.c.b16 %v1014, %v1012
  %v1387 = vpack.c.b16 %v1015, %v1013
  %v1388 = vpack.c.b16 %v1018, %v1016
  %v1389 = vpack.c.b16 %v1019, %v1017
  %v1390 = vpack.c.b16 %v1022, %v1020
  %v1391 = vpack.c.b16 %v1023, %v1021
  %v1392 = vpack.c.b16 %v1026, %v1024
  %v1393 = vpack.c.b16 %v1027, %v1025
  %v1394 = vpack.c.b16 %v1030, %v1028
  %v1395 = vpack.c.b16 %v1031, %v1029
  %v1396 = vpack.c.b16 %v1034, %v1032
  %v1397 = vpack.c.b16 %v1035, %v1033
  %v1398 = vpack.c.b16 %v1038, %v1036
  %v1399 = vpack.c.b16 %v1039, %v1037
  %v1400 = vpack.c.b16 %v1042, %v1040
  %v1401 = vpack.c.b16 %v1043, %v1041
  %v1402 = vpack.c.b16 %v1046, %v1044
  %v1403 = vpack.c.b16 %v1047, %v1045
  %v1404 = vpack.c.b16 %v1050, %v1048
  %v1405 = vpack.c.b16 %v1051, %v1049
  %v1406 = vpack.c.b16 %v1054, %v1052
  %v1407 = vpack.c.b16 %v1055, %v1053
  %v1408 = vpack.c.b16 %v1058, %v1056
  %v1409 = vpack.c.b16 %v1059, %v1057
  %v1410 = vpack.c.b16 %v1062, %v1060
  %v1411 = vpack.c.b16 %v1063, %v1061
  %v1412 = vpack.c.b16 %v1066, %v1064
  %v1413 = vpack.c.b16 %v1067, %v1065
  %v1414 = vpack.c.b16 %v1070, %v1068
  %v1415 = vpack.c.b16 %v1071, %v1069
  %v1416 = vpack.c.b16 %v1074, %v1072
  %v1417 = vpack.c.b16 %v1075, %v1073
  %v1418 = vpack.c.b16 %v1078, %v1076
  %v1419 = vpack.c.b16 %v1079, %v1077
  %v1420 = vpack.c.b16 %v1082, %v1080
  %v1421 = vpack.c.b16 %v1083, %v1081
  %v1422 = vpack.c.b16 %v1086, %v1084
  %v1423 = vpack.c.b16 %v1087, %v1085
  %v1424 = vpack.c.b16 %v1090, %v1088
  %v1425 = vpack.c.b16 %v1091, %v1089
  %v1426 = vpack.c.b16 %v1094, %v1092
  %v1427 = vpack.c.b16 %v1095, %v1093
  %v1428 = vpack.c.b16 %v1098, %v1096
  %v1429 = vpack.c.b16 %v1099, %v1097
  %v1430 = vpack.c.b16 %v1102, %v1100
  %v1431 = vpack.c.b16 %v1103, %v1101
  %v1432 = vpack.c.b16 %v1106, %v1104
  %v1433 = vpack.c.b16 %v1107, %v1105
  %v1434 = vpack.c.b16 %v1110, %v1108
  %v1435 = vpack.c.b16 %v1111, %v1109
  %v1436 = vpack.c.b16 %v1114, %v1112
  %v1437 = vpack.c.b16 %v1115, %v1113
  %v1438 = vpack.c.b16 %v1118, %v1116
  %v1439 = vpack.c.b16 %v1119, %v1117
  %v1440 = vpack.c.b16 %v1122, %v1120
  %v1441 = vpack.c.b16 %v1123, %v1121
  %v1442 = vpack.c.b16 %v1126, %v1124
  %v1443 = vpack.c.b16 %v1127, %v1125
  %v1444 = vpack.c.b16 %v1130, %v1128
  %v1445 = vpack.c.b16 %v1131, %v1129
  %v1446 = vpack.c.b16 %v1134, %v1132
  %v1447 = vpack.c.b16 %v1135, %v1133
  %v1448 = vpack.c.b16 %v1138, %v1136
  %v1449 = vpack.c.b16 %v1139, %v1137
  %v1450 = vpack.c.b16 %v1142, %v1140
  %v1451 = vpack.c.b16 %v1143, %v1141
  %v1452 = vpack.c.b16 %v1146, %v1144
  %v1453 = vpack.c.b16 %v1147, %v1145
  %v1454 = vpack.c.b16 %v1150, %v1148
  %v1455 = vpack.c.b16 %v1151, %v1149
  %v1456 = vpack.c.b16 %v1154, %v1152
  %v1457 = vpack.c.b16 %v1155, %v1153
  %v1458 = vpack.c.b16 %v1158, %v1156
  %v1459 = vpack.c.b16 %v1159, %v1157
  %v1460 = vpack.c.b16 %v1162, %v1160
  %v1461 = vpack.c.b16 %v1163, %v1161
  %v1462 = vpack.c.b16 %v1166, %v1164
  %v1463 = vpack.c.b16 %v1167, %v1165
  %v1464 = vpack.c.b16 %v1170, %v1168
  %v1465 = vpack.c.b16 %v1171, %v1169
  %v1466 = vpack.c.b16 %v1174, %v1172
  %v1467 = vpack.c.b16 %v1175, %v1173
  %v1468 = vpack.c.b16 %v1178, %v1176
  %v1469 = vpack.c.b16 %v1179, %v1177
  %v1470 = vpack.c.b16 %v1182, %v1180
  %v1471 = vpack.c.b16 %v1183, %v1181
  %v1472 = vpack.c.b16 %v1186, %v1184
  %v1473 = vpack.c.b16 %v1187, %v1185
  %v1474 = vpack.c.b16 %v1190, %v1188
  %v1475 = vpack.c.b16 %v1191, %v1189
  %v1476 = vpack.c.b16 %v1194, %v1192
  %v1477 = vpack.c.b16 %v1195, %v1193
  %v1478 = vpack.c.b16 %v1198, %v1196
  %v1479 = vpack.c.b16 %v1199, %v1197
  %v1480 = vpack.c.b16 %v1202, %v1200
  %v1481 = vpack.c.b16 %v1203, %v1201
  %v1482 = vpack.c.b16 %v1206, %v1204
  %v1483 = vpack.c.b16 %v1207, %v1205
  %v1484 = vpack.c.b16 %v1210, %v1208
  %v1485 = vpack.c.b16 %v1211, %v1209
  %v1486 = vpack.c.b16 %v1214, %v1212
  %v1487 = vpack.c.b16 %v1215, %v1213
  %v1488 = vpack.c.b16 %v1218, %v1216
  %v1489 = vpack.c.b16 %v1219, %v1217
  %v1490 = vpack.c.b16 %v1222, %v1220
  %v1491 = vpack.c.b16 %v1223, %v1221
  %v1492 = vpack.c.b16 %v1226, %v1224
  %v1493 = vpack.c.b16 %v1227, %v1225
  %v1494 = vpack.c.b16 %v1230, %v1228
  %v1495 = vpack.c.b16 %v1231, %v1229
  %v1496 = vpack.c.b16 %v1234, %v1232
  %v1497 = vpack.c.b16 %v1235, %v1233
  %v1498 = vpack.c.b16 %v1238, %v1236
  %v1499 = vpack.c.b16 %v1239, %v1237
  %v1500 = vpack.c.b16 %v1242, %v1240
  %v1501 = vpack.c.b16 %v1243, %v1241
  %v1502 = vpack.c.b16 %v1246, %v1244
  %v1503 = vpack.c.b16 %v1247, %v1245
  %1760 = vmatprep.subr.bf16.mxu0 %v1263
  %1761 = vmatpush1.bf16.msra.mxu0 %v1262
  %1762 = vmatprep.subr.bf16.mxu0 %v1261
  %1763 = vmatpush1.bf16.msra.mxu0 %v1260
  %1764 = vmatprep.subr.bf16.mxu0 %v1259
  %1765 = vmatpush1.bf16.msra.mxu0 %v1258
  %1766 = vmatprep.subr.bf16.mxu0 %v1257
  %1767 = vmatpush1.bf16.msra.mxu0 %v1256
  %1768 = vmatprep.subr.bf16.mxu0 %v1255
  %1769 = vmatpush1.bf16.msra.mxu0 %v1254
  %1770 = vmatprep.subr.bf16.mxu0 %v1253
  %1771 = vmatpush1.bf16.msra.mxu0 %v1252
  %1772 = vmatprep.subr.bf16.mxu0 %v1251
  %1773 = vmatpush1.bf16.msra.mxu0 %v1250
  %1774 = vmatprep.subr.bf16.mxu0 %v1249
  %1775 = vmatpush1.bf16.msra.mxu0 %v1248
  %1776 = vmatprep.subr.bf16.mxu0 %v1279
  %1777 = vmatpush2.bf16.msra.mxu0 %v1278
  %1778 = vmatprep.subr.bf16.mxu0 %v1277
  %1779 = vmatpush2.bf16.msra.mxu0 %v1276
  %1780 = vmatprep.subr.bf16.mxu0 %v1275
  %1781 = vmatpush2.bf16.msra.mxu0 %v1274
  %1782 = vmatprep.subr.bf16.mxu0 %v1273
  %1783 = vmatpush2.bf16.msra.mxu0 %v1272
  %1784 = vmatprep.subr.bf16.mxu0 %v1271
  %1785 = vmatpush2.bf16.msra.mxu0 %v1270
  %1786 = vmatprep.subr.bf16.mxu0 %v1269
  %1787 = vmatpush2.bf16.msra.mxu0 %v1268
  %1788 = vmatprep.subr.bf16.mxu0 %v1267
  %1789 = vmatpush2.bf16.msra.mxu0 %v1266
  %1790 = vmatprep.subr.bf16.mxu0 %v1265
  %1791 = vmatpush2.bf16.msra.mxu0 %v1264
  %1792 = vmatprep.mubr.bf16.mxu0 %v417
  %1793 = vmatmul.mubr.bf16.gmra.mxu0 %v416
  %v1794 = vpop.f32.mrf.mxu0
  %v1795 = vadd.f32 %v313, %v1794
  %v1796 = vpop.f32.mrf.mxu0
  %v1797 = vadd.f32 %v317, %v1796
  %v1798 = vpop.f32.mrf.mxu0
  %v1799 = vadd.f32 %v313, %v1798
  %v1800 = vpop.f32.mrf.mxu0
  %v1801 = vadd.f32 %v317, %v1800
  %1802 = vmatprep.mubr.bf16.mxu0 %v433
  %1803 = vmatmul.mubr.bf16.gmra.mxu0 %v432
  %v1804 = vpop.f32.mrf.mxu0
  %v1805 = vadd.f32 %v313, %v1804
  %v1806 = vpop.f32.mrf.mxu0
  %v1807 = vadd.f32 %v317, %v1806
  %v1808 = vpop.f32.mrf.mxu0
  %v1809 = vadd.f32 %v313, %v1808
  %v1810 = vpop.f32.mrf.mxu0
  %v1811 = vadd.f32 %v317, %v1810
  %1812 = vdwg.mxu0
  %1813 = vmatprep.subr.bf16.mxu0 %v1295
  %1814 = vmatpush1.bf16.msra.mxu0 %v1294
  %1815 = vmatprep.subr.bf16.mxu0 %v1293
  %1816 = vmatpush1.bf16.msra.mxu0 %v1292
  %1817 = vmatprep.subr.bf16.mxu0 %v1291
  %1818 = vmatpush1.bf16.msra.mxu0 %v1290
  %1819 = vmatprep.subr.bf16.mxu0 %v1289
  %1820 = vmatpush1.bf16.msra.mxu0 %v1288
  %1821 = vmatprep.subr.bf16.mxu0 %v1287
  %1822 = vmatpush1.bf16.msra.mxu0 %v1286
  %1823 = vmatprep.subr.bf16.mxu0 %v1285
  %1824 = vmatpush1.bf16.msra.mxu0 %v1284
  %1825 = vmatprep.subr.bf16.mxu0 %v1283
  %1826 = vmatpush1.bf16.msra.mxu0 %v1282
  %1827 = vmatprep.subr.bf16.mxu0 %v1281
  %1828 = vmatpush1.bf16.msra.mxu0 %v1280
  %1829 = vmatprep.subr.bf16.mxu0 %v1311
  %1830 = vmatpush2.bf16.msra.mxu0 %v1310
  %1831 = vmatprep.subr.bf16.mxu0 %v1309
  %1832 = vmatpush2.bf16.msra.mxu0 %v1308
  %1833 = vmatprep.subr.bf16.mxu0 %v1307
  %1834 = vmatpush2.bf16.msra.mxu0 %v1306
  %1835 = vmatprep.subr.bf16.mxu0 %v1305
  %1836 = vmatpush2.bf16.msra.mxu0 %v1304
  %1837 = vmatprep.subr.bf16.mxu0 %v1303
  %1838 = vmatpush2.bf16.msra.mxu0 %v1302
  %1839 = vmatprep.subr.bf16.mxu0 %v1301
  %1840 = vmatpush2.bf16.msra.mxu0 %v1300
  %1841 = vmatprep.subr.bf16.mxu0 %v1299
  %1842 = vmatpush2.bf16.msra.mxu0 %v1298
  %1843 = vmatprep.subr.bf16.mxu0 %v1297
  %1844 = vmatpush2.bf16.msra.mxu0 %v1296
  %1845 = vmatprep.mubr.bf16.mxu0 %v419
  %1846 = vmatmul.mubr.bf16.gmra.mxu0 %v418
  %v1847 = vpop.f32.mrf.mxu0
  %v1848 = vadd.f32 %v1795, %v1847
  %v1849 = vpop.f32.mrf.mxu0
  %v1850 = vadd.f32 %v1797, %v1849
  %v1851 = vpop.f32.mrf.mxu0
  %v1852 = vadd.f32 %v1799, %v1851
  %v1853 = vpop.f32.mrf.mxu0
  %v1854 = vadd.f32 %v1801, %v1853
  %1855 = vmatprep.mubr.bf16.mxu0 %v435
  %1856 = vmatmul.mubr.bf16.gmra.mxu0 %v434
  %v1857 = vpop.f32.mrf.mxu0
  %v1858 = vadd.f32 %v1805, %v1857
  %v1859 = vpop.f32.mrf.mxu0
  %v1860 = vadd.f32 %v1807, %v1859
  %v1861 = vpop.f32.mrf.mxu0
  %v1862 = vadd.f32 %v1809, %v1861
  %v1863 = vpop.f32.mrf.mxu0
  %v1864 = vadd.f32 %v1811, %v1863
  %1865 = vdwg.mxu0
  %1866 = vmatprep.subr.bf16.mxu0 %v1327
  %1867 = vmatpush1.bf16.msra.mxu0 %v1326
  %1868 = vmatprep.subr.bf16.mxu0 %v1325
  %1869 = vmatpush1.bf16.msra.mxu0 %v1324
  %1870 = vmatprep.subr.bf16.mxu0 %v1323
  %1871 = vmatpush1.bf16.msra.mxu0 %v1322
  %1872 = vmatprep.subr.bf16.mxu0 %v1321
  %1873 = vmatpush1.bf16.msra.mxu0 %v1320
  %1874 = vmatprep.subr.bf16.mxu0 %v1319
  %1875 = vmatpush1.bf16.msra.mxu0 %v1318
  %1876 = vmatprep.subr.bf16.mxu0 %v1317
  %1877 = vmatpush1.bf16.msra.mxu0 %v1316
  %1878 = vmatprep.subr.bf16.mxu0 %v1315
  %1879 = vmatpush1.bf16.msra.mxu0 %v1314
  %1880 = vmatprep.subr.bf16.mxu0 %v1313
  %1881 = vmatpush1.bf16.msra.mxu0 %v1312
  %1882 = vmatprep.subr.bf16.mxu0 %v1343
  %1883 = vmatpush2.bf16.msra.mxu0 %v1342
  %1884 = vmatprep.subr.bf16.mxu0 %v1341
  %1885 = vmatpush2.bf16.msra.mxu0 %v1340
  %1886 = vmatprep.subr.bf16.mxu0 %v1339
  %1887 = vmatpush2.bf16.msra.mxu0 %v1338
  %1888 = vmatprep.subr.bf16.mxu0 %v1337
  %1889 = vmatpush2.bf16.msra.mxu0 %v1336
  %1890 = vmatprep.subr.bf16.mxu0 %v1335
  %1891 = vmatpush2.bf16.msra.mxu0 %v1334
  %1892 = vmatprep.subr.bf16.mxu0 %v1333
  %1893 = vmatpush2.bf16.msra.mxu0 %v1332
  %1894 = vmatprep.subr.bf16.mxu0 %v1331
  %1895 = vmatpush2.bf16.msra.mxu0 %v1330
  %1896 = vmatprep.subr.bf16.mxu0 %v1329
  %1897 = vmatpush2.bf16.msra.mxu0 %v1328
  %1898 = vmatprep.mubr.bf16.mxu0 %v421
  %1899 = vmatmul.mubr.bf16.gmra.mxu0 %v420
  %v1900 = vpop.f32.mrf.mxu0
  %v1901 = vadd.f32 %v1848, %v1900
  %v1902 = vpop.f32.mrf.mxu0
  %v1903 = vadd.f32 %v1850, %v1902
  %v1904 = vpop.f32.mrf.mxu0
  %v1905 = vadd.f32 %v1852, %v1904
  %v1906 = vpop.f32.mrf.mxu0
  %v1907 = vadd.f32 %v1854, %v1906
  %1908 = vmatprep.mubr.bf16.mxu0 %v437
  %1909 = vmatmul.mubr.bf16.gmra.mxu0 %v436
  %v1910 = vpop.f32.mrf.mxu0
  %v1911 = vadd.f32 %v1858, %v1910
  %v1912 = vpop.f32.mrf.mxu0
  %v1913 = vadd.f32 %v1860, %v1912
  %v1914 = vpop.f32.mrf.mxu0
  %v1915 = vadd.f32 %v1862, %v1914
  %v1916 = vpop.f32.mrf.mxu0
  %v1917 = vadd.f32 %v1864, %v1916
  %1918 = vdwg.mxu0
  %1919 = vmatprep.subr.bf16.mxu0 %v1359
  %1920 = vmatpush1.bf16.msra.mxu0 %v1358
  %1921 = vmatprep.subr.bf16.mxu0 %v1357
  %1922 = vmatpush1.bf16.msra.mxu0 %v1356
  %1923 = vmatprep.subr.bf16.mxu0 %v1355
  %1924 = vmatpush1.bf16.msra.mxu0 %v1354
  %1925 = vmatprep.subr.bf16.mxu0 %v1353
  %1926 = vmatpush1.bf16.msra.mxu0 %v1352
  %1927 = vmatprep.subr.bf16.mxu0 %v1351
  %1928 = vmatpush1.bf16.msra.mxu0 %v1350
  %1929 = vmatprep.subr.bf16.mxu0 %v1349
  %1930 = vmatpush1.bf16.msra.mxu0 %v1348
  %1931 = vmatprep.subr.bf16.mxu0 %v1347
  %1932 = vmatpush1.bf16.msra.mxu0 %v1346
  %1933 = vmatprep.subr.bf16.mxu0 %v1345
  %1934 = vmatpush1.bf16.msra.mxu0 %v1344
  %1935 = vmatprep.subr.bf16.mxu0 %v1375
  %1936 = vmatpush2.bf16.msra.mxu0 %v1374
  %1937 = vmatprep.subr.bf16.mxu0 %v1373
  %1938 = vmatpush2.bf16.msra.mxu0 %v1372
  %1939 = vmatprep.subr.bf16.mxu0 %v1371
  %1940 = vmatpush2.bf16.msra.mxu0 %v1370
  %1941 = vmatprep.subr.bf16.mxu0 %v1369
  %1942 = vmatpush2.bf16.msra.mxu0 %v1368
  %1943 = vmatprep.subr.bf16.mxu0 %v1367
  %1944 = vmatpush2.bf16.msra.mxu0 %v1366
  %1945 = vmatprep.subr.bf16.mxu0 %v1365
  %1946 = vmatpush2.bf16.msra.mxu0 %v1364
  %1947 = vmatprep.subr.bf16.mxu0 %v1363
  %1948 = vmatpush2.bf16.msra.mxu0 %v1362
  %1949 = vmatprep.subr.bf16.mxu0 %v1361
  %1950 = vmatpush2.bf16.msra.mxu0 %v1360
  %1951 = vmatprep.mubr.bf16.mxu0 %v423
  %1952 = vmatmul.mubr.bf16.gmra.mxu0 %v422
  %v1953 = vpop.f32.mrf.mxu0
  %v1954 = vadd.f32 %v1901, %v1953
  %v1955 = vpop.f32.mrf.mxu0
  %v1956 = vadd.f32 %v1903, %v1955
  %v1957 = vpop.f32.mrf.mxu0
  %v1958 = vadd.f32 %v1905, %v1957
  %v1959 = vpop.f32.mrf.mxu0
  %v1960 = vadd.f32 %v1907, %v1959
  %1961 = vmatprep.mubr.bf16.mxu0 %v439
  %1962 = vmatmul.mubr.bf16.gmra.mxu0 %v438
  %v1963 = vpop.f32.mrf.mxu0
  %v1964 = vadd.f32 %v1911, %v1963
  %v1965 = vpop.f32.mrf.mxu0
  %v1966 = vadd.f32 %v1913, %v1965
  %v1967 = vpop.f32.mrf.mxu0
  %v1968 = vadd.f32 %v1915, %v1967
  %v1969 = vpop.f32.mrf.mxu0
  %v1970 = vadd.f32 %v1917, %v1969
  %1971 = vdwg.mxu0
  %1972 = vmatprep.subr.bf16.mxu0 %v1391
  %1973 = vmatpush1.bf16.msra.mxu0 %v1390
  %1974 = vmatprep.subr.bf16.mxu0 %v1389
  %1975 = vmatpush1.bf16.msra.mxu0 %v1388
  %1976 = vmatprep.subr.bf16.mxu0 %v1387
  %1977 = vmatpush1.bf16.msra.mxu0 %v1386
  %1978 = vmatprep.subr.bf16.mxu0 %v1385
  %1979 = vmatpush1.bf16.msra.mxu0 %v1384
  %1980 = vmatprep.subr.bf16.mxu0 %v1383
  %1981 = vmatpush1.bf16.msra.mxu0 %v1382
  %1982 = vmatprep.subr.bf16.mxu0 %v1381
  %1983 = vmatpush1.bf16.msra.mxu0 %v1380
  %1984 = vmatprep.subr.bf16.mxu0 %v1379
  %1985 = vmatpush1.bf16.msra.mxu0 %v1378
  %1986 = vmatprep.subr.bf16.mxu0 %v1377
  %1987 = vmatpush1.bf16.msra.mxu0 %v1376
  %1988 = vmatprep.subr.bf16.mxu0 %v1407
  %1989 = vmatpush2.bf16.msra.mxu0 %v1406
  %1990 = vmatprep.subr.bf16.mxu0 %v1405
  %1991 = vmatpush2.bf16.msra.mxu0 %v1404
  %1992 = vmatprep.subr.bf16.mxu0 %v1403
  %1993 = vmatpush2.bf16.msra.mxu0 %v1402
  %1994 = vmatprep.subr.bf16.mxu0 %v1401
  %1995 = vmatpush2.bf16.msra.mxu0 %v1400
  %1996 = vmatprep.subr.bf16.mxu0 %v1399
  %1997 = vmatpush2.bf16.msra.mxu0 %v1398
  %1998 = vmatprep.subr.bf16.mxu0 %v1397
  %1999 = vmatpush2.bf16.msra.mxu0 %v1396
  %2000 = vmatprep.subr.bf16.mxu0 %v1395
  %2001 = vmatpush2.bf16.msra.mxu0 %v1394
  %2002 = vmatprep.subr.bf16.mxu0 %v1393
  %2003 = vmatpush2.bf16.msra.mxu0 %v1392
  %2004 = vmatprep.mubr.bf16.mxu0 %v425
  %2005 = vmatmul.mubr.bf16.gmra.mxu0 %v424
  %v2006 = vpop.f32.mrf.mxu0
  %v2007 = vadd.f32 %v1954, %v2006
  %v2008 = vpop.f32.mrf.mxu0
  %v2009 = vadd.f32 %v1956, %v2008
  %v2010 = vpop.f32.mrf.mxu0
  %v2011 = vadd.f32 %v1958, %v2010
  %v2012 = vpop.f32.mrf.mxu0
  %v2013 = vadd.f32 %v1960, %v2012
  %2014 = vmatprep.mubr.bf16.mxu0 %v441
  %2015 = vmatmul.mubr.bf16.gmra.mxu0 %v440
  %v2016 = vpop.f32.mrf.mxu0
  %v2017 = vadd.f32 %v1964, %v2016
  %v2018 = vpop.f32.mrf.mxu0
  %v2019 = vadd.f32 %v1966, %v2018
  %v2020 = vpop.f32.mrf.mxu0
  %v2021 = vadd.f32 %v1968, %v2020
  %v2022 = vpop.f32.mrf.mxu0
  %v2023 = vadd.f32 %v1970, %v2022
  %2024 = vdwg.mxu0
  %2025 = vmatprep.subr.bf16.mxu0 %v1423
  %2026 = vmatpush1.bf16.msra.mxu0 %v1422
  %2027 = vmatprep.subr.bf16.mxu0 %v1421
  %2028 = vmatpush1.bf16.msra.mxu0 %v1420
  %2029 = vmatprep.subr.bf16.mxu0 %v1419
  %2030 = vmatpush1.bf16.msra.mxu0 %v1418
  %2031 = vmatprep.subr.bf16.mxu0 %v1417
  %2032 = vmatpush1.bf16.msra.mxu0 %v1416
  %2033 = vmatprep.subr.bf16.mxu0 %v1415
  %2034 = vmatpush1.bf16.msra.mxu0 %v1414
  %2035 = vmatprep.subr.bf16.mxu0 %v1413
  %2036 = vmatpush1.bf16.msra.mxu0 %v1412
  %2037 = vmatprep.subr.bf16.mxu0 %v1411
  %2038 = vmatpush1.bf16.msra.mxu0 %v1410
  %2039 = vmatprep.subr.bf16.mxu0 %v1409
  %2040 = vmatpush1.bf16.msra.mxu0 %v1408
  %2041 = vmatprep.subr.bf16.mxu0 %v1439
  %2042 = vmatpush2.bf16.msra.mxu0 %v1438
  %2043 = vmatprep.subr.bf16.mxu0 %v1437
  %2044 = vmatpush2.bf16.msra.mxu0 %v1436
  %2045 = vmatprep.subr.bf16.mxu0 %v1435
  %2046 = vmatpush2.bf16.msra.mxu0 %v1434
  %2047 = vmatprep.subr.bf16.mxu0 %v1433
  %2048 = vmatpush2.bf16.msra.mxu0 %v1432
  %2049 = vmatprep.subr.bf16.mxu0 %v1431
  %2050 = vmatpush2.bf16.msra.mxu0 %v1430
  %2051 = vmatprep.subr.bf16.mxu0 %v1429
  %2052 = vmatpush2.bf16.msra.mxu0 %v1428
  %2053 = vmatprep.subr.bf16.mxu0 %v1427
  %2054 = vmatpush2.bf16.msra.mxu0 %v1426
  %2055 = vmatprep.subr.bf16.mxu0 %v1425
  %2056 = vmatpush2.bf16.msra.mxu0 %v1424
  %2057 = vmatprep.mubr.bf16.mxu0 %v427
  %2058 = vmatmul.mubr.bf16.gmra.mxu0 %v426
  %v2059 = vpop.f32.mrf.mxu0
  %v2060 = vadd.f32 %v2007, %v2059
  %v2061 = vpop.f32.mrf.mxu0
  %v2062 = vadd.f32 %v2009, %v2061
  %v2063 = vpop.f32.mrf.mxu0
  %v2064 = vadd.f32 %v2011, %v2063
  %v2065 = vpop.f32.mrf.mxu0
  %v2066 = vadd.f32 %v2013, %v2065
  %2067 = vmatprep.mubr.bf16.mxu0 %v443
  %2068 = vmatmul.mubr.bf16.gmra.mxu0 %v442
  %v2069 = vpop.f32.mrf.mxu0
  %v2070 = vadd.f32 %v2017, %v2069
  %v2071 = vpop.f32.mrf.mxu0
  %v2072 = vadd.f32 %v2019, %v2071
  %v2073 = vpop.f32.mrf.mxu0
  %v2074 = vadd.f32 %v2021, %v2073
  %v2075 = vpop.f32.mrf.mxu0
  %v2076 = vadd.f32 %v2023, %v2075
  %2077 = vdwg.mxu0
  %2078 = vmatprep.subr.bf16.mxu0 %v1455
  %2079 = vmatpush1.bf16.msra.mxu0 %v1454
  %2080 = vmatprep.subr.bf16.mxu0 %v1453
  %2081 = vmatpush1.bf16.msra.mxu0 %v1452
  %2082 = vmatprep.subr.bf16.mxu0 %v1451
  %2083 = vmatpush1.bf16.msra.mxu0 %v1450
  %2084 = vmatprep.subr.bf16.mxu0 %v1449
  %2085 = vmatpush1.bf16.msra.mxu0 %v1448
  %2086 = vmatprep.subr.bf16.mxu0 %v1447
  %2087 = vmatpush1.bf16.msra.mxu0 %v1446
  %2088 = vmatprep.subr.bf16.mxu0 %v1445
  %2089 = vmatpush1.bf16.msra.mxu0 %v1444
  %2090 = vmatprep.subr.bf16.mxu0 %v1443
  %2091 = vmatpush1.bf16.msra.mxu0 %v1442
  %2092 = vmatprep.subr.bf16.mxu0 %v1441
  %2093 = vmatpush1.bf16.msra.mxu0 %v1440
  %2094 = vmatprep.subr.bf16.mxu0 %v1471
  %2095 = vmatpush2.bf16.msra.mxu0 %v1470
  %2096 = vmatprep.subr.bf16.mxu0 %v1469
  %2097 = vmatpush2.bf16.msra.mxu0 %v1468
  %2098 = vmatprep.subr.bf16.mxu0 %v1467
  %2099 = vmatpush2.bf16.msra.mxu0 %v1466
  %2100 = vmatprep.subr.bf16.mxu0 %v1465
  %2101 = vmatpush2.bf16.msra.mxu0 %v1464
  %2102 = vmatprep.subr.bf16.mxu0 %v1463
  %2103 = vmatpush2.bf16.msra.mxu0 %v1462
  %2104 = vmatprep.subr.bf16.mxu0 %v1461
  %2105 = vmatpush2.bf16.msra.mxu0 %v1460
  %2106 = vmatprep.subr.bf16.mxu0 %v1459
  %2107 = vmatpush2.bf16.msra.mxu0 %v1458
  %2108 = vmatprep.subr.bf16.mxu0 %v1457
  %2109 = vmatpush2.bf16.msra.mxu0 %v1456
  %2110 = vmatprep.mubr.bf16.mxu0 %v429
  %2111 = vmatmul.mubr.bf16.gmra.mxu0 %v428
  %v2112 = vpop.f32.mrf.mxu0
  %v2113 = vadd.f32 %v2060, %v2112
  %v2114 = vpop.f32.mrf.mxu0
  %v2115 = vadd.f32 %v2062, %v2114
  %v2116 = vpop.f32.mrf.mxu0
  %v2117 = vadd.f32 %v2064, %v2116
  %v2118 = vpop.f32.mrf.mxu0
  %v2119 = vadd.f32 %v2066, %v2118
  %2120 = vmatprep.mubr.bf16.mxu0 %v445
  %2121 = vmatmul.mubr.bf16.gmra.mxu0 %v444
  %v2122 = vpop.f32.mrf.mxu0
  %v2123 = vadd.f32 %v2070, %v2122
  %v2124 = vpop.f32.mrf.mxu0
  %v2125 = vadd.f32 %v2072, %v2124
  %v2126 = vpop.f32.mrf.mxu0
  %v2127 = vadd.f32 %v2074, %v2126
  %v2128 = vpop.f32.mrf.mxu0
  %v2129 = vadd.f32 %v2076, %v2128
  %2130 = vdwg.mxu0
  %2131 = vmatprep.subr.bf16.mxu0 %v1487
  %2132 = vmatpush1.bf16.msra.mxu0 %v1486
  %2133 = vmatprep.subr.bf16.mxu0 %v1485
  %2134 = vmatpush1.bf16.msra.mxu0 %v1484
  %2135 = vmatprep.subr.bf16.mxu0 %v1483
  %2136 = vmatpush1.bf16.msra.mxu0 %v1482
  %2137 = vmatprep.subr.bf16.mxu0 %v1481
  %2138 = vmatpush1.bf16.msra.mxu0 %v1480
  %2139 = vmatprep.subr.bf16.mxu0 %v1479
  %2140 = vmatpush1.bf16.msra.mxu0 %v1478
  %2141 = vmatprep.subr.bf16.mxu0 %v1477
  %2142 = vmatpush1.bf16.msra.mxu0 %v1476
  %2143 = vmatprep.subr.bf16.mxu0 %v1475
  %2144 = vmatpush1.bf16.msra.mxu0 %v1474
  %2145 = vmatprep.subr.bf16.mxu0 %v1473
  %2146 = vmatpush1.bf16.msra.mxu0 %v1472
  %2147 = vmatprep.subr.bf16.mxu0 %v1503
  %2148 = vmatpush2.bf16.msra.mxu0 %v1502
  %2149 = vmatprep.subr.bf16.mxu0 %v1501
  %2150 = vmatpush2.bf16.msra.mxu0 %v1500
  %2151 = vmatprep.subr.bf16.mxu0 %v1499
  %2152 = vmatpush2.bf16.msra.mxu0 %v1498
  %2153 = vmatprep.subr.bf16.mxu0 %v1497
  %2154 = vmatpush2.bf16.msra.mxu0 %v1496
  %2155 = vmatprep.subr.bf16.mxu0 %v1495
  %2156 = vmatpush2.bf16.msra.mxu0 %v1494
  %2157 = vmatprep.subr.bf16.mxu0 %v1493
  %2158 = vmatpush2.bf16.msra.mxu0 %v1492
  %2159 = vmatprep.subr.bf16.mxu0 %v1491
  %2160 = vmatpush2.bf16.msra.mxu0 %v1490
  %2161 = vmatprep.subr.bf16.mxu0 %v1489
  %2162 = vmatpush2.bf16.msra.mxu0 %v1488
  %2163 = vmatprep.mubr.bf16.mxu0 %v431
  %2164 = vmatmul.mubr.bf16.gmra.mxu0 %v430
  %v2165 = vpop.f32.mrf.mxu0
  %v2166 = vadd.f32 %v2113, %v2165
  %v2167 = vpop.f32.mrf.mxu0
  %v2168 = vadd.f32 %v2115, %v2167
  %v2169 = vpop.f32.mrf.mxu0
  %v2170 = vadd.f32 %v2117, %v2169
  %v2171 = vpop.f32.mrf.mxu0
  %v2172 = vadd.f32 %v2119, %v2171
  %2173 = vmatprep.mubr.bf16.mxu0 %v447
  %2174 = vmatmul.mubr.bf16.gmra.mxu0 %v446
  %v2175 = vpop.f32.mrf.mxu0
  %v2176 = vadd.f32 %v2123, %v2175
  %v2177 = vpop.f32.mrf.mxu0
  %v2178 = vadd.f32 %v2125, %v2177
  %v2179 = vpop.f32.mrf.mxu0
  %v2180 = vadd.f32 %v2127, %v2179
  %v2181 = vpop.f32.mrf.mxu0
  %v2182 = vadd.f32 %v2129, %v2181
  %2183 = vdwg.mxu0
  %v2184 = vadd.f32 %v2166, %v2170
  %v2185 = vadd.f32 %v2184, %v2176
  %v2186 = vadd.f32 %v2185, %v2180
  %v2187 = vrot.slane %v2186, 4
  %v2188 = vadd.f32 %v2186, %v2187
  %v2189 = vrot.slane %v2188, 2
  %v2190 = vadd.f32 %v2188, %v2189
  %v2191 = vrot.slane %v2190, 1
  %v2192 = vadd.f32 %v2190, %v2191
  %v2193 = vadd.f32 %v2168, %v2172
  %v2194 = vadd.f32 %v2193, %v2178
  %v2195 = vadd.f32 %v2194, %v2182
  %v2196 = vrot.slane %v2195, 4
  %v2197 = vadd.f32 %v2195, %v2196
  %v2198 = vrot.slane %v2197, 2
  %v2199 = vadd.f32 %v2197, %v2198
  %v2200 = vrot.slane %v2199, 1
  %v2201 = vadd.f32 %v2199, %v2200
  %v2202 = vmul.f32 %v2192, 0.03125
  %v2203 = vmul.f32 %v2201, 0.03125
  %v2204 = vmul.f32 %v2166, %v2166
  %v2205 = vmul.f32 %v2168, %v2168
  %v2206 = vmul.f32 %v2170, %v2170
  %v2207 = vmul.f32 %v2172, %v2172
  %v2208 = vmul.f32 %v2176, %v2176
  %v2209 = vmul.f32 %v2178, %v2178
  %v2210 = vmul.f32 %v2180, %v2180
  %v2211 = vmul.f32 %v2182, %v2182
  %v2212 = vadd.f32 %v2204, %v2206
  %v2213 = vadd.f32 %v2212, %v2208
  %v2214 = vadd.f32 %v2213, %v2210
  %v2215 = vrot.slane %v2214, 4
  %v2216 = vadd.f32 %v2214, %v2215
  %v2217 = vrot.slane %v2216, 2
  %v2218 = vadd.f32 %v2216, %v2217
  %v2219 = vrot.slane %v2218, 1
  %v2220 = vadd.f32 %v2218, %v2219
  %v2221 = vadd.f32 %v2205, %v2207
  %v2222 = vadd.f32 %v2221, %v2209
  %v2223 = vadd.f32 %v2222, %v2211
  %v2224 = vrot.slane %v2223, 4
  %v2225 = vadd.f32 %v2223, %v2224
  %v2226 = vrot.slane %v2225, 2
  %v2227 = vadd.f32 %v2225, %v2226
  %v2228 = vrot.slane %v2227, 1
  %v2229 = vadd.f32 %v2227, %v2228
  %v2230 = vmul.f32 %v2220, 0.03125
  %v2231 = vmul.f32 %v2229, 0.03125
  %v2232 = vmul.f32 %v2202, %v2202
  %v2233 = vmul.f32 %v2203, %v2203
  %v2234 = vsub.f32 %v2230, %v2232
  %v2235 = vsub.f32 %v2231, %v2233
  %v2236 = vld [vmem:[%s3] sm:$0x3]
  %v2237 = vadd.f32 %v2234, 1e-05
  %v2238 = vadd.f32 %v2235, 1e-05
  %v2239 = vrsqrt.pop %v2237
  %v2240 = vrsqrt.pop %v2238
  %v2243 = vcombine.low %v2239, %v2240
  %v2245 = vunpack.c.l.s4 1966171168
  %v2246 = vunpack.c.0.s8 %v2245
  %v2247 = vlaneseq
  %v2248 = vshrl.u32 %v2247, 7
  %v2249 = vsub.s32 %v2246, %v2248
  %v2250 = vrot.slane %v2243, %v2249
  %v2252 = vunpack.c.l.s4 1966171168
  %v2253 = vunpack.c.0.s8 %v2252
  %v2254 = vlaneseq
  %v2255 = vshrl.u32 %v2254, 7
  %v2256 = vsub.s32 %v2253, %v2255
  %v2257 = vrot.slane %v2250, %v2256
  %v2259 = vmul.f32 %v2236, %v2257
  %v2260 = vld [vmem:[%s4] sm:$0x3]
  %v2262 = vlaneseq
  %v2263 = vshrl.u32 %v2262, 7
  %v2264 = vsub.s32 0, %v2263
  %v2265 = vrot.slane %v2259, %v2264
  %v2266 = vlaneseq
  %v2267 = vshrl.u32 %v2266, 7
  %v2268 = vsub.s32 1, %v2267
  %v2269 = vrot.slane %v2259, %v2268
  %v2272 = vmul.f32 %v2202, %v2265
  %v2273 = vmul.f32 %v2203, %v2269
  %v2276 = vcombine.low %v2272, %v2273
  %v2278 = vunpack.c.l.s4 1966171168
  %v2279 = vunpack.c.0.s8 %v2278
  %v2280 = vlaneseq
  %v2281 = vshrl.u32 %v2280, 7
  %v2282 = vsub.s32 %v2279, %v2281
  %v2283 = vrot.slane %v2276, %v2282
  %v2285 = vunpack.c.l.s4 1966171168
  %v2286 = vunpack.c.0.s8 %v2285
  %v2287 = vlaneseq
  %v2288 = vshrl.u32 %v2287, 7
  %v2289 = vsub.s32 %v2286, %v2288
  %v2290 = vrot.slane %v2283, %v2289
  %v2292 = vsub.f32 %v2260, %v2290
  %v2293 = vmul.f32 %v2166, %v2265
  %v2294 = vmul.f32 %v2168, %v2269
  %v2295 = vmul.f32 %v2170, %v2265
  %v2296 = vmul.f32 %v2172, %v2269
  %v2297 = vmul.f32 %v2176, %v2265
  %v2298 = vmul.f32 %v2178, %v2269
  %v2299 = vmul.f32 %v2180, %v2265
  %v2300 = vmul.f32 %v2182, %v2269
  %v2302 = vlaneseq
  %v2303 = vshrl.u32 %v2302, 7
  %v2304 = vsub.s32 0, %v2303
  %v2305 = vrot.slane %v2292, %v2304
  %v2306 = vlaneseq
  %v2307 = vshrl.u32 %v2306, 7
  %v2308 = vsub.s32 1, %v2307
  %v2309 = vrot.slane %v2292, %v2308
  %v2312 = vadd.f32 %v2293, %v2305
  %v2313 = vadd.f32 %v2294, %v2309
  %v2314 = vadd.f32 %v2295, %v2305
  %v2315 = vadd.f32 %v2296, %v2309
  %v2316 = vadd.f32 %v2297, %v2305
  %v2317 = vadd.f32 %v2298, %v2309
  %v2318 = vadd.f32 %v2299, %v2305
  %v2319 = vadd.f32 %v2300, %v2309
  %v2320 = vmul.f32 %v2312, 0.2
  %v2321 = vmul.f32 %v2313, 0.2
  %v2322 = vmul.f32 %v2314, 0.2
  %v2323 = vmul.f32 %v2315, 0.2
  %v2324 = vmul.f32 %v2316, 0.2
  %v2325 = vmul.f32 %v2317, 0.2
  %v2326 = vmul.f32 %v2318, 0.2
  %v2327 = vmul.f32 %v2319, 0.2
  %v2328 = vmax.f32 %v2312, %v2320
  %v2329 = vmax.f32 %v2313, %v2321
  %v2330 = vmax.f32 %v2314, %v2322
  %v2331 = vmax.f32 %v2315, %v2323
  %v2332 = vmax.f32 %v2316, %v2324
  %v2333 = vmax.f32 %v2317, %v2325
  %v2334 = vmax.f32 %v2318, %v2326
  %v2335 = vmax.f32 %v2319, %v2327
  %2336 = vst [vmem:[%s5] sm:$0xff] %v2328
  %2337 = vst [vmem:[%s5 + $0x8] sm:$0xff] %v2329
  %2338 = vst [vmem:[%s5 + $0x10] sm:$0xff] %v2330
  %2339 = vst [vmem:[%s5 + $0x18] sm:$0xff] %v2331
  %2340 = vst [vmem:[%s5 + $0x20] sm:$0xff] %v2332
  %2341 = vst [vmem:[%s5 + $0x28] sm:$0xff] %v2333
  %2342 = vst [vmem:[%s5 + $0x30] sm:$0xff] %v2334
  %2343 = vst [vmem:[%s5 + $0x38] sm:$0xff] %v2335
  // Predicated region
  $region22: #{discriminator_forward.10} parent=0 // pred_check
    _
  $region23: #{discriminator_forward.10} parent=0 // pred_check_branch
    %2345 = sbr.rel (0) target = $region25
  $region24: #{discriminator_forward.10} parent=0 // pred_region
    _
  $region25: #{discriminator_forward.10} parent=0 // pred_fallthru
    _
  // Predicated region
  $region26: #{discriminator_forward.10} parent=0 // pred_check
    _
  $region27: #{discriminator_forward.10} parent=0 // pred_check_branch
    %2347 = sbr.rel (0) target = $region29
  $region28: #{discriminator_forward.10} parent=0 // pred_region
    _
  $region29: #{discriminator_forward.10} parent=0 // pred_fallthru
    _

// kernel: discriminator_forward.11
$region0: #{discriminator_forward.11}
  #allocation0 [shape = 'u32[]', space=smem, size = 0x4, offset = 0x4, fixed_abs, tag = 'smem constant byte address 0x4 - core index']
  #allocation1 [shape = 'u32[144,128]{1,0:T(1,128)}', space=vmem, size = 0x12000, scoped, tag = 'internal scratch']
  %s0 = inlined_call_operand.vmem [shape: bf16[32,4096], index: 0, kind: input, shape index: {}]
  %s1 = inlined_call_operand.vmem [shape: bf16[4096,128], index: 1, kind: input, shape index: {}]
  %s2 = inlined_call_operand.vmem [shape: f32[1,128], index: 2, kind: input, shape index: {}]
  %s3 = inlined_call_operand.vmem [shape: f32[32,128], index: 3, kind: output, shape index: {}]
  %s4 = sld [smem:[#allocation0]]
  $region22: #{discriminator_forward.11} parent=0
    _
  %s6 = ssub.s32 1, %s4
  %s7 = scalar_select 0, %s6, %s4
  // Predicated region
  $region2: #{discriminator_forward.11} parent=0 // pred_check
    _
  $region3: #{discriminator_forward.11} parent=0 // pred_check_branch
    %9 = sbr.rel (0) target = $region5
  $region4: #{discriminator_forward.11} parent=0 // pred_region
    _
  $region5: #{discriminator_forward.11} parent=0 // pred_fallthru
    _
  // Predicated region
  $region6: #{discriminator_forward.11} parent=0 // pred_check
    _
  $region7: #{discriminator_forward.11} parent=0 // pred_check_branch
    %11 = sbr.rel (0) target = $region9
  $region8: #{discriminator_forward.11} parent=0 // pred_region
    _
  $region9: #{discriminator_forward.11} parent=0 // pred_fallthru
    _
  // Predicated region
  $region10: #{discriminator_forward.11} parent=0 // pred_check
    _
  $region11: #{discriminator_forward.11} parent=0 // pred_check_branch
    %13 = sbr.rel (0) target = $region13
  $region12: #{discriminator_forward.11} parent=0 // pred_region
    _
  $region13: #{discriminator_forward.11} parent=0 // pred_fallthru
    _
  %v15 = vld [vmem:[%s0] sm:$0xff]
  %v16 = vld [vmem:[%s0 + $0x8] sm:$0xff]
  %v17 = vld [vmem:[%s0 + $0x10] sm:$0xff]
  %v18 = vld [vmem:[%s0 + $0x18] sm:$0xff]
  %v19 = vld [vmem:[%s0 + $0x20] sm:$0xff]
  %v20 = vld [vmem:[%s0 + $0x28] sm:$0xff]
  %v21 = vld [vmem:[%s0 + $0x30] sm:$0xff]
  %v22 = vld [vmem:[%s0 + $0x38] sm:$0xff]
  %v23 = vld [vmem:[%s0 + $0x40] sm:$0xff]
  %v24 = vld [vmem:[%s0 + $0x48] sm:$0xff]
  %v25 = vld [vmem:[%s0 + $0x50] sm:$0xff]
  %v26 = vld [vmem:[%s0 + $0x58] sm:$0xff]
  %v27 = vld [vmem:[%s0 + $0x60] sm:$0xff]
  %v28 = vld [vmem:[%s0 + $0x68] sm:$0xff]
  %v29 = vld [vmem:[%s0 + $0x70] sm:$0xff]
  %v30 = vld [vmem:[%s0 + $0x78] sm:$0xff]
  %v31 = vld [vmem:[%s0 + $0x80] sm:$0xff]
  %v32 = vld [vmem:[%s0 + $0x88] sm:$0xff]
  %v33 = vld [vmem:[%s0 + $0x90] sm:$0xff]
  %v34 = vld [vmem:[%s0 + $0x98] sm:$0xff]
  %v35 = vld [vmem:[%s0 + $0xa0] sm:$0xff]
  %v36 = vld [vmem:[%s0 + $0xa8] sm:$0xff]
  %v37 = vld [vmem:[%s0 + $0xb0] sm:$0xff]
  %v38 = vld [vmem:[%s0 + $0xb8] sm:$0xff]
  %v39 = vld [vmem:[%s0 + $0xc0] sm:$0xff]
  %v40 = vld [vmem:[%s0 + $0xc8] sm:$0xff]
  %v41 = vld [vmem:[%s0 + $0xd0] sm:$0xff]
  %v42 = vld [vmem:[%s0 + $0xd8] sm:$0xff]
  %v43 = vld [vmem:[%s0 + $0xe0] sm:$0xff]
  %v44 = vld [vmem:[%s0 + $0xe8] sm:$0xff]
  %v45 = vld [vmem:[%s0 + $0xf0] sm:$0xff]
  %v46 = vld [vmem:[%s0 + $0xf8] sm:$0xff]
  %v47 = vld [vmem:[%s0 + $0x100] sm:$0xff]
  %v48 = vld [vmem:[%s0 + $0x108] sm:$0xff]
  %v49 = vld [vmem:[%s0 + $0x110] sm:$0xff]
  %v50 = vld [vmem:[%s0 + $0x118] sm:$0xff]
  %v51 = vld [vmem:[%s0 + $0x120] sm:$0xff]
  %v52 = vld [vmem:[%s0 + $0x128] sm:$0xff]
  %v53 = vld [vmem:[%s0 + $0x130] sm:$0xff]
  %v54 = vld [vmem:[%s0 + $0x138] sm:$0xff]
  %v55 = vld [vmem:[%s0 + $0x140] sm:$0xff]
  %v56 = vld [vmem:[%s0 + $0x148] sm:$0xff]
  %v57 = vld [vmem:[%s0 + $0x150] sm:$0xff]
  %v58 = vld [vmem:[%s0 + $0x158] sm:$0xff]
  %v59 = vld [vmem:[%s0 + $0x160] sm:$0xff]
  %v60 = vld [vmem:[%s0 + $0x168] sm:$0xff]
  %v61 = vld [vmem:[%s0 + $0x170] sm:$0xff]
  %v62 = vld [vmem:[%s0 + $0x178] sm:$0xff]
  %v63 = vld [vmem:[%s0 + $0x180] sm:$0xff]
  %v64 = vld [vmem:[%s0 + $0x188] sm:$0xff]
  %v65 = vld [vmem:[%s0 + $0x190] sm:$0xff]
  %v66 = vld [vmem:[%s0 + $0x198] sm:$0xff]
  %v67 = vld [vmem:[%s0 + $0x1a0] sm:$0xff]
  %v68 = vld [vmem:[%s0 + $0x1a8] sm:$0xff]
  %v69 = vld [vmem:[%s0 + $0x1b0] sm:$0xff]
  %v70 = vld [vmem:[%s0 + $0x1b8] sm:$0xff]
  %v71 = vld [vmem:[%s0 + $0x1c0] sm:$0xff]
  %v72 = vld [vmem:[%s0 + $0x1c8] sm:$0xff]
  %v73 = vld [vmem:[%s0 + $0x1d0] sm:$0xff]
  %v74 = vld [vmem:[%s0 + $0x1d8] sm:$0xff]
  %v75 = vld [vmem:[%s0 + $0x1e0] sm:$0xff]
  %v76 = vld [vmem:[%s0 + $0x1e8] sm:$0xff]
  %v77 = vld [vmem:[%s0 + $0x1f0] sm:$0xff]
  %v78 = vld [vmem:[%s0 + $0x1f8] sm:$0xff]
  %v79 = vld [vmem:[%s1] sm:$0xf]
  %v80 = vld [vmem:[%s1 + $0x4] sm:$0xf]
  %v81 = vld [vmem:[%s1 + $0x8] sm:$0xf]
  %v82 = vld [vmem:[%s1 + $0xc] sm:$0xf]
  %v83 = vld [vmem:[%s1 + $0x10] sm:$0xf]
  %v84 = vld [vmem:[%s1 + $0x14] sm:$0xf]
  %v85 = vld [vmem:[%s1 + $0x18] sm:$0xf]
  %v86 = vld [vmem:[%s1 + $0x1c] sm:$0xf]
  %v87 = vld [vmem:[%s1 + $0x20] sm:$0xf]
  %v88 = vld [vmem:[%s1 + $0x24] sm:$0xf]
  %v89 = vld [vmem:[%s1 + $0x28] sm:$0xf]
  %v90 = vld [vmem:[%s1 + $0x2c] sm:$0xf]
  %v91 = vld [vmem:[%s1 + $0x30] sm:$0xf]
  %v92 = vld [vmem:[%s1 + $0x34] sm:$0xf]
  %v93 = vld [vmem:[%s1 + $0x38] sm:$0xf]
  %v94 = vld [vmem:[%s1 + $0x3c] sm:$0xf]
  %v95 = vld [vmem:[%s1 + $0x40] sm:$0xf]
  %v96 = vld [vmem:[%s1 + $0x44] sm:$0xf]
  %v97 = vld [vmem:[%s1 + $0x48] sm:$0xf]
  %v98 = vld [vmem:[%s1 + $0x4c] sm:$0xf]
  %v99 = vld [vmem:[%s1 + $0x50] sm:$0xf]
  %v100 = vld [vmem:[%s1 + $0x54] sm:$0xf]
  %v101 = vld [vmem:[%s1 + $0x58] sm:$0xf]
  %v102 = vld [vmem:[%s1 + $0x5c] sm:$0xf]
  %v103 = vld [vmem:[%s1 + $0x60] sm:$0xf]
  %v104 = vld [vmem:[%s1 + $0x64] sm:$0xf]
  %v105 = vld [vmem:[%s1 + $0x68] sm:$0xf]
  %v106 = vld [vmem:[%s1 + $0x6c] sm:$0xf]
  %v107 = vld [vmem:[%s1 + $0x70] sm:$0xf]
  %v108 = vld [vmem:[%s1 + $0x74] sm:$0xf]
  %v109 = vld [vmem:[%s1 + $0x78] sm:$0xf]
  %v110 = vld [vmem:[%s1 + $0x7c] sm:$0xf]
  %v111 = vld [vmem:[%s1 + $0x80] sm:$0xf]
  %v112 = vld [vmem:[%s1 + $0x84] sm:$0xf]
  %v113 = vld [vmem:[%s1 + $0x88] sm:$0xf]
  %v114 = vld [vmem:[%s1 + $0x8c] sm:$0xf]
  %v115 = vld [vmem:[%s1 + $0x90] sm:$0xf]
  %v116 = vld [vmem:[%s1 + $0x94] sm:$0xf]
  %v117 = vld [vmem:[%s1 + $0x98] sm:$0xf]
  %v118 = vld [vmem:[%s1 + $0x9c] sm:$0xf]
  %v119 = vld [vmem:[%s1 + $0xa0] sm:$0xf]
  %v120 = vld [vmem:[%s1 + $0xa4] sm:$0xf]
  %v121 = vld [vmem:[%s1 + $0xa8] sm:$0xf]
  %v122 = vld [vmem:[%s1 + $0xac] sm:$0xf]
  %v123 = vld [vmem:[%s1 + $0xb0] sm:$0xf]
  %v124 = vld [vmem:[%s1 + $0xb4] sm:$0xf]
  %v125 = vld [vmem:[%s1 + $0xb8] sm:$0xf]
  %v126 = vld [vmem:[%s1 + $0xbc] sm:$0xf]
  %v127 = vld [vmem:[%s1 + $0xc0] sm:$0xf]
  %v128 = vld [vmem:[%s1 + $0xc4] sm:$0xf]
  %v129 = vld [vmem:[%s1 + $0xc8] sm:$0xf]
  %v130 = vld [vmem:[%s1 + $0xcc] sm:$0xf]
  %v131 = vld [vmem:[%s1 + $0xd0] sm:$0xf]
  %v132 = vld [vmem:[%s1 + $0xd4] sm:$0xf]
  %v133 = vld [vmem:[%s1 + $0xd8] sm:$0xf]
  %v134 = vld [vmem:[%s1 + $0xdc] sm:$0xf]
  %v135 = vld [vmem:[%s1 + $0xe0] sm:$0xf]
  %v136 = vld [vmem:[%s1 + $0xe4] sm:$0xf]
  %v137 = vld [vmem:[%s1 + $0xe8] sm:$0xf]
  %v138 = vld [vmem:[%s1 + $0xec] sm:$0xf]
  %v139 = vld [vmem:[%s1 + $0xf0] sm:$0xf]
  %v140 = vld [vmem:[%s1 + $0xf4] sm:$0xf]
  %v141 = vld [vmem:[%s1 + $0xf8] sm:$0xf]
  %v142 = vld [vmem:[%s1 + $0xfc] sm:$0xf]
  %v143 = vld [vmem:[%s1 + $0x100] sm:$0xf]
  %v144 = vld [vmem:[%s1 + $0x104] sm:$0xf]
  %v145 = vld [vmem:[%s1 + $0x108] sm:$0xf]
  %v146 = vld [vmem:[%s1 + $0x10c] sm:$0xf]
  %v147 = vld [vmem:[%s1 + $0x110] sm:$0xf]
  %v148 = vld [vmem:[%s1 + $0x114] sm:$0xf]
  %v149 = vld [vmem:[%s1 + $0x118] sm:$0xf]
  %v150 = vld [vmem:[%s1 + $0x11c] sm:$0xf]
  %v151 = vld [vmem:[%s1 + $0x120] sm:$0xf]
  %v152 = vld [vmem:[%s1 + $0x124] sm:$0xf]
  %v153 = vld [vmem:[%s1 + $0x128] sm:$0xf]
  %v154 = vld [vmem:[%s1 + $0x12c] sm:$0xf]
  %v155 = vld [vmem:[%s1 + $0x130] sm:$0xf]
  %v156 = vld [vmem:[%s1 + $0x134] sm:$0xf]
  %v157 = vld [vmem:[%s1 + $0x138] sm:$0xf]
  %v158 = vld [vmem:[%s1 + $0x13c] sm:$0xf]
  %v159 = vld [vmem:[%s1 + $0x140] sm:$0xf]
  %v160 = vld [vmem:[%s1 + $0x144] sm:$0xf]
  %v161 = vld [vmem:[%s1 + $0x148] sm:$0xf]
  %v162 = vld [vmem:[%s1 + $0x14c] sm:$0xf]
  %v163 = vld [vmem:[%s1 + $0x150] sm:$0xf]
  %v164 = vld [vmem:[%s1 + $0x154] sm:$0xf]
  %v165 = vld [vmem:[%s1 + $0x158] sm:$0xf]
  %v166 = vld [vmem:[%s1 + $0x15c] sm:$0xf]
  %v167 = vld [vmem:[%s1 + $0x160] sm:$0xf]
  %v168 = vld [vmem:[%s1 + $0x164] sm:$0xf]
  %v169 = vld [vmem:[%s1 + $0x168] sm:$0xf]
  %v170 = vld [vmem:[%s1 + $0x16c] sm:$0xf]
  %v171 = vld [vmem:[%s1 + $0x170] sm:$0xf]
  %v172 = vld [vmem:[%s1 + $0x174] sm:$0xf]
  %v173 = vld [vmem:[%s1 + $0x178] sm:$0xf]
  %v174 = vld [vmem:[%s1 + $0x17c] sm:$0xf]
  %v175 = vld [vmem:[%s1 + $0x180] sm:$0xf]
  %v176 = vld [vmem:[%s1 + $0x184] sm:$0xf]
  %v177 = vld [vmem:[%s1 + $0x188] sm:$0xf]
  %v178 = vld [vmem:[%s1 + $0x18c] sm:$0xf]
  %v179 = vld [vmem:[%s1 + $0x190] sm:$0xf]
  %v180 = vld [vmem:[%s1 + $0x194] sm:$0xf]
  %v181 = vld [vmem:[%s1 + $0x198] sm:$0xf]
  %v182 = vld [vmem:[%s1 + $0x19c] sm:$0xf]
  %v183 = vld [vmem:[%s1 + $0x1a0] sm:$0xf]
  %v184 = vld [vmem:[%s1 + $0x1a4] sm:$0xf]
  %v185 = vld [vmem:[%s1 + $0x1a8] sm:$0xf]
  %v186 = vld [vmem:[%s1 + $0x1ac] sm:$0xf]
  %v187 = vld [vmem:[%s1 + $0x1b0] sm:$0xf]
  %v188 = vld [vmem:[%s1 + $0x1b4] sm:$0xf]
  %v189 = vld [vmem:[%s1 + $0x1b8] sm:$0xf]
  %v190 = vld [vmem:[%s1 + $0x1bc] sm:$0xf]
  %v191 = vld [vmem:[%s1 + $0x1c0] sm:$0xf]
  %v192 = vld [vmem:[%s1 + $0x1c4] sm:$0xf]
  %v193 = vld [vmem:[%s1 + $0x1c8] sm:$0xf]
  %v194 = vld [vmem:[%s1 + $0x1cc] sm:$0xf]
  %v195 = vld [vmem:[%s1 + $0x1d0] sm:$0xf]
  %v196 = vld [vmem:[%s1 + $0x1d4] sm:$0xf]
  %v197 = vld [vmem:[%s1 + $0x1d8] sm:$0xf]
  %v198 = vld [vmem:[%s1 + $0x1dc] sm:$0xf]
  %v199 = vld [vmem:[%s1 + $0x1e0] sm:$0xf]
  %v200 = vld [vmem:[%s1 + $0x1e4] sm:$0xf]
  %v201 = vld [vmem:[%s1 + $0x1e8] sm:$0xf]
  %v202 = vld [vmem:[%s1 + $0x1ec] sm:$0xf]
  %v203 = vld [vmem:[%s1 + $0x1f0] sm:$0xf]
  %v204 = vld [vmem:[%s1 + $0x1f4] sm:$0xf]
  %v205 = vld [vmem:[%s1 + $0x1f8] sm:$0xf]
  %v206 = vld [vmem:[%s1 + $0x1fc] sm:$0xf]
  %v207 = vld [vmem:[%s1 + $0x200] sm:$0xf]
  %v208 = vld [vmem:[%s1 + $0x204] sm:$0xf]
  %v209 = vld [vmem:[%s1 + $0x208] sm:$0xf]
  %v210 = vld [vmem:[%s1 + $0x20c] sm:$0xf]
  %v211 = vld [vmem:[%s1 + $0x210] sm:$0xf]
  %v212 = vld [vmem:[%s1 + $0x214] sm:$0xf]
  %v213 = vld [vmem:[%s1 + $0x218] sm:$0xf]
  %v214 = vld [vmem:[%s1 + $0x21c] sm:$0xf]
  %v215 = vld [vmem:[%s1 + $0x220] sm:$0xf]
  %v216 = vld [vmem:[%s1 + $0x224] sm:$0xf]
  %v217 = vld [vmem:[%s1 + $0x228] sm:$0xf]
  %v218 = vld [vmem:[%s1 + $0x22c] sm:$0xf]
  %v219 = vld [vmem:[%s1 + $0x230] sm:$0xf]
  %v220 = vld [vmem:[%s1 + $0x234] sm:$0xf]
  %v221 = vld [vmem:[%s1 + $0x238] sm:$0xf]
  %v222 = vld [vmem:[%s1 + $0x23c] sm:$0xf]
  %v223 = vld [vmem:[%s1 + $0x240] sm:$0xf]
  %v224 = vld [vmem:[%s1 + $0x244] sm:$0xf]
  %v225 = vld [vmem:[%s1 + $0x248] sm:$0xf]
  %v226 = vld [vmem:[%s1 + $0x24c] sm:$0xf]
  %v227 = vld [vmem:[%s1 + $0x250] sm:$0xf]
  %v228 = vld [vmem:[%s1 + $0x254] sm:$0xf]
  %v229 = vld [vmem:[%s1 + $0x258] sm:$0xf]
  %v230 = vld [vmem:[%s1 + $0x25c] sm:$0xf]
  %v231 = vld [vmem:[%s1 + $0x260] sm:$0xf]
  %v232 = vld [vmem:[%s1 + $0x264] sm:$0xf]
  %v233 = vld [vmem:[%s1 + $0x268] sm:$0xf]
  %v234 = vld [vmem:[%s1 + $0x26c] sm:$0xf]
  %v235 = vld [vmem:[%s1 + $0x270] sm:$0xf]
  %v236 = vld [vmem:[%s1 + $0x274] sm:$0xf]
  %v237 = vld [vmem:[%s1 + $0x278] sm:$0xf]
  %v238 = vld [vmem:[%s1 + $0x27c] sm:$0xf]
  %v239 = vld [vmem:[%s1 + $0x280] sm:$0xf]
  %v240 = vld [vmem:[%s1 + $0x284] sm:$0xf]
  %v241 = vld [vmem:[%s1 + $0x288] sm:$0xf]
  %v242 = vld [vmem:[%s1 + $0x28c] sm:$0xf]
  %v243 = vld [vmem:[%s1 + $0x290] sm:$0xf]
  %v244 = vld [vmem:[%s1 + $0x294] sm:$0xf]
  %v245 = vld [vmem:[%s1 + $0x298] sm:$0xf]
  %v246 = vld [vmem:[%s1 + $0x29c] sm:$0xf]
  %v247 = vld [vmem:[%s1 + $0x2a0] sm:$0xf]
  %v248 = vld [vmem:[%s1 + $0x2a4] sm:$0xf]
  %v249 = vld [vmem:[%s1 + $0x2a8] sm:$0xf]
  %v250 = vld [vmem:[%s1 + $0x2ac] sm:$0xf]
  %v251 = vld [vmem:[%s1 + $0x2b0] sm:$0xf]
  %v252 = vld [vmem:[%s1 + $0x2b4] sm:$0xf]
  %v253 = vld [vmem:[%s1 + $0x2b8] sm:$0xf]
  %v254 = vld [vmem:[%s1 + $0x2bc] sm:$0xf]
  %v255 = vld [vmem:[%s1 + $0x2c0] sm:$0xf]
  %v256 = vld [vmem:[%s1 + $0x2c4] sm:$0xf]
  %v257 = vld [vmem:[%s1 + $0x2c8] sm:$0xf]
  %v258 = vld [vmem:[%s1 + $0x2cc] sm:$0xf]
  %v259 = vld [vmem:[%s1 + $0x2d0] sm:$0xf]
  %v260 = vld [vmem:[%s1 + $0x2d4] sm:$0xf]
  %v261 = vld [vmem:[%s1 + $0x2d8] sm:$0xf]
  %v262 = vld [vmem:[%s1 + $0x2dc] sm:$0xf]
  %v263 = vld [vmem:[%s1 + $0x2e0] sm:$0xf]
  %v264 = vld [vmem:[%s1 + $0x2e4] sm:$0xf]
  %v265 = vld [vmem:[%s1 + $0x2e8] sm:$0xf]
  %v266 = vld [vmem:[%s1 + $0x2ec] sm:$0xf]
  %v267 = vld [vmem:[%s1 + $0x2f0] sm:$0xf]
  %v268 = vld [vmem:[%s1 + $0x2f4] sm:$0xf]
  %v269 = vld [vmem:[%s1 + $0x2f8] sm:$0xf]
  %v270 = vld [vmem:[%s1 + $0x2fc] sm:$0xf]
  %v271 = vld [vmem:[%s1 + $0x300] sm:$0xf]
  %v272 = vld [vmem:[%s1 + $0x304] sm:$0xf]
  %v273 = vld [vmem:[%s1 + $0x308] sm:$0xf]
  %v274 = vld [vmem:[%s1 + $0x30c] sm:$0xf]
  %v275 = vld [vmem:[%s1 + $0x310] sm:$0xf]
  %v276 = vld [vmem:[%s1 + $0x314] sm:$0xf]
  %v277 = vld [vmem:[%s1 + $0x318] sm:$0xf]
  %v278 = vld [vmem:[%s1 + $0x31c] sm:$0xf]
  %v279 = vld [vmem:[%s1 + $0x320] sm:$0xf]
  %v280 = vld [vmem:[%s1 + $0x324] sm:$0xf]
  %v281 = vld [vmem:[%s1 + $0x328] sm:$0xf]
  %v282 = vld [vmem:[%s1 + $0x32c] sm:$0xf]
  %v283 = vld [vmem:[%s1 + $0x330] sm:$0xf]
  %v284 = vld [vmem:[%s1 + $0x334] sm:$0xf]
  %v285 = vld [vmem:[%s1 + $0x338] sm:$0xf]
  %v286 = vld [vmem:[%s1 + $0x33c] sm:$0xf]
  %v287 = vld [vmem:[%s1 + $0x340] sm:$0xf]
  %v288 = vld [vmem:[%s1 + $0x344] sm:$0xf]
  %v289 = vld [vmem:[%s1 + $0x348] sm:$0xf]
  %v290 = vld [vmem:[%s1 + $0x34c] sm:$0xf]
  %v291 = vld [vmem:[%s1 + $0x350] sm:$0xf]
  %v292 = vld [vmem:[%s1 + $0x354] sm:$0xf]
  %v293 = vld [vmem:[%s1 + $0x358] sm:$0xf]
  %v294 = vld [vmem:[%s1 + $0x35c] sm:$0xf]
  %v295 = vld [vmem:[%s1 + $0x360] sm:$0xf]
  %v296 = vld [vmem:[%s1 + $0x364] sm:$0xf]
  %v297 = vld [vmem:[%s1 + $0x368] sm:$0xf]
  %v298 = vld [vmem:[%s1 + $0x36c] sm:$0xf]
  %v299 = vld [vmem:[%s1 + $0x370] sm:$0xf]
  %v300 = vld [vmem:[%s1 + $0x374] sm:$0xf]
  %v301 = vld [vmem:[%s1 + $0x378] sm:$0xf]
  %v302 = vld [vmem:[%s1 + $0x37c] sm:$0xf]
  %v303 = vld [vmem:[%s1 + $0x380] sm:$0xf]
  %v304 = vld [vmem:[%s1 + $0x384] sm:$0xf]
  %v305 = vld [vmem:[%s1 + $0x388] sm:$0xf]
  %v306 = vld [vmem:[%s1 + $0x38c] sm:$0xf]
  %v307 = vld [vmem:[%s1 + $0x390] sm:$0xf]
  %v308 = vld [vmem:[%s1 + $0x394] sm:$0xf]
  %v309 = vld [vmem:[%s1 + $0x398] sm:$0xf]
  %v310 = vld [vmem:[%s1 + $0x39c] sm:$0xf]
  %v311 = vld [vmem:[%s1 + $0x3a0] sm:$0xf]
  %v312 = vld [vmem:[%s1 + $0x3a4] sm:$0xf]
  %v313 = vld [vmem:[%s1 + $0x3a8] sm:$0xf]
  %v314 = vld [vmem:[%s1 + $0x3ac] sm:$0xf]
  %v315 = vld [vmem:[%s1 + $0x3b0] sm:$0xf]
  %v316 = vld [vmem:[%s1 + $0x3b4] sm:$0xf]
  %v317 = vld [vmem:[%s1 + $0x3b8] sm:$0xf]
  %v318 = vld [vmem:[%s1 + $0x3bc] sm:$0xf]
  %v319 = vld [vmem:[%s1 + $0x3c0] sm:$0xf]
  %v320 = vld [vmem:[%s1 + $0x3c4] sm:$0xf]
  %v321 = vld [vmem:[%s1 + $0x3c8] sm:$0xf]
  %v322 = vld [vmem:[%s1 + $0x3cc] sm:$0xf]
  %v323 = vld [vmem:[%s1 + $0x3d0] sm:$0xf]
  %v324 = vld [vmem:[%s1 + $0x3d4] sm:$0xf]
  %v325 = vld [vmem:[%s1 + $0x3d8] sm:$0xf]
  %v326 = vld [vmem:[%s1 + $0x3dc] sm:$0xf]
  %v327 = vld [vmem:[%s1 + $0x3e0] sm:$0xf]
  %v328 = vld [vmem:[%s1 + $0x3e4] sm:$0xf]
  %v329 = vld [vmem:[%s1 + $0x3e8] sm:$0xf]
  %v330 = vld [vmem:[%s1 + $0x3ec] sm:$0xf]
  %v331 = vld [vmem:[%s1 + $0x3f0] sm:$0xf]
  %v332 = vld [vmem:[%s1 + $0x3f4] sm:$0xf]
  %v333 = vld [vmem:[%s1 + $0x3f8] sm:$0xf]
  %v334 = vld [vmem:[%s1 + $0x3fc] sm:$0xf]
  %v335 = vld [vmem:[%s1 + $0x400] sm:$0xf]
  %v336 = vld [vmem:[%s1 + $0x404] sm:$0xf]
  %v337 = vld [vmem:[%s1 + $0x408] sm:$0xf]
  %v338 = vld [vmem:[%s1 + $0x40c] sm:$0xf]
  %v339 = vld [vmem:[%s1 + $0x410] sm:$0xf]
  %v340 = vld [vmem:[%s1 + $0x414] sm:$0xf]
  %v341 = vld [vmem:[%s1 + $0x418] sm:$0xf]
  %v342 = vld [vmem:[%s1 + $0x41c] sm:$0xf]
  %v343 = vld [vmem:[%s1 + $0x420] sm:$0xf]
  %v344 = vld [vmem:[%s1 + $0x424] sm:$0xf]
  %v345 = vld [vmem:[%s1 + $0x428] sm:$0xf]
  %v346 = vld [vmem:[%s1 + $0x42c] sm:$0xf]
  %v347 = vld [vmem:[%s1 + $0x430] sm:$0xf]
  %v348 = vld [vmem:[%s1 + $0x434] sm:$0xf]
  %v349 = vld [vmem:[%s1 + $0x438] sm:$0xf]
  %v350 = vld [vmem:[%s1 + $0x43c] sm:$0xf]
  %v351 = vld [vmem:[%s1 + $0x440] sm:$0xf]
  %v352 = vld [vmem:[%s1 + $0x444] sm:$0xf]
  %v353 = vld [vmem:[%s1 + $0x448] sm:$0xf]
  %v354 = vld [vmem:[%s1 + $0x44c] sm:$0xf]
  %v355 = vld [vmem:[%s1 + $0x450] sm:$0xf]
  %v356 = vld [vmem:[%s1 + $0x454] sm:$0xf]
  %v357 = vld [vmem:[%s1 + $0x458] sm:$0xf]
  %v358 = vld [vmem:[%s1 + $0x45c] sm:$0xf]
  %v359 = vld [vmem:[%s1 + $0x460] sm:$0xf]
  %v360 = vld [vmem:[%s1 + $0x464] sm:$0xf]
  %v361 = vld [vmem:[%s1 + $0x468] sm:$0xf]
  %v362 = vld [vmem:[%s1 + $0x46c] sm:$0xf]
  %v363 = vld [vmem:[%s1 + $0x470] sm:$0xf]
  %v364 = vld [vmem:[%s1 + $0x474] sm:$0xf]
  %v365 = vld [vmem:[%s1 + $0x478] sm:$0xf]
  %v366 = vld [vmem:[%s1 + $0x47c] sm:$0xf]
  %v367 = vld [vmem:[%s1 + $0x480] sm:$0xf]
  %v368 = vld [vmem:[%s1 + $0x484] sm:$0xf]
  %v369 = vld [vmem:[%s1 + $0x488] sm:$0xf]
  %v370 = vld [vmem:[%s1 + $0x48c] sm:$0xf]
  %v371 = vld [vmem:[%s1 + $0x490] sm:$0xf]
  %v372 = vld [vmem:[%s1 + $0x494] sm:$0xf]
  %v373 = vld [vmem:[%s1 + $0x498] sm:$0xf]
  %v374 = vld [vmem:[%s1 + $0x49c] sm:$0xf]
  %v375 = vld [vmem:[%s1 + $0x4a0] sm:$0xf]
  %v376 = vld [vmem:[%s1 + $0x4a4] sm:$0xf]
  %v377 = vld [vmem:[%s1 + $0x4a8] sm:$0xf]
  %v378 = vld [vmem:[%s1 + $0x4ac] sm:$0xf]
  %v379 = vld [vmem:[%s1 + $0x4b0] sm:$0xf]
  %v380 = vld [vmem:[%s1 + $0x4b4] sm:$0xf]
  %v381 = vld [vmem:[%s1 + $0x4b8] sm:$0xf]
  %v382 = vld [vmem:[%s1 + $0x4bc] sm:$0xf]
  %v383 = vld [vmem:[%s1 + $0x4c0] sm:$0xf]
  %v384 = vld [vmem:[%s1 + $0x4c4] sm:$0xf]
  %v385 = vld [vmem:[%s1 + $0x4c8] sm:$0xf]
  %v386 = vld [vmem:[%s1 + $0x4cc] sm:$0xf]
  %v387 = vld [vmem:[%s1 + $0x4d0] sm:$0xf]
  %v388 = vld [vmem:[%s1 + $0x4d4] sm:$0xf]
  %v389 = vld [vmem:[%s1 + $0x4d8] sm:$0xf]
  %v390 = vld [vmem:[%s1 + $0x4dc] sm:$0xf]
  %v391 = vld [vmem:[%s1 + $0x4e0] sm:$0xf]
  %v392 = vld [vmem:[%s1 + $0x4e4] sm:$0xf]
  %v393 = vld [vmem:[%s1 + $0x4e8] sm:$0xf]
  %v394 = vld [vmem:[%s1 + $0x4ec] sm:$0xf]
  %v395 = vld [vmem:[%s1 + $0x4f0] sm:$0xf]
  %v396 = vld [vmem:[%s1 + $0x4f4] sm:$0xf]
  %v397 = vld [vmem:[%s1 + $0x4f8] sm:$0xf]
  %v398 = vld [vmem:[%s1 + $0x4fc] sm:$0xf]
  %v399 = vld [vmem:[%s1 + $0x500] sm:$0xf]
  %v400 = vld [vmem:[%s1 + $0x504] sm:$0xf]
  %v401 = vld [vmem:[%s1 + $0x508] sm:$0xf]
  %v402 = vld [vmem:[%s1 + $0x50c] sm:$0xf]
  %v403 = vld [vmem:[%s1 + $0x510] sm:$0xf]
  %v404 = vld [vmem:[%s1 + $0x514] sm:$0xf]
  %v405 = vld [vmem:[%s1 + $0x518] sm:$0xf]
  %v406 = vld [vmem:[%s1 + $0x51c] sm:$0xf]
  %v407 = vld [vmem:[%s1 + $0x520] sm:$0xf]
  %v408 = vld [vmem:[%s1 + $0x524] sm:$0xf]
  %v409 = vld [vmem:[%s1 + $0x528] sm:$0xf]
  %v410 = vld [vmem:[%s1 + $0x52c] sm:$0xf]
  %v411 = vld [vmem:[%s1 + $0x530] sm:$0xf]
  %v412 = vld [vmem:[%s1 + $0x534] sm:$0xf]
  %v413 = vld [vmem:[%s1 + $0x538] sm:$0xf]
  %v414 = vld [vmem:[%s1 + $0x53c] sm:$0xf]
  %v415 = vld [vmem:[%s1 + $0x540] sm:$0xf]
  %v416 = vld [vmem:[%s1 + $0x544] sm:$0xf]
  %v417 = vld [vmem:[%s1 + $0x548] sm:$0xf]
  %v418 = vld [vmem:[%s1 + $0x54c] sm:$0xf]
  %v419 = vld [vmem:[%s1 + $0x550] sm:$0xf]
  %v420 = vld [vmem:[%s1 + $0x554] sm:$0xf]
  %v421 = vld [vmem:[%s1 + $0x558] sm:$0xf]
  %v422 = vld [vmem:[%s1 + $0x55c] sm:$0xf]
  %v423 = vld [vmem:[%s1 + $0x560] sm:$0xf]
  %v424 = vld [vmem:[%s1 + $0x564] sm:$0xf]
  %v425 = vld [vmem:[%s1 + $0x568] sm:$0xf]
  %v426 = vld [vmem:[%s1 + $0x56c] sm:$0xf]
  %v427 = vld [vmem:[%s1 + $0x570] sm:$0xf]
  %v428 = vld [vmem:[%s1 + $0x574] sm:$0xf]
  %v429 = vld [vmem:[%s1 + $0x578] sm:$0xf]
  %v430 = vld [vmem:[%s1 + $0x57c] sm:$0xf]
  %v431 = vld [vmem:[%s1 + $0x580] sm:$0xf]
  %v432 = vld [vmem:[%s1 + $0x584] sm:$0xf]
  %v433 = vld [vmem:[%s1 + $0x588] sm:$0xf]
  %v434 = vld [vmem:[%s1 + $0x58c] sm:$0xf]
  %v435 = vld [vmem:[%s1 + $0x590] sm:$0xf]
  %v436 = vld [vmem:[%s1 + $0x594] sm:$0xf]
  %v437 = vld [vmem:[%s1 + $0x598] sm:$0xf]
  %v438 = vld [vmem:[%s1 + $0x59c] sm:$0xf]
  %v439 = vld [vmem:[%s1 + $0x5a0] sm:$0xf]
  %v440 = vld [vmem:[%s1 + $0x5a4] sm:$0xf]
  %v441 = vld [vmem:[%s1 + $0x5a8] sm:$0xf]
  %v442 = vld [vmem:[%s1 + $0x5ac] sm:$0xf]
  %v443 = vld [vmem:[%s1 + $0x5b0] sm:$0xf]
  %v444 = vld [vmem:[%s1 + $0x5b4] sm:$0xf]
  %v445 = vld [vmem:[%s1 + $0x5b8] sm:$0xf]
  %v446 = vld [vmem:[%s1 + $0x5bc] sm:$0xf]
  %v447 = vld [vmem:[%s1 + $0x5c0] sm:$0xf]
  %v448 = vld [vmem:[%s1 + $0x5c4] sm:$0xf]
  %v449 = vld [vmem:[%s1 + $0x5c8] sm:$0xf]
  %v450 = vld [vmem:[%s1 + $0x5cc] sm:$0xf]
  %v451 = vld [vmem:[%s1 + $0x5d0] sm:$0xf]
  %v452 = vld [vmem:[%s1 + $0x5d4] sm:$0xf]
  %v453 = vld [vmem:[%s1 + $0x5d8] sm:$0xf]
  %v454 = vld [vmem:[%s1 + $0x5dc] sm:$0xf]
  %v455 = vld [vmem:[%s1 + $0x5e0] sm:$0xf]
  %v456 = vld [vmem:[%s1 + $0x5e4] sm:$0xf]
  %v457 = vld [vmem:[%s1 + $0x5e8] sm:$0xf]
  %v458 = vld [vmem:[%s1 + $0x5ec] sm:$0xf]
  %v459 = vld [vmem:[%s1 + $0x5f0] sm:$0xf]
  %v460 = vld [vmem:[%s1 + $0x5f4] sm:$0xf]
  %v461 = vld [vmem:[%s1 + $0x5f8] sm:$0xf]
  %v462 = vld [vmem:[%s1 + $0x5fc] sm:$0xf]
  %v463 = vld [vmem:[%s1 + $0x600] sm:$0xf]
  %v464 = vld [vmem:[%s1 + $0x604] sm:$0xf]
  %v465 = vld [vmem:[%s1 + $0x608] sm:$0xf]
  %v466 = vld [vmem:[%s1 + $0x60c] sm:$0xf]
  %v467 = vld [vmem:[%s1 + $0x610] sm:$0xf]
  %v468 = vld [vmem:[%s1 + $0x614] sm:$0xf]
  %v469 = vld [vmem:[%s1 + $0x618] sm:$0xf]
  %v470 = vld [vmem:[%s1 + $0x61c] sm:$0xf]
  %v471 = vld [vmem:[%s1 + $0x620] sm:$0xf]
  %v472 = vld [vmem:[%s1 + $0x624] sm:$0xf]
  %v473 = vld [vmem:[%s1 + $0x628] sm:$0xf]
  %v474 = vld [vmem:[%s1 + $0x62c] sm:$0xf]
  %v475 = vld [vmem:[%s1 + $0x630] sm:$0xf]
  %v476 = vld [vmem:[%s1 + $0x634] sm:$0xf]
  %v477 = vld [vmem:[%s1 + $0x638] sm:$0xf]
  %v478 = vld [vmem:[%s1 + $0x63c] sm:$0xf]
  %v479 = vld [vmem:[%s1 + $0x640] sm:$0xf]
  %v480 = vld [vmem:[%s1 + $0x644] sm:$0xf]
  %v481 = vld [vmem:[%s1 + $0x648] sm:$0xf]
  %v482 = vld [vmem:[%s1 + $0x64c] sm:$0xf]
  %v483 = vld [vmem:[%s1 + $0x650] sm:$0xf]
  %v484 = vld [vmem:[%s1 + $0x654] sm:$0xf]
  %v485 = vld [vmem:[%s1 + $0x658] sm:$0xf]
  %v486 = vld [vmem:[%s1 + $0x65c] sm:$0xf]
  %v487 = vld [vmem:[%s1 + $0x660] sm:$0xf]
  %v488 = vld [vmem:[%s1 + $0x664] sm:$0xf]
  %v489 = vld [vmem:[%s1 + $0x668] sm:$0xf]
  %v490 = vld [vmem:[%s1 + $0x66c] sm:$0xf]
  %v491 = vld [vmem:[%s1 + $0x670] sm:$0xf]
  %v492 = vld [vmem:[%s1 + $0x674] sm:$0xf]
  %v493 = vld [vmem:[%s1 + $0x678] sm:$0xf]
  %v494 = vld [vmem:[%s1 + $0x67c] sm:$0xf]
  %v495 = vld [vmem:[%s1 + $0x680] sm:$0xf]
  %v496 = vld [vmem:[%s1 + $0x684] sm:$0xf]
  %v497 = vld [vmem:[%s1 + $0x688] sm:$0xf]
  %v498 = vld [vmem:[%s1 + $0x68c] sm:$0xf]
  %v499 = vld [vmem:[%s1 + $0x690] sm:$0xf]
  %v500 = vld [vmem:[%s1 + $0x694] sm:$0xf]
  %v501 = vld [vmem:[%s1 + $0x698] sm:$0xf]
  %v502 = vld [vmem:[%s1 + $0x69c] sm:$0xf]
  %v503 = vld [vmem:[%s1 + $0x6a0] sm:$0xf]
  %v504 = vld [vmem:[%s1 + $0x6a4] sm:$0xf]
  %v505 = vld [vmem:[%s1 + $0x6a8] sm:$0xf]
  %v506 = vld [vmem:[%s1 + $0x6ac] sm:$0xf]
  %v507 = vld [vmem:[%s1 + $0x6b0] sm:$0xf]
  %v508 = vld [vmem:[%s1 + $0x6b4] sm:$0xf]
  %v509 = vld [vmem:[%s1 + $0x6b8] sm:$0xf]
  %v510 = vld [vmem:[%s1 + $0x6bc] sm:$0xf]
  %v511 = vld [vmem:[%s1 + $0x6c0] sm:$0xf]
  %v512 = vld [vmem:[%s1 + $0x6c4] sm:$0xf]
  %v513 = vld [vmem:[%s1 + $0x6c8] sm:$0xf]
  %v514 = vld [vmem:[%s1 + $0x6cc] sm:$0xf]
  %v515 = vld [vmem:[%s1 + $0x6d0] sm:$0xf]
  %v516 = vld [vmem:[%s1 + $0x6d4] sm:$0xf]
  %v517 = vld [vmem:[%s1 + $0x6d8] sm:$0xf]
  %v518 = vld [vmem:[%s1 + $0x6dc] sm:$0xf]
  %v519 = vld [vmem:[%s1 + $0x6e0] sm:$0xf]
  %v520 = vld [vmem:[%s1 + $0x6e4] sm:$0xf]
  %v521 = vld [vmem:[%s1 + $0x6e8] sm:$0xf]
  %v522 = vld [vmem:[%s1 + $0x6ec] sm:$0xf]
  %v523 = vld [vmem:[%s1 + $0x6f0] sm:$0xf]
  %v524 = vld [vmem:[%s1 + $0x6f4] sm:$0xf]
  %v525 = vld [vmem:[%s1 + $0x6f8] sm:$0xf]
  %v526 = vld [vmem:[%s1 + $0x6fc] sm:$0xf]
  %v527 = vld [vmem:[%s1 + $0x700] sm:$0xf]
  %v528 = vld [vmem:[%s1 + $0x704] sm:$0xf]
  %v529 = vld [vmem:[%s1 + $0x708] sm:$0xf]
  %v530 = vld [vmem:[%s1 + $0x70c] sm:$0xf]
  %v531 = vld [vmem:[%s1 + $0x710] sm:$0xf]
  %v532 = vld [vmem:[%s1 + $0x714] sm:$0xf]
  %v533 = vld [vmem:[%s1 + $0x718] sm:$0xf]
  %v534 = vld [vmem:[%s1 + $0x71c] sm:$0xf]
  %v535 = vld [vmem:[%s1 + $0x720] sm:$0xf]
  %v536 = vld [vmem:[%s1 + $0x724] sm:$0xf]
  %v537 = vld [vmem:[%s1 + $0x728] sm:$0xf]
  %v538 = vld [vmem:[%s1 + $0x72c] sm:$0xf]
  %v539 = vld [vmem:[%s1 + $0x730] sm:$0xf]
  %v540 = vld [vmem:[%s1 + $0x734] sm:$0xf]
  %v541 = vld [vmem:[%s1 + $0x738] sm:$0xf]
  %v542 = vld [vmem:[%s1 + $0x73c] sm:$0xf]
  %v543 = vld [vmem:[%s1 + $0x740] sm:$0xf]
  %v544 = vld [vmem:[%s1 + $0x744] sm:$0xf]
  %v545 = vld [vmem:[%s1 + $0x748] sm:$0xf]
  %v546 = vld [vmem:[%s1 + $0x74c] sm:$0xf]
  %v547 = vld [vmem:[%s1 + $0x750] sm:$0xf]
  %v548 = vld [vmem:[%s1 + $0x754] sm:$0xf]
  %v549 = vld [vmem:[%s1 + $0x758] sm:$0xf]
  %v550 = vld [vmem:[%s1 + $0x75c] sm:$0xf]
  %v551 = vld [vmem:[%s1 + $0x760] sm:$0xf]
  %v552 = vld [vmem:[%s1 + $0x764] sm:$0xf]
  %v553 = vld [vmem:[%s1 + $0x768] sm:$0xf]
  %v554 = vld [vmem:[%s1 + $0x76c] sm:$0xf]
  %v555 = vld [vmem:[%s1 + $0x770] sm:$0xf]
  %v556 = vld [vmem:[%s1 + $0x774] sm:$0xf]
  %v557 = vld [vmem:[%s1 + $0x778] sm:$0xf]
  %v558 = vld [vmem:[%s1 + $0x77c] sm:$0xf]
  %v559 = vld [vmem:[%s1 + $0x780] sm:$0xf]
  %v560 = vld [vmem:[%s1 + $0x784] sm:$0xf]
  %v561 = vld [vmem:[%s1 + $0x788] sm:$0xf]
  %v562 = vld [vmem:[%s1 + $0x78c] sm:$0xf]
  %v563 = vld [vmem:[%s1 + $0x790] sm:$0xf]
  %v564 = vld [vmem:[%s1 + $0x794] sm:$0xf]
  %v565 = vld [vmem:[%s1 + $0x798] sm:$0xf]
  %v566 = vld [vmem:[%s1 + $0x79c] sm:$0xf]
  %v567 = vld [vmem:[%s1 + $0x7a0] sm:$0xf]
  %v568 = vld [vmem:[%s1 + $0x7a4] sm:$0xf]
  %v569 = vld [vmem:[%s1 + $0x7a8] sm:$0xf]
  %v570 = vld [vmem:[%s1 + $0x7ac] sm:$0xf]
  %v571 = vld [vmem:[%s1 + $0x7b0] sm:$0xf]
  %v572 = vld [vmem:[%s1 + $0x7b4] sm:$0xf]
  %v573 = vld [vmem:[%s1 + $0x7b8] sm:$0xf]
  %v574 = vld [vmem:[%s1 + $0x7bc] sm:$0xf]
  %v575 = vld [vmem:[%s1 + $0x7c0] sm:$0xf]
  %v576 = vld [vmem:[%s1 + $0x7c4] sm:$0xf]
  %v577 = vld [vmem:[%s1 + $0x7c8] sm:$0xf]
  %v578 = vld [vmem:[%s1 + $0x7cc] sm:$0xf]
  %v579 = vld [vmem:[%s1 + $0x7d0] sm:$0xf]
  %v580 = vld [vmem:[%s1 + $0x7d4] sm:$0xf]
  %v581 = vld [vmem:[%s1 + $0x7d8] sm:$0xf]
  %v582 = vld [vmem:[%s1 + $0x7dc] sm:$0xf]
  %v583 = vld [vmem:[%s1 + $0x7e0] sm:$0xf]
  %v584 = vld [vmem:[%s1 + $0x7e4] sm:$0xf]
  %v585 = vld [vmem:[%s1 + $0x7e8] sm:$0xf]
  %v586 = vld [vmem:[%s1 + $0x7ec] sm:$0xf]
  %v587 = vld [vmem:[%s1 + $0x7f0] sm:$0xf]
  %v588 = vld [vmem:[%s1 + $0x7f4] sm:$0xf]
  %v589 = vld [vmem:[%s1 + $0x7f8] sm:$0xf]
  %v590 = vld [vmem:[%s1 + $0x7fc] sm:$0xf]
  %v591 = vld [vmem:[%s2] sm:$0x1]
  %v593 = vlaneseq
  %v594 = vshrl.u32 %v593, 7
  %v595 = vsub.s32 0, %v594
  %v596 = vrot.slane %v591, %v595
  %v662 = vunpack.c.l.b16 %v15
  %v663 = vunpack.c.h.b16 %v15
  %v664 = vunpack.c.l.b16 %v16
  %v665 = vunpack.c.h.b16 %v16
  %v666 = vunpack.c.l.b16 %v17
  %v667 = vunpack.c.h.b16 %v17
  %v668 = vunpack.c.l.b16 %v18
  %v669 = vunpack.c.h.b16 %v18
  %v670 = vunpack.c.l.b16 %v19
  %v671 = vunpack.c.h.b16 %v19
  %v672 = vunpack.c.l.b16 %v20
  %v673 = vunpack.c.h.b16 %v20
  %v674 = vunpack.c.l.b16 %v21
  %v675 = vunpack.c.h.b16 %v21
  %v676 = vunpack.c.l.b16 %v22
  %v677 = vunpack.c.h.b16 %v22
  %v678 = vunpack.c.l.b16 %v23
  %v679 = vunpack.c.h.b16 %v23
  %v680 = vunpack.c.l.b16 %v24
  %v681 = vunpack.c.h.b16 %v24
  %v682 = vunpack.c.l.b16 %v25
  %v683 = vunpack.c.h.b16 %v25
  %v684 = vunpack.c.l.b16 %v26
  %v685 = vunpack.c.h.b16 %v26
  %v686 = vunpack.c.l.b16 %v27
  %v687 = vunpack.c.h.b16 %v27
  %v688 = vunpack.c.l.b16 %v28
  %v689 = vunpack.c.h.b16 %v28
  %v690 = vunpack.c.l.b16 %v29
  %v691 = vunpack.c.h.b16 %v29
  %v692 = vunpack.c.l.b16 %v30
  %v693 = vunpack.c.h.b16 %v30
  %v694 = vunpack.c.l.b16 %v31
  %v695 = vunpack.c.h.b16 %v31
  %v696 = vunpack.c.l.b16 %v32
  %v697 = vunpack.c.h.b16 %v32
  %v698 = vunpack.c.l.b16 %v33
  %v699 = vunpack.c.h.b16 %v33
  %v700 = vunpack.c.l.b16 %v34
  %v701 = vunpack.c.h.b16 %v34
  %v702 = vunpack.c.l.b16 %v35
  %v703 = vunpack.c.h.b16 %v35
  %v704 = vunpack.c.l.b16 %v36
  %v705 = vunpack.c.h.b16 %v36
  %v706 = vunpack.c.l.b16 %v37
  %v707 = vunpack.c.h.b16 %v37
  %v708 = vunpack.c.l.b16 %v38
  %v709 = vunpack.c.h.b16 %v38
  %v710 = vunpack.c.l.b16 %v39
  %v711 = vunpack.c.h.b16 %v39
  %v712 = vunpack.c.l.b16 %v40
  %v713 = vunpack.c.h.b16 %v40
  %v714 = vunpack.c.l.b16 %v41
  %v715 = vunpack.c.h.b16 %v41
  %v716 = vunpack.c.l.b16 %v42
  %v717 = vunpack.c.h.b16 %v42
  %v718 = vunpack.c.l.b16 %v43
  %v719 = vunpack.c.h.b16 %v43
  %v720 = vunpack.c.l.b16 %v44
  %v721 = vunpack.c.h.b16 %v44
  %v722 = vunpack.c.l.b16 %v45
  %v723 = vunpack.c.h.b16 %v45
  %v724 = vunpack.c.l.b16 %v46
  %v725 = vunpack.c.h.b16 %v46
  %v726 = vunpack.c.l.b16 %v47
  %v727 = vunpack.c.h.b16 %v47
  %v728 = vunpack.c.l.b16 %v48
  %v729 = vunpack.c.h.b16 %v48
  %v730 = vunpack.c.l.b16 %v49
  %v731 = vunpack.c.h.b16 %v49
  %v732 = vunpack.c.l.b16 %v50
  %v733 = vunpack.c.h.b16 %v50
  %v734 = vunpack.c.l.b16 %v51
  %v735 = vunpack.c.h.b16 %v51
  %v736 = vunpack.c.l.b16 %v52
  %v737 = vunpack.c.h.b16 %v52
  %v738 = vunpack.c.l.b16 %v53
  %v739 = vunpack.c.h.b16 %v53
  %v740 = vunpack.c.l.b16 %v54
  %v741 = vunpack.c.h.b16 %v54
  %v742 = vunpack.c.l.b16 %v55
  %v743 = vunpack.c.h.b16 %v55
  %v744 = vunpack.c.l.b16 %v56
  %v745 = vunpack.c.h.b16 %v56
  %v746 = vunpack.c.l.b16 %v57
  %v747 = vunpack.c.h.b16 %v57
  %v748 = vunpack.c.l.b16 %v58
  %v749 = vunpack.c.h.b16 %v58
  %v750 = vunpack.c.l.b16 %v59
  %v751 = vunpack.c.h.b16 %v59
  %v752 = vunpack.c.l.b16 %v60
  %v753 = vunpack.c.h.b16 %v60
  %v754 = vunpack.c.l.b16 %v61
  %v755 = vunpack.c.h.b16 %v61
  %v756 = vunpack.c.l.b16 %v62
  %v757 = vunpack.c.h.b16 %v62
  %v758 = vunpack.c.l.b16 %v63
  %v759 = vunpack.c.h.b16 %v63
  %v760 = vunpack.c.l.b16 %v64
  %v761 = vunpack.c.h.b16 %v64
  %v762 = vunpack.c.l.b16 %v65
  %v763 = vunpack.c.h.b16 %v65
  %v764 = vunpack.c.l.b16 %v66
  %v765 = vunpack.c.h.b16 %v66
  %v766 = vunpack.c.l.b16 %v67
  %v767 = vunpack.c.h.b16 %v67
  %v768 = vunpack.c.l.b16 %v68
  %v769 = vunpack.c.h.b16 %v68
  %v770 = vunpack.c.l.b16 %v69
  %v771 = vunpack.c.h.b16 %v69
  %v772 = vunpack.c.l.b16 %v70
  %v773 = vunpack.c.h.b16 %v70
  %v774 = vunpack.c.l.b16 %v71
  %v775 = vunpack.c.h.b16 %v71
  %v776 = vunpack.c.l.b16 %v72
  %v777 = vunpack.c.h.b16 %v72
  %v778 = vunpack.c.l.b16 %v73
  %v779 = vunpack.c.h.b16 %v73
  %v780 = vunpack.c.l.b16 %v74
  %v781 = vunpack.c.h.b16 %v74
  %v782 = vunpack.c.l.b16 %v75
  %v783 = vunpack.c.h.b16 %v75
  %v784 = vunpack.c.l.b16 %v76
  %v785 = vunpack.c.h.b16 %v76
  %v786 = vunpack.c.l.b16 %v77
  %v787 = vunpack.c.h.b16 %v77
  %v788 = vunpack.c.l.b16 %v78
  %v789 = vunpack.c.h.b16 %v78
  %v790 = vpack.c.b16 %v694, %v662
  %v791 = vpack.c.b16 %v695, %v663
  %v792 = vpack.c.b16 %v696, %v664
  %v793 = vpack.c.b16 %v697, %v665
  %v794 = vpack.c.b16 %v698, %v666
  %v795 = vpack.c.b16 %v699, %v667
  %v796 = vpack.c.b16 %v700, %v668
  %v797 = vpack.c.b16 %v701, %v669
  %v798 = vpack.c.b16 %v702, %v670
  %v799 = vpack.c.b16 %v703, %v671
  %v800 = vpack.c.b16 %v704, %v672
  %v801 = vpack.c.b16 %v705, %v673
  %v802 = vpack.c.b16 %v706, %v674
  %v803 = vpack.c.b16 %v707, %v675
  %v804 = vpack.c.b16 %v708, %v676
  %v805 = vpack.c.b16 %v709, %v677
  %v806 = vpack.c.b16 %v710, %v678
  %v807 = vpack.c.b16 %v711, %v679
  %v808 = vpack.c.b16 %v712, %v680
  %v809 = vpack.c.b16 %v713, %v681
  %v810 = vpack.c.b16 %v714, %v682
  %v811 = vpack.c.b16 %v715, %v683
  %v812 = vpack.c.b16 %v716, %v684
  %v813 = vpack.c.b16 %v717, %v685
  %v814 = vpack.c.b16 %v718, %v686
  %v815 = vpack.c.b16 %v719, %v687
  %v816 = vpack.c.b16 %v720, %v688
  %v817 = vpack.c.b16 %v721, %v689
  %v818 = vpack.c.b16 %v722, %v690
  %v819 = vpack.c.b16 %v723, %v691
  %v820 = vpack.c.b16 %v724, %v692
  %v821 = vpack.c.b16 %v725, %v693
  %v822 = vpack.c.b16 %v758, %v726
  %v823 = vpack.c.b16 %v759, %v727
  %v824 = vpack.c.b16 %v760, %v728
  %v825 = vpack.c.b16 %v761, %v729
  %v826 = vpack.c.b16 %v762, %v730
  %v827 = vpack.c.b16 %v763, %v731
  %v828 = vpack.c.b16 %v764, %v732
  %v829 = vpack.c.b16 %v765, %v733
  %v830 = vpack.c.b16 %v766, %v734
  %v831 = vpack.c.b16 %v767, %v735
  %v832 = vpack.c.b16 %v768, %v736
  %v833 = vpack.c.b16 %v769, %v737
  %v834 = vpack.c.b16 %v770, %v738
  %v835 = vpack.c.b16 %v771, %v739
  %v836 = vpack.c.b16 %v772, %v740
  %v837 = vpack.c.b16 %v773, %v741
  %v838 = vpack.c.b16 %v774, %v742
  %v839 = vpack.c.b16 %v775, %v743
  %v840 = vpack.c.b16 %v776, %v744
  %v841 = vpack.c.b16 %v777, %v745
  %v842 = vpack.c.b16 %v778, %v746
  %v843 = vpack.c.b16 %v779, %v747
  %v844 = vpack.c.b16 %v780, %v748
  %v845 = vpack.c.b16 %v781, %v749
  %v846 = vpack.c.b16 %v782, %v750
  %v847 = vpack.c.b16 %v783, %v751
  %v848 = vpack.c.b16 %v784, %v752
  %v849 = vpack.c.b16 %v785, %v753
  %v850 = vpack.c.b16 %v786, %v754
  %v851 = vpack.c.b16 %v787, %v755
  %v852 = vpack.c.b16 %v788, %v756
  %v853 = vpack.c.b16 %v789, %v757
  %v1430 = vunpack.c.l.b16 %v79
  %v1431 = vunpack.c.l.b16 %v80
  %v1432 = vunpack.c.l.b16 %v81
  %v1433 = vunpack.c.l.b16 %v82
  %v1434 = vunpack.c.l.b16 %v83
  %v1435 = vunpack.c.l.b16 %v84
  %v1436 = vunpack.c.l.b16 %v85
  %v1437 = vunpack.c.l.b16 %v86
  %v1438 = vunpack.c.l.b16 %v87
  %v1439 = vunpack.c.l.b16 %v88
  %v1440 = vunpack.c.l.b16 %v89
  %v1441 = vunpack.c.l.b16 %v90
  %v1442 = vunpack.c.l.b16 %v91
  %v1443 = vunpack.c.l.b16 %v92
  %v1444 = vunpack.c.l.b16 %v93
  %v1445 = vunpack.c.l.b16 %v94
  %v1446 = vunpack.c.l.b16 %v95
  %v1447 = vunpack.c.l.b16 %v96
  %v1448 = vunpack.c.l.b16 %v97
  %v1449 = vunpack.c.l.b16 %v98
  %v1450 = vunpack.c.l.b16 %v99
  %v1451 = vunpack.c.l.b16 %v100
  %v1452 = vunpack.c.l.b16 %v101
  %v1453 = vunpack.c.l.b16 %v102
  %v1454 = vunpack.c.l.b16 %v103
  %v1455 = vunpack.c.l.b16 %v104
  %v1456 = vunpack.c.l.b16 %v105
  %v1457 = vunpack.c.l.b16 %v106
  %v1458 = vunpack.c.l.b16 %v107
  %v1459 = vunpack.c.l.b16 %v108
  %v1460 = vunpack.c.l.b16 %v109
  %v1461 = vunpack.c.l.b16 %v110
  %v1462 = vunpack.c.l.b16 %v111
  %v1463 = vunpack.c.l.b16 %v112
  %v1464 = vunpack.c.l.b16 %v113
  %v1465 = vunpack.c.l.b16 %v114
  %v1466 = vunpack.c.l.b16 %v115
  %v1467 = vunpack.c.l.b16 %v116
  %v1468 = vunpack.c.l.b16 %v117
  %v1469 = vunpack.c.l.b16 %v118
  %v1470 = vunpack.c.l.b16 %v119
  %v1471 = vunpack.c.l.b16 %v120
  %v1472 = vunpack.c.l.b16 %v121
  %v1473 = vunpack.c.l.b16 %v122
  %v1474 = vunpack.c.l.b16 %v123
  %v1475 = vunpack.c.l.b16 %v124
  %v1476 = vunpack.c.l.b16 %v125
  %v1477 = vunpack.c.l.b16 %v126
  %v1478 = vunpack.c.l.b16 %v127
  %v1479 = vunpack.c.l.b16 %v128
  %v1480 = vunpack.c.l.b16 %v129
  %v1481 = vunpack.c.l.b16 %v130
  %v1482 = vunpack.c.l.b16 %v131
  %v1483 = vunpack.c.l.b16 %v132
  %v1484 = vunpack.c.l.b16 %v133
  %v1485 = vunpack.c.l.b16 %v134
  %v1486 = vunpack.c.l.b16 %v135
  %v1487 = vunpack.c.l.b16 %v136
  %v1488 = vunpack.c.l.b16 %v137
  %v1489 = vunpack.c.l.b16 %v138
  %v1490 = vunpack.c.l.b16 %v139
  %v1491 = vunpack.c.l.b16 %v140
  %v1492 = vunpack.c.l.b16 %v141
  %v1493 = vunpack.c.l.b16 %v142
  %v1494 = vunpack.c.l.b16 %v143
  %v1495 = vunpack.c.l.b16 %v144
  %v1496 = vunpack.c.l.b16 %v145
  %v1497 = vunpack.c.l.b16 %v146
  %v1498 = vunpack.c.l.b16 %v147
  %v1499 = vunpack.c.l.b16 %v148
  %v1500 = vunpack.c.l.b16 %v149
  %v1501 = vunpack.c.l.b16 %v150
  %v1502 = vunpack.c.l.b16 %v151
  %v1503 = vunpack.c.l.b16 %v152
  %v1504 = vunpack.c.l.b16 %v153
  %v1505 = vunpack.c.l.b16 %v154
  %v1506 = vunpack.c.l.b16 %v155
  %v1507 = vunpack.c.l.b16 %v156
  %v1508 = vunpack.c.l.b16 %v157
  %v1509 = vunpack.c.l.b16 %v158
  %v1510 = vunpack.c.l.b16 %v159
  %v1511 = vunpack.c.l.b16 %v160
  %v1512 = vunpack.c.l.b16 %v161
  %v1513 = vunpack.c.l.b16 %v162
  %v1514 = vunpack.c.l.b16 %v163
  %v1515 = vunpack.c.l.b16 %v164
  %v1516 = vunpack.c.l.b16 %v165
  %v1517 = vunpack.c.l.b16 %v166
  %v1518 = vunpack.c.l.b16 %v167
  %v1519 = vunpack.c.l.b16 %v168
  %v1520 = vunpack.c.l.b16 %v169
  %v1521 = vunpack.c.l.b16 %v170
  %v1522 = vunpack.c.l.b16 %v171
  %v1523 = vunpack.c.l.b16 %v172
  %v1524 = vunpack.c.l.b16 %v173
  %v1525 = vunpack.c.l.b16 %v174
  %v1526 = vunpack.c.l.b16 %v175
  %v1527 = vunpack.c.l.b16 %v176
  %v1528 = vunpack.c.l.b16 %v177
  %v1529 = vunpack.c.l.b16 %v178
  %v1530 = vunpack.c.l.b16 %v179
  %v1531 = vunpack.c.l.b16 %v180
  %v1532 = vunpack.c.l.b16 %v181
  %v1533 = vunpack.c.l.b16 %v182
  %v1534 = vunpack.c.l.b16 %v183
  %v1535 = vunpack.c.l.b16 %v184
  %v1536 = vunpack.c.l.b16 %v185
  %v1537 = vunpack.c.l.b16 %v186
  %v1538 = vunpack.c.l.b16 %v187
  %v1539 = vunpack.c.l.b16 %v188
  %v1540 = vunpack.c.l.b16 %v189
  %v1541 = vunpack.c.l.b16 %v190
  %v1542 = vunpack.c.l.b16 %v191
  %v1543 = vunpack.c.l.b16 %v192
  %v1544 = vunpack.c.l.b16 %v193
  %v1545 = vunpack.c.l.b16 %v194
  %v1546 = vunpack.c.l.b16 %v195
  %v1547 = vunpack.c.l.b16 %v196
  %v1548 = vunpack.c.l.b16 %v197
  %v1549 = vunpack.c.l.b16 %v198
  %v1550 = vunpack.c.l.b16 %v199
  %v1551 = vunpack.c.l.b16 %v200
  %v1552 = vunpack.c.l.b16 %v201
  %v1553 = vunpack.c.l.b16 %v202
  %v1554 = vunpack.c.l.b16 %v203
  %v1555 = vunpack.c.l.b16 %v204
  %v1556 = vunpack.c.l.b16 %v205
  %v1557 = vunpack.c.l.b16 %v206
  %v1558 = vunpack.c.l.b16 %v207
  %v1559 = vunpack.c.l.b16 %v208
  %v1560 = vunpack.c.l.b16 %v209
  %v1561 = vunpack.c.l.b16 %v210
  %v1562 = vunpack.c.l.b16 %v211
  %v1563 = vunpack.c.l.b16 %v212
  %v1564 = vunpack.c.l.b16 %v213
  %v1565 = vunpack.c.l.b16 %v214
  %v1566 = vunpack.c.l.b16 %v215
  %v1567 = vunpack.c.l.b16 %v216
  %v1568 = vunpack.c.l.b16 %v217
  %v1569 = vunpack.c.l.b16 %v218
  %v1570 = vunpack.c.l.b16 %v219
  %v1571 = vunpack.c.l.b16 %v220
  %v1572 = vunpack.c.l.b16 %v221
  %v1573 = vunpack.c.l.b16 %v222
  %v1574 = vunpack.c.l.b16 %v223
  %v1575 = vunpack.c.l.b16 %v224
  %v1576 = vunpack.c.l.b16 %v225
  %v1577 = vunpack.c.l.b16 %v226
  %v1578 = vunpack.c.l.b16 %v227
  %v1579 = vunpack.c.l.b16 %v228
  %v1580 = vunpack.c.l.b16 %v229
  %v1581 = vunpack.c.l.b16 %v230
  %v1582 = vunpack.c.l.b16 %v231
  %v1583 = vunpack.c.l.b16 %v232
  %v1584 = vunpack.c.l.b16 %v233
  %v1585 = vunpack.c.l.b16 %v234
  %v1586 = vunpack.c.l.b16 %v235
  %v1587 = vunpack.c.l.b16 %v236
  %v1588 = vunpack.c.l.b16 %v237
  %v1589 = vunpack.c.l.b16 %v238
  %v1590 = vunpack.c.l.b16 %v239
  %v1591 = vunpack.c.l.b16 %v240
  %v1592 = vunpack.c.l.b16 %v241
  %v1593 = vunpack.c.l.b16 %v242
  %v1594 = vunpack.c.l.b16 %v243
  %v1595 = vunpack.c.l.b16 %v244
  %v1596 = vunpack.c.l.b16 %v245
  %v1597 = vunpack.c.l.b16 %v246
  %v1598 = vunpack.c.l.b16 %v247
  %v1599 = vunpack.c.l.b16 %v248
  %v1600 = vunpack.c.l.b16 %v249
  %v1601 = vunpack.c.l.b16 %v250
  %v1602 = vunpack.c.l.b16 %v251
  %v1603 = vunpack.c.l.b16 %v252
  %v1604 = vunpack.c.l.b16 %v253
  %v1605 = vunpack.c.l.b16 %v254
  %v1606 = vunpack.c.l.b16 %v255
  %v1607 = vunpack.c.l.b16 %v256
  %v1608 = vunpack.c.l.b16 %v257
  %v1609 = vunpack.c.l.b16 %v258
  %v1610 = vunpack.c.l.b16 %v259
  %v1611 = vunpack.c.l.b16 %v260
  %v1612 = vunpack.c.l.b16 %v261
  %v1613 = vunpack.c.l.b16 %v262
  %v1614 = vunpack.c.l.b16 %v263
  %v1615 = vunpack.c.l.b16 %v264
  %v1616 = vunpack.c.l.b16 %v265
  %v1617 = vunpack.c.l.b16 %v266
  %v1618 = vunpack.c.l.b16 %v267
  %v1619 = vunpack.c.l.b16 %v268
  %v1620 = vunpack.c.l.b16 %v269
  %v1621 = vunpack.c.l.b16 %v270
  %v1622 = vunpack.c.l.b16 %v271
  %v1623 = vunpack.c.l.b16 %v272
  %v1624 = vunpack.c.l.b16 %v273
  %v1625 = vunpack.c.l.b16 %v274
  %v1626 = vunpack.c.l.b16 %v275
  %v1627 = vunpack.c.l.b16 %v276
  %v1628 = vunpack.c.l.b16 %v277
  %v1629 = vunpack.c.l.b16 %v278
  %v1630 = vunpack.c.l.b16 %v279
  %v1631 = vunpack.c.l.b16 %v280
  %v1632 = vunpack.c.l.b16 %v281
  %v1633 = vunpack.c.l.b16 %v282
  %v1634 = vunpack.c.l.b16 %v283
  %v1635 = vunpack.c.l.b16 %v284
  %v1636 = vunpack.c.l.b16 %v285
  %v1637 = vunpack.c.l.b16 %v286
  %v1638 = vunpack.c.l.b16 %v287
  %v1639 = vunpack.c.l.b16 %v288
  %v1640 = vunpack.c.l.b16 %v289
  %v1641 = vunpack.c.l.b16 %v290
  %v1642 = vunpack.c.l.b16 %v291
  %v1643 = vunpack.c.l.b16 %v292
  %v1644 = vunpack.c.l.b16 %v293
  %v1645 = vunpack.c.l.b16 %v294
  %v1646 = vunpack.c.l.b16 %v295
  %v1647 = vunpack.c.l.b16 %v296
  %v1648 = vunpack.c.l.b16 %v297
  %v1649 = vunpack.c.l.b16 %v298
  %v1650 = vunpack.c.l.b16 %v299
  %v1651 = vunpack.c.l.b16 %v300
  %v1652 = vunpack.c.l.b16 %v301
  %v1653 = vunpack.c.l.b16 %v302
  %v1654 = vunpack.c.l.b16 %v303
  %v1655 = vunpack.c.l.b16 %v304
  %v1656 = vunpack.c.l.b16 %v305
  %v1657 = vunpack.c.l.b16 %v306
  %v1658 = vunpack.c.l.b16 %v307
  %v1659 = vunpack.c.l.b16 %v308
  %v1660 = vunpack.c.l.b16 %v309
  %v1661 = vunpack.c.l.b16 %v310
  %v1662 = vunpack.c.l.b16 %v311
  %v1663 = vunpack.c.l.b16 %v312
  %v1664 = vunpack.c.l.b16 %v313
  %v1665 = vunpack.c.l.b16 %v314
  %v1666 = vunpack.c.l.b16 %v315
  %v1667 = vunpack.c.l.b16 %v316
  %v1668 = vunpack.c.l.b16 %v317
  %v1669 = vunpack.c.l.b16 %v318
  %v1670 = vunpack.c.l.b16 %v319
  %v1671 = vunpack.c.l.b16 %v320
  %v1672 = vunpack.c.l.b16 %v321
  %v1673 = vunpack.c.l.b16 %v322
  %v1674 = vunpack.c.l.b16 %v323
  %v1675 = vunpack.c.l.b16 %v324
  %v1676 = vunpack.c.l.b16 %v325
  %v1677 = vunpack.c.l.b16 %v326
  %v1678 = vunpack.c.l.b16 %v327
  %v1679 = vunpack.c.l.b16 %v328
  %v1680 = vunpack.c.l.b16 %v329
  %v1681 = vunpack.c.l.b16 %v330
  %v1682 = vunpack.c.l.b16 %v331
  %v1683 = vunpack.c.l.b16 %v332
  %v1684 = vunpack.c.l.b16 %v333
  %v1685 = vunpack.c.l.b16 %v334
  %v1686 = vunpack.c.l.b16 %v335
  %v1687 = vunpack.c.l.b16 %v336
  %v1688 = vunpack.c.l.b16 %v337
  %v1689 = vunpack.c.l.b16 %v338
  %v1690 = vunpack.c.l.b16 %v339
  %v1691 = vunpack.c.l.b16 %v340
  %v1692 = vunpack.c.l.b16 %v341
  %v1693 = vunpack.c.l.b16 %v342
  %v1694 = vunpack.c.l.b16 %v343
  %v1695 = vunpack.c.l.b16 %v344
  %v1696 = vunpack.c.l.b16 %v345
  %v1697 = vunpack.c.l.b16 %v346
  %v1698 = vunpack.c.l.b16 %v347
  %v1699 = vunpack.c.l.b16 %v348
  %v1700 = vunpack.c.l.b16 %v349
  %v1701 = vunpack.c.l.b16 %v350
  %v1702 = vunpack.c.l.b16 %v351
  %v1703 = vunpack.c.l.b16 %v352
  %v1704 = vunpack.c.l.b16 %v353
  %v1705 = vunpack.c.l.b16 %v354
  %v1706 = vunpack.c.l.b16 %v355
  %v1707 = vunpack.c.l.b16 %v356
  %v1708 = vunpack.c.l.b16 %v357
  %v1709 = vunpack.c.l.b16 %v358
  %v1710 = vunpack.c.l.b16 %v359
  %v1711 = vunpack.c.l.b16 %v360
  %v1712 = vunpack.c.l.b16 %v361
  %v1713 = vunpack.c.l.b16 %v362
  %v1714 = vunpack.c.l.b16 %v363
  %v1715 = vunpack.c.l.b16 %v364
  %v1716 = vunpack.c.l.b16 %v365
  %v1717 = vunpack.c.l.b16 %v366
  %v1718 = vunpack.c.l.b16 %v367
  %v1719 = vunpack.c.l.b16 %v368
  %v1720 = vunpack.c.l.b16 %v369
  %v1721 = vunpack.c.l.b16 %v370
  %v1722 = vunpack.c.l.b16 %v371
  %v1723 = vunpack.c.l.b16 %v372
  %v1724 = vunpack.c.l.b16 %v373
  %v1725 = vunpack.c.l.b16 %v374
  %v1726 = vunpack.c.l.b16 %v375
  %v1727 = vunpack.c.l.b16 %v376
  %v1728 = vunpack.c.l.b16 %v377
  %v1729 = vunpack.c.l.b16 %v378
  %v1730 = vunpack.c.l.b16 %v379
  %v1731 = vunpack.c.l.b16 %v380
  %v1732 = vunpack.c.l.b16 %v381
  %v1733 = vunpack.c.l.b16 %v382
  %v1734 = vunpack.c.l.b16 %v383
  %v1735 = vunpack.c.l.b16 %v384
  %v1736 = vunpack.c.l.b16 %v385
  %v1737 = vunpack.c.l.b16 %v386
  %v1738 = vunpack.c.l.b16 %v387
  %v1739 = vunpack.c.l.b16 %v388
  %v1740 = vunpack.c.l.b16 %v389
  %v1741 = vunpack.c.l.b16 %v390
  %v1742 = vunpack.c.l.b16 %v391
  %v1743 = vunpack.c.l.b16 %v392
  %v1744 = vunpack.c.l.b16 %v393
  %v1745 = vunpack.c.l.b16 %v394
  %v1746 = vunpack.c.l.b16 %v395
  %v1747 = vunpack.c.l.b16 %v396
  %v1748 = vunpack.c.l.b16 %v397
  %v1749 = vunpack.c.l.b16 %v398
  %v1750 = vunpack.c.l.b16 %v399
  %v1751 = vunpack.c.l.b16 %v400
  %v1752 = vunpack.c.l.b16 %v401
  %v1753 = vunpack.c.l.b16 %v402
  %v1754 = vunpack.c.l.b16 %v403
  %v1755 = vunpack.c.l.b16 %v404
  %v1756 = vunpack.c.l.b16 %v405
  %v1757 = vunpack.c.l.b16 %v406
  %v1758 = vunpack.c.l.b16 %v407
  %v1759 = vunpack.c.l.b16 %v408
  %v1760 = vunpack.c.l.b16 %v409
  %v1761 = vunpack.c.l.b16 %v410
  %v1762 = vunpack.c.l.b16 %v411
  %v1763 = vunpack.c.l.b16 %v412
  %v1764 = vunpack.c.l.b16 %v413
  %v1765 = vunpack.c.l.b16 %v414
  %v1766 = vunpack.c.l.b16 %v415
  %v1767 = vunpack.c.l.b16 %v416
  %v1768 = vunpack.c.l.b16 %v417
  %v1769 = vunpack.c.l.b16 %v418
  %v1770 = vunpack.c.l.b16 %v419
  %v1771 = vunpack.c.l.b16 %v420
  %v1772 = vunpack.c.l.b16 %v421
  %v1773 = vunpack.c.l.b16 %v422
  %v1774 = vunpack.c.l.b16 %v423
  %v1775 = vunpack.c.l.b16 %v424
  %v1776 = vunpack.c.l.b16 %v425
  %v1777 = vunpack.c.l.b16 %v426
  %v1778 = vunpack.c.l.b16 %v427
  %v1779 = vunpack.c.l.b16 %v428
  %v1780 = vunpack.c.l.b16 %v429
  %v1781 = vunpack.c.l.b16 %v430
  %v1782 = vunpack.c.l.b16 %v431
  %v1783 = vunpack.c.l.b16 %v432
  %v1784 = vunpack.c.l.b16 %v433
  %v1785 = vunpack.c.l.b16 %v434
  %v1786 = vunpack.c.l.b16 %v435
  %v1787 = vunpack.c.l.b16 %v436
  %v1788 = vunpack.c.l.b16 %v437
  %v1789 = vunpack.c.l.b16 %v438
  %v1790 = vunpack.c.l.b16 %v439
  %v1791 = vunpack.c.l.b16 %v440
  %v1792 = vunpack.c.l.b16 %v441
  %v1793 = vunpack.c.l.b16 %v442
  %v1794 = vunpack.c.l.b16 %v443
  %v1795 = vunpack.c.l.b16 %v444
  %v1796 = vunpack.c.l.b16 %v445
  %v1797 = vunpack.c.l.b16 %v446
  %v1798 = vunpack.c.l.b16 %v447
  %v1799 = vunpack.c.l.b16 %v448
  %v1800 = vunpack.c.l.b16 %v449
  %v1801 = vunpack.c.l.b16 %v450
  %v1802 = vunpack.c.l.b16 %v451
  %v1803 = vunpack.c.l.b16 %v452
  %v1804 = vunpack.c.l.b16 %v453
  %v1805 = vunpack.c.l.b16 %v454
  %v1806 = vunpack.c.l.b16 %v455
  %v1807 = vunpack.c.l.b16 %v456
  %v1808 = vunpack.c.l.b16 %v457
  %v1809 = vunpack.c.l.b16 %v458
  %v1810 = vunpack.c.l.b16 %v459
  %v1811 = vunpack.c.l.b16 %v460
  %v1812 = vunpack.c.l.b16 %v461
  %v1813 = vunpack.c.l.b16 %v462
  %v1814 = vunpack.c.l.b16 %v463
  %v1815 = vunpack.c.l.b16 %v464
  %v1816 = vunpack.c.l.b16 %v465
  %v1817 = vunpack.c.l.b16 %v466
  %v1818 = vunpack.c.l.b16 %v467
  %v1819 = vunpack.c.l.b16 %v468
  %v1820 = vunpack.c.l.b16 %v469
  %v1821 = vunpack.c.l.b16 %v470
  %v1822 = vunpack.c.l.b16 %v471
  %v1823 = vunpack.c.l.b16 %v472
  %v1824 = vunpack.c.l.b16 %v473
  %v1825 = vunpack.c.l.b16 %v474
  %v1826 = vunpack.c.l.b16 %v475
  %v1827 = vunpack.c.l.b16 %v476
  %v1828 = vunpack.c.l.b16 %v477
  %v1829 = vunpack.c.l.b16 %v478
  %v1830 = vunpack.c.l.b16 %v479
  %v1831 = vunpack.c.l.b16 %v480
  %v1832 = vunpack.c.l.b16 %v481
  %v1833 = vunpack.c.l.b16 %v482
  %v1834 = vunpack.c.l.b16 %v483
  %v1835 = vunpack.c.l.b16 %v484
  %v1836 = vunpack.c.l.b16 %v485
  %v1837 = vunpack.c.l.b16 %v486
  %v1838 = vunpack.c.l.b16 %v487
  %v1839 = vunpack.c.l.b16 %v488
  %v1840 = vunpack.c.l.b16 %v489
  %v1841 = vunpack.c.l.b16 %v490
  %v1842 = vunpack.c.l.b16 %v491
  %v1843 = vunpack.c.l.b16 %v492
  %v1844 = vunpack.c.l.b16 %v493
  %v1845 = vunpack.c.l.b16 %v494
  %v1846 = vunpack.c.l.b16 %v495
  %v1847 = vunpack.c.l.b16 %v496
  %v1848 = vunpack.c.l.b16 %v497
  %v1849 = vunpack.c.l.b16 %v498
  %v1850 = vunpack.c.l.b16 %v499
  %v1851 = vunpack.c.l.b16 %v500
  %v1852 = vunpack.c.l.b16 %v501
  %v1853 = vunpack.c.l.b16 %v502
  %v1854 = vunpack.c.l.b16 %v503
  %v1855 = vunpack.c.l.b16 %v504
  %v1856 = vunpack.c.l.b16 %v505
  %v1857 = vunpack.c.l.b16 %v506
  %v1858 = vunpack.c.l.b16 %v507
  %v1859 = vunpack.c.l.b16 %v508
  %v1860 = vunpack.c.l.b16 %v509
  %v1861 = vunpack.c.l.b16 %v510
  %v1862 = vunpack.c.l.b16 %v511
  %v1863 = vunpack.c.l.b16 %v512
  %v1864 = vunpack.c.l.b16 %v513
  %v1865 = vunpack.c.l.b16 %v514
  %v1866 = vunpack.c.l.b16 %v515
  %v1867 = vunpack.c.l.b16 %v516
  %v1868 = vunpack.c.l.b16 %v517
  %v1869 = vunpack.c.l.b16 %v518
  %v1870 = vunpack.c.l.b16 %v519
  %v1871 = vunpack.c.l.b16 %v520
  %v1872 = vunpack.c.l.b16 %v521
  %v1873 = vunpack.c.l.b16 %v522
  %v1874 = vunpack.c.l.b16 %v523
  %v1875 = vunpack.c.l.b16 %v524
  %v1876 = vunpack.c.l.b16 %v525
  %v1877 = vunpack.c.l.b16 %v526
  %v1878 = vunpack.c.l.b16 %v527
  %v1879 = vunpack.c.l.b16 %v528
  %v1880 = vunpack.c.l.b16 %v529
  %v1881 = vunpack.c.l.b16 %v530
  %v1882 = vunpack.c.l.b16 %v531
  %v1883 = vunpack.c.l.b16 %v532
  %v1884 = vunpack.c.l.b16 %v533
  %v1885 = vunpack.c.l.b16 %v534
  %v1886 = vunpack.c.l.b16 %v535
  %v1887 = vunpack.c.l.b16 %v536
  %v1888 = vunpack.c.l.b16 %v537
  %v1889 = vunpack.c.l.b16 %v538
  %v1890 = vunpack.c.l.b16 %v539
  %v1891 = vunpack.c.l.b16 %v540
  %v1892 = vunpack.c.l.b16 %v541
  %v1893 = vunpack.c.l.b16 %v542
  %v1894 = vunpack.c.l.b16 %v543
  %v1895 = vunpack.c.l.b16 %v544
  %v1896 = vunpack.c.l.b16 %v545
  %v1897 = vunpack.c.l.b16 %v546
  %v1898 = vunpack.c.l.b16 %v547
  %v1899 = vunpack.c.l.b16 %v548
  %v1900 = vunpack.c.l.b16 %v549
  %v1901 = vunpack.c.l.b16 %v550
  %v1902 = vunpack.c.l.b16 %v551
  %v1903 = vunpack.c.l.b16 %v552
  %v1904 = vunpack.c.l.b16 %v553
  %v1905 = vunpack.c.l.b16 %v554
  %v1906 = vunpack.c.l.b16 %v555
  %v1907 = vunpack.c.l.b16 %v556
  %v1908 = vunpack.c.l.b16 %v557
  %v1909 = vunpack.c.l.b16 %v558
  %v1910 = vunpack.c.l.b16 %v559
  %v1911 = vunpack.c.l.b16 %v560
  %v1912 = vunpack.c.l.b16 %v561
  %v1913 = vunpack.c.l.b16 %v562
  %v1914 = vunpack.c.l.b16 %v563
  %v1915 = vunpack.c.l.b16 %v564
  %v1916 = vunpack.c.l.b16 %v565
  %v1917 = vunpack.c.l.b16 %v566
  %v1918 = vunpack.c.l.b16 %v567
  %v1919 = vunpack.c.l.b16 %v568
  %v1920 = vunpack.c.l.b16 %v569
  %v1921 = vunpack.c.l.b16 %v570
  %v1922 = vunpack.c.l.b16 %v571
  %v1923 = vunpack.c.l.b16 %v572
  %v1924 = vunpack.c.l.b16 %v573
  %v1925 = vunpack.c.l.b16 %v574
  %v1926 = vunpack.c.l.b16 %v575
  %v1927 = vunpack.c.l.b16 %v576
  %v1928 = vunpack.c.l.b16 %v577
  %v1929 = vunpack.c.l.b16 %v578
  %v1930 = vunpack.c.l.b16 %v579
  %v1931 = vunpack.c.l.b16 %v580
  %v1932 = vunpack.c.l.b16 %v581
  %v1933 = vunpack.c.l.b16 %v582
  %v1934 = vunpack.c.l.b16 %v583
  %v1935 = vunpack.c.l.b16 %v584
  %v1936 = vunpack.c.l.b16 %v585
  %v1937 = vunpack.c.l.b16 %v586
  %v1938 = vunpack.c.l.b16 %v587
  %v1939 = vunpack.c.l.b16 %v588
  %v1940 = vunpack.c.l.b16 %v589
  %v1941 = vunpack.c.l.b16 %v590
  %v1942 = vpack.c.b16 %v1431, %v1430
  %v1943 = vpack.c.b16 %v1433, %v1432
  %v1944 = vpack.c.b16 %v1435, %v1434
  %v1945 = vpack.c.b16 %v1437, %v1436
  %v1946 = vpack.c.b16 %v1439, %v1438
  %v1947 = vpack.c.b16 %v1441, %v1440
  %v1948 = vpack.c.b16 %v1443, %v1442
  %v1949 = vpack.c.b16 %v1445, %v1444
  %v1950 = vpack.c.b16 %v1447, %v1446
  %v1951 = vpack.c.b16 %v1449, %v1448
  %v1952 = vpack.c.b16 %v1451, %v1450
  %v1953 = vpack.c.b16 %v1453, %v1452
  %v1954 = vpack.c.b16 %v1455, %v1454
  %v1955 = vpack.c.b16 %v1457, %v1456
  %v1956 = vpack.c.b16 %v1459, %v1458
  %v1957 = vpack.c.b16 %v1461, %v1460
  %v1958 = vpack.c.b16 %v1463, %v1462
  %v1959 = vpack.c.b16 %v1465, %v1464
  %v1960 = vpack.c.b16 %v1467, %v1466
  %v1961 = vpack.c.b16 %v1469, %v1468
  %v1962 = vpack.c.b16 %v1471, %v1470
  %v1963 = vpack.c.b16 %v1473, %v1472
  %v1964 = vpack.c.b16 %v1475, %v1474
  %v1965 = vpack.c.b16 %v1477, %v1476
  %v1966 = vpack.c.b16 %v1479, %v1478
  %v1967 = vpack.c.b16 %v1481, %v1480
  %v1968 = vpack.c.b16 %v1483, %v1482
  %v1969 = vpack.c.b16 %v1485, %v1484
  %v1970 = vpack.c.b16 %v1487, %v1486
  %v1971 = vpack.c.b16 %v1489, %v1488
  %v1972 = vpack.c.b16 %v1491, %v1490
  %v1973 = vpack.c.b16 %v1493, %v1492
  %v1974 = vpack.c.b16 %v1495, %v1494
  %v1975 = vpack.c.b16 %v1497, %v1496
  %v1976 = vpack.c.b16 %v1499, %v1498
  %v1977 = vpack.c.b16 %v1501, %v1500
  %v1978 = vpack.c.b16 %v1503, %v1502
  %v1979 = vpack.c.b16 %v1505, %v1504
  %v1980 = vpack.c.b16 %v1507, %v1506
  %v1981 = vpack.c.b16 %v1509, %v1508
  %v1982 = vpack.c.b16 %v1511, %v1510
  %v1983 = vpack.c.b16 %v1513, %v1512
  %v1984 = vpack.c.b16 %v1515, %v1514
  %v1985 = vpack.c.b16 %v1517, %v1516
  %v1986 = vpack.c.b16 %v1519, %v1518
  %v1987 = vpack.c.b16 %v1521, %v1520
  %v1988 = vpack.c.b16 %v1523, %v1522
  %v1989 = vpack.c.b16 %v1525, %v1524
  %v1990 = vpack.c.b16 %v1527, %v1526
  %v1991 = vpack.c.b16 %v1529, %v1528
  %v1992 = vpack.c.b16 %v1531, %v1530
  %v1993 = vpack.c.b16 %v1533, %v1532
  %v1994 = vpack.c.b16 %v1535, %v1534
  %v1995 = vpack.c.b16 %v1537, %v1536
  %v1996 = vpack.c.b16 %v1539, %v1538
  %v1997 = vpack.c.b16 %v1541, %v1540
  %v1998 = vpack.c.b16 %v1543, %v1542
  %v1999 = vpack.c.b16 %v1545, %v1544
  %v2000 = vpack.c.b16 %v1547, %v1546
  %v2001 = vpack.c.b16 %v1549, %v1548
  %v2002 = vpack.c.b16 %v1551, %v1550
  %v2003 = vpack.c.b16 %v1553, %v1552
  %v2004 = vpack.c.b16 %v1555, %v1554
  %v2005 = vpack.c.b16 %v1557, %v1556
  %v2006 = vpack.c.b16 %v1559, %v1558
  %v2007 = vpack.c.b16 %v1561, %v1560
  %v2008 = vpack.c.b16 %v1563, %v1562
  %v2009 = vpack.c.b16 %v1565, %v1564
  %v2010 = vpack.c.b16 %v1567, %v1566
  %v2011 = vpack.c.b16 %v1569, %v1568
  %v2012 = vpack.c.b16 %v1571, %v1570
  %v2013 = vpack.c.b16 %v1573, %v1572
  %v2014 = vpack.c.b16 %v1575, %v1574
  %v2015 = vpack.c.b16 %v1577, %v1576
  %v2016 = vpack.c.b16 %v1579, %v1578
  %v2017 = vpack.c.b16 %v1581, %v1580
  %v2018 = vpack.c.b16 %v1583, %v1582
  %v2019 = vpack.c.b16 %v1585, %v1584
  %v2020 = vpack.c.b16 %v1587, %v1586
  %v2021 = vpack.c.b16 %v1589, %v1588
  %v2022 = vpack.c.b16 %v1591, %v1590
  %v2023 = vpack.c.b16 %v1593, %v1592
  %v2024 = vpack.c.b16 %v1595, %v1594
  %v2025 = vpack.c.b16 %v1597, %v1596
  %v2026 = vpack.c.b16 %v1599, %v1598
  %v2027 = vpack.c.b16 %v1601, %v1600
  %v2028 = vpack.c.b16 %v1603, %v1602
  %v2029 = vpack.c.b16 %v1605, %v1604
  %v2030 = vpack.c.b16 %v1607, %v1606
  %v2031 = vpack.c.b16 %v1609, %v1608
  %v2032 = vpack.c.b16 %v1611, %v1610
  %v2033 = vpack.c.b16 %v1613, %v1612
  %v2034 = vpack.c.b16 %v1615, %v1614
  %v2035 = vpack.c.b16 %v1617, %v1616
  %v2036 = vpack.c.b16 %v1619, %v1618
  %v2037 = vpack.c.b16 %v1621, %v1620
  %v2038 = vpack.c.b16 %v1623, %v1622
  %v2039 = vpack.c.b16 %v1625, %v1624
  %v2040 = vpack.c.b16 %v1627, %v1626
  %v2041 = vpack.c.b16 %v1629, %v1628
  %v2042 = vpack.c.b16 %v1631, %v1630
  %v2043 = vpack.c.b16 %v1633, %v1632
  %v2044 = vpack.c.b16 %v1635, %v1634
  %v2045 = vpack.c.b16 %v1637, %v1636
  %v2046 = vpack.c.b16 %v1639, %v1638
  %v2047 = vpack.c.b16 %v1641, %v1640
  %v2048 = vpack.c.b16 %v1643, %v1642
  %v2049 = vpack.c.b16 %v1645, %v1644
  %v2050 = vpack.c.b16 %v1647, %v1646
  %v2051 = vpack.c.b16 %v1649, %v1648
  %v2052 = vpack.c.b16 %v1651, %v1650
  %v2053 = vpack.c.b16 %v1653, %v1652
  %v2054 = vpack.c.b16 %v1655, %v1654
  %v2055 = vpack.c.b16 %v1657, %v1656
  %v2056 = vpack.c.b16 %v1659, %v1658
  %v2057 = vpack.c.b16 %v1661, %v1660
  %v2058 = vpack.c.b16 %v1663, %v1662
  %v2059 = vpack.c.b16 %v1665, %v1664
  %v2060 = vpack.c.b16 %v1667, %v1666
  %v2061 = vpack.c.b16 %v1669, %v1668
  %v2062 = vpack.c.b16 %v1671, %v1670
  %v2063 = vpack.c.b16 %v1673, %v1672
  %v2064 = vpack.c.b16 %v1675, %v1674
  %v2065 = vpack.c.b16 %v1677, %v1676
  %v2066 = vpack.c.b16 %v1679, %v1678
  %v2067 = vpack.c.b16 %v1681, %v1680
  %v2068 = vpack.c.b16 %v1683, %v1682
  %v2069 = vpack.c.b16 %v1685, %v1684
  %v2070 = vpack.c.b16 %v1687, %v1686
  %v2071 = vpack.c.b16 %v1689, %v1688
  %v2072 = vpack.c.b16 %v1691, %v1690
  %v2073 = vpack.c.b16 %v1693, %v1692
  %v2074 = vpack.c.b16 %v1695, %v1694
  %v2075 = vpack.c.b16 %v1697, %v1696
  %v2076 = vpack.c.b16 %v1699, %v1698
  %v2077 = vpack.c.b16 %v1701, %v1700
  %v2078 = vpack.c.b16 %v1703, %v1702
  %v2079 = vpack.c.b16 %v1705, %v1704
  %v2080 = vpack.c.b16 %v1707, %v1706
  %v2081 = vpack.c.b16 %v1709, %v1708
  %v2082 = vpack.c.b16 %v1711, %v1710
  %v2083 = vpack.c.b16 %v1713, %v1712
  %v2084 = vpack.c.b16 %v1715, %v1714
  %v2085 = vpack.c.b16 %v1717, %v1716
  %v2086 = vpack.c.b16 %v1719, %v1718
  %v2087 = vpack.c.b16 %v1721, %v1720
  %v2088 = vpack.c.b16 %v1723, %v1722
  %v2089 = vpack.c.b16 %v1725, %v1724
  %v2090 = vpack.c.b16 %v1727, %v1726
  %v2091 = vpack.c.b16 %v1729, %v1728
  %v2092 = vpack.c.b16 %v1731, %v1730
  %v2093 = vpack.c.b16 %v1733, %v1732
  %v2094 = vpack.c.b16 %v1735, %v1734
  %v2095 = vpack.c.b16 %v1737, %v1736
  %v2096 = vpack.c.b16 %v1739, %v1738
  %v2097 = vpack.c.b16 %v1741, %v1740
  %v2098 = vpack.c.b16 %v1743, %v1742
  %v2099 = vpack.c.b16 %v1745, %v1744
  %v2100 = vpack.c.b16 %v1747, %v1746
  %v2101 = vpack.c.b16 %v1749, %v1748
  %v2102 = vpack.c.b16 %v1751, %v1750
  %v2103 = vpack.c.b16 %v1753, %v1752
  %v2104 = vpack.c.b16 %v1755, %v1754
  %v2105 = vpack.c.b16 %v1757, %v1756
  %v2106 = vpack.c.b16 %v1759, %v1758
  %v2107 = vpack.c.b16 %v1761, %v1760
  %v2108 = vpack.c.b16 %v1763, %v1762
  %v2109 = vpack.c.b16 %v1765, %v1764
  %v2110 = vpack.c.b16 %v1767, %v1766
  %v2111 = vpack.c.b16 %v1769, %v1768
  %v2112 = vpack.c.b16 %v1771, %v1770
  %v2113 = vpack.c.b16 %v1773, %v1772
  %v2114 = vpack.c.b16 %v1775, %v1774
  %v2115 = vpack.c.b16 %v1777, %v1776
  %v2116 = vpack.c.b16 %v1779, %v1778
  %v2117 = vpack.c.b16 %v1781, %v1780
  %v2118 = vpack.c.b16 %v1783, %v1782
  %v2119 = vpack.c.b16 %v1785, %v1784
  %v2120 = vpack.c.b16 %v1787, %v1786
  %v2121 = vpack.c.b16 %v1789, %v1788
  %v2122 = vpack.c.b16 %v1791, %v1790
  %v2123 = vpack.c.b16 %v1793, %v1792
  %v2124 = vpack.c.b16 %v1795, %v1794
  %v2125 = vpack.c.b16 %v1797, %v1796
  %v2126 = vpack.c.b16 %v1799, %v1798
  %v2127 = vpack.c.b16 %v1801, %v1800
  %v2128 = vpack.c.b16 %v1803, %v1802
  %v2129 = vpack.c.b16 %v1805, %v1804
  %v2130 = vpack.c.b16 %v1807, %v1806
  %v2131 = vpack.c.b16 %v1809, %v1808
  %v2132 = vpack.c.b16 %v1811, %v1810
  %v2133 = vpack.c.b16 %v1813, %v1812
  %v2134 = vpack.c.b16 %v1815, %v1814
  %v2135 = vpack.c.b16 %v1817, %v1816
  %v2136 = vpack.c.b16 %v1819, %v1818
  %v2137 = vpack.c.b16 %v1821, %v1820
  %v2138 = vpack.c.b16 %v1823, %v1822
  %v2139 = vpack.c.b16 %v1825, %v1824
  %v2140 = vpack.c.b16 %v1827, %v1826
  %v2141 = vpack.c.b16 %v1829, %v1828
  %v2142 = vpack.c.b16 %v1831, %v1830
  %v2143 = vpack.c.b16 %v1833, %v1832
  %v2144 = vpack.c.b16 %v1835, %v1834
  %v2145 = vpack.c.b16 %v1837, %v1836
  %v2146 = vpack.c.b16 %v1839, %v1838
  %v2147 = vpack.c.b16 %v1841, %v1840
  %v2148 = vpack.c.b16 %v1843, %v1842
  %v2149 = vpack.c.b16 %v1845, %v1844
  %v2150 = vpack.c.b16 %v1847, %v1846
  %v2151 = vpack.c.b16 %v1849, %v1848
  %v2152 = vpack.c.b16 %v1851, %v1850
  %v2153 = vpack.c.b16 %v1853, %v1852
  %v2154 = vpack.c.b16 %v1855, %v1854
  %v2155 = vpack.c.b16 %v1857, %v1856
  %v2156 = vpack.c.b16 %v1859, %v1858
  %v2157 = vpack.c.b16 %v1861, %v1860
  %v2158 = vpack.c.b16 %v1863, %v1862
  %v2159 = vpack.c.b16 %v1865, %v1864
  %v2160 = vpack.c.b16 %v1867, %v1866
  %v2161 = vpack.c.b16 %v1869, %v1868
  %v2162 = vpack.c.b16 %v1871, %v1870
  %v2163 = vpack.c.b16 %v1873, %v1872
  %v2164 = vpack.c.b16 %v1875, %v1874
  %v2165 = vpack.c.b16 %v1877, %v1876
  %v2166 = vpack.c.b16 %v1879, %v1878
  %v2167 = vpack.c.b16 %v1881, %v1880
  %v2168 = vpack.c.b16 %v1883, %v1882
  %v2169 = vpack.c.b16 %v1885, %v1884
  %v2170 = vpack.c.b16 %v1887, %v1886
  %v2171 = vpack.c.b16 %v1889, %v1888
  %v2172 = vpack.c.b16 %v1891, %v1890
  %v2173 = vpack.c.b16 %v1893, %v1892
  %v2174 = vpack.c.b16 %v1895, %v1894
  %v2175 = vpack.c.b16 %v1897, %v1896
  %v2176 = vpack.c.b16 %v1899, %v1898
  %v2177 = vpack.c.b16 %v1901, %v1900
  %v2178 = vpack.c.b16 %v1903, %v1902
  %v2179 = vpack.c.b16 %v1905, %v1904
  %v2180 = vpack.c.b16 %v1907, %v1906
  %v2181 = vpack.c.b16 %v1909, %v1908
  %v2182 = vpack.c.b16 %v1911, %v1910
  %v2183 = vpack.c.b16 %v1913, %v1912
  %v2184 = vpack.c.b16 %v1915, %v1914
  %v2185 = vpack.c.b16 %v1917, %v1916
  %v2186 = vpack.c.b16 %v1919, %v1918
  %v2187 = vpack.c.b16 %v1921, %v1920
  %v2188 = vpack.c.b16 %v1923, %v1922
  %v2189 = vpack.c.b16 %v1925, %v1924
  %v2190 = vpack.c.b16 %v1927, %v1926
  %v2191 = vpack.c.b16 %v1929, %v1928
  %v2192 = vpack.c.b16 %v1931, %v1930
  %v2193 = vpack.c.b16 %v1933, %v1932
  %v2194 = vpack.c.b16 %v1935, %v1934
  %v2195 = vpack.c.b16 %v1937, %v1936
  %v2196 = vpack.c.b16 %v1939, %v1938
  %v2197 = vpack.c.b16 %v1941, %v1940
  %2454 = vmatprep.subr.bf16.mxu0 0
  %2455 = vmatpush1.bf16.msra.mxu0 %v1949
  %2456 = vmatprep.subr.bf16.mxu0 0
  %2457 = vmatpush1.bf16.msra.mxu0 %v1948
  %2458 = vmatprep.subr.bf16.mxu0 0
  %2459 = vmatpush1.bf16.msra.mxu0 %v1947
  %2460 = vmatprep.subr.bf16.mxu0 0
  %2461 = vmatpush1.bf16.msra.mxu0 %v1946
  %2462 = vmatprep.subr.bf16.mxu0 0
  %2463 = vmatpush1.bf16.msra.mxu0 %v1945
  %2464 = vmatprep.subr.bf16.mxu0 0
  %2465 = vmatpush1.bf16.msra.mxu0 %v1944
  %2466 = vmatprep.subr.bf16.mxu0 0
  %2467 = vmatpush1.bf16.msra.mxu0 %v1943
  %2468 = vmatprep.subr.bf16.mxu0 0
  %2469 = vmatpush1.bf16.msra.mxu0 %v1942
  %2470 = vmatprep.subr.bf16.mxu0 0
  %2471 = vmatpush2.bf16.msra.mxu0 %v1957
  %2472 = vmatprep.subr.bf16.mxu0 0
  %2473 = vmatpush2.bf16.msra.mxu0 %v1956
  %2474 = vmatprep.subr.bf16.mxu0 0
  %2475 = vmatpush2.bf16.msra.mxu0 %v1955
  %2476 = vmatprep.subr.bf16.mxu0 0
  %2477 = vmatpush2.bf16.msra.mxu0 %v1954
  %2478 = vmatprep.subr.bf16.mxu0 0
  %2479 = vmatpush2.bf16.msra.mxu0 %v1953
  %2480 = vmatprep.subr.bf16.mxu0 0
  %2481 = vmatpush2.bf16.msra.mxu0 %v1952
  %2482 = vmatprep.subr.bf16.mxu0 0
  %2483 = vmatpush2.bf16.msra.mxu0 %v1951
  %2484 = vmatprep.subr.bf16.mxu0 0
  %2485 = vmatpush2.bf16.msra.mxu0 %v1950
  %2486 = vmatprep.mubr.bf16.mxu0 %v791
  %2487 = vmatmul.mubr.bf16.gmra.mxu0 %v790
  %v2488 = vpop.f32.mrf.mxu0
  %v2489 = vadd.f32 %v596, %v2488
  %v2490 = vpop.f32.mrf.mxu0
  %v2491 = vpop.f32.mrf.mxu0
  %v2492 = vadd.f32 %v596, %v2491
  %v2493 = vpop.f32.mrf.mxu0
  %2494 = vmatprep.mubr.bf16.mxu0 %v823
  %2495 = vmatmul.mubr.bf16.gmra.mxu0 %v822
  %v2496 = vpop.f32.mrf.mxu0
  %v2497 = vadd.f32 %v596, %v2496
  %v2498 = vpop.f32.mrf.mxu0
  %v2499 = vpop.f32.mrf.mxu0
  %v2500 = vadd.f32 %v596, %v2499
  %v2501 = vpop.f32.mrf.mxu0
  %2502 = vdwg.mxu0
  %2503 = vmatprep.subr.bf16.mxu0 0
  %2504 = vmatpush1.bf16.msra.mxu0 %v1965
  %2505 = vmatprep.subr.bf16.mxu0 0
  %2506 = vmatpush1.bf16.msra.mxu0 %v1964
  %2507 = vmatprep.subr.bf16.mxu0 0
  %2508 = vmatpush1.bf16.msra.mxu0 %v1963
  %2509 = vmatprep.subr.bf16.mxu0 0
  %2510 = vmatpush1.bf16.msra.mxu0 %v1962
  %2511 = vmatprep.subr.bf16.mxu0 0
  %2512 = vmatpush1.bf16.msra.mxu0 %v1961
  %2513 = vmatprep.subr.bf16.mxu0 0
  %2514 = vmatpush1.bf16.msra.mxu0 %v1960
  %2515 = vmatprep.subr.bf16.mxu0 0
  %2516 = vmatpush1.bf16.msra.mxu0 %v1959
  %2517 = vmatprep.subr.bf16.mxu0 0
  %2518 = vmatpush1.bf16.msra.mxu0 %v1958
  %2519 = vmatprep.subr.bf16.mxu0 0
  %2520 = vmatpush2.bf16.msra.mxu0 %v1973
  %2521 = vmatprep.subr.bf16.mxu0 0
  %2522 = vmatpush2.bf16.msra.mxu0 %v1972
  %2523 = vmatprep.subr.bf16.mxu0 0
  %2524 = vmatpush2.bf16.msra.mxu0 %v1971
  %2525 = vmatprep.subr.bf16.mxu0 0
  %2526 = vmatpush2.bf16.msra.mxu0 %v1970
  %2527 = vmatprep.subr.bf16.mxu0 0
  %2528 = vmatpush2.bf16.msra.mxu0 %v1969
  %2529 = vmatprep.subr.bf16.mxu0 0
  %2530 = vmatpush2.bf16.msra.mxu0 %v1968
  %2531 = vmatprep.subr.bf16.mxu0 0
  %2532 = vmatpush2.bf16.msra.mxu0 %v1967
  %2533 = vmatprep.subr.bf16.mxu0 0
  %2534 = vmatpush2.bf16.msra.mxu0 %v1966
  %2535 = vmatprep.mubr.bf16.mxu0 %v793
  %2536 = vmatmul.mubr.bf16.gmra.mxu0 %v792
  %v2537 = vpop.f32.mrf.mxu0
  %v2538 = vadd.f32 %v2489, %v2537
  %v2539 = vpop.f32.mrf.mxu0
  %v2540 = vpop.f32.mrf.mxu0
  %v2541 = vadd.f32 %v2492, %v2540
  %v2542 = vpop.f32.mrf.mxu0
  %2543 = vmatprep.mubr.bf16.mxu0 %v825
  %2544 = vmatmul.mubr.bf16.gmra.mxu0 %v824
  %v2545 = vpop.f32.mrf.mxu0
  %v2546 = vadd.f32 %v2497, %v2545
  %v2547 = vpop.f32.mrf.mxu0
  %v2548 = vpop.f32.mrf.mxu0
  %v2549 = vadd.f32 %v2500, %v2548
  %v2550 = vpop.f32.mrf.mxu0
  %2551 = vdwg.mxu0
  %2552 = vmatprep.subr.bf16.mxu0 0
  %2553 = vmatpush1.bf16.msra.mxu0 %v1981
  %2554 = vmatprep.subr.bf16.mxu0 0
  %2555 = vmatpush1.bf16.msra.mxu0 %v1980
  %2556 = vmatprep.subr.bf16.mxu0 0
  %2557 = vmatpush1.bf16.msra.mxu0 %v1979
  %2558 = vmatprep.subr.bf16.mxu0 0
  %2559 = vmatpush1.bf16.msra.mxu0 %v1978
  %2560 = vmatprep.subr.bf16.mxu0 0
  %2561 = vmatpush1.bf16.msra.mxu0 %v1977
  %2562 = vmatprep.subr.bf16.mxu0 0
  %2563 = vmatpush1.bf16.msra.mxu0 %v1976
  %2564 = vmatprep.subr.bf16.mxu0 0
  %2565 = vmatpush1.bf16.msra.mxu0 %v1975
  %2566 = vmatprep.subr.bf16.mxu0 0
  %2567 = vmatpush1.bf16.msra.mxu0 %v1974
  %2568 = vmatprep.subr.bf16.mxu0 0
  %2569 = vmatpush2.bf16.msra.mxu0 %v1989
  %2570 = vmatprep.subr.bf16.mxu0 0
  %2571 = vmatpush2.bf16.msra.mxu0 %v1988
  %2572 = vmatprep.subr.bf16.mxu0 0
  %2573 = vmatpush2.bf16.msra.mxu0 %v1987
  %2574 = vmatprep.subr.bf16.mxu0 0
  %2575 = vmatpush2.bf16.msra.mxu0 %v1986
  %2576 = vmatprep.subr.bf16.mxu0 0
  %2577 = vmatpush2.bf16.msra.mxu0 %v1985
  %2578 = vmatprep.subr.bf16.mxu0 0
  %2579 = vmatpush2.bf16.msra.mxu0 %v1984
  %2580 = vmatprep.subr.bf16.mxu0 0
  %2581 = vmatpush2.bf16.msra.mxu0 %v1983
  %2582 = vmatprep.subr.bf16.mxu0 0
  %2583 = vmatpush2.bf16.msra.mxu0 %v1982
  %2584 = vmatprep.mubr.bf16.mxu0 %v795
  %2585 = vmatmul.mubr.bf16.gmra.mxu0 %v794
  %v2586 = vpop.f32.mrf.mxu0
  %v2587 = vadd.f32 %v2538, %v2586
  %v2588 = vpop.f32.mrf.mxu0
  %v2589 = vpop.f32.mrf.mxu0
  %v2590 = vadd.f32 %v2541, %v2589
  %v2591 = vpop.f32.mrf.mxu0
  %2592 = vmatprep.mubr.bf16.mxu0 %v827
  %2593 = vmatmul.mubr.bf16.gmra.mxu0 %v826
  %v2594 = vpop.f32.mrf.mxu0
  %v2595 = vadd.f32 %v2546, %v2594
  %v2596 = vpop.f32.mrf.mxu0
  %v2597 = vpop.f32.mrf.mxu0
  %v2598 = vadd.f32 %v2549, %v2597
  %v2599 = vpop.f32.mrf.mxu0
  %2600 = vdwg.mxu0
  %2601 = vmatprep.subr.bf16.mxu0 0
  %2602 = vmatpush1.bf16.msra.mxu0 %v1997
  %2603 = vmatprep.subr.bf16.mxu0 0
  %2604 = vmatpush1.bf16.msra.mxu0 %v1996
  %2605 = vmatprep.subr.bf16.mxu0 0
  %2606 = vmatpush1.bf16.msra.mxu0 %v1995
  %2607 = vmatprep.subr.bf16.mxu0 0
  %2608 = vmatpush1.bf16.msra.mxu0 %v1994
  %2609 = vmatprep.subr.bf16.mxu0 0
  %2610 = vmatpush1.bf16.msra.mxu0 %v1993
  %2611 = vmatprep.subr.bf16.mxu0 0
  %2612 = vmatpush1.bf16.msra.mxu0 %v1992
  %2613 = vmatprep.subr.bf16.mxu0 0
  %2614 = vmatpush1.bf16.msra.mxu0 %v1991
  %2615 = vmatprep.subr.bf16.mxu0 0
  %2616 = vmatpush1.bf16.msra.mxu0 %v1990
  %2617 = vmatprep.subr.bf16.mxu0 0
  %2618 = vmatpush2.bf16.msra.mxu0 %v2005
  %2619 = vmatprep.subr.bf16.mxu0 0
  %2620 = vmatpush2.bf16.msra.mxu0 %v2004
  %2621 = vmatprep.subr.bf16.mxu0 0
  %2622 = vmatpush2.bf16.msra.mxu0 %v2003
  %2623 = vmatprep.subr.bf16.mxu0 0
  %2624 = vmatpush2.bf16.msra.mxu0 %v2002
  %2625 = vmatprep.subr.bf16.mxu0 0
  %2626 = vmatpush2.bf16.msra.mxu0 %v2001
  %2627 = vmatprep.subr.bf16.mxu0 0
  %2628 = vmatpush2.bf16.msra.mxu0 %v2000
  %2629 = vmatprep.subr.bf16.mxu0 0
  %2630 = vmatpush2.bf16.msra.mxu0 %v1999
  %2631 = vmatprep.subr.bf16.mxu0 0
  %2632 = vmatpush2.bf16.msra.mxu0 %v1998
  %2633 = vmatprep.mubr.bf16.mxu0 %v797
  %2634 = vmatmul.mubr.bf16.gmra.mxu0 %v796
  %v2635 = vpop.f32.mrf.mxu0
  %v2636 = vadd.f32 %v2587, %v2635
  %v2637 = vpop.f32.mrf.mxu0
  %v2638 = vpop.f32.mrf.mxu0
  %v2639 = vadd.f32 %v2590, %v2638
  %v2640 = vpop.f32.mrf.mxu0
  %2641 = vmatprep.mubr.bf16.mxu0 %v829
  %2642 = vmatmul.mubr.bf16.gmra.mxu0 %v828
  %v2643 = vpop.f32.mrf.mxu0
  %v2644 = vadd.f32 %v2595, %v2643
  %v2645 = vpop.f32.mrf.mxu0
  %v2646 = vpop.f32.mrf.mxu0
  %v2647 = vadd.f32 %v2598, %v2646
  %v2648 = vpop.f32.mrf.mxu0
  %2649 = vdwg.mxu0
  %2650 = vmatprep.subr.bf16.mxu0 0
  %2651 = vmatpush1.bf16.msra.mxu0 %v2013
  %2652 = vmatprep.subr.bf16.mxu0 0
  %2653 = vmatpush1.bf16.msra.mxu0 %v2012
  %2654 = vmatprep.subr.bf16.mxu0 0
  %2655 = vmatpush1.bf16.msra.mxu0 %v2011
  %2656 = vmatprep.subr.bf16.mxu0 0
  %2657 = vmatpush1.bf16.msra.mxu0 %v2010
  %2658 = vmatprep.subr.bf16.mxu0 0
  %2659 = vmatpush1.bf16.msra.mxu0 %v2009
  %2660 = vmatprep.subr.bf16.mxu0 0
  %2661 = vmatpush1.bf16.msra.mxu0 %v2008
  %2662 = vmatprep.subr.bf16.mxu0 0
  %2663 = vmatpush1.bf16.msra.mxu0 %v2007
  %2664 = vmatprep.subr.bf16.mxu0 0
  %2665 = vmatpush1.bf16.msra.mxu0 %v2006
  %2666 = vmatprep.subr.bf16.mxu0 0
  %2667 = vmatpush2.bf16.msra.mxu0 %v2021
  %2668 = vmatprep.subr.bf16.mxu0 0
  %2669 = vmatpush2.bf16.msra.mxu0 %v2020
  %2670 = vmatprep.subr.bf16.mxu0 0
  %2671 = vmatpush2.bf16.msra.mxu0 %v2019
  %2672 = vmatprep.subr.bf16.mxu0 0
  %2673 = vmatpush2.bf16.msra.mxu0 %v2018
  %2674 = vmatprep.subr.bf16.mxu0 0
  %2675 = vmatpush2.bf16.msra.mxu0 %v2017
  %2676 = vmatprep.subr.bf16.mxu0 0
  %2677 = vmatpush2.bf16.msra.mxu0 %v2016
  %2678 = vmatprep.subr.bf16.mxu0 0
  %2679 = vmatpush2.bf16.msra.mxu0 %v2015
  %2680 = vmatprep.subr.bf16.mxu0 0
  %2681 = vmatpush2.bf16.msra.mxu0 %v2014
  %2682 = vmatprep.mubr.bf16.mxu0 %v799
  %2683 = vmatmul.mubr.bf16.gmra.mxu0 %v798
  %v2684 = vpop.f32.mrf.mxu0
  %v2685 = vadd.f32 %v2636, %v2684
  %v2686 = vpop.f32.mrf.mxu0
  %v2687 = vpop.f32.mrf.mxu0
  %v2688 = vadd.f32 %v2639, %v2687
  %v2689 = vpop.f32.mrf.mxu0
  %2690 = vmatprep.mubr.bf16.mxu0 %v831
  %2691 = vmatmul.mubr.bf16.gmra.mxu0 %v830
  %v2692 = vpop.f32.mrf.mxu0
  %v2693 = vadd.f32 %v2644, %v2692
  %v2694 = vpop.f32.mrf.mxu0
  %v2695 = vpop.f32.mrf.mxu0
  %v2696 = vadd.f32 %v2647, %v2695
  %v2697 = vpop.f32.mrf.mxu0
  %2698 = vdwg.mxu0
  %2699 = vmatprep.subr.bf16.mxu0 0
  %2700 = vmatpush1.bf16.msra.mxu0 %v2029
  %2701 = vmatprep.subr.bf16.mxu0 0
  %2702 = vmatpush1.bf16.msra.mxu0 %v2028
  %2703 = vmatprep.subr.bf16.mxu0 0
  %2704 = vmatpush1.bf16.msra.mxu0 %v2027
  %2705 = vmatprep.subr.bf16.mxu0 0
  %2706 = vmatpush1.bf16.msra.mxu0 %v2026
  %2707 = vmatprep.subr.bf16.mxu0 0
  %2708 = vmatpush1.bf16.msra.mxu0 %v2025
  %2709 = vmatprep.subr.bf16.mxu0 0
  %2710 = vmatpush1.bf16.msra.mxu0 %v2024
  %2711 = vmatprep.subr.bf16.mxu0 0
  %2712 = vmatpush1.bf16.msra.mxu0 %v2023
  %2713 = vmatprep.subr.bf16.mxu0 0
  %2714 = vmatpush1.bf16.msra.mxu0 %v2022
  %2715 = vmatprep.subr.bf16.mxu0 0
  %2716 = vmatpush2.bf16.msra.mxu0 %v2037
  %2717 = vmatprep.subr.bf16.mxu0 0
  %2718 = vmatpush2.bf16.msra.mxu0 %v2036
  %2719 = vmatprep.subr.bf16.mxu0 0
  %2720 = vmatpush2.bf16.msra.mxu0 %v2035
  %2721 = vmatprep.subr.bf16.mxu0 0
  %2722 = vmatpush2.bf16.msra.mxu0 %v2034
  %2723 = vmatprep.subr.bf16.mxu0 0
  %2724 = vmatpush2.bf16.msra.mxu0 %v2033
  %2725 = vmatprep.subr.bf16.mxu0 0
  %2726 = vmatpush2.bf16.msra.mxu0 %v2032
  %2727 = vmatprep.subr.bf16.mxu0 0
  %2728 = vmatpush2.bf16.msra.mxu0 %v2031
  %2729 = vmatprep.subr.bf16.mxu0 0
  %2730 = vmatpush2.bf16.msra.mxu0 %v2030
  %2731 = vmatprep.mubr.bf16.mxu0 %v801
  %2732 = vmatmul.mubr.bf16.gmra.mxu0 %v800
  %v2733 = vpop.f32.mrf.mxu0
  %v2734 = vadd.f32 %v2685, %v2733
  %v2735 = vpop.f32.mrf.mxu0
  %v2736 = vpop.f32.mrf.mxu0
  %v2737 = vadd.f32 %v2688, %v2736
  %v2738 = vpop.f32.mrf.mxu0
  %2739 = vmatprep.mubr.bf16.mxu0 %v833
  %2740 = vmatmul.mubr.bf16.gmra.mxu0 %v832
  %v2741 = vpop.f32.mrf.mxu0
  %v2742 = vadd.f32 %v2693, %v2741
  %v2743 = vpop.f32.mrf.mxu0
  %v2744 = vpop.f32.mrf.mxu0
  %v2745 = vadd.f32 %v2696, %v2744
  %v2746 = vpop.f32.mrf.mxu0
  %2747 = vdwg.mxu0
  %2748 = vmatprep.subr.bf16.mxu0 0
  %2749 = vmatpush1.bf16.msra.mxu0 %v2045
  %2750 = vmatprep.subr.bf16.mxu0 0
  %2751 = vmatpush1.bf16.msra.mxu0 %v2044
  %2752 = vmatprep.subr.bf16.mxu0 0
  %2753 = vmatpush1.bf16.msra.mxu0 %v2043
  %2754 = vmatprep.subr.bf16.mxu0 0
  %2755 = vmatpush1.bf16.msra.mxu0 %v2042
  %2756 = vmatprep.subr.bf16.mxu0 0
  %2757 = vmatpush1.bf16.msra.mxu0 %v2041
  %2758 = vmatprep.subr.bf16.mxu0 0
  %2759 = vmatpush1.bf16.msra.mxu0 %v2040
  %2760 = vmatprep.subr.bf16.mxu0 0
  %2761 = vmatpush1.bf16.msra.mxu0 %v2039
  %2762 = vmatprep.subr.bf16.mxu0 0
  %2763 = vmatpush1.bf16.msra.mxu0 %v2038
  %2764 = vmatprep.subr.bf16.mxu0 0
  %2765 = vmatpush2.bf16.msra.mxu0 %v2053
  %2766 = vmatprep.subr.bf16.mxu0 0
  %2767 = vmatpush2.bf16.msra.mxu0 %v2052
  %2768 = vmatprep.subr.bf16.mxu0 0
  %2769 = vmatpush2.bf16.msra.mxu0 %v2051
  %2770 = vmatprep.subr.bf16.mxu0 0
  %2771 = vmatpush2.bf16.msra.mxu0 %v2050
  %2772 = vmatprep.subr.bf16.mxu0 0
  %2773 = vmatpush2.bf16.msra.mxu0 %v2049
  %2774 = vmatprep.subr.bf16.mxu0 0
  %2775 = vmatpush2.bf16.msra.mxu0 %v2048
  %2776 = vmatprep.subr.bf16.mxu0 0
  %2777 = vmatpush2.bf16.msra.mxu0 %v2047
  %2778 = vmatprep.subr.bf16.mxu0 0
  %2779 = vmatpush2.bf16.msra.mxu0 %v2046
  %2780 = vmatprep.mubr.bf16.mxu0 %v803
  %2781 = vmatmul.mubr.bf16.gmra.mxu0 %v802
  %v2782 = vpop.f32.mrf.mxu0
  %v2783 = vadd.f32 %v2734, %v2782
  %v2784 = vpop.f32.mrf.mxu0
  %v2785 = vpop.f32.mrf.mxu0
  %v2786 = vadd.f32 %v2737, %v2785
  %v2787 = vpop.f32.mrf.mxu0
  %2788 = vmatprep.mubr.bf16.mxu0 %v835
  %2789 = vmatmul.mubr.bf16.gmra.mxu0 %v834
  %v2790 = vpop.f32.mrf.mxu0
  %v2791 = vadd.f32 %v2742, %v2790
  %v2792 = vpop.f32.mrf.mxu0
  %v2793 = vpop.f32.mrf.mxu0
  %v2794 = vadd.f32 %v2745, %v2793
  %v2795 = vpop.f32.mrf.mxu0
  %2796 = vdwg.mxu0
  %2797 = vmatprep.subr.bf16.mxu0 0
  %2798 = vmatpush1.bf16.msra.mxu0 %v2061
  %2799 = vmatprep.subr.bf16.mxu0 0
  %2800 = vmatpush1.bf16.msra.mxu0 %v2060
  %2801 = vmatprep.subr.bf16.mxu0 0
  %2802 = vmatpush1.bf16.msra.mxu0 %v2059
  %2803 = vmatprep.subr.bf16.mxu0 0
  %2804 = vmatpush1.bf16.msra.mxu0 %v2058
  %2805 = vmatprep.subr.bf16.mxu0 0
  %2806 = vmatpush1.bf16.msra.mxu0 %v2057
  %2807 = vmatprep.subr.bf16.mxu0 0
  %2808 = vmatpush1.bf16.msra.mxu0 %v2056
  %2809 = vmatprep.subr.bf16.mxu0 0
  %2810 = vmatpush1.bf16.msra.mxu0 %v2055
  %2811 = vmatprep.subr.bf16.mxu0 0
  %2812 = vmatpush1.bf16.msra.mxu0 %v2054
  %2813 = vmatprep.subr.bf16.mxu0 0
  %2814 = vmatpush2.bf16.msra.mxu0 %v2069
  %2815 = vmatprep.subr.bf16.mxu0 0
  %2816 = vmatpush2.bf16.msra.mxu0 %v2068
  %2817 = vmatprep.subr.bf16.mxu0 0
  %2818 = vmatpush2.bf16.msra.mxu0 %v2067
  %2819 = vmatprep.subr.bf16.mxu0 0
  %2820 = vmatpush2.bf16.msra.mxu0 %v2066
  %2821 = vmatprep.subr.bf16.mxu0 0
  %2822 = vmatpush2.bf16.msra.mxu0 %v2065
  %2823 = vmatprep.subr.bf16.mxu0 0
  %2824 = vmatpush2.bf16.msra.mxu0 %v2064
  %2825 = vmatprep.subr.bf16.mxu0 0
  %2826 = vmatpush2.bf16.msra.mxu0 %v2063
  %2827 = vmatprep.subr.bf16.mxu0 0
  %2828 = vmatpush2.bf16.msra.mxu0 %v2062
  %2829 = vmatprep.mubr.bf16.mxu0 %v805
  %2830 = vmatmul.mubr.bf16.gmra.mxu0 %v804
  %v2831 = vpop.f32.mrf.mxu0
  %v2832 = vadd.f32 %v2783, %v2831
  %v2833 = vpop.f32.mrf.mxu0
  %v2834 = vpop.f32.mrf.mxu0
  %v2835 = vadd.f32 %v2786, %v2834
  %v2836 = vpop.f32.mrf.mxu0
  %2837 = vmatprep.mubr.bf16.mxu0 %v837
  %2838 = vmatmul.mubr.bf16.gmra.mxu0 %v836
  %v2839 = vpop.f32.mrf.mxu0
  %v2840 = vadd.f32 %v2791, %v2839
  %v2841 = vpop.f32.mrf.mxu0
  %v2842 = vpop.f32.mrf.mxu0
  %v2843 = vadd.f32 %v2794, %v2842
  %v2844 = vpop.f32.mrf.mxu0
  %2845 = vdwg.mxu0
  %2846 = vmatprep.subr.bf16.mxu0 0
  %2847 = vmatpush1.bf16.msra.mxu0 %v2077
  %2848 = vmatprep.subr.bf16.mxu0 0
  %2849 = vmatpush1.bf16.msra.mxu0 %v2076
  %2850 = vmatprep.subr.bf16.mxu0 0
  %2851 = vmatpush1.bf16.msra.mxu0 %v2075
  %2852 = vmatprep.subr.bf16.mxu0 0
  %2853 = vmatpush1.bf16.msra.mxu0 %v2074
  %2854 = vmatprep.subr.bf16.mxu0 0
  %2855 = vmatpush1.bf16.msra.mxu0 %v2073
  %2856 = vmatprep.subr.bf16.mxu0 0
  %2857 = vmatpush1.bf16.msra.mxu0 %v2072
  %2858 = vmatprep.subr.bf16.mxu0 0
  %2859 = vmatpush1.bf16.msra.mxu0 %v2071
  %2860 = vmatprep.subr.bf16.mxu0 0
  %2861 = vmatpush1.bf16.msra.mxu0 %v2070
  %2862 = vmatprep.subr.bf16.mxu0 0
  %2863 = vmatpush2.bf16.msra.mxu0 %v2085
  %2864 = vmatprep.subr.bf16.mxu0 0
  %2865 = vmatpush2.bf16.msra.mxu0 %v2084
  %2866 = vmatprep.subr.bf16.mxu0 0
  %2867 = vmatpush2.bf16.msra.mxu0 %v2083
  %2868 = vmatprep.subr.bf16.mxu0 0
  %2869 = vmatpush2.bf16.msra.mxu0 %v2082
  %2870 = vmatprep.subr.bf16.mxu0 0
  %2871 = vmatpush2.bf16.msra.mxu0 %v2081
  %2872 = vmatprep.subr.bf16.mxu0 0
  %2873 = vmatpush2.bf16.msra.mxu0 %v2080
  %2874 = vmatprep.subr.bf16.mxu0 0
  %2875 = vmatpush2.bf16.msra.mxu0 %v2079
  %2876 = vmatprep.subr.bf16.mxu0 0
  %2877 = vmatpush2.bf16.msra.mxu0 %v2078
  %2878 = vmatprep.mubr.bf16.mxu0 %v807
  %2879 = vmatmul.mubr.bf16.gmra.mxu0 %v806
  %v2880 = vpop.f32.mrf.mxu0
  %v2881 = vadd.f32 %v2832, %v2880
  %v2882 = vpop.f32.mrf.mxu0
  %v2883 = vpop.f32.mrf.mxu0
  %v2884 = vadd.f32 %v2835, %v2883
  %v2885 = vpop.f32.mrf.mxu0
  %2886 = vmatprep.mubr.bf16.mxu0 %v839
  %2887 = vmatmul.mubr.bf16.gmra.mxu0 %v838
  %v2888 = vpop.f32.mrf.mxu0
  %v2889 = vadd.f32 %v2840, %v2888
  %v2890 = vpop.f32.mrf.mxu0
  %v2891 = vpop.f32.mrf.mxu0
  %v2892 = vadd.f32 %v2843, %v2891
  %v2893 = vpop.f32.mrf.mxu0
  %2894 = vdwg.mxu0
  %2895 = vmatprep.subr.bf16.mxu0 0
  %2896 = vmatpush1.bf16.msra.mxu0 %v2093
  %2897 = vmatprep.subr.bf16.mxu0 0
  %2898 = vmatpush1.bf16.msra.mxu0 %v2092
  %2899 = vmatprep.subr.bf16.mxu0 0
  %2900 = vmatpush1.bf16.msra.mxu0 %v2091
  %2901 = vmatprep.subr.bf16.mxu0 0
  %2902 = vmatpush1.bf16.msra.mxu0 %v2090
  %2903 = vmatprep.subr.bf16.mxu0 0
  %2904 = vmatpush1.bf16.msra.mxu0 %v2089
  %2905 = vmatprep.subr.bf16.mxu0 0
  %2906 = vmatpush1.bf16.msra.mxu0 %v2088
  %2907 = vmatprep.subr.bf16.mxu0 0
  %2908 = vmatpush1.bf16.msra.mxu0 %v2087
  %2909 = vmatprep.subr.bf16.mxu0 0
  %2910 = vmatpush1.bf16.msra.mxu0 %v2086
  %2911 = vmatprep.subr.bf16.mxu0 0
  %2912 = vmatpush2.bf16.msra.mxu0 %v2101
  %2913 = vmatprep.subr.bf16.mxu0 0
  %2914 = vmatpush2.bf16.msra.mxu0 %v2100
  %2915 = vmatprep.subr.bf16.mxu0 0
  %2916 = vmatpush2.bf16.msra.mxu0 %v2099
  %2917 = vmatprep.subr.bf16.mxu0 0
  %2918 = vmatpush2.bf16.msra.mxu0 %v2098
  %2919 = vmatprep.subr.bf16.mxu0 0
  %2920 = vmatpush2.bf16.msra.mxu0 %v2097
  %2921 = vmatprep.subr.bf16.mxu0 0
  %2922 = vmatpush2.bf16.msra.mxu0 %v2096
  %2923 = vmatprep.subr.bf16.mxu0 0
  %2924 = vmatpush2.bf16.msra.mxu0 %v2095
  %2925 = vmatprep.subr.bf16.mxu0 0
  %2926 = vmatpush2.bf16.msra.mxu0 %v2094
  %2927 = vmatprep.mubr.bf16.mxu0 %v809
  %2928 = vmatmul.mubr.bf16.gmra.mxu0 %v808
  %v2929 = vpop.f32.mrf.mxu0
  %v2930 = vadd.f32 %v2881, %v2929
  %v2931 = vpop.f32.mrf.mxu0
  %v2932 = vpop.f32.mrf.mxu0
  %v2933 = vadd.f32 %v2884, %v2932
  %v2934 = vpop.f32.mrf.mxu0
  %2935 = vmatprep.mubr.bf16.mxu0 %v841
  %2936 = vmatmul.mubr.bf16.gmra.mxu0 %v840
  %v2937 = vpop.f32.mrf.mxu0
  %v2938 = vadd.f32 %v2889, %v2937
  %v2939 = vpop.f32.mrf.mxu0
  %v2940 = vpop.f32.mrf.mxu0
  %v2941 = vadd.f32 %v2892, %v2940
  %v2942 = vpop.f32.mrf.mxu0
  %2943 = vdwg.mxu0
  %2944 = vmatprep.subr.bf16.mxu0 0
  %2945 = vmatpush1.bf16.msra.mxu0 %v2109
  %2946 = vmatprep.subr.bf16.mxu0 0
  %2947 = vmatpush1.bf16.msra.mxu0 %v2108
  %2948 = vmatprep.subr.bf16.mxu0 0
  %2949 = vmatpush1.bf16.msra.mxu0 %v2107
  %2950 = vmatprep.subr.bf16.mxu0 0
  %2951 = vmatpush1.bf16.msra.mxu0 %v2106
  %2952 = vmatprep.subr.bf16.mxu0 0
  %2953 = vmatpush1.bf16.msra.mxu0 %v2105
  %2954 = vmatprep.subr.bf16.mxu0 0
  %2955 = vmatpush1.bf16.msra.mxu0 %v2104
  %2956 = vmatprep.subr.bf16.mxu0 0
  %2957 = vmatpush1.bf16.msra.mxu0 %v2103
  %2958 = vmatprep.subr.bf16.mxu0 0
  %2959 = vmatpush1.bf16.msra.mxu0 %v2102
  %2960 = vmatprep.subr.bf16.mxu0 0
  %2961 = vmatpush2.bf16.msra.mxu0 %v2117
  %2962 = vmatprep.subr.bf16.mxu0 0
  %2963 = vmatpush2.bf16.msra.mxu0 %v2116
  %2964 = vmatprep.subr.bf16.mxu0 0
  %2965 = vmatpush2.bf16.msra.mxu0 %v2115
  %2966 = vmatprep.subr.bf16.mxu0 0
  %2967 = vmatpush2.bf16.msra.mxu0 %v2114
  %2968 = vmatprep.subr.bf16.mxu0 0
  %2969 = vmatpush2.bf16.msra.mxu0 %v2113
  %2970 = vmatprep.subr.bf16.mxu0 0
  %2971 = vmatpush2.bf16.msra.mxu0 %v2112
  %2972 = vmatprep.subr.bf16.mxu0 0
  %2973 = vmatpush2.bf16.msra.mxu0 %v2111
  %2974 = vmatprep.subr.bf16.mxu0 0
  %2975 = vmatpush2.bf16.msra.mxu0 %v2110
  %2976 = vmatprep.mubr.bf16.mxu0 %v811
  %2977 = vmatmul.mubr.bf16.gmra.mxu0 %v810
  %v2978 = vpop.f32.mrf.mxu0
  %v2979 = vadd.f32 %v2930, %v2978
  %v2980 = vpop.f32.mrf.mxu0
  %v2981 = vpop.f32.mrf.mxu0
  %v2982 = vadd.f32 %v2933, %v2981
  %v2983 = vpop.f32.mrf.mxu0
  %2984 = vmatprep.mubr.bf16.mxu0 %v843
  %2985 = vmatmul.mubr.bf16.gmra.mxu0 %v842
  %v2986 = vpop.f32.mrf.mxu0
  %v2987 = vadd.f32 %v2938, %v2986
  %v2988 = vpop.f32.mrf.mxu0
  %v2989 = vpop.f32.mrf.mxu0
  %v2990 = vadd.f32 %v2941, %v2989
  %v2991 = vpop.f32.mrf.mxu0
  %2992 = vdwg.mxu0
  %2993 = vmatprep.subr.bf16.mxu0 0
  %2994 = vmatpush1.bf16.msra.mxu0 %v2125
  %2995 = vmatprep.subr.bf16.mxu0 0
  %2996 = vmatpush1.bf16.msra.mxu0 %v2124
  %2997 = vmatprep.subr.bf16.mxu0 0
  %2998 = vmatpush1.bf16.msra.mxu0 %v2123
  %2999 = vmatprep.subr.bf16.mxu0 0
  %3000 = vmatpush1.bf16.msra.mxu0 %v2122
  %3001 = vmatprep.subr.bf16.mxu0 0
  %3002 = vmatpush1.bf16.msra.mxu0 %v2121
  %3003 = vmatprep.subr.bf16.mxu0 0
  %3004 = vmatpush1.bf16.msra.mxu0 %v2120
  %3005 = vmatprep.subr.bf16.mxu0 0
  %3006 = vmatpush1.bf16.msra.mxu0 %v2119
  %3007 = vmatprep.subr.bf16.mxu0 0
  %3008 = vmatpush1.bf16.msra.mxu0 %v2118
  %3009 = vmatprep.subr.bf16.mxu0 0
  %3010 = vmatpush2.bf16.msra.mxu0 %v2133
  %3011 = vmatprep.subr.bf16.mxu0 0
  %3012 = vmatpush2.bf16.msra.mxu0 %v2132
  %3013 = vmatprep.subr.bf16.mxu0 0
  %3014 = vmatpush2.bf16.msra.mxu0 %v2131
  %3015 = vmatprep.subr.bf16.mxu0 0
  %3016 = vmatpush2.bf16.msra.mxu0 %v2130
  %3017 = vmatprep.subr.bf16.mxu0 0
  %3018 = vmatpush2.bf16.msra.mxu0 %v2129
  %3019 = vmatprep.subr.bf16.mxu0 0
  %3020 = vmatpush2.bf16.msra.mxu0 %v2128
  %3021 = vmatprep.subr.bf16.mxu0 0
  %3022 = vmatpush2.bf16.msra.mxu0 %v2127
  %3023 = vmatprep.subr.bf16.mxu0 0
  %3024 = vmatpush2.bf16.msra.mxu0 %v2126
  %3025 = vmatprep.mubr.bf16.mxu0 %v813
  %3026 = vmatmul.mubr.bf16.gmra.mxu0 %v812
  %v3027 = vpop.f32.mrf.mxu0
  %v3028 = vadd.f32 %v2979, %v3027
  %v3029 = vpop.f32.mrf.mxu0
  %v3030 = vpop.f32.mrf.mxu0
  %v3031 = vadd.f32 %v2982, %v3030
  %v3032 = vpop.f32.mrf.mxu0
  %3033 = vmatprep.mubr.bf16.mxu0 %v845
  %3034 = vmatmul.mubr.bf16.gmra.mxu0 %v844
  %v3035 = vpop.f32.mrf.mxu0
  %v3036 = vadd.f32 %v2987, %v3035
  %v3037 = vpop.f32.mrf.mxu0
  %v3038 = vpop.f32.mrf.mxu0
  %v3039 = vadd.f32 %v2990, %v3038
  %v3040 = vpop.f32.mrf.mxu0
  %3041 = vdwg.mxu0
  %3042 = vmatprep.subr.bf16.mxu0 0
  %3043 = vmatpush1.bf16.msra.mxu0 %v2141
  %3044 = vmatprep.subr.bf16.mxu0 0
  %3045 = vmatpush1.bf16.msra.mxu0 %v2140
  %3046 = vmatprep.subr.bf16.mxu0 0
  %3047 = vmatpush1.bf16.msra.mxu0 %v2139
  %3048 = vmatprep.subr.bf16.mxu0 0
  %3049 = vmatpush1.bf16.msra.mxu0 %v2138
  %3050 = vmatprep.subr.bf16.mxu0 0
  %3051 = vmatpush1.bf16.msra.mxu0 %v2137
  %3052 = vmatprep.subr.bf16.mxu0 0
  %3053 = vmatpush1.bf16.msra.mxu0 %v2136
  %3054 = vmatprep.subr.bf16.mxu0 0
  %3055 = vmatpush1.bf16.msra.mxu0 %v2135
  %3056 = vmatprep.subr.bf16.mxu0 0
  %3057 = vmatpush1.bf16.msra.mxu0 %v2134
  %3058 = vmatprep.subr.bf16.mxu0 0
  %3059 = vmatpush2.bf16.msra.mxu0 %v2149
  %3060 = vmatprep.subr.bf16.mxu0 0
  %3061 = vmatpush2.bf16.msra.mxu0 %v2148
  %3062 = vmatprep.subr.bf16.mxu0 0
  %3063 = vmatpush2.bf16.msra.mxu0 %v2147
  %3064 = vmatprep.subr.bf16.mxu0 0
  %3065 = vmatpush2.bf16.msra.mxu0 %v2146
  %3066 = vmatprep.subr.bf16.mxu0 0
  %3067 = vmatpush2.bf16.msra.mxu0 %v2145
  %3068 = vmatprep.subr.bf16.mxu0 0
  %3069 = vmatpush2.bf16.msra.mxu0 %v2144
  %3070 = vmatprep.subr.bf16.mxu0 0
  %3071 = vmatpush2.bf16.msra.mxu0 %v2143
  %3072 = vmatprep.subr.bf16.mxu0 0
  %3073 = vmatpush2.bf16.msra.mxu0 %v2142
  %3074 = vmatprep.mubr.bf16.mxu0 %v815
  %3075 = vmatmul.mubr.bf16.gmra.mxu0 %v814
  %v3076 = vpop.f32.mrf.mxu0
  %v3077 = vadd.f32 %v3028, %v3076
  %v3078 = vpop.f32.mrf.mxu0
  %v3079 = vpop.f32.mrf.mxu0
  %v3080 = vadd.f32 %v3031, %v3079
  %v3081 = vpop.f32.mrf.mxu0
  %3082 = vmatprep.mubr.bf16.mxu0 %v847
  %3083 = vmatmul.mubr.bf16.gmra.mxu0 %v846
  %v3084 = vpop.f32.mrf.mxu0
  %v3085 = vadd.f32 %v3036, %v3084
  %v3086 = vpop.f32.mrf.mxu0
  %v3087 = vpop.f32.mrf.mxu0
  %v3088 = vadd.f32 %v3039, %v3087
  %v3089 = vpop.f32.mrf.mxu0
  %3090 = vdwg.mxu0
  %3091 = vmatprep.subr.bf16.mxu0 0
  %3092 = vmatpush1.bf16.msra.mxu0 %v2157
  %3093 = vmatprep.subr.bf16.mxu0 0
  %3094 = vmatpush1.bf16.msra.mxu0 %v2156
  %3095 = vmatprep.subr.bf16.mxu0 0
  %3096 = vmatpush1.bf16.msra.mxu0 %v2155
  %3097 = vmatprep.subr.bf16.mxu0 0
  %3098 = vmatpush1.bf16.msra.mxu0 %v2154
  %3099 = vmatprep.subr.bf16.mxu0 0
  %3100 = vmatpush1.bf16.msra.mxu0 %v2153
  %3101 = vmatprep.subr.bf16.mxu0 0
  %3102 = vmatpush1.bf16.msra.mxu0 %v2152
  %3103 = vmatprep.subr.bf16.mxu0 0
  %3104 = vmatpush1.bf16.msra.mxu0 %v2151
  %3105 = vmatprep.subr.bf16.mxu0 0
  %3106 = vmatpush1.bf16.msra.mxu0 %v2150
  %3107 = vmatprep.subr.bf16.mxu0 0
  %3108 = vmatpush2.bf16.msra.mxu0 %v2165
  %3109 = vmatprep.subr.bf16.mxu0 0
  %3110 = vmatpush2.bf16.msra.mxu0 %v2164
  %3111 = vmatprep.subr.bf16.mxu0 0
  %3112 = vmatpush2.bf16.msra.mxu0 %v2163
  %3113 = vmatprep.subr.bf16.mxu0 0
  %3114 = vmatpush2.bf16.msra.mxu0 %v2162
  %3115 = vmatprep.subr.bf16.mxu0 0
  %3116 = vmatpush2.bf16.msra.mxu0 %v2161
  %3117 = vmatprep.subr.bf16.mxu0 0
  %3118 = vmatpush2.bf16.msra.mxu0 %v2160
  %3119 = vmatprep.subr.bf16.mxu0 0
  %3120 = vmatpush2.bf16.msra.mxu0 %v2159
  %3121 = vmatprep.subr.bf16.mxu0 0
  %3122 = vmatpush2.bf16.msra.mxu0 %v2158
  %3123 = vmatprep.mubr.bf16.mxu0 %v817
  %3124 = vmatmul.mubr.bf16.gmra.mxu0 %v816
  %v3125 = vpop.f32.mrf.mxu0
  %v3126 = vadd.f32 %v3077, %v3125
  %v3127 = vpop.f32.mrf.mxu0
  %v3128 = vpop.f32.mrf.mxu0
  %v3129 = vadd.f32 %v3080, %v3128
  %v3130 = vpop.f32.mrf.mxu0
  %3131 = vmatprep.mubr.bf16.mxu0 %v849
  %3132 = vmatmul.mubr.bf16.gmra.mxu0 %v848
  %v3133 = vpop.f32.mrf.mxu0
  %v3134 = vadd.f32 %v3085, %v3133
  %v3135 = vpop.f32.mrf.mxu0
  %v3136 = vpop.f32.mrf.mxu0
  %v3137 = vadd.f32 %v3088, %v3136
  %v3138 = vpop.f32.mrf.mxu0
  %3139 = vdwg.mxu0
  %3140 = vmatprep.subr.bf16.mxu0 0
  %3141 = vmatpush1.bf16.msra.mxu0 %v2173
  %3142 = vmatprep.subr.bf16.mxu0 0
  %3143 = vmatpush1.bf16.msra.mxu0 %v2172
  %3144 = vmatprep.subr.bf16.mxu0 0
  %3145 = vmatpush1.bf16.msra.mxu0 %v2171
  %3146 = vmatprep.subr.bf16.mxu0 0
  %3147 = vmatpush1.bf16.msra.mxu0 %v2170
  %3148 = vmatprep.subr.bf16.mxu0 0
  %3149 = vmatpush1.bf16.msra.mxu0 %v2169
  %3150 = vmatprep.subr.bf16.mxu0 0
  %3151 = vmatpush1.bf16.msra.mxu0 %v2168
  %3152 = vmatprep.subr.bf16.mxu0 0
  %3153 = vmatpush1.bf16.msra.mxu0 %v2167
  %3154 = vmatprep.subr.bf16.mxu0 0
  %3155 = vmatpush1.bf16.msra.mxu0 %v2166
  %3156 = vmatprep.subr.bf16.mxu0 0
  %3157 = vmatpush2.bf16.msra.mxu0 %v2181
  %3158 = vmatprep.subr.bf16.mxu0 0
  %3159 = vmatpush2.bf16.msra.mxu0 %v2180
  %3160 = vmatprep.subr.bf16.mxu0 0
  %3161 = vmatpush2.bf16.msra.mxu0 %v2179
  %3162 = vmatprep.subr.bf16.mxu0 0
  %3163 = vmatpush2.bf16.msra.mxu0 %v2178
  %3164 = vmatprep.subr.bf16.mxu0 0
  %3165 = vmatpush2.bf16.msra.mxu0 %v2177
  %3166 = vmatprep.subr.bf16.mxu0 0
  %3167 = vmatpush2.bf16.msra.mxu0 %v2176
  %3168 = vmatprep.subr.bf16.mxu0 0
  %3169 = vmatpush2.bf16.msra.mxu0 %v2175
  %3170 = vmatprep.subr.bf16.mxu0 0
  %3171 = vmatpush2.bf16.msra.mxu0 %v2174
  %3172 = vmatprep.mubr.bf16.mxu0 %v819
  %3173 = vmatmul.mubr.bf16.gmra.mxu0 %v818
  %v3174 = vpop.f32.mrf.mxu0
  %v3175 = vadd.f32 %v3126, %v3174
  %v3176 = vpop.f32.mrf.mxu0
  %v3177 = vpop.f32.mrf.mxu0
  %v3178 = vadd.f32 %v3129, %v3177
  %v3179 = vpop.f32.mrf.mxu0
  %3180 = vmatprep.mubr.bf16.mxu0 %v851
  %3181 = vmatmul.mubr.bf16.gmra.mxu0 %v850
  %v3182 = vpop.f32.mrf.mxu0
  %v3183 = vadd.f32 %v3134, %v3182
  %v3184 = vpop.f32.mrf.mxu0
  %v3185 = vpop.f32.mrf.mxu0
  %v3186 = vadd.f32 %v3137, %v3185
  %v3187 = vpop.f32.mrf.mxu0
  %3188 = vdwg.mxu0
  %3189 = vmatprep.subr.bf16.mxu0 0
  %3190 = vmatpush1.bf16.msra.mxu0 %v2189
  %3191 = vmatprep.subr.bf16.mxu0 0
  %3192 = vmatpush1.bf16.msra.mxu0 %v2188
  %3193 = vmatprep.subr.bf16.mxu0 0
  %3194 = vmatpush1.bf16.msra.mxu0 %v2187
  %3195 = vmatprep.subr.bf16.mxu0 0
  %3196 = vmatpush1.bf16.msra.mxu0 %v2186
  %3197 = vmatprep.subr.bf16.mxu0 0
  %3198 = vmatpush1.bf16.msra.mxu0 %v2185
  %3199 = vmatprep.subr.bf16.mxu0 0
  %3200 = vmatpush1.bf16.msra.mxu0 %v2184
  %3201 = vmatprep.subr.bf16.mxu0 0
  %3202 = vmatpush1.bf16.msra.mxu0 %v2183
  %3203 = vmatprep.subr.bf16.mxu0 0
  %3204 = vmatpush1.bf16.msra.mxu0 %v2182
  %3205 = vmatprep.subr.bf16.mxu0 0
  %3206 = vmatpush2.bf16.msra.mxu0 %v2197
  %3207 = vmatprep.subr.bf16.mxu0 0
  %3208 = vmatpush2.bf16.msra.mxu0 %v2196
  %3209 = vmatprep.subr.bf16.mxu0 0
  %3210 = vmatpush2.bf16.msra.mxu0 %v2195
  %3211 = vmatprep.subr.bf16.mxu0 0
  %3212 = vmatpush2.bf16.msra.mxu0 %v2194
  %3213 = vmatprep.subr.bf16.mxu0 0
  %3214 = vmatpush2.bf16.msra.mxu0 %v2193
  %3215 = vmatprep.subr.bf16.mxu0 0
  %3216 = vmatpush2.bf16.msra.mxu0 %v2192
  %3217 = vmatprep.subr.bf16.mxu0 0
  %3218 = vmatpush2.bf16.msra.mxu0 %v2191
  %3219 = vmatprep.subr.bf16.mxu0 0
  %3220 = vmatpush2.bf16.msra.mxu0 %v2190
  %3221 = vmatprep.mubr.bf16.mxu0 %v821
  %3222 = vmatmul.mubr.bf16.gmra.mxu0 %v820
  %v3223 = vpop.f32.mrf.mxu0
  %v3224 = vadd.f32 %v3175, %v3223
  %v3225 = vpop.f32.mrf.mxu0
  %v3226 = vpop.f32.mrf.mxu0
  %v3227 = vadd.f32 %v3178, %v3226
  %v3228 = vpop.f32.mrf.mxu0
  %3229 = vmatprep.mubr.bf16.mxu0 %v853
  %3230 = vmatmul.mubr.bf16.gmra.mxu0 %v852
  %v3231 = vpop.f32.mrf.mxu0
  %v3232 = vadd.f32 %v3183, %v3231
  %v3233 = vpop.f32.mrf.mxu0
  %v3234 = vpop.f32.mrf.mxu0
  %v3235 = vadd.f32 %v3186, %v3234
  %v3236 = vpop.f32.mrf.mxu0
  %3237 = vdwg.mxu0
  %3238 = vst [vmem:[%s3] sm:$0xff] %v3224
  %3239 = vst [vmem:[%s3 + $0x8] sm:$0xff] %v3227
  %3240 = vst [vmem:[%s3 + $0x10] sm:$0xff] %v3232
  %3241 = vst [vmem:[%s3 + $0x18] sm:$0xff] %v3235
  // Predicated region
  $region14: #{discriminator_forward.11} parent=0 // pred_check
    _
  $region15: #{discriminator_forward.11} parent=0 // pred_check_branch
    %3243 = sbr.rel (0) target = $region17
  $region16: #{discriminator_forward.11} parent=0 // pred_region
    _
  $region17: #{discriminator_forward.11} parent=0 // pred_fallthru
    _
  // Predicated region
  $region18: #{discriminator_forward.11} parent=0 // pred_check
    _
  $region19: #{discriminator_forward.11} parent=0 // pred_check_branch
    %3245 = sbr.rel (0) target = $region21
  $region20: #{discriminator_forward.11} parent=0 // pred_region
    _
  $region21: #{discriminator_forward.11} parent=0 // pred_fallthru
    _

</llo_original>
